<compile_context>
chip_gen: v6e
topology: v6e:2x2x1
jax: 0.10.0
libtpu: 0.0.40
codegen_flags: <defaults>
</compile_context>

<pallas_src>
import functools

import jax
import jax.numpy as jnp
from jax.experimental import pallas as pl
from jax.experimental.pallas import tpu as pltpu


def _decoder_kernel(blk_ref, a_dst_ref, a_src_ref, m_ref, msg_ref, adj_ref,
                    bias_ref, out_ref, acc_ref, *, g1p):
    i = pl.program_id(0)
    j = pl.program_id(1)
    nj = pl.num_programs(1)

    @pl.when(j == 0)
    def _init():
        acc_ref[...] = jnp.zeros_like(acc_ref)

    # Skip source blocks that carry no edges for this dst block.
    @pl.when(blk_ref[i * nj + j] != 0)
    def _body():
        # e[i, j] = LeakyReLU(a_dst[i] + a_src[j]); the exact per-row softmax
        # max m[i] was precomputed in the wrapper (separable + monotone).
        e = a_dst_ref[...] + a_src_ref[...]                        # [tn1, tn2]
        e = jnp.where(e > 0, e, 0.2 * e)                           # LeakyReLU(0.2)
        mask = adj_ref[...].astype(jnp.float32) > 0.0
        p = jnp.where(mask, jnp.exp(e - m_ref[...]), 0.0)          # [tn1, tn2]
        # msg_aug has a ones column at index g1p, so this single MXU matmul
        # also accumulates the softmax denominator sum_j p_ij in acc[:, g1p].
        acc_ref[...] += jnp.dot(p.astype(jnp.bfloat16), msg_ref[...],
                                preferred_element_type=jnp.float32)

    @pl.when(j == nj - 1)
    def _finalize():
        acc = acc_ref[...]
        l = acc[:, g1p:g1p + 1]                                    # [tn1, 1]
        inv = pl.reciprocal(jnp.maximum(l, 1e-9), approx=False)    # once per dst block
        out = acc[:, :g1p] * inv + bias_ref[...]
        out_ref[...] = jnp.maximum(out, 0.0).astype(out_ref.dtype)


def _round_up(x, m):
    return ((x + m - 1) // m) * m


def _pad2(x, rows, cols):
    pr, pc = rows - x.shape[0], cols - x.shape[1]
    if pr or pc:
        x = jnp.pad(x, ((0, pr), (0, pc)))
    return x


def decoder_forward(pi_edge_index, slice1_feature, slice2_X, params,
                    slice1_spots_num, slice2_spots_num,
                    *, dst_block=512, src_block=1024):
    """Pallas implementation of Decoder.forward.

    pi_edge_index : int32 [2, E]   row0 = source (slice2) idx, row1 = target (slice1) idx
    slice1_feature: f32  [N1, H]   hidden embedding of slice1 spots (target nodes)
    slice2_X      : f32  [N2, G2]  gene expression of slice2 spots (source nodes)
    returns       : f32  [N1, G1]  reconstructed slice1 expression
    """
    n1, n2 = slice1_spots_num, slice2_spots_num
    g2, g1 = params["W_src"].shape

    x2 = slice2_X.astype(jnp.float32)
    f1 = slice1_feature.astype(jnp.float32)

    # ---- source projection hoisted out of the kernel (one big XLA matmul) ----
    msg = (x2 @ params["W_src"]).astype(jnp.bfloat16)                 # [N2, G1]

    # ---- attention logits folded algebraically ----
    w_asrc = params["W_src"] @ params["att_src"]                      # [G2, 1]
    w_adst = params["W_dst"] @ params["att_dst"]                      # [H , 1]
    a_dst_vec = (f1 @ w_adst)[:, 0]                                   # [N1]
    a_src_vec = (x2 @ w_asrc)[:, 0]                                   # [N2]

    src = pi_edge_index[0]
    dst = pi_edge_index[1]

    # Exact per-row softmax max: LeakyReLU monotone => fold the segment max.
    seg_max = jnp.full((n1,), -jnp.inf, jnp.float32).at[dst].max(a_src_vec[src])
    m = a_dst_vec + seg_max
    m = jnp.where(m > 0, m, 0.2 * m)
    m = jnp.where(jnp.isfinite(m), m, 0.0)                            # isolated rows

    # Dense int8 adjacency (duplicate edges collapse to a single 1).
    adj = jnp.zeros((n1, n2), jnp.int8).at[dst, src].set(1)

    # ---- tiling ((8,128)/int8-aligned); keep >= 2 dst blocks when possible ----
    n1a = _round_up(n1, 32)
    n2a = _round_up(n2, 128)
    tn1 = min(dst_block, _round_up(max(n1a // 2, 32), 32))
    tn2 = min(src_block, n2a)
    n1p = _round_up(n1a, tn1)
    n2p = _round_up(n2a, tn2)
    grid0, grid1 = n1p // tn1, n2p // tn2

    g1p = _round_up(g1, 128)      # output / gene slab width
    g1w = g1p + 128               # + lane group holding the "ones" (denominator) column

    a_dst_in = _pad2(a_dst_vec[:, None], n1p, 1)
    m_in = _pad2(m[:, None], n1p, 1)
    a_src_in = _pad2(a_src_vec[None, :], 1, n2p)
    adj_in = _pad2(adj, n1p, n2p)

    msg_aug = jnp.zeros((n2p, g1w), jnp.bfloat16)
    msg_aug = msg_aug.at[:n2, :g1].set(msg)
    msg_aug = msg_aug.at[:n2, g1p].set(1.0)                           # denominator column

    bias = jnp.zeros((1, g1p), jnp.float32).at[:, :g1].set(
        params["bias"].astype(jnp.float32).reshape(1, g1))

    # Per-(i, j) block-occupancy table (scalar-prefetched; empty blocks skipped).
    blk = jnp.zeros((grid0 * grid1,), jnp.int32).at[
        (dst // tn1) * grid1 + (src // tn2)].set(1)

    kernel = functools.partial(_decoder_kernel, g1p=g1p)

    out = pl.pallas_call(
        kernel,
        out_shape=jax.ShapeDtypeStruct((n1p, g1p), jnp.float32),
        grid_spec=pltpu.PrefetchScalarGridSpec(
            num_scalar_prefetch=1,
            grid=(grid0, grid1),
            in_specs=[
                pl.BlockSpec((tn1, 1), lambda i, j, _blk: (i, 0)),     # a_dst (f32)
                pl.BlockSpec((1, tn2), lambda i, j, _blk: (0, j)),     # a_src (f32)
                pl.BlockSpec((tn1, 1), lambda i, j, _blk: (i, 0)),     # row max m (f32)
                pl.BlockSpec((tn2, g1w), lambda i, j, _blk: (j, 0)),   # msg + ones (bf16)
                pl.BlockSpec((tn1, tn2), lambda i, j, _blk: (i, j)),   # adj (int8)
                pl.BlockSpec((1, g1p), lambda i, j, _blk: (0, 0)),     # bias (f32)
            ],
            out_specs=pl.BlockSpec((tn1, g1p), lambda i, j, _blk: (i, 0)),
            scratch_shapes=[pltpu.VMEM((tn1, g1w), jnp.float32)],      # accumulator
        ),
        compiler_params=pltpu.CompilerParams(
            dimension_semantics=("parallel", "arbitrary"),
            vmem_limit_bytes=48 << 20),
    )(blk, a_dst_in, a_src_in, m_in, msg_aug, adj_in, bias)

    return out[:n1, :g1]


def _decoder_reference(pi_edge_index, slice1_feature, slice2_X, params, n1, n2):
    """Pure-JAX dense reference (f32 everywhere) for correctness checking."""
    src, dst = pi_edge_index[0], pi_edge_index[1]
    adj = jnp.zeros((n1, n2), jnp.float32).at[dst, src].set(1.0)
    msg = slice2_X @ params["W_src"]                                  # [N2, G1]
    a_src = (msg @ params["att_src"]).T                               # [1, N2]
    a_dst = (slice1_feature @ params["W_dst"]) @ params["att_dst"]    # [N1, 1]
    e = a_dst + a_src
    e = jnp.where(e > 0, e, 0.2 * e)
    e = jnp.where(adj > 0, e, -1e30)
    p = jnp.where(adj > 0, jnp.exp(e - e.max(axis=-1, keepdims=True)), 0.0)
    alpha = p / jnp.maximum(p.sum(axis=-1, keepdims=True), 1e-9)
    return jnp.maximum(alpha @ msg + params["bias"], 0.0)


def init_params(key, slice2_genes_num, slice1_genes_num, hidden_dim):
    k1, k2, k3, k4 = jax.random.split(key, 4)
    scale_src = 1.0 / jnp.sqrt(jnp.float32(slice2_genes_num))
    scale_dst = 1.0 / jnp.sqrt(jnp.float32(hidden_dim))
    return {
        # lin_src: slice2_genes_num -> slice1_genes_num (source messages)
        "W_src": scale_src * jax.random.normal(
            k1, (slice2_genes_num, slice1_genes_num), jnp.float32),
        # lin_dst: hidden_dim -> slice1_genes_num (target projection, attention only)
        "W_dst": scale_dst * jax.random.normal(
            k2, (hidden_dim, slice1_genes_num), jnp.float32),
        "att_src": 0.1 * jax.random.normal(k3, (slice1_genes_num, 1), jnp.float32),
        "att_dst": 0.1 * jax.random.normal(k4, (slice1_genes_num, 1), jnp.float32),
        "bias": jnp.zeros((1, slice1_genes_num), jnp.float32),
    }


if __name__ == "__main__":
    # Small shapes, large enough to exercise a 2 x 1 grid (2 dst blocks of 256).
    slice1_spots_num = 512    # N1 (target nodes)
    slice2_spots_num = 1024   # N2 (source nodes)
    slice1_genes_num = 256    # G1 (reconstructed genes)
    slice2_genes_num = 128    # G2 (source input genes)
    hidden_dim = 32           # H  (slice1 latent feature dim)

    key = jax.random.PRNGKey(0)
    kf, kx, kp = jax.random.split(key, 3)

    slice1_feature = jax.random.normal(
        kf, (slice1_spots_num, hidden_dim), jnp.float32)
    slice2_X = jax.random.normal(
        kx, (slice2_spots_num, slice2_genes_num), jnp.float32)

    # Deterministic bipartite edge list: every slice1 spot gets 3 slice2 neighbors.
    dst_ids = jnp.arange(slice1_spots_num, dtype=jnp.int32)
    src0 = dst_ids % slice2_spots_num
    src1 = (dst_ids * 7 + 3) % slice2_spots_num
    src2 = (dst_ids * 13 + 5) % slice2_spots_num
    pi_edge_index = jnp.stack([
        jnp.concatenate([src0, src1, src2]),              # source (slice2) indices
        jnp.concatenate([dst_ids, dst_ids, dst_ids]),     # target (slice1) indices
    ], axis=0).astype(jnp.int32)

    params = init_params(kp, slice2_genes_num, slice1_genes_num, hidden_dim)

    slice1_X0 = decoder_forward(pi_edge_index, slice1_feature, slice2_X, params,
                                slice1_spots_num, slice2_spots_num)
    slice1_X0 = jax.block_until_ready(slice1_X0)

    assert slice1_X0.shape == (slice1_spots_num, slice1_genes_num)
    assert bool(jnp.all(slice1_X0 >= 0.0))       # ReLU output
    assert bool(jnp.all(jnp.isfinite(slice1_X0)))

    ref = _decoder_reference(pi_edge_index, slice1_feature, slice2_X, params,
                             slice1_spots_num, slice2_spots_num)
    max_err = float(jnp.max(jnp.abs(slice1_X0 - ref)))
    assert max_err < 5e-2, f"max abs error vs reference: {max_err}"
    print("KERNEL_OK")
</pallas_src>

<mosaic_0001>
module attributes {stable_mosaic.version = 11 : i64} {
  func.func @_decoder_kernel(%arg0: i32, %arg1: i32, %arg2: memref<2xi32, #tpu.memory_space<smem>>, %arg3: memref<256x1xf32, #tpu.memory_space<vmem>>, %arg4: memref<1x1024xf32, #tpu.memory_space<vmem>>, %arg5: memref<256x1xf32, #tpu.memory_space<vmem>>, %arg6: memref<1024x384xbf16, #tpu.memory_space<vmem>>, %arg7: memref<256x1024xi8, #tpu.memory_space<vmem>>, %arg8: memref<1x256xf32, #tpu.memory_space<vmem>>, %arg9: memref<256x256xf32, #tpu.memory_space<vmem>>, %arg10: memref<256x384xf32, #tpu.memory_space<vmem>>) attributes {dimension_semantics = [#tpu.dimension_semantics<parallel>, #tpu.dimension_semantics<arbitrary>], iteration_bounds = array<i64: 2, 1>, scalar_prefetch = 1 : i64, scratch_operands = 1 : i64, tpu.core_type = #tpu.core_type<tc>, window_params = [{transform_indices = @transform_0, window_bounds = array<i64: 256, 1>}, {transform_indices = @transform_1, window_bounds = array<i64: 1, 1024>}, {transform_indices = @transform_2, window_bounds = array<i64: 256, 1>}, {transform_indices = @transform_3, window_bounds = array<i64: 1024, 384>}, {transform_indices = @transform_4, window_bounds = array<i64: 256, 1024>}, {pipeline_mode = #tpu.pipeline_mode<synchronous>, transform_indices = @transform_5, window_bounds = array<i64: 1, 256>}, {transform_indices = @transform_6, window_bounds = array<i64: 256, 256>}]} {
    %c0_i32 = arith.constant 0 : i32
    %0 = arith.cmpi eq, %arg1, %c0_i32 : i32
    %1 = arith.extui %0 : i1 to i32
    %c0_i32_0 = arith.constant 0 : i32
    %2 = arith.cmpi ne, %1, %c0_i32_0 : i32
    scf.if %2 {
      %cst = arith.constant 0.000000e+00 : f32
      %13 = vector.broadcast %cst : f32 to vector<256x384xf32>
      %c0 = arith.constant 0 : index
      %c0_5 = arith.constant 0 : index
      %14 = vector.load %arg10[%c0, %c0_5] : memref<256x384xf32, #tpu.memory_space<vmem>>, vector<256x384xf32>
      tpu.vector_store %arg10[%c0, %c0_5], %13 {strides = array<i32>} : memref<256x384xf32, #tpu.memory_space<vmem>>, vector<256x384xf32>,
    } else {
    }
    %c1_i32 = arith.constant 1 : i32
    %3 = arith.muli %arg0, %c1_i32 : i32
    %4 = arith.addi %3, %arg1 : i32
    %5 = arith.index_cast %4 : i32 to index
    %6 = memref.load %arg2[%5] : memref<2xi32, #tpu.memory_space<smem>>
    %c0_i32_1 = arith.constant 0 : i32
    %7 = arith.cmpi ne, %6, %c0_i32_1 : i32
    %8 = arith.extui %7 : i1 to i32
    %c0_i32_2 = arith.constant 0 : i32
    %9 = arith.cmpi ne, %8, %c0_i32_2 : i32
    scf.if %9 {
      %c0 = arith.constant 0 : index
      %c0_5 = arith.constant 0 : index
      %13 = vector.load %arg3[%c0, %c0_5] : memref<256x1xf32, #tpu.memory_space<vmem>>, vector<256x1xf32>
      %c0_6 = arith.constant 0 : index
      %c0_7 = arith.constant 0 : index
      %14 = vector.load %arg4[%c0_6, %c0_7] : memref<1x1024xf32, #tpu.memory_space<vmem>>, vector<1x1024xf32>
      %15 = vector.broadcast %13 : vector<256x1xf32> to vector<256x1024xf32>
      %16 = vector.broadcast %14 : vector<1x1024xf32> to vector<256x1024xf32>
      %17 = arith.addf %15, %16 : vector<256x1024xf32>
      %cst = arith.constant 0.000000e+00 : f32
      %18 = vector.broadcast %cst : f32 to vector<256x1024xf32>
      %19 = arith.cmpf ogt, %17, %18 : vector<256x1024xf32>
      %cst_8 = arith.constant 2.000000e-01 : f32
      %20 = vector.broadcast %cst_8 : f32 to vector<256x1024xf32>
      %21 = arith.mulf %20, %17 : vector<256x1024xf32>
      %22 = arith.select %19, %17, %21 : vector<256x1024xi1>, vector<256x1024xf32>
      %c0_9 = arith.constant 0 : index
      %c0_10 = arith.constant 0 : index
      %23 = vector.load %arg7[%c0_9, %c0_10] : memref<256x1024xi8, #tpu.memory_space<vmem>>, vector<256x1024xi8>
      %24 = arith.sitofp %23 : vector<256x1024xi8> to vector<256x1024xf32>
      %cst_11 = arith.constant 0.000000e+00 : f32
      %25 = vector.broadcast %cst_11 : f32 to vector<256x1024xf32>
      %26 = arith.cmpf ogt, %24, %25 : vector<256x1024xf32>
      %c0_12 = arith.constant 0 : index
      %c0_13 = arith.constant 0 : index
      %27 = vector.load %arg5[%c0_12, %c0_13] : memref<256x1xf32, #tpu.memory_space<vmem>>, vector<256x1xf32>
      %28 = vector.broadcast %27 : vector<256x1xf32> to vector<256x1024xf32>
      %29 = arith.subf %22, %28 : vector<256x1024xf32>
      %30 = math.exp %29 : vector<256x1024xf32>
      %cst_14 = arith.constant 0.000000e+00 : f32
      %31 = vector.broadcast %cst_14 : f32 to vector<256x1024xf32>
      %32 = arith.select %26, %30, %31 : vector<256x1024xi1>, vector<256x1024xf32>
      %c0_15 = arith.constant 0 : index
      %c0_16 = arith.constant 0 : index
      %33 = vector.load %arg10[%c0_15, %c0_16] : memref<256x384xf32, #tpu.memory_space<vmem>>, vector<256x384xf32>
      %34 = arith.truncf %32 : vector<256x1024xf32> to vector<256x1024xbf16>
      %c0_17 = arith.constant 0 : index
      %c0_18 = arith.constant 0 : index
      %35 = vector.load %arg6[%c0_17, %c0_18] : memref<1024x384xbf16, #tpu.memory_space<vmem>>, vector<1024x384xbf16>
      %cst_19 = arith.constant dense<0.000000e+00> : vector<256x384xf32>
      %36 = tpu.matmul %34, %35, %cst_19 {dimension_numbers = #tpu.dot_dimension_numbers<[1], [0], [0], [1], [0, 0, 1, 1], [], []>} : vector<256x1024xbf16>, vector<1024x384xbf16>, vector<256x384xf32> -> vector<256x384xf32>
      %37 = arith.addf %33, %36 : vector<256x384xf32>
      %c0_20 = arith.constant 0 : index
      %c0_21 = arith.constant 0 : index
      %38 = vector.load %arg10[%c0_20, %c0_21] : memref<256x384xf32, #tpu.memory_space<vmem>>, vector<256x384xf32>
      tpu.vector_store %arg10[%c0_20, %c0_21], %37 {strides = array<i32>} : memref<256x384xf32, #tpu.memory_space<vmem>>, vector<256x384xf32>,
    } else {
    }
    %c0_i32_3 = arith.constant 0 : i32
    %10 = arith.cmpi eq, %arg1, %c0_i32_3 : i32
    %11 = arith.extui %10 : i1 to i32
    %c0_i32_4 = arith.constant 0 : i32
    %12 = arith.cmpi ne, %11, %c0_i32_4 : i32
    scf.if %12 {
      %c0 = arith.constant 0 : index
      %c0_5 = arith.constant 0 : index
      %13 = vector.load %arg10[%c0, %c0_5] : memref<256x384xf32, #tpu.memory_space<vmem>>, vector<256x384xf32>
      %14 = vector.extract_strided_slice %13 {offsets = [0, 256], sizes = [256, 1], strides = [1, 1]} : vector<256x384xf32> to vector<256x1xf32>
      %cst = arith.constant 9.99999971E-10 : f32
      %15 = vector.broadcast %cst : f32 to vector<256x1xf32>
      %16 = arith.maximumf %14, %15 : vector<256x1xf32>
      %17 = tpu.reciprocal %16 : vector<256x1xf32> -> vector<256x1xf32>
      %18 = vector.extract_strided_slice %13 {offsets = [0, 0], sizes = [256, 256], strides = [1, 1]} : vector<256x384xf32> to vector<256x256xf32>
      %19 = vector.broadcast %17 : vector<256x1xf32> to vector<256x256xf32>
      %20 = arith.mulf %18, %19 : vector<256x256xf32>
      %c0_6 = arith.constant 0 : index
      %c0_7 = arith.constant 0 : index
      %21 = vector.load %arg8[%c0_6, %c0_7] : memref<1x256xf32, #tpu.memory_space<vmem>>, vector<1x256xf32>
      %22 = vector.broadcast %21 : vector<1x256xf32> to vector<256x256xf32>
      %23 = arith.addf %20, %22 : vector<256x256xf32>
      %cst_8 = arith.constant 0.000000e+00 : f32
      %24 = vector.broadcast %cst_8 : f32 to vector<256x256xf32>
      %25 = arith.maximumf %23, %24 : vector<256x256xf32>
      %c0_9 = arith.constant 0 : index
      %c0_10 = arith.constant 0 : index
      %26 = vector.load %arg9[%c0_9, %c0_10] : memref<256x256xf32, #tpu.memory_space<vmem>>, vector<256x256xf32>
      tpu.vector_store %arg9[%c0_9, %c0_10], %25 {strides = array<i32>} : memref<256x256xf32, #tpu.memory_space<vmem>>, vector<256x256xf32>,
    } else {
    }
    return
  }
  func.func @transform_0(%arg0: i32, %arg1: i32, %arg2: memref<2xi32, #tpu.memory_space<smem>>) -> (i32, i32) {
    %c0_i32 = arith.constant 0 : i32
    %c0_i32_0 = arith.constant 0 : i32
    return %arg0, %c0_i32 : i32, i32
  }
  func.func @transform_1(%arg0: i32, %arg1: i32, %arg2: memref<2xi32, #tpu.memory_space<smem>>) -> (i32, i32) {
    %c0_i32 = arith.constant 0 : i32
    %c0_i32_0 = arith.constant 0 : i32
    return %c0_i32, %arg1 : i32, i32
  }
  func.func @transform_2(%arg0: i32, %arg1: i32, %arg2: memref<2xi32, #tpu.memory_space<smem>>) -> (i32, i32) {
    %c0_i32 = arith.constant 0 : i32
    %c0_i32_0 = arith.constant 0 : i32
    return %arg0, %c0_i32 : i32, i32
  }
  func.func @transform_3(%arg0: i32, %arg1: i32, %arg2: memref<2xi32, #tpu.memory_space<smem>>) -> (i32, i32) {
    %c0_i32 = arith.constant 0 : i32
    %c0_i32_0 = arith.constant 0 : i32
    return %arg1, %c0_i32 : i32, i32
  }
  func.func @transform_4(%arg0: i32, %arg1: i32, %arg2: memref<2xi32, #tpu.memory_space<smem>>) -> (i32, i32) {
    %c0_i32 = arith.constant 0 : i32
    return %arg0, %arg1 : i32, i32
  }
  func.func @transform_5(%arg0: i32, %arg1: i32, %arg2: memref<2xi32, #tpu.memory_space<smem>>) -> (i32, i32) {
    %c0_i32 = arith.constant 0 : i32
    %c0_i32_0 = arith.constant 0 : i32
    %c0_i32_1 = arith.constant 0 : i32
    return %c0_i32, %c0_i32_0 : i32, i32
  }
  func.func @transform_6(%arg0: i32, %arg1: i32, %arg2: memref<2xi32, #tpu.memory_space<smem>>) -> (i32, i32) {
    %c0_i32 = arith.constant 0 : i32
    %c0_i32_0 = arith.constant 0 : i32
    return %arg0, %c0_i32 : i32, i32
  }
}

</mosaic_0001>

<llo_original>
// kernel: tpu_custom_call.1
$region0: #{tpu_custom_call.1}
  #allocation0 [shape = 'u32[]', space=smem, size = 0x4, offset = 0x4, fixed_abs, tag = 'smem constant byte address 0x4 - core index']
  #allocation1 [shape = 'u32[144,128]{1,0:T(1,128)}', space=vmem, size = 0x12000, scoped, tag = 'internal scratch']
  #allocation2 [shape = 'f32[256,384]{1,0:T(8,128)}', space=vmem, size = 0x60000, scoped, tag = 'scratch operand']
  #allocation3 [shape = 's32[1]{0}', space=sflag, size = 0x4, scoped, tag = 'scoped memory for tpu_custom_call.1']
  #allocation4 [shape = 'u8[512]{0}', space=smem, size = 0x200, scoped, tag = 'prefetched SMEM operand 0']
  %s0 = inlined_call_operand.vmem [shape: s32[2], index: 0, kind: input, shape index: {}]
  %s1 = inlined_call_operand.vmem [shape: f32[512,1], index: 1, kind: input, shape index: {}]
  %s2 = inlined_call_operand.vmem [shape: f32[1,1024], index: 2, kind: input, shape index: {}]
  %s3 = inlined_call_operand.vmem [shape: f32[512,1], index: 3, kind: input, shape index: {}]
  %s4 = inlined_call_operand.hbm [shape: bf16[1024,384], index: 4, kind: input, shape index: {}]
  %s5 = inlined_call_operand.vmem [shape: s8[512,1024], index: 5, kind: input, shape index: {}]
  %s6 = inlined_call_operand.vmem [shape: f32[1,256], index: 6, kind: input, shape index: {}]
  %s7 = inlined_call_operand.hbm [shape: f32[512,256], index: 7, kind: output, shape index: {}]
  %s8 = sld [smem:[#allocation0]]
  $region73: #{tpu_custom_call.1} parent=0
    _
  %s10 = ssub.s32 1, %s8
  %s11 = scalar_select 0, %s10, %s8
  %s12 = sshll.u32 %s0, 4
  %s13 = int_to_ptr.vmem [resolvable:$true] %s12
  %15 = dma.vmem_to_smem %s13, 16, [#allocation4], [#allocation3]
  %16 = dma.done [#allocation3], 16
  %17 = sfence
  $region1: #{tpu_custom_call.1} parent=0
    #allocation5 [shape = 'u8[786432]{0}', space=vmem, size = 0xc0000, scoped, tag = 'input window, operand 4, single buffered']
    #allocation6 [shape = 's32[2]{0}', space=sflag, size = 0x8, scoped, tag = 'scoped memory for tpu_custom_call.1']
    #allocation7 [shape = 's32[2]{0}', space=sflag, size = 0x8, scoped, tag = 'scoped memory for tpu_custom_call.1']
    #allocation8 [shape = 'u8[524288]{0}', space=vmem, size = 0x80000, scoped, tag = 'output window, operand 0']
    %18 = vsyncpa [#allocation6], 0
    %19 = vsyncpa [#allocation7], 0
    %s20 = scalar_lea.sflag [#allocation7], 1
    %21 = vsyncpa %s20, 0
    loop: start=0, step=1, limit=4
    $region2: #{tpu_custom_call.1} parent=1 // loop_pre_header
      _
    $region3: #{tpu_custom_call.1} parent=1 // loop_header
      %s23 = sphi 0, %s27
      %p24 = scmp.ge.s32.totalorder %s23, 4
      %s30 = sphi 0, %s42
      %s31 = sphi 0, %s38
      %s32 = sphi 0, %s30
      %s33 = sphi 0, %s31
      %s34 = sphi 0, %s32
      %s35 = sphi 0, %s33
      %s45 = sphi 0, %s47
      %s48 = sphi 0, %s45
      %s49 = sphi 0, %s48
      %s65 = sphi 0, %s49
      %s71 = sphi 0, %s73
      %s74 = sphi 0, %s71
      %s75 = sphi 0, %s74
      %s91 = sphi 0, %s75
      %s97 = sphi 0, %s99
      %s100 = sphi 0, %s97
      %s101 = sphi 0, %s100
      %s117 = sphi 0, %s101
      %s123 = sphi 0, %s125
      %s126 = sphi 0, %s123
      %s127 = sphi 0, %s126
      %s143 = sphi 0, %s127
      %s151 = sphi 0, %s153
      %s154 = sphi 0, %s151
      %s155 = sphi 0, %s154
      %s171 = sphi 0, %s155
      %s175 = sphi 0, %s175
      %s177 = sphi 0, %s175
      %s178 = sphi 0, %s177
      %s192 = sphi 0, %s178
      %s198 = sphi 0, %s200
      %s201 = sphi 0, %s198
      %s202 = sphi 0, %s201
      %s218 = sphi 0, %s202
    $region4: #{tpu_custom_call.1} parent=1 // loop_header_branch
      %26 = sbr.rel (%p24) target = $region8
    $region5: #{tpu_custom_call.1} parent=1 // loop_body
      %s28 = ssub.s32 %s23, 1
      %s29 = ssub.s32 %s23, 2
      %s36 = sadd.s32 1, %s31
      %p37 = scmp.ge.s32.totalorder %s36, 1
      %s38 = scalar_select %p37, 0, %s36
      %s39 = sadd.s32 1, %s30
      %s40 = scalar_select %p37, %s39, %s30
      %p41 = scmp.ge.s32.totalorder %s40, 2
      %s42 = scalar_select %p41, 0, %s40
      %s43 = ssub.s32 %s30, %s42
      %p44 = scmp.eq.s32.totalorder %s43, 0
      %s46 = sadd.s32 %s45, 1
      %s47 = scalar_select %p44, %s45, %s46
      %p50 = pneg %p44
      %p51 = scmp.eq.s32.totalorder %s23, 1
      %p52 = por %p50, %p51
      %p53 = scmp.ne.s32.totalorder %s45, %s48
      %p54 = scmp.eq.s32.totalorder %s23, 0
      %p55 = por %p53, %p54
      %p56 = scmp.ne.s32.totalorder %s45, %s48
      %p57 = scmp.eq.s32.totalorder %s28, 1
      %p58 = por %p56, %p57
      %p59 = scmp.ne.s32.totalorder %s48, %s49
      %p60 = scmp.eq.s32.totalorder %s28, 0
      %p61 = por %p59, %p60
      %p62 = scmp.ne.s32.totalorder %s48, %s49
      %p63 = scmp.eq.s32.totalorder %s29, 1
      %p64 = por %p62, %p63
      %p66 = scmp.ne.s32.totalorder %s49, %s65
      %p67 = scmp.eq.s32.totalorder %s29, 0
      %p68 = por %p66, %p67
      %s69 = ssub.s32 %s31, %s38
      %p70 = scmp.eq.s32.totalorder %s69, 0
      %s72 = sadd.s32 %s71, 1
      %s73 = scalar_select %p70, %s71, %s72
      %p76 = pneg %p70
      %p77 = scmp.eq.s32.totalorder %s23, 1
      %p78 = por %p76, %p77
      %p79 = scmp.ne.s32.totalorder %s71, %s74
      %p80 = scmp.eq.s32.totalorder %s23, 0
      %p81 = por %p79, %p80
      %p82 = scmp.ne.s32.totalorder %s71, %s74
      %p83 = scmp.eq.s32.totalorder %s28, 1
      %p84 = por %p82, %p83
      %p85 = scmp.ne.s32.totalorder %s74, %s75
      %p86 = scmp.eq.s32.totalorder %s28, 0
      %p87 = por %p85, %p86
      %p88 = scmp.ne.s32.totalorder %s74, %s75
      %p89 = scmp.eq.s32.totalorder %s29, 1
      %p90 = por %p88, %p89
      %p92 = scmp.ne.s32.totalorder %s75, %s91
      %p93 = scmp.eq.s32.totalorder %s29, 0
      %p94 = por %p92, %p93
      %s95 = ssub.s32 %s30, %s42
      %p96 = scmp.eq.s32.totalorder %s95, 0
      %s98 = sadd.s32 %s97, 1
      %s99 = scalar_select %p96, %s97, %s98
      %p102 = pneg %p96
      %p103 = scmp.eq.s32.totalorder %s23, 1
      %p104 = por %p102, %p103
      %p105 = scmp.ne.s32.totalorder %s97, %s100
      %p106 = scmp.eq.s32.totalorder %s23, 0
      %p107 = por %p105, %p106
      %p108 = scmp.ne.s32.totalorder %s97, %s100
      %p109 = scmp.eq.s32.totalorder %s28, 1
      %p110 = por %p108, %p109
      %p111 = scmp.ne.s32.totalorder %s100, %s101
      %p112 = scmp.eq.s32.totalorder %s28, 0
      %p113 = por %p111, %p112
      %p114 = scmp.ne.s32.totalorder %s100, %s101
      %p115 = scmp.eq.s32.totalorder %s29, 1
      %p116 = por %p114, %p115
      %p118 = scmp.ne.s32.totalorder %s101, %s117
      %p119 = scmp.eq.s32.totalorder %s29, 0
      %p120 = por %p118, %p119
      %s121 = ssub.s32 %s31, %s38
      %p122 = scmp.eq.s32.totalorder %s121, 0
      %s124 = sadd.s32 %s123, 1
      %s125 = scalar_select %p122, %s123, %s124
      %p128 = pneg %p122
      %p129 = scmp.eq.s32.totalorder %s23, 1
      %p130 = por %p128, %p129
      %p131 = scmp.ne.s32.totalorder %s123, %s126
      %p132 = scmp.eq.s32.totalorder %s23, 0
      %p133 = por %p131, %p132
      %p134 = scmp.ne.s32.totalorder %s123, %s126
      %p135 = scmp.eq.s32.totalorder %s28, 1
      %p136 = por %p134, %p135
      %p137 = scmp.ne.s32.totalorder %s126, %s127
      %p138 = scmp.eq.s32.totalorder %s28, 0
      %p139 = por %p137, %p138
      %p140 = scmp.ne.s32.totalorder %s126, %s127
      %p141 = scmp.eq.s32.totalorder %s29, 1
      %p142 = por %p140, %p141
      %p144 = scmp.ne.s32.totalorder %s127, %s143
      %p145 = scmp.eq.s32.totalorder %s29, 0
      %p146 = por %p144, %p145
      %s147 = ssub.s32 %s30, %s42
      %s148 = ssub.s32 %s31, %s38
      %s149 = sor.u32 %s147, %s148
      %p150 = scmp.eq.s32.totalorder %s149, 0
      %s152 = sadd.s32 %s151, 1
      %s153 = scalar_select %p150, %s151, %s152
      %p156 = pneg %p150
      %p157 = scmp.eq.s32.totalorder %s23, 1
      %p158 = por %p156, %p157
      %p159 = scmp.ne.s32.totalorder %s151, %s154
      %p160 = scmp.eq.s32.totalorder %s23, 0
      %p161 = por %p159, %p160
      %p162 = scmp.ne.s32.totalorder %s151, %s154
      %p163 = scmp.eq.s32.totalorder %s28, 1
      %p164 = por %p162, %p163
      %p165 = scmp.ne.s32.totalorder %s154, %s155
      %p166 = scmp.eq.s32.totalorder %s28, 0
      %p167 = por %p165, %p166
      %p168 = scmp.ne.s32.totalorder %s154, %s155
      %p169 = scmp.eq.s32.totalorder %s29, 1
      %p170 = por %p168, %p169
      %p172 = scmp.ne.s32.totalorder %s155, %s171
      %p173 = scmp.eq.s32.totalorder %s29, 0
      %p174 = por %p172, %p173
      %s176 = sadd.s32 %s175, 1
      %p179 = scmp.eq.s32.totalorder %s23, 1
      %p180 = scmp.ne.s32.totalorder %s175, %s177
      %p181 = scmp.eq.s32.totalorder %s23, 0
      %p182 = por %p180, %p181
      %p183 = scmp.ne.s32.totalorder %s175, %s177
      %p184 = scmp.eq.s32.totalorder %s28, 1
      %p185 = por %p183, %p184
      %p186 = scmp.ne.s32.totalorder %s177, %s178
      %p187 = scmp.eq.s32.totalorder %s28, 0
      %p188 = por %p186, %p187
      %p189 = scmp.ne.s32.totalorder %s177, %s178
      %p190 = scmp.eq.s32.totalorder %s29, 1
      %p191 = por %p189, %p190
      %p193 = scmp.ne.s32.totalorder %s178, %s192
      %p194 = scmp.eq.s32.totalorder %s29, 0
      %p195 = por %p193, %p194
      %s196 = ssub.s32 %s30, %s42
      %p197 = scmp.eq.s32.totalorder %s196, 0
      %s199 = sadd.s32 %s198, 1
      %s200 = scalar_select %p197, %s198, %s199
      %p203 = pneg %p197
      %p204 = scmp.eq.s32.totalorder %s23, 1
      %p205 = por %p203, %p204
      %p206 = scmp.ne.s32.totalorder %s198, %s201
      %p207 = scmp.eq.s32.totalorder %s23, 0
      %p208 = por %p206, %p207
      %p209 = scmp.ne.s32.totalorder %s198, %s201
      %p210 = scmp.eq.s32.totalorder %s28, 1
      %p211 = por %p209, %p210
      %p212 = scmp.ne.s32.totalorder %s201, %s202
      %p213 = scmp.eq.s32.totalorder %s28, 0
      %p214 = por %p212, %p213
      %p215 = scmp.ne.s32.totalorder %s201, %s202
      %p216 = scmp.eq.s32.totalorder %s29, 1
      %p217 = por %p215, %p216
      %p219 = scmp.ne.s32.totalorder %s202, %s218
      %p220 = scmp.eq.s32.totalorder %s29, 0
      %p221 = por %p219, %p220
      %p222 = scmp.le.s32.totalorder 1, %s23
      %p223 = scmp.lt.s32.totalorder %s23, 3
      %p224 = pnand %p222, %p223
      %p225 = pneg %p224
      // Predicated region
      $region9: #{tpu_custom_call.1} parent=5 // pred_check
        _
      $region10: #{tpu_custom_call.1} parent=5 // pred_check_branch
        %227 = sbr.rel (%p224) target = $region12
      $region11: #{tpu_custom_call.1} parent=5 // pred_region
        %s228 = ssub.s32 %s23, 1
        // Predicated region
        $region13: #{tpu_custom_call.1} parent=11 // pred_check
          %p229 = pneg %p87
        $region14: #{tpu_custom_call.1} parent=11 // pred_check_branch
          %231 = sbr.rel (%p229) target = $region16
        $region15: #{tpu_custom_call.1} parent=11 // pred_region
          %s232 = smul.u32 8, %s33
          %p233 = scmp.lt.s32.totalorder %s232, 7
          %s234 = scalar_select %p233, %s232, 7
          %s235 = scalar_lea.vmem %s2, %s234
          %s236 = smul.u32 8, %s33
        $region16: #{tpu_custom_call.1} parent=11 // pred_fallthru
          _
        // Predicated region
        $region17: #{tpu_custom_call.1} parent=11 // pred_check
          %p237 = pneg %p139
        $region18: #{tpu_custom_call.1} parent=11 // pred_check_branch
          %239 = sbr.rel (%p237) target = $region20
        $region19: #{tpu_custom_call.1} parent=11 // pred_region
          %s240 = smul.u32 128, %s33
          %s242 = ssub.s32 24576, 24576
          %243 = vsyncadd [#allocation6], %s242
          %s244 = smul.addr %s240, 3
          %s245 = smul.addr %s244, 64
          %s246 = scalar_lea.hbm %s4, %s245
          %s247 = sshll.u32 [#allocation5], 4
          %s248 = int_to_ptr.vmem [resolvable:$true] %s247
          %253 = dma.hbm_to_vmem [thread:$0]  %s246, 24576, %s248, [#allocation6], 192, 192, 12
        $region20: #{tpu_custom_call.1} parent=11 // pred_fallthru
          _
        // Predicated region
        $region21: #{tpu_custom_call.1} parent=11 // pred_check
          %p254 = pneg %p188
        $region22: #{tpu_custom_call.1} parent=11 // pred_check_branch
          %256 = sbr.rel (%p254) target = $region24
        $region23: #{tpu_custom_call.1} parent=11 // pred_region
          _
        $region24: #{tpu_custom_call.1} parent=11 // pred_fallthru
          _
      $region12: #{tpu_custom_call.1} parent=5 // pred_fallthru
        _
      %p257 = scmp.lt.s32.totalorder %s23, 2
      // Predicated region
      $region25: #{tpu_custom_call.1} parent=5 // pred_check
        %p258 = pneg %p257
      $region26: #{tpu_custom_call.1} parent=5 // pred_check_branch
        %260 = sbr.rel (%p258) target = $region28
      $region27: #{tpu_custom_call.1} parent=5 // pred_region
        // Predicated region
        $region29: #{tpu_custom_call.1} parent=27 // pred_check
          %p261 = pneg %p55
        $region30: #{tpu_custom_call.1} parent=27 // pred_check_branch
          %263 = sbr.rel (%p261) target = $region32
        $region31: #{tpu_custom_call.1} parent=27 // pred_region
          %s264 = smul.u32 32, %s30
          %p265 = scmp.lt.s32.totalorder %s264, 63
          %s266 = scalar_select %p265, %s264, 63
          %s267 = smul.addr %s266, 8
          %s268 = scalar_lea.vmem %s1, %s267
          %s269 = smul.u32 32, %s30
        $region32: #{tpu_custom_call.1} parent=27 // pred_fallthru
          _
        // Predicated region
        $region33: #{tpu_custom_call.1} parent=27 // pred_check
          %p270 = pneg %p107
        $region34: #{tpu_custom_call.1} parent=27 // pred_check_branch
          %272 = sbr.rel (%p270) target = $region36
        $region35: #{tpu_custom_call.1} parent=27 // pred_region
          %s273 = smul.u32 32, %s30
          %p274 = scmp.lt.s32.totalorder %s273, 63
          %s275 = scalar_select %p274, %s273, 63
          %s276 = smul.addr %s275, 8
          %s277 = scalar_lea.vmem %s3, %s276
          %s278 = smul.u32 32, %s30
        $region36: #{tpu_custom_call.1} parent=27 // pred_fallthru
          _
        // Predicated region
        $region37: #{tpu_custom_call.1} parent=27 // pred_check
          %p279 = pneg %p161
        $region38: #{tpu_custom_call.1} parent=27 // pred_check_branch
          %281 = sbr.rel (%p279) target = $region40
        $region39: #{tpu_custom_call.1} parent=27 // pred_region
          %s282 = smul.u32 8, %s30
          %s283 = smul.u32 8, %s31
          %p284 = scmp.lt.s32.totalorder %s282, 15
          %s285 = scalar_select %p284, %s282, 15
          %p286 = scmp.lt.s32.totalorder %s283, 7
          %s287 = scalar_select %p286, %s283, 7
          %s288 = smul.addr %s285, 8
          %s289 = sadd.s32 %s287, %s288
          %s290 = smul.addr %s289, 8
          %s291 = scalar_lea.vmem %s5, %s290
          %s292 = smul.u32 8, %s30
          %s293 = smul.u32 8, %s31
        $region40: #{tpu_custom_call.1} parent=27 // pred_fallthru
          _
      $region28: #{tpu_custom_call.1} parent=5 // pred_fallthru
        _
      %p294 = scmp.le.s32.totalorder 1, %s23
      %p295 = scmp.lt.s32.totalorder %s23, 3
      %p296 = pnand %p294, %p295
      %p297 = pneg %p296
      // Predicated region
      $region41: #{tpu_custom_call.1} parent=5 // pred_check
        _
      $region42: #{tpu_custom_call.1} parent=5 // pred_check_branch
        %299 = sbr.rel (%p296) target = $region44
      $region43: #{tpu_custom_call.1} parent=5 // pred_region
        %s300 = ssub.s32 %s23, 1
        // Predicated region
        $region45: #{tpu_custom_call.1} parent=43 // pred_check
          %p301 = pneg %p139
        $region46: #{tpu_custom_call.1} parent=43 // pred_check_branch
          %303 = sbr.rel (%p301) target = $region48
        $region47: #{tpu_custom_call.1} parent=43 // pred_region
          %304 = dma.done [#allocation6], 24576
        $region48: #{tpu_custom_call.1} parent=43 // pred_fallthru
          _
        %s305 = smul.u32 32, %s32
        %p306 = scmp.lt.s32.totalorder %s305, 63
        %s307 = scalar_select %p306, %s305, 63
        %s308 = smul.addr %s307, 8
        %s309 = scalar_lea.vmem %s1, %s308
        %p310 = pneg %p61
        %p311 = pneg %p58
        %s312 = smul.u32 8, %s33
        %p313 = scmp.lt.s32.totalorder %s312, 7
        %s314 = scalar_select %p313, %s312, 7
        %s315 = scalar_lea.vmem %s2, %s314
        %p316 = pneg %p87
        %p317 = pneg %p84
        %s318 = smul.u32 32, %s32
        %p319 = scmp.lt.s32.totalorder %s318, 63
        %s320 = scalar_select %p319, %s318, 63
        %s321 = smul.addr %s320, 8
        %s322 = scalar_lea.vmem %s3, %s321
        %p323 = pneg %p113
        %p324 = pneg %p110
        %p325 = pneg %p139
        %p326 = pneg %p136
        %s327 = smul.u32 8, %s32
        %s328 = smul.u32 8, %s33
        %p329 = scmp.lt.s32.totalorder %s327, 15
        %s330 = scalar_select %p329, %s327, 15
        %p331 = scmp.lt.s32.totalorder %s328, 7
        %s332 = scalar_select %p331, %s328, 7
        %s333 = smul.addr %s330, 8
        %s334 = sadd.s32 %s332, %s333
        %s335 = smul.addr %s334, 8
        %s336 = scalar_lea.vmem %s5, %s335
        %p337 = pneg %p167
        %p338 = pneg %p164
        %p339 = pneg %p188
        %p340 = pneg %p185
        %p341 = pneg %p214
        %p342 = pneg %p211
        %s343 = sand.u32 %s201, 1
        %s344 = scalar_lea.sflag [#allocation7], %s343
        %s345 = sand.u32 %s201, 1
        %s346 = smul.addr %s345, 512
        %s347 = scalar_lea.vmem [#allocation8], %s346
        %s348 = smul.u32 32, %s32
        %p349 = scmp.lt.s32.totalorder %s348, 63
        %s350 = scalar_select %p349, %s348, 63
        %s351 = smul.addr %s350, 8
        %s352 = scalar_lea.vmem %s1, %s351
        %s353 = smul.u32 32, %s32
        %s354 = smul.u32 8, %s33
        %p355 = scmp.lt.s32.totalorder %s354, 7
        %s356 = scalar_select %p355, %s354, 7
        %s357 = scalar_lea.vmem %s2, %s356
        %s358 = smul.u32 8, %s33
        %s359 = smul.u32 32, %s32
        %p360 = scmp.lt.s32.totalorder %s359, 63
        %s361 = scalar_select %p360, %s359, 63
        %s362 = smul.addr %s361, 8
        %s363 = scalar_lea.vmem %s3, %s362
        %s364 = smul.u32 32, %s32
        %s365 = smul.u32 128, %s33
        %s366 = smul.u32 8, %s32
        %s367 = smul.u32 8, %s33
        %p368 = scmp.lt.s32.totalorder %s366, 15
        %s369 = scalar_select %p368, %s366, 15
        %p370 = scmp.lt.s32.totalorder %s367, 7
        %s371 = scalar_select %p370, %s367, 7
        %s372 = smul.addr %s369, 8
        %s373 = sadd.s32 %s371, %s372
        %s374 = smul.addr %s373, 8
        %s375 = scalar_lea.vmem %s5, %s374
        %s376 = smul.u32 8, %s32
        %s377 = smul.u32 8, %s33
        %s378 = smul.u32 32, %s32
        %p380 = scmp.eq.s32.totalorder %s33, 0
        // Predicated region
        $region49: #{tpu_custom_call.1} parent=43 // pred_check
          %p381 = pneg %p380
        $region50: #{tpu_custom_call.1} parent=43 // pred_check_branch
          %383 = sbr.rel (%p381) target = $region52
        $region51: #{tpu_custom_call.1} parent=43 // pred_region
          %384 = vst [vmem:[#allocation2] sm:$0xff] 0.0
          %385 = vst [vmem:[#allocation2 + $0x8] sm:$0xff] 0.0
          %386 = vst [vmem:[#allocation2 + $0x10] sm:$0xff] 0.0
          %387 = vst [vmem:[#allocation2 + $0x18] sm:$0xff] 0.0
          %388 = vst [vmem:[#allocation2 + $0x20] sm:$0xff] 0.0
          %389 = vst [vmem:[#allocation2 + $0x28] sm:$0xff] 0.0
          %390 = vst [vmem:[#allocation2 + $0x30] sm:$0xff] 0.0
          %391 = vst [vmem:[#allocation2 + $0x38] sm:$0xff] 0.0
          %392 = vst [vmem:[#allocation2 + $0x40] sm:$0xff] 0.0
          %393 = vst [vmem:[#allocation2 + $0x48] sm:$0xff] 0.0
          %394 = vst [vmem:[#allocation2 + $0x50] sm:$0xff] 0.0
          %395 = vst [vmem:[#allocation2 + $0x58] sm:$0xff] 0.0
          %396 = vst [vmem:[#allocation2 + $0x60] sm:$0xff] 0.0
          %397 = vst [vmem:[#allocation2 + $0x68] sm:$0xff] 0.0
          %398 = vst [vmem:[#allocation2 + $0x70] sm:$0xff] 0.0
          %399 = vst [vmem:[#allocation2 + $0x78] sm:$0xff] 0.0
          %400 = vst [vmem:[#allocation2 + $0x80] sm:$0xff] 0.0
          %401 = vst [vmem:[#allocation2 + $0x88] sm:$0xff] 0.0
          %402 = vst [vmem:[#allocation2 + $0x90] sm:$0xff] 0.0
          %403 = vst [vmem:[#allocation2 + $0x98] sm:$0xff] 0.0
          %404 = vst [vmem:[#allocation2 + $0xa0] sm:$0xff] 0.0
          %405 = vst [vmem:[#allocation2 + $0xa8] sm:$0xff] 0.0
          %406 = vst [vmem:[#allocation2 + $0xb0] sm:$0xff] 0.0
          %407 = vst [vmem:[#allocation2 + $0xb8] sm:$0xff] 0.0
          %408 = vst [vmem:[#allocation2 + $0xc0] sm:$0xff] 0.0
          %409 = vst [vmem:[#allocation2 + $0xc8] sm:$0xff] 0.0
          %410 = vst [vmem:[#allocation2 + $0xd0] sm:$0xff] 0.0
          %411 = vst [vmem:[#allocation2 + $0xd8] sm:$0xff] 0.0
          %412 = vst [vmem:[#allocation2 + $0xe0] sm:$0xff] 0.0
          %413 = vst [vmem:[#allocation2 + $0xe8] sm:$0xff] 0.0
          %414 = vst [vmem:[#allocation2 + $0xf0] sm:$0xff] 0.0
          %415 = vst [vmem:[#allocation2 + $0xf8] sm:$0xff] 0.0
          %416 = vst [vmem:[#allocation2 + $0x100] sm:$0xff] 0.0
          %417 = vst [vmem:[#allocation2 + $0x108] sm:$0xff] 0.0
          %418 = vst [vmem:[#allocation2 + $0x110] sm:$0xff] 0.0
          %419 = vst [vmem:[#allocation2 + $0x118] sm:$0xff] 0.0
          %420 = vst [vmem:[#allocation2 + $0x120] sm:$0xff] 0.0
          %421 = vst [vmem:[#allocation2 + $0x128] sm:$0xff] 0.0
          %422 = vst [vmem:[#allocation2 + $0x130] sm:$0xff] 0.0
          %423 = vst [vmem:[#allocation2 + $0x138] sm:$0xff] 0.0
          %424 = vst [vmem:[#allocation2 + $0x140] sm:$0xff] 0.0
          %425 = vst [vmem:[#allocation2 + $0x148] sm:$0xff] 0.0
          %426 = vst [vmem:[#allocation2 + $0x150] sm:$0xff] 0.0
          %427 = vst [vmem:[#allocation2 + $0x158] sm:$0xff] 0.0
          %428 = vst [vmem:[#allocation2 + $0x160] sm:$0xff] 0.0
          %429 = vst [vmem:[#allocation2 + $0x168] sm:$0xff] 0.0
          %430 = vst [vmem:[#allocation2 + $0x170] sm:$0xff] 0.0
          %431 = vst [vmem:[#allocation2 + $0x178] sm:$0xff] 0.0
          %432 = vst [vmem:[#allocation2 + $0x180] sm:$0xff] 0.0
          %433 = vst [vmem:[#allocation2 + $0x188] sm:$0xff] 0.0
          %434 = vst [vmem:[#allocation2 + $0x190] sm:$0xff] 0.0
          %435 = vst [vmem:[#allocation2 + $0x198] sm:$0xff] 0.0
          %436 = vst [vmem:[#allocation2 + $0x1a0] sm:$0xff] 0.0
          %437 = vst [vmem:[#allocation2 + $0x1a8] sm:$0xff] 0.0
          %438 = vst [vmem:[#allocation2 + $0x1b0] sm:$0xff] 0.0
          %439 = vst [vmem:[#allocation2 + $0x1b8] sm:$0xff] 0.0
          %440 = vst [vmem:[#allocation2 + $0x1c0] sm:$0xff] 0.0
          %441 = vst [vmem:[#allocation2 + $0x1c8] sm:$0xff] 0.0
          %442 = vst [vmem:[#allocation2 + $0x1d0] sm:$0xff] 0.0
          %443 = vst [vmem:[#allocation2 + $0x1d8] sm:$0xff] 0.0
          %444 = vst [vmem:[#allocation2 + $0x1e0] sm:$0xff] 0.0
          %445 = vst [vmem:[#allocation2 + $0x1e8] sm:$0xff] 0.0
          %446 = vst [vmem:[#allocation2 + $0x1f0] sm:$0xff] 0.0
          %447 = vst [vmem:[#allocation2 + $0x1f8] sm:$0xff] 0.0
          %448 = vst [vmem:[#allocation2 + $0x200] sm:$0xff] 0.0
          %449 = vst [vmem:[#allocation2 + $0x208] sm:$0xff] 0.0
          %450 = vst [vmem:[#allocation2 + $0x210] sm:$0xff] 0.0
          %451 = vst [vmem:[#allocation2 + $0x218] sm:$0xff] 0.0
          %452 = vst [vmem:[#allocation2 + $0x220] sm:$0xff] 0.0
          %453 = vst [vmem:[#allocation2 + $0x228] sm:$0xff] 0.0
          %454 = vst [vmem:[#allocation2 + $0x230] sm:$0xff] 0.0
          %455 = vst [vmem:[#allocation2 + $0x238] sm:$0xff] 0.0
          %456 = vst [vmem:[#allocation2 + $0x240] sm:$0xff] 0.0
          %457 = vst [vmem:[#allocation2 + $0x248] sm:$0xff] 0.0
          %458 = vst [vmem:[#allocation2 + $0x250] sm:$0xff] 0.0
          %459 = vst [vmem:[#allocation2 + $0x258] sm:$0xff] 0.0
          %460 = vst [vmem:[#allocation2 + $0x260] sm:$0xff] 0.0
          %461 = vst [vmem:[#allocation2 + $0x268] sm:$0xff] 0.0
          %462 = vst [vmem:[#allocation2 + $0x270] sm:$0xff] 0.0
          %463 = vst [vmem:[#allocation2 + $0x278] sm:$0xff] 0.0
          %464 = vst [vmem:[#allocation2 + $0x280] sm:$0xff] 0.0
          %465 = vst [vmem:[#allocation2 + $0x288] sm:$0xff] 0.0
          %466 = vst [vmem:[#allocation2 + $0x290] sm:$0xff] 0.0
          %467 = vst [vmem:[#allocation2 + $0x298] sm:$0xff] 0.0
          %468 = vst [vmem:[#allocation2 + $0x2a0] sm:$0xff] 0.0
          %469 = vst [vmem:[#allocation2 + $0x2a8] sm:$0xff] 0.0
          %470 = vst [vmem:[#allocation2 + $0x2b0] sm:$0xff] 0.0
          %471 = vst [vmem:[#allocation2 + $0x2b8] sm:$0xff] 0.0
          %472 = vst [vmem:[#allocation2 + $0x2c0] sm:$0xff] 0.0
          %473 = vst [vmem:[#allocation2 + $0x2c8] sm:$0xff] 0.0
          %474 = vst [vmem:[#allocation2 + $0x2d0] sm:$0xff] 0.0
          %475 = vst [vmem:[#allocation2 + $0x2d8] sm:$0xff] 0.0
          %476 = vst [vmem:[#allocation2 + $0x2e0] sm:$0xff] 0.0
          %477 = vst [vmem:[#allocation2 + $0x2e8] sm:$0xff] 0.0
          %478 = vst [vmem:[#allocation2 + $0x2f0] sm:$0xff] 0.0
          %479 = vst [vmem:[#allocation2 + $0x2f8] sm:$0xff] 0.0
        $region52: #{tpu_custom_call.1} parent=43 // pred_fallthru
          _
        %s480 = sadd.s32 %s32, %s33
        %s481 = sld [smem:[#allocation4 + %s480]]
        %p482 = scmp.ne.s32.totalorder %s481, 0
        // Predicated region
        $region53: #{tpu_custom_call.1} parent=43 // pred_check
          %p483 = pneg %p482
        $region54: #{tpu_custom_call.1} parent=43 // pred_check_branch
          %485 = sbr.rel (%p483) target = $region56
        $region55: #{tpu_custom_call.1} parent=43 // pred_region
          %v486 = vld [vmem:[%s352] sm:$0xff]
          %v487 = vld [vmem:[%s352 + $0x8] sm:$0xff]
          %v488 = vld [vmem:[%s352 + $0x10] sm:$0xff]
          %v489 = vld [vmem:[%s352 + $0x18] sm:$0xff]
          %v490 = vld [vmem:[%s352 + $0x20] sm:$0xff]
          %v491 = vld [vmem:[%s352 + $0x28] sm:$0xff]
          %v492 = vld [vmem:[%s352 + $0x30] sm:$0xff]
          %v493 = vld [vmem:[%s352 + $0x38] sm:$0xff]
          %v494 = vld [vmem:[%s352 + $0x40] sm:$0xff]
          %v495 = vld [vmem:[%s352 + $0x48] sm:$0xff]
          %v496 = vld [vmem:[%s352 + $0x50] sm:$0xff]
          %v497 = vld [vmem:[%s352 + $0x58] sm:$0xff]
          %v498 = vld [vmem:[%s352 + $0x60] sm:$0xff]
          %v499 = vld [vmem:[%s352 + $0x68] sm:$0xff]
          %v500 = vld [vmem:[%s352 + $0x70] sm:$0xff]
          %v501 = vld [vmem:[%s352 + $0x78] sm:$0xff]
          %v502 = vld [vmem:[%s352 + $0x80] sm:$0xff]
          %v503 = vld [vmem:[%s352 + $0x88] sm:$0xff]
          %v504 = vld [vmem:[%s352 + $0x90] sm:$0xff]
          %v505 = vld [vmem:[%s352 + $0x98] sm:$0xff]
          %v506 = vld [vmem:[%s352 + $0xa0] sm:$0xff]
          %v507 = vld [vmem:[%s352 + $0xa8] sm:$0xff]
          %v508 = vld [vmem:[%s352 + $0xb0] sm:$0xff]
          %v509 = vld [vmem:[%s352 + $0xb8] sm:$0xff]
          %v510 = vld [vmem:[%s352 + $0xc0] sm:$0xff]
          %v511 = vld [vmem:[%s352 + $0xc8] sm:$0xff]
          %v512 = vld [vmem:[%s352 + $0xd0] sm:$0xff]
          %v513 = vld [vmem:[%s352 + $0xd8] sm:$0xff]
          %v514 = vld [vmem:[%s352 + $0xe0] sm:$0xff]
          %v515 = vld [vmem:[%s352 + $0xe8] sm:$0xff]
          %v516 = vld [vmem:[%s352 + $0xf0] sm:$0xff]
          %v517 = vld [vmem:[%s352 + $0xf8] sm:$0xff]
          %v518 = vld [vmem:[%s357] sm:$0xff]
          %520 = vset.pattern.permute.xlu0 0
          %521 = vperm.xlu0 %520, %v486
          %v522 = vpop.permute.xlu0 %521
          %525 = vset.pattern.permute.xlu0 0
          %526 = vperm.xlu0 %525, %v487
          %v527 = vpop.permute.xlu0 %526
          %530 = vset.pattern.permute.xlu0 0
          %531 = vperm.xlu0 %530, %v488
          %v532 = vpop.permute.xlu0 %531
          %535 = vset.pattern.permute.xlu0 0
          %536 = vperm.xlu0 %535, %v489
          %v537 = vpop.permute.xlu0 %536
          %540 = vset.pattern.permute.xlu0 0
          %541 = vperm.xlu0 %540, %v490
          %v542 = vpop.permute.xlu0 %541
          %545 = vset.pattern.permute.xlu0 0
          %546 = vperm.xlu0 %545, %v491
          %v547 = vpop.permute.xlu0 %546
          %550 = vset.pattern.permute.xlu0 0
          %551 = vperm.xlu0 %550, %v492
          %v552 = vpop.permute.xlu0 %551
          %555 = vset.pattern.permute.xlu0 0
          %556 = vperm.xlu0 %555, %v493
          %v557 = vpop.permute.xlu0 %556
          %560 = vset.pattern.permute.xlu0 0
          %561 = vperm.xlu0 %560, %v494
          %v562 = vpop.permute.xlu0 %561
          %565 = vset.pattern.permute.xlu0 0
          %566 = vperm.xlu0 %565, %v495
          %v567 = vpop.permute.xlu0 %566
          %570 = vset.pattern.permute.xlu0 0
          %571 = vperm.xlu0 %570, %v496
          %v572 = vpop.permute.xlu0 %571
          %575 = vset.pattern.permute.xlu0 0
          %576 = vperm.xlu0 %575, %v497
          %v577 = vpop.permute.xlu0 %576
          %580 = vset.pattern.permute.xlu0 0
          %581 = vperm.xlu0 %580, %v498
          %v582 = vpop.permute.xlu0 %581
          %585 = vset.pattern.permute.xlu0 0
          %586 = vperm.xlu0 %585, %v499
          %v587 = vpop.permute.xlu0 %586
          %590 = vset.pattern.permute.xlu0 0
          %591 = vperm.xlu0 %590, %v500
          %v592 = vpop.permute.xlu0 %591
          %595 = vset.pattern.permute.xlu0 0
          %596 = vperm.xlu0 %595, %v501
          %v597 = vpop.permute.xlu0 %596
          %600 = vset.pattern.permute.xlu0 0
          %601 = vperm.xlu0 %600, %v502
          %v602 = vpop.permute.xlu0 %601
          %605 = vset.pattern.permute.xlu0 0
          %606 = vperm.xlu0 %605, %v503
          %v607 = vpop.permute.xlu0 %606
          %610 = vset.pattern.permute.xlu0 0
          %611 = vperm.xlu0 %610, %v504
          %v612 = vpop.permute.xlu0 %611
          %615 = vset.pattern.permute.xlu0 0
          %616 = vperm.xlu0 %615, %v505
          %v617 = vpop.permute.xlu0 %616
          %620 = vset.pattern.permute.xlu0 0
          %621 = vperm.xlu0 %620, %v506
          %v622 = vpop.permute.xlu0 %621
          %625 = vset.pattern.permute.xlu0 0
          %626 = vperm.xlu0 %625, %v507
          %v627 = vpop.permute.xlu0 %626
          %630 = vset.pattern.permute.xlu0 0
          %631 = vperm.xlu0 %630, %v508
          %v632 = vpop.permute.xlu0 %631
          %635 = vset.pattern.permute.xlu0 0
          %636 = vperm.xlu0 %635, %v509
          %v637 = vpop.permute.xlu0 %636
          %640 = vset.pattern.permute.xlu0 0
          %641 = vperm.xlu0 %640, %v510
          %v642 = vpop.permute.xlu0 %641
          %645 = vset.pattern.permute.xlu0 0
          %646 = vperm.xlu0 %645, %v511
          %v647 = vpop.permute.xlu0 %646
          %650 = vset.pattern.permute.xlu0 0
          %651 = vperm.xlu0 %650, %v512
          %v652 = vpop.permute.xlu0 %651
          %655 = vset.pattern.permute.xlu0 0
          %656 = vperm.xlu0 %655, %v513
          %v657 = vpop.permute.xlu0 %656
          %660 = vset.pattern.permute.xlu0 0
          %661 = vperm.xlu0 %660, %v514
          %v662 = vpop.permute.xlu0 %661
          %665 = vset.pattern.permute.xlu0 0
          %666 = vperm.xlu0 %665, %v515
          %v667 = vpop.permute.xlu0 %666
          %670 = vset.pattern.permute.xlu0 0
          %671 = vperm.xlu0 %670, %v516
          %v672 = vpop.permute.xlu0 %671
          %675 = vset.pattern.permute.xlu0 0
          %676 = vperm.xlu0 %675, %v517
          %v677 = vpop.permute.xlu0 %676
          %v680 = vlaneseq
          %v681 = vshrl.u32 %v680, 7
          %v682 = vsub.s32 0, %v681
          %v683 = vrot.slane %v518, %v682
          %v684 = vlaneseq
          %v685 = vshrl.u32 %v684, 7
          %v686 = vsub.s32 1, %v685
          %v687 = vrot.slane %v518, %v686
          %v688 = vlaneseq
          %v689 = vshrl.u32 %v688, 7
          %v690 = vsub.s32 2, %v689
          %v691 = vrot.slane %v518, %v690
          %v692 = vlaneseq
          %v693 = vshrl.u32 %v692, 7
          %v694 = vsub.s32 3, %v693
          %v695 = vrot.slane %v518, %v694
          %v696 = vlaneseq
          %v697 = vshrl.u32 %v696, 7
          %v698 = vsub.s32 4, %v697
          %v699 = vrot.slane %v518, %v698
          %v700 = vlaneseq
          %v701 = vshrl.u32 %v700, 7
          %v702 = vsub.s32 5, %v701
          %v703 = vrot.slane %v518, %v702
          %v704 = vlaneseq
          %v705 = vshrl.u32 %v704, 7
          %v706 = vsub.s32 6, %v705
          %v707 = vrot.slane %v518, %v706
          %v708 = vlaneseq
          %v709 = vshrl.u32 %v708, 7
          %v710 = vsub.s32 7, %v709
          %v711 = vrot.slane %v518, %v710
          %v720 = vadd.f32 %v522, %v683
          %v721 = vadd.f32 %v522, %v687
          %v722 = vadd.f32 %v522, %v691
          %v723 = vadd.f32 %v522, %v695
          %v724 = vadd.f32 %v522, %v699
          %v725 = vadd.f32 %v522, %v703
          %v726 = vadd.f32 %v522, %v707
          %v727 = vadd.f32 %v522, %v711
          %v728 = vadd.f32 %v527, %v683
          %v729 = vadd.f32 %v527, %v687
          %v730 = vadd.f32 %v527, %v691
          %v731 = vadd.f32 %v527, %v695
          %v732 = vadd.f32 %v527, %v699
          %v733 = vadd.f32 %v527, %v703
          %v734 = vadd.f32 %v527, %v707
          %v735 = vadd.f32 %v527, %v711
          %v736 = vadd.f32 %v532, %v683
          %v737 = vadd.f32 %v532, %v687
          %v738 = vadd.f32 %v532, %v691
          %v739 = vadd.f32 %v532, %v695
          %v740 = vadd.f32 %v532, %v699
          %v741 = vadd.f32 %v532, %v703
          %v742 = vadd.f32 %v532, %v707
          %v743 = vadd.f32 %v532, %v711
          %v744 = vadd.f32 %v537, %v683
          %v745 = vadd.f32 %v537, %v687
          %v746 = vadd.f32 %v537, %v691
          %v747 = vadd.f32 %v537, %v695
          %v748 = vadd.f32 %v537, %v699
          %v749 = vadd.f32 %v537, %v703
          %v750 = vadd.f32 %v537, %v707
          %v751 = vadd.f32 %v537, %v711
          %v752 = vadd.f32 %v542, %v683
          %v753 = vadd.f32 %v542, %v687
          %v754 = vadd.f32 %v542, %v691
          %v755 = vadd.f32 %v542, %v695
          %v756 = vadd.f32 %v542, %v699
          %v757 = vadd.f32 %v542, %v703
          %v758 = vadd.f32 %v542, %v707
          %v759 = vadd.f32 %v542, %v711
          %v760 = vadd.f32 %v547, %v683
          %v761 = vadd.f32 %v547, %v687
          %v762 = vadd.f32 %v547, %v691
          %v763 = vadd.f32 %v547, %v695
          %v764 = vadd.f32 %v547, %v699
          %v765 = vadd.f32 %v547, %v703
          %v766 = vadd.f32 %v547, %v707
          %v767 = vadd.f32 %v547, %v711
          %v768 = vadd.f32 %v552, %v683
          %v769 = vadd.f32 %v552, %v687
          %v770 = vadd.f32 %v552, %v691
          %v771 = vadd.f32 %v552, %v695
          %v772 = vadd.f32 %v552, %v699
          %v773 = vadd.f32 %v552, %v703
          %v774 = vadd.f32 %v552, %v707
          %v775 = vadd.f32 %v552, %v711
          %v776 = vadd.f32 %v557, %v683
          %v777 = vadd.f32 %v557, %v687
          %v778 = vadd.f32 %v557, %v691
          %v779 = vadd.f32 %v557, %v695
          %v780 = vadd.f32 %v557, %v699
          %v781 = vadd.f32 %v557, %v703
          %v782 = vadd.f32 %v557, %v707
          %v783 = vadd.f32 %v557, %v711
          %v784 = vadd.f32 %v562, %v683
          %v785 = vadd.f32 %v562, %v687
          %v786 = vadd.f32 %v562, %v691
          %v787 = vadd.f32 %v562, %v695
          %v788 = vadd.f32 %v562, %v699
          %v789 = vadd.f32 %v562, %v703
          %v790 = vadd.f32 %v562, %v707
          %v791 = vadd.f32 %v562, %v711
          %v792 = vadd.f32 %v567, %v683
          %v793 = vadd.f32 %v567, %v687
          %v794 = vadd.f32 %v567, %v691
          %v795 = vadd.f32 %v567, %v695
          %v796 = vadd.f32 %v567, %v699
          %v797 = vadd.f32 %v567, %v703
          %v798 = vadd.f32 %v567, %v707
          %v799 = vadd.f32 %v567, %v711
          %v800 = vadd.f32 %v572, %v683
          %v801 = vadd.f32 %v572, %v687
          %v802 = vadd.f32 %v572, %v691
          %v803 = vadd.f32 %v572, %v695
          %v804 = vadd.f32 %v572, %v699
          %v805 = vadd.f32 %v572, %v703
          %v806 = vadd.f32 %v572, %v707
          %v807 = vadd.f32 %v572, %v711
          %v808 = vadd.f32 %v577, %v683
          %v809 = vadd.f32 %v577, %v687
          %v810 = vadd.f32 %v577, %v691
          %v811 = vadd.f32 %v577, %v695
          %v812 = vadd.f32 %v577, %v699
          %v813 = vadd.f32 %v577, %v703
          %v814 = vadd.f32 %v577, %v707
          %v815 = vadd.f32 %v577, %v711
          %v816 = vadd.f32 %v582, %v683
          %v817 = vadd.f32 %v582, %v687
          %v818 = vadd.f32 %v582, %v691
          %v819 = vadd.f32 %v582, %v695
          %v820 = vadd.f32 %v582, %v699
          %v821 = vadd.f32 %v582, %v703
          %v822 = vadd.f32 %v582, %v707
          %v823 = vadd.f32 %v582, %v711
          %v824 = vadd.f32 %v587, %v683
          %v825 = vadd.f32 %v587, %v687
          %v826 = vadd.f32 %v587, %v691
          %v827 = vadd.f32 %v587, %v695
          %v828 = vadd.f32 %v587, %v699
          %v829 = vadd.f32 %v587, %v703
          %v830 = vadd.f32 %v587, %v707
          %v831 = vadd.f32 %v587, %v711
          %v832 = vadd.f32 %v592, %v683
          %v833 = vadd.f32 %v592, %v687
          %v834 = vadd.f32 %v592, %v691
          %v835 = vadd.f32 %v592, %v695
          %v836 = vadd.f32 %v592, %v699
          %v837 = vadd.f32 %v592, %v703
          %v838 = vadd.f32 %v592, %v707
          %v839 = vadd.f32 %v592, %v711
          %v840 = vadd.f32 %v597, %v683
          %v841 = vadd.f32 %v597, %v687
          %v842 = vadd.f32 %v597, %v691
          %v843 = vadd.f32 %v597, %v695
          %v844 = vadd.f32 %v597, %v699
          %v845 = vadd.f32 %v597, %v703
          %v846 = vadd.f32 %v597, %v707
          %v847 = vadd.f32 %v597, %v711
          %v848 = vadd.f32 %v602, %v683
          %v849 = vadd.f32 %v602, %v687
          %v850 = vadd.f32 %v602, %v691
          %v851 = vadd.f32 %v602, %v695
          %v852 = vadd.f32 %v602, %v699
          %v853 = vadd.f32 %v602, %v703
          %v854 = vadd.f32 %v602, %v707
          %v855 = vadd.f32 %v602, %v711
          %v856 = vadd.f32 %v607, %v683
          %v857 = vadd.f32 %v607, %v687
          %v858 = vadd.f32 %v607, %v691
          %v859 = vadd.f32 %v607, %v695
          %v860 = vadd.f32 %v607, %v699
          %v861 = vadd.f32 %v607, %v703
          %v862 = vadd.f32 %v607, %v707
          %v863 = vadd.f32 %v607, %v711
          %v864 = vadd.f32 %v612, %v683
          %v865 = vadd.f32 %v612, %v687
          %v866 = vadd.f32 %v612, %v691
          %v867 = vadd.f32 %v612, %v695
          %v868 = vadd.f32 %v612, %v699
          %v869 = vadd.f32 %v612, %v703
          %v870 = vadd.f32 %v612, %v707
          %v871 = vadd.f32 %v612, %v711
          %v872 = vadd.f32 %v617, %v683
          %v873 = vadd.f32 %v617, %v687
          %v874 = vadd.f32 %v617, %v691
          %v875 = vadd.f32 %v617, %v695
          %v876 = vadd.f32 %v617, %v699
          %v877 = vadd.f32 %v617, %v703
          %v878 = vadd.f32 %v617, %v707
          %v879 = vadd.f32 %v617, %v711
          %v880 = vadd.f32 %v622, %v683
          %v881 = vadd.f32 %v622, %v687
          %v882 = vadd.f32 %v622, %v691
          %v883 = vadd.f32 %v622, %v695
          %v884 = vadd.f32 %v622, %v699
          %v885 = vadd.f32 %v622, %v703
          %v886 = vadd.f32 %v622, %v707
          %v887 = vadd.f32 %v622, %v711
          %v888 = vadd.f32 %v627, %v683
          %v889 = vadd.f32 %v627, %v687
          %v890 = vadd.f32 %v627, %v691
          %v891 = vadd.f32 %v627, %v695
          %v892 = vadd.f32 %v627, %v699
          %v893 = vadd.f32 %v627, %v703
          %v894 = vadd.f32 %v627, %v707
          %v895 = vadd.f32 %v627, %v711
          %v896 = vadd.f32 %v632, %v683
          %v897 = vadd.f32 %v632, %v687
          %v898 = vadd.f32 %v632, %v691
          %v899 = vadd.f32 %v632, %v695
          %v900 = vadd.f32 %v632, %v699
          %v901 = vadd.f32 %v632, %v703
          %v902 = vadd.f32 %v632, %v707
          %v903 = vadd.f32 %v632, %v711
          %v904 = vadd.f32 %v637, %v683
          %v905 = vadd.f32 %v637, %v687
          %v906 = vadd.f32 %v637, %v691
          %v907 = vadd.f32 %v637, %v695
          %v908 = vadd.f32 %v637, %v699
          %v909 = vadd.f32 %v637, %v703
          %v910 = vadd.f32 %v637, %v707
          %v911 = vadd.f32 %v637, %v711
          %v912 = vadd.f32 %v642, %v683
          %v913 = vadd.f32 %v642, %v687
          %v914 = vadd.f32 %v642, %v691
          %v915 = vadd.f32 %v642, %v695
          %v916 = vadd.f32 %v642, %v699
          %v917 = vadd.f32 %v642, %v703
          %v918 = vadd.f32 %v642, %v707
          %v919 = vadd.f32 %v642, %v711
          %v920 = vadd.f32 %v647, %v683
          %v921 = vadd.f32 %v647, %v687
          %v922 = vadd.f32 %v647, %v691
          %v923 = vadd.f32 %v647, %v695
          %v924 = vadd.f32 %v647, %v699
          %v925 = vadd.f32 %v647, %v703
          %v926 = vadd.f32 %v647, %v707
          %v927 = vadd.f32 %v647, %v711
          %v928 = vadd.f32 %v652, %v683
          %v929 = vadd.f32 %v652, %v687
          %v930 = vadd.f32 %v652, %v691
          %v931 = vadd.f32 %v652, %v695
          %v932 = vadd.f32 %v652, %v699
          %v933 = vadd.f32 %v652, %v703
          %v934 = vadd.f32 %v652, %v707
          %v935 = vadd.f32 %v652, %v711
          %v936 = vadd.f32 %v657, %v683
          %v937 = vadd.f32 %v657, %v687
          %v938 = vadd.f32 %v657, %v691
          %v939 = vadd.f32 %v657, %v695
          %v940 = vadd.f32 %v657, %v699
          %v941 = vadd.f32 %v657, %v703
          %v942 = vadd.f32 %v657, %v707
          %v943 = vadd.f32 %v657, %v711
          %v944 = vadd.f32 %v662, %v683
          %v945 = vadd.f32 %v662, %v687
          %v946 = vadd.f32 %v662, %v691
          %v947 = vadd.f32 %v662, %v695
          %v948 = vadd.f32 %v662, %v699
          %v949 = vadd.f32 %v662, %v703
          %v950 = vadd.f32 %v662, %v707
          %v951 = vadd.f32 %v662, %v711
          %v952 = vadd.f32 %v667, %v683
          %v953 = vadd.f32 %v667, %v687
          %v954 = vadd.f32 %v667, %v691
          %v955 = vadd.f32 %v667, %v695
          %v956 = vadd.f32 %v667, %v699
          %v957 = vadd.f32 %v667, %v703
          %v958 = vadd.f32 %v667, %v707
          %v959 = vadd.f32 %v667, %v711
          %v960 = vadd.f32 %v672, %v683
          %v961 = vadd.f32 %v672, %v687
          %v962 = vadd.f32 %v672, %v691
          %v963 = vadd.f32 %v672, %v695
          %v964 = vadd.f32 %v672, %v699
          %v965 = vadd.f32 %v672, %v703
          %v966 = vadd.f32 %v672, %v707
          %v967 = vadd.f32 %v672, %v711
          %v968 = vadd.f32 %v677, %v683
          %v969 = vadd.f32 %v677, %v687
          %v970 = vadd.f32 %v677, %v691
          %v971 = vadd.f32 %v677, %v695
          %v972 = vadd.f32 %v677, %v699
          %v973 = vadd.f32 %v677, %v703
          %v974 = vadd.f32 %v677, %v707
          %v975 = vadd.f32 %v677, %v711
          %vm976 = vcmp.gt.f32.partialorder %v720, 0.0
          %vm977 = vcmp.gt.f32.partialorder %v721, 0.0
          %vm978 = vcmp.gt.f32.partialorder %v722, 0.0
          %vm979 = vcmp.gt.f32.partialorder %v723, 0.0
          %vm980 = vcmp.gt.f32.partialorder %v724, 0.0
          %vm981 = vcmp.gt.f32.partialorder %v725, 0.0
          %vm982 = vcmp.gt.f32.partialorder %v726, 0.0
          %vm983 = vcmp.gt.f32.partialorder %v727, 0.0
          %vm984 = vcmp.gt.f32.partialorder %v728, 0.0
          %vm985 = vcmp.gt.f32.partialorder %v729, 0.0
          %vm986 = vcmp.gt.f32.partialorder %v730, 0.0
          %vm987 = vcmp.gt.f32.partialorder %v731, 0.0
          %vm988 = vcmp.gt.f32.partialorder %v732, 0.0
          %vm989 = vcmp.gt.f32.partialorder %v733, 0.0
          %vm990 = vcmp.gt.f32.partialorder %v734, 0.0
          %vm991 = vcmp.gt.f32.partialorder %v735, 0.0
          %vm992 = vcmp.gt.f32.partialorder %v736, 0.0
          %vm993 = vcmp.gt.f32.partialorder %v737, 0.0
          %vm994 = vcmp.gt.f32.partialorder %v738, 0.0
          %vm995 = vcmp.gt.f32.partialorder %v739, 0.0
          %vm996 = vcmp.gt.f32.partialorder %v740, 0.0
          %vm997 = vcmp.gt.f32.partialorder %v741, 0.0
          %vm998 = vcmp.gt.f32.partialorder %v742, 0.0
          %vm999 = vcmp.gt.f32.partialorder %v743, 0.0
          %vm1000 = vcmp.gt.f32.partialorder %v744, 0.0
          %vm1001 = vcmp.gt.f32.partialorder %v745, 0.0
          %vm1002 = vcmp.gt.f32.partialorder %v746, 0.0
          %vm1003 = vcmp.gt.f32.partialorder %v747, 0.0
          %vm1004 = vcmp.gt.f32.partialorder %v748, 0.0
          %vm1005 = vcmp.gt.f32.partialorder %v749, 0.0
          %vm1006 = vcmp.gt.f32.partialorder %v750, 0.0
          %vm1007 = vcmp.gt.f32.partialorder %v751, 0.0
          %vm1008 = vcmp.gt.f32.partialorder %v752, 0.0
          %vm1009 = vcmp.gt.f32.partialorder %v753, 0.0
          %vm1010 = vcmp.gt.f32.partialorder %v754, 0.0
          %vm1011 = vcmp.gt.f32.partialorder %v755, 0.0
          %vm1012 = vcmp.gt.f32.partialorder %v756, 0.0
          %vm1013 = vcmp.gt.f32.partialorder %v757, 0.0
          %vm1014 = vcmp.gt.f32.partialorder %v758, 0.0
          %vm1015 = vcmp.gt.f32.partialorder %v759, 0.0
          %vm1016 = vcmp.gt.f32.partialorder %v760, 0.0
          %vm1017 = vcmp.gt.f32.partialorder %v761, 0.0
          %vm1018 = vcmp.gt.f32.partialorder %v762, 0.0
          %vm1019 = vcmp.gt.f32.partialorder %v763, 0.0
          %vm1020 = vcmp.gt.f32.partialorder %v764, 0.0
          %vm1021 = vcmp.gt.f32.partialorder %v765, 0.0
          %vm1022 = vcmp.gt.f32.partialorder %v766, 0.0
          %vm1023 = vcmp.gt.f32.partialorder %v767, 0.0
          %vm1024 = vcmp.gt.f32.partialorder %v768, 0.0
          %vm1025 = vcmp.gt.f32.partialorder %v769, 0.0
          %vm1026 = vcmp.gt.f32.partialorder %v770, 0.0
          %vm1027 = vcmp.gt.f32.partialorder %v771, 0.0
          %vm1028 = vcmp.gt.f32.partialorder %v772, 0.0
          %vm1029 = vcmp.gt.f32.partialorder %v773, 0.0
          %vm1030 = vcmp.gt.f32.partialorder %v774, 0.0
          %vm1031 = vcmp.gt.f32.partialorder %v775, 0.0
          %vm1032 = vcmp.gt.f32.partialorder %v776, 0.0
          %vm1033 = vcmp.gt.f32.partialorder %v777, 0.0
          %vm1034 = vcmp.gt.f32.partialorder %v778, 0.0
          %vm1035 = vcmp.gt.f32.partialorder %v779, 0.0
          %vm1036 = vcmp.gt.f32.partialorder %v780, 0.0
          %vm1037 = vcmp.gt.f32.partialorder %v781, 0.0
          %vm1038 = vcmp.gt.f32.partialorder %v782, 0.0
          %vm1039 = vcmp.gt.f32.partialorder %v783, 0.0
          %vm1040 = vcmp.gt.f32.partialorder %v784, 0.0
          %vm1041 = vcmp.gt.f32.partialorder %v785, 0.0
          %vm1042 = vcmp.gt.f32.partialorder %v786, 0.0
          %vm1043 = vcmp.gt.f32.partialorder %v787, 0.0
          %vm1044 = vcmp.gt.f32.partialorder %v788, 0.0
          %vm1045 = vcmp.gt.f32.partialorder %v789, 0.0
          %vm1046 = vcmp.gt.f32.partialorder %v790, 0.0
          %vm1047 = vcmp.gt.f32.partialorder %v791, 0.0
          %vm1048 = vcmp.gt.f32.partialorder %v792, 0.0
          %vm1049 = vcmp.gt.f32.partialorder %v793, 0.0
          %vm1050 = vcmp.gt.f32.partialorder %v794, 0.0
          %vm1051 = vcmp.gt.f32.partialorder %v795, 0.0
          %vm1052 = vcmp.gt.f32.partialorder %v796, 0.0
          %vm1053 = vcmp.gt.f32.partialorder %v797, 0.0
          %vm1054 = vcmp.gt.f32.partialorder %v798, 0.0
          %vm1055 = vcmp.gt.f32.partialorder %v799, 0.0
          %vm1056 = vcmp.gt.f32.partialorder %v800, 0.0
          %vm1057 = vcmp.gt.f32.partialorder %v801, 0.0
          %vm1058 = vcmp.gt.f32.partialorder %v802, 0.0
          %vm1059 = vcmp.gt.f32.partialorder %v803, 0.0
          %vm1060 = vcmp.gt.f32.partialorder %v804, 0.0
          %vm1061 = vcmp.gt.f32.partialorder %v805, 0.0
          %vm1062 = vcmp.gt.f32.partialorder %v806, 0.0
          %vm1063 = vcmp.gt.f32.partialorder %v807, 0.0
          %vm1064 = vcmp.gt.f32.partialorder %v808, 0.0
          %vm1065 = vcmp.gt.f32.partialorder %v809, 0.0
          %vm1066 = vcmp.gt.f32.partialorder %v810, 0.0
          %vm1067 = vcmp.gt.f32.partialorder %v811, 0.0
          %vm1068 = vcmp.gt.f32.partialorder %v812, 0.0
          %vm1069 = vcmp.gt.f32.partialorder %v813, 0.0
          %vm1070 = vcmp.gt.f32.partialorder %v814, 0.0
          %vm1071 = vcmp.gt.f32.partialorder %v815, 0.0
          %vm1072 = vcmp.gt.f32.partialorder %v816, 0.0
          %vm1073 = vcmp.gt.f32.partialorder %v817, 0.0
          %vm1074 = vcmp.gt.f32.partialorder %v818, 0.0
          %vm1075 = vcmp.gt.f32.partialorder %v819, 0.0
          %vm1076 = vcmp.gt.f32.partialorder %v820, 0.0
          %vm1077 = vcmp.gt.f32.partialorder %v821, 0.0
          %vm1078 = vcmp.gt.f32.partialorder %v822, 0.0
          %vm1079 = vcmp.gt.f32.partialorder %v823, 0.0
          %vm1080 = vcmp.gt.f32.partialorder %v824, 0.0
          %vm1081 = vcmp.gt.f32.partialorder %v825, 0.0
          %vm1082 = vcmp.gt.f32.partialorder %v826, 0.0
          %vm1083 = vcmp.gt.f32.partialorder %v827, 0.0
          %vm1084 = vcmp.gt.f32.partialorder %v828, 0.0
          %vm1085 = vcmp.gt.f32.partialorder %v829, 0.0
          %vm1086 = vcmp.gt.f32.partialorder %v830, 0.0
          %vm1087 = vcmp.gt.f32.partialorder %v831, 0.0
          %vm1088 = vcmp.gt.f32.partialorder %v832, 0.0
          %vm1089 = vcmp.gt.f32.partialorder %v833, 0.0
          %vm1090 = vcmp.gt.f32.partialorder %v834, 0.0
          %vm1091 = vcmp.gt.f32.partialorder %v835, 0.0
          %vm1092 = vcmp.gt.f32.partialorder %v836, 0.0
          %vm1093 = vcmp.gt.f32.partialorder %v837, 0.0
          %vm1094 = vcmp.gt.f32.partialorder %v838, 0.0
          %vm1095 = vcmp.gt.f32.partialorder %v839, 0.0
          %vm1096 = vcmp.gt.f32.partialorder %v840, 0.0
          %vm1097 = vcmp.gt.f32.partialorder %v841, 0.0
          %vm1098 = vcmp.gt.f32.partialorder %v842, 0.0
          %vm1099 = vcmp.gt.f32.partialorder %v843, 0.0
          %vm1100 = vcmp.gt.f32.partialorder %v844, 0.0
          %vm1101 = vcmp.gt.f32.partialorder %v845, 0.0
          %vm1102 = vcmp.gt.f32.partialorder %v846, 0.0
          %vm1103 = vcmp.gt.f32.partialorder %v847, 0.0
          %vm1104 = vcmp.gt.f32.partialorder %v848, 0.0
          %vm1105 = vcmp.gt.f32.partialorder %v849, 0.0
          %vm1106 = vcmp.gt.f32.partialorder %v850, 0.0
          %vm1107 = vcmp.gt.f32.partialorder %v851, 0.0
          %vm1108 = vcmp.gt.f32.partialorder %v852, 0.0
          %vm1109 = vcmp.gt.f32.partialorder %v853, 0.0
          %vm1110 = vcmp.gt.f32.partialorder %v854, 0.0
          %vm1111 = vcmp.gt.f32.partialorder %v855, 0.0
          %vm1112 = vcmp.gt.f32.partialorder %v856, 0.0
          %vm1113 = vcmp.gt.f32.partialorder %v857, 0.0
          %vm1114 = vcmp.gt.f32.partialorder %v858, 0.0
          %vm1115 = vcmp.gt.f32.partialorder %v859, 0.0
          %vm1116 = vcmp.gt.f32.partialorder %v860, 0.0
          %vm1117 = vcmp.gt.f32.partialorder %v861, 0.0
          %vm1118 = vcmp.gt.f32.partialorder %v862, 0.0
          %vm1119 = vcmp.gt.f32.partialorder %v863, 0.0
          %vm1120 = vcmp.gt.f32.partialorder %v864, 0.0
          %vm1121 = vcmp.gt.f32.partialorder %v865, 0.0
          %vm1122 = vcmp.gt.f32.partialorder %v866, 0.0
          %vm1123 = vcmp.gt.f32.partialorder %v867, 0.0
          %vm1124 = vcmp.gt.f32.partialorder %v868, 0.0
          %vm1125 = vcmp.gt.f32.partialorder %v869, 0.0
          %vm1126 = vcmp.gt.f32.partialorder %v870, 0.0
          %vm1127 = vcmp.gt.f32.partialorder %v871, 0.0
          %vm1128 = vcmp.gt.f32.partialorder %v872, 0.0
          %vm1129 = vcmp.gt.f32.partialorder %v873, 0.0
          %vm1130 = vcmp.gt.f32.partialorder %v874, 0.0
          %vm1131 = vcmp.gt.f32.partialorder %v875, 0.0
          %vm1132 = vcmp.gt.f32.partialorder %v876, 0.0
          %vm1133 = vcmp.gt.f32.partialorder %v877, 0.0
          %vm1134 = vcmp.gt.f32.partialorder %v878, 0.0
          %vm1135 = vcmp.gt.f32.partialorder %v879, 0.0
          %vm1136 = vcmp.gt.f32.partialorder %v880, 0.0
          %vm1137 = vcmp.gt.f32.partialorder %v881, 0.0
          %vm1138 = vcmp.gt.f32.partialorder %v882, 0.0
          %vm1139 = vcmp.gt.f32.partialorder %v883, 0.0
          %vm1140 = vcmp.gt.f32.partialorder %v884, 0.0
          %vm1141 = vcmp.gt.f32.partialorder %v885, 0.0
          %vm1142 = vcmp.gt.f32.partialorder %v886, 0.0
          %vm1143 = vcmp.gt.f32.partialorder %v887, 0.0
          %vm1144 = vcmp.gt.f32.partialorder %v888, 0.0
          %vm1145 = vcmp.gt.f32.partialorder %v889, 0.0
          %vm1146 = vcmp.gt.f32.partialorder %v890, 0.0
          %vm1147 = vcmp.gt.f32.partialorder %v891, 0.0
          %vm1148 = vcmp.gt.f32.partialorder %v892, 0.0
          %vm1149 = vcmp.gt.f32.partialorder %v893, 0.0
          %vm1150 = vcmp.gt.f32.partialorder %v894, 0.0
          %vm1151 = vcmp.gt.f32.partialorder %v895, 0.0
          %vm1152 = vcmp.gt.f32.partialorder %v896, 0.0
          %vm1153 = vcmp.gt.f32.partialorder %v897, 0.0
          %vm1154 = vcmp.gt.f32.partialorder %v898, 0.0
          %vm1155 = vcmp.gt.f32.partialorder %v899, 0.0
          %vm1156 = vcmp.gt.f32.partialorder %v900, 0.0
          %vm1157 = vcmp.gt.f32.partialorder %v901, 0.0
          %vm1158 = vcmp.gt.f32.partialorder %v902, 0.0
          %vm1159 = vcmp.gt.f32.partialorder %v903, 0.0
          %vm1160 = vcmp.gt.f32.partialorder %v904, 0.0
          %vm1161 = vcmp.gt.f32.partialorder %v905, 0.0
          %vm1162 = vcmp.gt.f32.partialorder %v906, 0.0
          %vm1163 = vcmp.gt.f32.partialorder %v907, 0.0
          %vm1164 = vcmp.gt.f32.partialorder %v908, 0.0
          %vm1165 = vcmp.gt.f32.partialorder %v909, 0.0
          %vm1166 = vcmp.gt.f32.partialorder %v910, 0.0
          %vm1167 = vcmp.gt.f32.partialorder %v911, 0.0
          %vm1168 = vcmp.gt.f32.partialorder %v912, 0.0
          %vm1169 = vcmp.gt.f32.partialorder %v913, 0.0
          %vm1170 = vcmp.gt.f32.partialorder %v914, 0.0
          %vm1171 = vcmp.gt.f32.partialorder %v915, 0.0
          %vm1172 = vcmp.gt.f32.partialorder %v916, 0.0
          %vm1173 = vcmp.gt.f32.partialorder %v917, 0.0
          %vm1174 = vcmp.gt.f32.partialorder %v918, 0.0
          %vm1175 = vcmp.gt.f32.partialorder %v919, 0.0
          %vm1176 = vcmp.gt.f32.partialorder %v920, 0.0
          %vm1177 = vcmp.gt.f32.partialorder %v921, 0.0
          %vm1178 = vcmp.gt.f32.partialorder %v922, 0.0
          %vm1179 = vcmp.gt.f32.partialorder %v923, 0.0
          %vm1180 = vcmp.gt.f32.partialorder %v924, 0.0
          %vm1181 = vcmp.gt.f32.partialorder %v925, 0.0
          %vm1182 = vcmp.gt.f32.partialorder %v926, 0.0
          %vm1183 = vcmp.gt.f32.partialorder %v927, 0.0
          %vm1184 = vcmp.gt.f32.partialorder %v928, 0.0
          %vm1185 = vcmp.gt.f32.partialorder %v929, 0.0
          %vm1186 = vcmp.gt.f32.partialorder %v930, 0.0
          %vm1187 = vcmp.gt.f32.partialorder %v931, 0.0
          %vm1188 = vcmp.gt.f32.partialorder %v932, 0.0
          %vm1189 = vcmp.gt.f32.partialorder %v933, 0.0
          %vm1190 = vcmp.gt.f32.partialorder %v934, 0.0
          %vm1191 = vcmp.gt.f32.partialorder %v935, 0.0
          %vm1192 = vcmp.gt.f32.partialorder %v936, 0.0
          %vm1193 = vcmp.gt.f32.partialorder %v937, 0.0
          %vm1194 = vcmp.gt.f32.partialorder %v938, 0.0
          %vm1195 = vcmp.gt.f32.partialorder %v939, 0.0
          %vm1196 = vcmp.gt.f32.partialorder %v940, 0.0
          %vm1197 = vcmp.gt.f32.partialorder %v941, 0.0
          %vm1198 = vcmp.gt.f32.partialorder %v942, 0.0
          %vm1199 = vcmp.gt.f32.partialorder %v943, 0.0
          %vm1200 = vcmp.gt.f32.partialorder %v944, 0.0
          %vm1201 = vcmp.gt.f32.partialorder %v945, 0.0
          %vm1202 = vcmp.gt.f32.partialorder %v946, 0.0
          %vm1203 = vcmp.gt.f32.partialorder %v947, 0.0
          %vm1204 = vcmp.gt.f32.partialorder %v948, 0.0
          %vm1205 = vcmp.gt.f32.partialorder %v949, 0.0
          %vm1206 = vcmp.gt.f32.partialorder %v950, 0.0
          %vm1207 = vcmp.gt.f32.partialorder %v951, 0.0
          %vm1208 = vcmp.gt.f32.partialorder %v952, 0.0
          %vm1209 = vcmp.gt.f32.partialorder %v953, 0.0
          %vm1210 = vcmp.gt.f32.partialorder %v954, 0.0
          %vm1211 = vcmp.gt.f32.partialorder %v955, 0.0
          %vm1212 = vcmp.gt.f32.partialorder %v956, 0.0
          %vm1213 = vcmp.gt.f32.partialorder %v957, 0.0
          %vm1214 = vcmp.gt.f32.partialorder %v958, 0.0
          %vm1215 = vcmp.gt.f32.partialorder %v959, 0.0
          %vm1216 = vcmp.gt.f32.partialorder %v960, 0.0
          %vm1217 = vcmp.gt.f32.partialorder %v961, 0.0
          %vm1218 = vcmp.gt.f32.partialorder %v962, 0.0
          %vm1219 = vcmp.gt.f32.partialorder %v963, 0.0
          %vm1220 = vcmp.gt.f32.partialorder %v964, 0.0
          %vm1221 = vcmp.gt.f32.partialorder %v965, 0.0
          %vm1222 = vcmp.gt.f32.partialorder %v966, 0.0
          %vm1223 = vcmp.gt.f32.partialorder %v967, 0.0
          %vm1224 = vcmp.gt.f32.partialorder %v968, 0.0
          %vm1225 = vcmp.gt.f32.partialorder %v969, 0.0
          %vm1226 = vcmp.gt.f32.partialorder %v970, 0.0
          %vm1227 = vcmp.gt.f32.partialorder %v971, 0.0
          %vm1228 = vcmp.gt.f32.partialorder %v972, 0.0
          %vm1229 = vcmp.gt.f32.partialorder %v973, 0.0
          %vm1230 = vcmp.gt.f32.partialorder %v974, 0.0
          %vm1231 = vcmp.gt.f32.partialorder %v975, 0.0
          %v1232 = vmul.f32 %v720, 0.2
          %v1233 = vmul.f32 %v721, 0.2
          %v1234 = vmul.f32 %v722, 0.2
          %v1235 = vmul.f32 %v723, 0.2
          %v1236 = vmul.f32 %v724, 0.2
          %v1237 = vmul.f32 %v725, 0.2
          %v1238 = vmul.f32 %v726, 0.2
          %v1239 = vmul.f32 %v727, 0.2
          %v1240 = vmul.f32 %v728, 0.2
          %v1241 = vmul.f32 %v729, 0.2
          %v1242 = vmul.f32 %v730, 0.2
          %v1243 = vmul.f32 %v731, 0.2
          %v1244 = vmul.f32 %v732, 0.2
          %v1245 = vmul.f32 %v733, 0.2
          %v1246 = vmul.f32 %v734, 0.2
          %v1247 = vmul.f32 %v735, 0.2
          %v1248 = vmul.f32 %v736, 0.2
          %v1249 = vmul.f32 %v737, 0.2
          %v1250 = vmul.f32 %v738, 0.2
          %v1251 = vmul.f32 %v739, 0.2
          %v1252 = vmul.f32 %v740, 0.2
          %v1253 = vmul.f32 %v741, 0.2
          %v1254 = vmul.f32 %v742, 0.2
          %v1255 = vmul.f32 %v743, 0.2
          %v1256 = vmul.f32 %v744, 0.2
          %v1257 = vmul.f32 %v745, 0.2
          %v1258 = vmul.f32 %v746, 0.2
          %v1259 = vmul.f32 %v747, 0.2
          %v1260 = vmul.f32 %v748, 0.2
          %v1261 = vmul.f32 %v749, 0.2
          %v1262 = vmul.f32 %v750, 0.2
          %v1263 = vmul.f32 %v751, 0.2
          %v1264 = vmul.f32 %v752, 0.2
          %v1265 = vmul.f32 %v753, 0.2
          %v1266 = vmul.f32 %v754, 0.2
          %v1267 = vmul.f32 %v755, 0.2
          %v1268 = vmul.f32 %v756, 0.2
          %v1269 = vmul.f32 %v757, 0.2
          %v1270 = vmul.f32 %v758, 0.2
          %v1271 = vmul.f32 %v759, 0.2
          %v1272 = vmul.f32 %v760, 0.2
          %v1273 = vmul.f32 %v761, 0.2
          %v1274 = vmul.f32 %v762, 0.2
          %v1275 = vmul.f32 %v763, 0.2
          %v1276 = vmul.f32 %v764, 0.2
          %v1277 = vmul.f32 %v765, 0.2
          %v1278 = vmul.f32 %v766, 0.2
          %v1279 = vmul.f32 %v767, 0.2
          %v1280 = vmul.f32 %v768, 0.2
          %v1281 = vmul.f32 %v769, 0.2
          %v1282 = vmul.f32 %v770, 0.2
          %v1283 = vmul.f32 %v771, 0.2
          %v1284 = vmul.f32 %v772, 0.2
          %v1285 = vmul.f32 %v773, 0.2
          %v1286 = vmul.f32 %v774, 0.2
          %v1287 = vmul.f32 %v775, 0.2
          %v1288 = vmul.f32 %v776, 0.2
          %v1289 = vmul.f32 %v777, 0.2
          %v1290 = vmul.f32 %v778, 0.2
          %v1291 = vmul.f32 %v779, 0.2
          %v1292 = vmul.f32 %v780, 0.2
          %v1293 = vmul.f32 %v781, 0.2
          %v1294 = vmul.f32 %v782, 0.2
          %v1295 = vmul.f32 %v783, 0.2
          %v1296 = vmul.f32 %v784, 0.2
          %v1297 = vmul.f32 %v785, 0.2
          %v1298 = vmul.f32 %v786, 0.2
          %v1299 = vmul.f32 %v787, 0.2
          %v1300 = vmul.f32 %v788, 0.2
          %v1301 = vmul.f32 %v789, 0.2
          %v1302 = vmul.f32 %v790, 0.2
          %v1303 = vmul.f32 %v791, 0.2
          %v1304 = vmul.f32 %v792, 0.2
          %v1305 = vmul.f32 %v793, 0.2
          %v1306 = vmul.f32 %v794, 0.2
          %v1307 = vmul.f32 %v795, 0.2
          %v1308 = vmul.f32 %v796, 0.2
          %v1309 = vmul.f32 %v797, 0.2
          %v1310 = vmul.f32 %v798, 0.2
          %v1311 = vmul.f32 %v799, 0.2
          %v1312 = vmul.f32 %v800, 0.2
          %v1313 = vmul.f32 %v801, 0.2
          %v1314 = vmul.f32 %v802, 0.2
          %v1315 = vmul.f32 %v803, 0.2
          %v1316 = vmul.f32 %v804, 0.2
          %v1317 = vmul.f32 %v805, 0.2
          %v1318 = vmul.f32 %v806, 0.2
          %v1319 = vmul.f32 %v807, 0.2
          %v1320 = vmul.f32 %v808, 0.2
          %v1321 = vmul.f32 %v809, 0.2
          %v1322 = vmul.f32 %v810, 0.2
          %v1323 = vmul.f32 %v811, 0.2
          %v1324 = vmul.f32 %v812, 0.2
          %v1325 = vmul.f32 %v813, 0.2
          %v1326 = vmul.f32 %v814, 0.2
          %v1327 = vmul.f32 %v815, 0.2
          %v1328 = vmul.f32 %v816, 0.2
          %v1329 = vmul.f32 %v817, 0.2
          %v1330 = vmul.f32 %v818, 0.2
          %v1331 = vmul.f32 %v819, 0.2
          %v1332 = vmul.f32 %v820, 0.2
          %v1333 = vmul.f32 %v821, 0.2
          %v1334 = vmul.f32 %v822, 0.2
          %v1335 = vmul.f32 %v823, 0.2
          %v1336 = vmul.f32 %v824, 0.2
          %v1337 = vmul.f32 %v825, 0.2
          %v1338 = vmul.f32 %v826, 0.2
          %v1339 = vmul.f32 %v827, 0.2
          %v1340 = vmul.f32 %v828, 0.2
          %v1341 = vmul.f32 %v829, 0.2
          %v1342 = vmul.f32 %v830, 0.2
          %v1343 = vmul.f32 %v831, 0.2
          %v1344 = vmul.f32 %v832, 0.2
          %v1345 = vmul.f32 %v833, 0.2
          %v1346 = vmul.f32 %v834, 0.2
          %v1347 = vmul.f32 %v835, 0.2
          %v1348 = vmul.f32 %v836, 0.2
          %v1349 = vmul.f32 %v837, 0.2
          %v1350 = vmul.f32 %v838, 0.2
          %v1351 = vmul.f32 %v839, 0.2
          %v1352 = vmul.f32 %v840, 0.2
          %v1353 = vmul.f32 %v841, 0.2
          %v1354 = vmul.f32 %v842, 0.2
          %v1355 = vmul.f32 %v843, 0.2
          %v1356 = vmul.f32 %v844, 0.2
          %v1357 = vmul.f32 %v845, 0.2
          %v1358 = vmul.f32 %v846, 0.2
          %v1359 = vmul.f32 %v847, 0.2
          %v1360 = vmul.f32 %v848, 0.2
          %v1361 = vmul.f32 %v849, 0.2
          %v1362 = vmul.f32 %v850, 0.2
          %v1363 = vmul.f32 %v851, 0.2
          %v1364 = vmul.f32 %v852, 0.2
          %v1365 = vmul.f32 %v853, 0.2
          %v1366 = vmul.f32 %v854, 0.2
          %v1367 = vmul.f32 %v855, 0.2
          %v1368 = vmul.f32 %v856, 0.2
          %v1369 = vmul.f32 %v857, 0.2
          %v1370 = vmul.f32 %v858, 0.2
          %v1371 = vmul.f32 %v859, 0.2
          %v1372 = vmul.f32 %v860, 0.2
          %v1373 = vmul.f32 %v861, 0.2
          %v1374 = vmul.f32 %v862, 0.2
          %v1375 = vmul.f32 %v863, 0.2
          %v1376 = vmul.f32 %v864, 0.2
          %v1377 = vmul.f32 %v865, 0.2
          %v1378 = vmul.f32 %v866, 0.2
          %v1379 = vmul.f32 %v867, 0.2
          %v1380 = vmul.f32 %v868, 0.2
          %v1381 = vmul.f32 %v869, 0.2
          %v1382 = vmul.f32 %v870, 0.2
          %v1383 = vmul.f32 %v871, 0.2
          %v1384 = vmul.f32 %v872, 0.2
          %v1385 = vmul.f32 %v873, 0.2
          %v1386 = vmul.f32 %v874, 0.2
          %v1387 = vmul.f32 %v875, 0.2
          %v1388 = vmul.f32 %v876, 0.2
          %v1389 = vmul.f32 %v877, 0.2
          %v1390 = vmul.f32 %v878, 0.2
          %v1391 = vmul.f32 %v879, 0.2
          %v1392 = vmul.f32 %v880, 0.2
          %v1393 = vmul.f32 %v881, 0.2
          %v1394 = vmul.f32 %v882, 0.2
          %v1395 = vmul.f32 %v883, 0.2
          %v1396 = vmul.f32 %v884, 0.2
          %v1397 = vmul.f32 %v885, 0.2
          %v1398 = vmul.f32 %v886, 0.2
          %v1399 = vmul.f32 %v887, 0.2
          %v1400 = vmul.f32 %v888, 0.2
          %v1401 = vmul.f32 %v889, 0.2
          %v1402 = vmul.f32 %v890, 0.2
          %v1403 = vmul.f32 %v891, 0.2
          %v1404 = vmul.f32 %v892, 0.2
          %v1405 = vmul.f32 %v893, 0.2
          %v1406 = vmul.f32 %v894, 0.2
          %v1407 = vmul.f32 %v895, 0.2
          %v1408 = vmul.f32 %v896, 0.2
          %v1409 = vmul.f32 %v897, 0.2
          %v1410 = vmul.f32 %v898, 0.2
          %v1411 = vmul.f32 %v899, 0.2
          %v1412 = vmul.f32 %v900, 0.2
          %v1413 = vmul.f32 %v901, 0.2
          %v1414 = vmul.f32 %v902, 0.2
          %v1415 = vmul.f32 %v903, 0.2
          %v1416 = vmul.f32 %v904, 0.2
          %v1417 = vmul.f32 %v905, 0.2
          %v1418 = vmul.f32 %v906, 0.2
          %v1419 = vmul.f32 %v907, 0.2
          %v1420 = vmul.f32 %v908, 0.2
          %v1421 = vmul.f32 %v909, 0.2
          %v1422 = vmul.f32 %v910, 0.2
          %v1423 = vmul.f32 %v911, 0.2
          %v1424 = vmul.f32 %v912, 0.2
          %v1425 = vmul.f32 %v913, 0.2
          %v1426 = vmul.f32 %v914, 0.2
          %v1427 = vmul.f32 %v915, 0.2
          %v1428 = vmul.f32 %v916, 0.2
          %v1429 = vmul.f32 %v917, 0.2
          %v1430 = vmul.f32 %v918, 0.2
          %v1431 = vmul.f32 %v919, 0.2
          %v1432 = vmul.f32 %v920, 0.2
          %v1433 = vmul.f32 %v921, 0.2
          %v1434 = vmul.f32 %v922, 0.2
          %v1435 = vmul.f32 %v923, 0.2
          %v1436 = vmul.f32 %v924, 0.2
          %v1437 = vmul.f32 %v925, 0.2
          %v1438 = vmul.f32 %v926, 0.2
          %v1439 = vmul.f32 %v927, 0.2
          %v1440 = vmul.f32 %v928, 0.2
          %v1441 = vmul.f32 %v929, 0.2
          %v1442 = vmul.f32 %v930, 0.2
          %v1443 = vmul.f32 %v931, 0.2
          %v1444 = vmul.f32 %v932, 0.2
          %v1445 = vmul.f32 %v933, 0.2
          %v1446 = vmul.f32 %v934, 0.2
          %v1447 = vmul.f32 %v935, 0.2
          %v1448 = vmul.f32 %v936, 0.2
          %v1449 = vmul.f32 %v937, 0.2
          %v1450 = vmul.f32 %v938, 0.2
          %v1451 = vmul.f32 %v939, 0.2
          %v1452 = vmul.f32 %v940, 0.2
          %v1453 = vmul.f32 %v941, 0.2
          %v1454 = vmul.f32 %v942, 0.2
          %v1455 = vmul.f32 %v943, 0.2
          %v1456 = vmul.f32 %v944, 0.2
          %v1457 = vmul.f32 %v945, 0.2
          %v1458 = vmul.f32 %v946, 0.2
          %v1459 = vmul.f32 %v947, 0.2
          %v1460 = vmul.f32 %v948, 0.2
          %v1461 = vmul.f32 %v949, 0.2
          %v1462 = vmul.f32 %v950, 0.2
          %v1463 = vmul.f32 %v951, 0.2
          %v1464 = vmul.f32 %v952, 0.2
          %v1465 = vmul.f32 %v953, 0.2
          %v1466 = vmul.f32 %v954, 0.2
          %v1467 = vmul.f32 %v955, 0.2
          %v1468 = vmul.f32 %v956, 0.2
          %v1469 = vmul.f32 %v957, 0.2
          %v1470 = vmul.f32 %v958, 0.2
          %v1471 = vmul.f32 %v959, 0.2
          %v1472 = vmul.f32 %v960, 0.2
          %v1473 = vmul.f32 %v961, 0.2
          %v1474 = vmul.f32 %v962, 0.2
          %v1475 = vmul.f32 %v963, 0.2
          %v1476 = vmul.f32 %v964, 0.2
          %v1477 = vmul.f32 %v965, 0.2
          %v1478 = vmul.f32 %v966, 0.2
          %v1479 = vmul.f32 %v967, 0.2
          %v1480 = vmul.f32 %v968, 0.2
          %v1481 = vmul.f32 %v969, 0.2
          %v1482 = vmul.f32 %v970, 0.2
          %v1483 = vmul.f32 %v971, 0.2
          %v1484 = vmul.f32 %v972, 0.2
          %v1485 = vmul.f32 %v973, 0.2
          %v1486 = vmul.f32 %v974, 0.2
          %v1487 = vmul.f32 %v975, 0.2
          %v1488 = vsel %vm976, %v720, %v1232
          %v1489 = vsel %vm977, %v721, %v1233
          %v1490 = vsel %vm978, %v722, %v1234
          %v1491 = vsel %vm979, %v723, %v1235
          %v1492 = vsel %vm980, %v724, %v1236
          %v1493 = vsel %vm981, %v725, %v1237
          %v1494 = vsel %vm982, %v726, %v1238
          %v1495 = vsel %vm983, %v727, %v1239
          %v1496 = vsel %vm984, %v728, %v1240
          %v1497 = vsel %vm985, %v729, %v1241
          %v1498 = vsel %vm986, %v730, %v1242
          %v1499 = vsel %vm987, %v731, %v1243
          %v1500 = vsel %vm988, %v732, %v1244
          %v1501 = vsel %vm989, %v733, %v1245
          %v1502 = vsel %vm990, %v734, %v1246
          %v1503 = vsel %vm991, %v735, %v1247
          %v1504 = vsel %vm992, %v736, %v1248
          %v1505 = vsel %vm993, %v737, %v1249
          %v1506 = vsel %vm994, %v738, %v1250
          %v1507 = vsel %vm995, %v739, %v1251
          %v1508 = vsel %vm996, %v740, %v1252
          %v1509 = vsel %vm997, %v741, %v1253
          %v1510 = vsel %vm998, %v742, %v1254
          %v1511 = vsel %vm999, %v743, %v1255
          %v1512 = vsel %vm1000, %v744, %v1256
          %v1513 = vsel %vm1001, %v745, %v1257
          %v1514 = vsel %vm1002, %v746, %v1258
          %v1515 = vsel %vm1003, %v747, %v1259
          %v1516 = vsel %vm1004, %v748, %v1260
          %v1517 = vsel %vm1005, %v749, %v1261
          %v1518 = vsel %vm1006, %v750, %v1262
          %v1519 = vsel %vm1007, %v751, %v1263
          %v1520 = vsel %vm1008, %v752, %v1264
          %v1521 = vsel %vm1009, %v753, %v1265
          %v1522 = vsel %vm1010, %v754, %v1266
          %v1523 = vsel %vm1011, %v755, %v1267
          %v1524 = vsel %vm1012, %v756, %v1268
          %v1525 = vsel %vm1013, %v757, %v1269
          %v1526 = vsel %vm1014, %v758, %v1270
          %v1527 = vsel %vm1015, %v759, %v1271
          %v1528 = vsel %vm1016, %v760, %v1272
          %v1529 = vsel %vm1017, %v761, %v1273
          %v1530 = vsel %vm1018, %v762, %v1274
          %v1531 = vsel %vm1019, %v763, %v1275
          %v1532 = vsel %vm1020, %v764, %v1276
          %v1533 = vsel %vm1021, %v765, %v1277
          %v1534 = vsel %vm1022, %v766, %v1278
          %v1535 = vsel %vm1023, %v767, %v1279
          %v1536 = vsel %vm1024, %v768, %v1280
          %v1537 = vsel %vm1025, %v769, %v1281
          %v1538 = vsel %vm1026, %v770, %v1282
          %v1539 = vsel %vm1027, %v771, %v1283
          %v1540 = vsel %vm1028, %v772, %v1284
          %v1541 = vsel %vm1029, %v773, %v1285
          %v1542 = vsel %vm1030, %v774, %v1286
          %v1543 = vsel %vm1031, %v775, %v1287
          %v1544 = vsel %vm1032, %v776, %v1288
          %v1545 = vsel %vm1033, %v777, %v1289
          %v1546 = vsel %vm1034, %v778, %v1290
          %v1547 = vsel %vm1035, %v779, %v1291
          %v1548 = vsel %vm1036, %v780, %v1292
          %v1549 = vsel %vm1037, %v781, %v1293
          %v1550 = vsel %vm1038, %v782, %v1294
          %v1551 = vsel %vm1039, %v783, %v1295
          %v1552 = vsel %vm1040, %v784, %v1296
          %v1553 = vsel %vm1041, %v785, %v1297
          %v1554 = vsel %vm1042, %v786, %v1298
          %v1555 = vsel %vm1043, %v787, %v1299
          %v1556 = vsel %vm1044, %v788, %v1300
          %v1557 = vsel %vm1045, %v789, %v1301
          %v1558 = vsel %vm1046, %v790, %v1302
          %v1559 = vsel %vm1047, %v791, %v1303
          %v1560 = vsel %vm1048, %v792, %v1304
          %v1561 = vsel %vm1049, %v793, %v1305
          %v1562 = vsel %vm1050, %v794, %v1306
          %v1563 = vsel %vm1051, %v795, %v1307
          %v1564 = vsel %vm1052, %v796, %v1308
          %v1565 = vsel %vm1053, %v797, %v1309
          %v1566 = vsel %vm1054, %v798, %v1310
          %v1567 = vsel %vm1055, %v799, %v1311
          %v1568 = vsel %vm1056, %v800, %v1312
          %v1569 = vsel %vm1057, %v801, %v1313
          %v1570 = vsel %vm1058, %v802, %v1314
          %v1571 = vsel %vm1059, %v803, %v1315
          %v1572 = vsel %vm1060, %v804, %v1316
          %v1573 = vsel %vm1061, %v805, %v1317
          %v1574 = vsel %vm1062, %v806, %v1318
          %v1575 = vsel %vm1063, %v807, %v1319
          %v1576 = vsel %vm1064, %v808, %v1320
          %v1577 = vsel %vm1065, %v809, %v1321
          %v1578 = vsel %vm1066, %v810, %v1322
          %v1579 = vsel %vm1067, %v811, %v1323
          %v1580 = vsel %vm1068, %v812, %v1324
          %v1581 = vsel %vm1069, %v813, %v1325
          %v1582 = vsel %vm1070, %v814, %v1326
          %v1583 = vsel %vm1071, %v815, %v1327
          %v1584 = vsel %vm1072, %v816, %v1328
          %v1585 = vsel %vm1073, %v817, %v1329
          %v1586 = vsel %vm1074, %v818, %v1330
          %v1587 = vsel %vm1075, %v819, %v1331
          %v1588 = vsel %vm1076, %v820, %v1332
          %v1589 = vsel %vm1077, %v821, %v1333
          %v1590 = vsel %vm1078, %v822, %v1334
          %v1591 = vsel %vm1079, %v823, %v1335
          %v1592 = vsel %vm1080, %v824, %v1336
          %v1593 = vsel %vm1081, %v825, %v1337
          %v1594 = vsel %vm1082, %v826, %v1338
          %v1595 = vsel %vm1083, %v827, %v1339
          %v1596 = vsel %vm1084, %v828, %v1340
          %v1597 = vsel %vm1085, %v829, %v1341
          %v1598 = vsel %vm1086, %v830, %v1342
          %v1599 = vsel %vm1087, %v831, %v1343
          %v1600 = vsel %vm1088, %v832, %v1344
          %v1601 = vsel %vm1089, %v833, %v1345
          %v1602 = vsel %vm1090, %v834, %v1346
          %v1603 = vsel %vm1091, %v835, %v1347
          %v1604 = vsel %vm1092, %v836, %v1348
          %v1605 = vsel %vm1093, %v837, %v1349
          %v1606 = vsel %vm1094, %v838, %v1350
          %v1607 = vsel %vm1095, %v839, %v1351
          %v1608 = vsel %vm1096, %v840, %v1352
          %v1609 = vsel %vm1097, %v841, %v1353
          %v1610 = vsel %vm1098, %v842, %v1354
          %v1611 = vsel %vm1099, %v843, %v1355
          %v1612 = vsel %vm1100, %v844, %v1356
          %v1613 = vsel %vm1101, %v845, %v1357
          %v1614 = vsel %vm1102, %v846, %v1358
          %v1615 = vsel %vm1103, %v847, %v1359
          %v1616 = vsel %vm1104, %v848, %v1360
          %v1617 = vsel %vm1105, %v849, %v1361
          %v1618 = vsel %vm1106, %v850, %v1362
          %v1619 = vsel %vm1107, %v851, %v1363
          %v1620 = vsel %vm1108, %v852, %v1364
          %v1621 = vsel %vm1109, %v853, %v1365
          %v1622 = vsel %vm1110, %v854, %v1366
          %v1623 = vsel %vm1111, %v855, %v1367
          %v1624 = vsel %vm1112, %v856, %v1368
          %v1625 = vsel %vm1113, %v857, %v1369
          %v1626 = vsel %vm1114, %v858, %v1370
          %v1627 = vsel %vm1115, %v859, %v1371
          %v1628 = vsel %vm1116, %v860, %v1372
          %v1629 = vsel %vm1117, %v861, %v1373
          %v1630 = vsel %vm1118, %v862, %v1374
          %v1631 = vsel %vm1119, %v863, %v1375
          %v1632 = vsel %vm1120, %v864, %v1376
          %v1633 = vsel %vm1121, %v865, %v1377
          %v1634 = vsel %vm1122, %v866, %v1378
          %v1635 = vsel %vm1123, %v867, %v1379
          %v1636 = vsel %vm1124, %v868, %v1380
          %v1637 = vsel %vm1125, %v869, %v1381
          %v1638 = vsel %vm1126, %v870, %v1382
          %v1639 = vsel %vm1127, %v871, %v1383
          %v1640 = vsel %vm1128, %v872, %v1384
          %v1641 = vsel %vm1129, %v873, %v1385
          %v1642 = vsel %vm1130, %v874, %v1386
          %v1643 = vsel %vm1131, %v875, %v1387
          %v1644 = vsel %vm1132, %v876, %v1388
          %v1645 = vsel %vm1133, %v877, %v1389
          %v1646 = vsel %vm1134, %v878, %v1390
          %v1647 = vsel %vm1135, %v879, %v1391
          %v1648 = vsel %vm1136, %v880, %v1392
          %v1649 = vsel %vm1137, %v881, %v1393
          %v1650 = vsel %vm1138, %v882, %v1394
          %v1651 = vsel %vm1139, %v883, %v1395
          %v1652 = vsel %vm1140, %v884, %v1396
          %v1653 = vsel %vm1141, %v885, %v1397
          %v1654 = vsel %vm1142, %v886, %v1398
          %v1655 = vsel %vm1143, %v887, %v1399
          %v1656 = vsel %vm1144, %v888, %v1400
          %v1657 = vsel %vm1145, %v889, %v1401
          %v1658 = vsel %vm1146, %v890, %v1402
          %v1659 = vsel %vm1147, %v891, %v1403
          %v1660 = vsel %vm1148, %v892, %v1404
          %v1661 = vsel %vm1149, %v893, %v1405
          %v1662 = vsel %vm1150, %v894, %v1406
          %v1663 = vsel %vm1151, %v895, %v1407
          %v1664 = vsel %vm1152, %v896, %v1408
          %v1665 = vsel %vm1153, %v897, %v1409
          %v1666 = vsel %vm1154, %v898, %v1410
          %v1667 = vsel %vm1155, %v899, %v1411
          %v1668 = vsel %vm1156, %v900, %v1412
          %v1669 = vsel %vm1157, %v901, %v1413
          %v1670 = vsel %vm1158, %v902, %v1414
          %v1671 = vsel %vm1159, %v903, %v1415
          %v1672 = vsel %vm1160, %v904, %v1416
          %v1673 = vsel %vm1161, %v905, %v1417
          %v1674 = vsel %vm1162, %v906, %v1418
          %v1675 = vsel %vm1163, %v907, %v1419
          %v1676 = vsel %vm1164, %v908, %v1420
          %v1677 = vsel %vm1165, %v909, %v1421
          %v1678 = vsel %vm1166, %v910, %v1422
          %v1679 = vsel %vm1167, %v911, %v1423
          %v1680 = vsel %vm1168, %v912, %v1424
          %v1681 = vsel %vm1169, %v913, %v1425
          %v1682 = vsel %vm1170, %v914, %v1426
          %v1683 = vsel %vm1171, %v915, %v1427
          %v1684 = vsel %vm1172, %v916, %v1428
          %v1685 = vsel %vm1173, %v917, %v1429
          %v1686 = vsel %vm1174, %v918, %v1430
          %v1687 = vsel %vm1175, %v919, %v1431
          %v1688 = vsel %vm1176, %v920, %v1432
          %v1689 = vsel %vm1177, %v921, %v1433
          %v1690 = vsel %vm1178, %v922, %v1434
          %v1691 = vsel %vm1179, %v923, %v1435
          %v1692 = vsel %vm1180, %v924, %v1436
          %v1693 = vsel %vm1181, %v925, %v1437
          %v1694 = vsel %vm1182, %v926, %v1438
          %v1695 = vsel %vm1183, %v927, %v1439
          %v1696 = vsel %vm1184, %v928, %v1440
          %v1697 = vsel %vm1185, %v929, %v1441
          %v1698 = vsel %vm1186, %v930, %v1442
          %v1699 = vsel %vm1187, %v931, %v1443
          %v1700 = vsel %vm1188, %v932, %v1444
          %v1701 = vsel %vm1189, %v933, %v1445
          %v1702 = vsel %vm1190, %v934, %v1446
          %v1703 = vsel %vm1191, %v935, %v1447
          %v1704 = vsel %vm1192, %v936, %v1448
          %v1705 = vsel %vm1193, %v937, %v1449
          %v1706 = vsel %vm1194, %v938, %v1450
          %v1707 = vsel %vm1195, %v939, %v1451
          %v1708 = vsel %vm1196, %v940, %v1452
          %v1709 = vsel %vm1197, %v941, %v1453
          %v1710 = vsel %vm1198, %v942, %v1454
          %v1711 = vsel %vm1199, %v943, %v1455
          %v1712 = vsel %vm1200, %v944, %v1456
          %v1713 = vsel %vm1201, %v945, %v1457
          %v1714 = vsel %vm1202, %v946, %v1458
          %v1715 = vsel %vm1203, %v947, %v1459
          %v1716 = vsel %vm1204, %v948, %v1460
          %v1717 = vsel %vm1205, %v949, %v1461
          %v1718 = vsel %vm1206, %v950, %v1462
          %v1719 = vsel %vm1207, %v951, %v1463
          %v1720 = vsel %vm1208, %v952, %v1464
          %v1721 = vsel %vm1209, %v953, %v1465
          %v1722 = vsel %vm1210, %v954, %v1466
          %v1723 = vsel %vm1211, %v955, %v1467
          %v1724 = vsel %vm1212, %v956, %v1468
          %v1725 = vsel %vm1213, %v957, %v1469
          %v1726 = vsel %vm1214, %v958, %v1470
          %v1727 = vsel %vm1215, %v959, %v1471
          %v1728 = vsel %vm1216, %v960, %v1472
          %v1729 = vsel %vm1217, %v961, %v1473
          %v1730 = vsel %vm1218, %v962, %v1474
          %v1731 = vsel %vm1219, %v963, %v1475
          %v1732 = vsel %vm1220, %v964, %v1476
          %v1733 = vsel %vm1221, %v965, %v1477
          %v1734 = vsel %vm1222, %v966, %v1478
          %v1735 = vsel %vm1223, %v967, %v1479
          %v1736 = vsel %vm1224, %v968, %v1480
          %v1737 = vsel %vm1225, %v969, %v1481
          %v1738 = vsel %vm1226, %v970, %v1482
          %v1739 = vsel %vm1227, %v971, %v1483
          %v1740 = vsel %vm1228, %v972, %v1484
          %v1741 = vsel %vm1229, %v973, %v1485
          %v1742 = vsel %vm1230, %v974, %v1486
          %v1743 = vsel %vm1231, %v975, %v1487
          %v1744 = vld [vmem:[%s375] sm:$0xff]
          %v1745 = vld [vmem:[%s375 + $0x8] sm:$0xff]
          %v1746 = vld [vmem:[%s375 + $0x10] sm:$0xff]
          %v1747 = vld [vmem:[%s375 + $0x18] sm:$0xff]
          %v1748 = vld [vmem:[%s375 + $0x20] sm:$0xff]
          %v1749 = vld [vmem:[%s375 + $0x28] sm:$0xff]
          %v1750 = vld [vmem:[%s375 + $0x30] sm:$0xff]
          %v1751 = vld [vmem:[%s375 + $0x38] sm:$0xff]
          %v1752 = vld [vmem:[%s375 + $0x40] sm:$0xff]
          %v1753 = vld [vmem:[%s375 + $0x48] sm:$0xff]
          %v1754 = vld [vmem:[%s375 + $0x50] sm:$0xff]
          %v1755 = vld [vmem:[%s375 + $0x58] sm:$0xff]
          %v1756 = vld [vmem:[%s375 + $0x60] sm:$0xff]
          %v1757 = vld [vmem:[%s375 + $0x68] sm:$0xff]
          %v1758 = vld [vmem:[%s375 + $0x70] sm:$0xff]
          %v1759 = vld [vmem:[%s375 + $0x78] sm:$0xff]
          %v1760 = vld [vmem:[%s375 + $0x80] sm:$0xff]
          %v1761 = vld [vmem:[%s375 + $0x88] sm:$0xff]
          %v1762 = vld [vmem:[%s375 + $0x90] sm:$0xff]
          %v1763 = vld [vmem:[%s375 + $0x98] sm:$0xff]
          %v1764 = vld [vmem:[%s375 + $0xa0] sm:$0xff]
          %v1765 = vld [vmem:[%s375 + $0xa8] sm:$0xff]
          %v1766 = vld [vmem:[%s375 + $0xb0] sm:$0xff]
          %v1767 = vld [vmem:[%s375 + $0xb8] sm:$0xff]
          %v1768 = vld [vmem:[%s375 + $0xc0] sm:$0xff]
          %v1769 = vld [vmem:[%s375 + $0xc8] sm:$0xff]
          %v1770 = vld [vmem:[%s375 + $0xd0] sm:$0xff]
          %v1771 = vld [vmem:[%s375 + $0xd8] sm:$0xff]
          %v1772 = vld [vmem:[%s375 + $0xe0] sm:$0xff]
          %v1773 = vld [vmem:[%s375 + $0xe8] sm:$0xff]
          %v1774 = vld [vmem:[%s375 + $0xf0] sm:$0xff]
          %v1775 = vld [vmem:[%s375 + $0xf8] sm:$0xff]
          %v1776 = vld [vmem:[%s375 + $0x100] sm:$0xff]
          %v1777 = vld [vmem:[%s375 + $0x108] sm:$0xff]
          %v1778 = vld [vmem:[%s375 + $0x110] sm:$0xff]
          %v1779 = vld [vmem:[%s375 + $0x118] sm:$0xff]
          %v1780 = vld [vmem:[%s375 + $0x120] sm:$0xff]
          %v1781 = vld [vmem:[%s375 + $0x128] sm:$0xff]
          %v1782 = vld [vmem:[%s375 + $0x130] sm:$0xff]
          %v1783 = vld [vmem:[%s375 + $0x138] sm:$0xff]
          %v1784 = vld [vmem:[%s375 + $0x140] sm:$0xff]
          %v1785 = vld [vmem:[%s375 + $0x148] sm:$0xff]
          %v1786 = vld [vmem:[%s375 + $0x150] sm:$0xff]
          %v1787 = vld [vmem:[%s375 + $0x158] sm:$0xff]
          %v1788 = vld [vmem:[%s375 + $0x160] sm:$0xff]
          %v1789 = vld [vmem:[%s375 + $0x168] sm:$0xff]
          %v1790 = vld [vmem:[%s375 + $0x170] sm:$0xff]
          %v1791 = vld [vmem:[%s375 + $0x178] sm:$0xff]
          %v1792 = vld [vmem:[%s375 + $0x180] sm:$0xff]
          %v1793 = vld [vmem:[%s375 + $0x188] sm:$0xff]
          %v1794 = vld [vmem:[%s375 + $0x190] sm:$0xff]
          %v1795 = vld [vmem:[%s375 + $0x198] sm:$0xff]
          %v1796 = vld [vmem:[%s375 + $0x1a0] sm:$0xff]
          %v1797 = vld [vmem:[%s375 + $0x1a8] sm:$0xff]
          %v1798 = vld [vmem:[%s375 + $0x1b0] sm:$0xff]
          %v1799 = vld [vmem:[%s375 + $0x1b8] sm:$0xff]
          %v1800 = vld [vmem:[%s375 + $0x1c0] sm:$0xff]
          %v1801 = vld [vmem:[%s375 + $0x1c8] sm:$0xff]
          %v1802 = vld [vmem:[%s375 + $0x1d0] sm:$0xff]
          %v1803 = vld [vmem:[%s375 + $0x1d8] sm:$0xff]
          %v1804 = vld [vmem:[%s375 + $0x1e0] sm:$0xff]
          %v1805 = vld [vmem:[%s375 + $0x1e8] sm:$0xff]
          %v1806 = vld [vmem:[%s375 + $0x1f0] sm:$0xff]
          %v1807 = vld [vmem:[%s375 + $0x1f8] sm:$0xff]
          %v1808 = vunpack.c.0.s8 %v1744
          %v1809 = vunpack.c.0.s8 %v1745
          %v1810 = vunpack.c.0.s8 %v1746
          %v1811 = vunpack.c.0.s8 %v1747
          %v1812 = vunpack.c.0.s8 %v1748
          %v1813 = vunpack.c.0.s8 %v1749
          %v1814 = vunpack.c.0.s8 %v1750
          %v1815 = vunpack.c.0.s8 %v1751
          %v1816 = vunpack.c.1.s8 %v1744
          %v1817 = vunpack.c.1.s8 %v1745
          %v1818 = vunpack.c.1.s8 %v1746
          %v1819 = vunpack.c.1.s8 %v1747
          %v1820 = vunpack.c.1.s8 %v1748
          %v1821 = vunpack.c.1.s8 %v1749
          %v1822 = vunpack.c.1.s8 %v1750
          %v1823 = vunpack.c.1.s8 %v1751
          %v1824 = vunpack.c.2.s8 %v1744
          %v1825 = vunpack.c.2.s8 %v1745
          %v1826 = vunpack.c.2.s8 %v1746
          %v1827 = vunpack.c.2.s8 %v1747
          %v1828 = vunpack.c.2.s8 %v1748
          %v1829 = vunpack.c.2.s8 %v1749
          %v1830 = vunpack.c.2.s8 %v1750
          %v1831 = vunpack.c.2.s8 %v1751
          %v1832 = vunpack.c.3.s8 %v1744
          %v1833 = vunpack.c.3.s8 %v1745
          %v1834 = vunpack.c.3.s8 %v1746
          %v1835 = vunpack.c.3.s8 %v1747
          %v1836 = vunpack.c.3.s8 %v1748
          %v1837 = vunpack.c.3.s8 %v1749
          %v1838 = vunpack.c.3.s8 %v1750
          %v1839 = vunpack.c.3.s8 %v1751
          %v1840 = vunpack.c.0.s8 %v1752
          %v1841 = vunpack.c.0.s8 %v1753
          %v1842 = vunpack.c.0.s8 %v1754
          %v1843 = vunpack.c.0.s8 %v1755
          %v1844 = vunpack.c.0.s8 %v1756
          %v1845 = vunpack.c.0.s8 %v1757
          %v1846 = vunpack.c.0.s8 %v1758
          %v1847 = vunpack.c.0.s8 %v1759
          %v1848 = vunpack.c.1.s8 %v1752
          %v1849 = vunpack.c.1.s8 %v1753
          %v1850 = vunpack.c.1.s8 %v1754
          %v1851 = vunpack.c.1.s8 %v1755
          %v1852 = vunpack.c.1.s8 %v1756
          %v1853 = vunpack.c.1.s8 %v1757
          %v1854 = vunpack.c.1.s8 %v1758
          %v1855 = vunpack.c.1.s8 %v1759
          %v1856 = vunpack.c.2.s8 %v1752
          %v1857 = vunpack.c.2.s8 %v1753
          %v1858 = vunpack.c.2.s8 %v1754
          %v1859 = vunpack.c.2.s8 %v1755
          %v1860 = vunpack.c.2.s8 %v1756
          %v1861 = vunpack.c.2.s8 %v1757
          %v1862 = vunpack.c.2.s8 %v1758
          %v1863 = vunpack.c.2.s8 %v1759
          %v1864 = vunpack.c.3.s8 %v1752
          %v1865 = vunpack.c.3.s8 %v1753
          %v1866 = vunpack.c.3.s8 %v1754
          %v1867 = vunpack.c.3.s8 %v1755
          %v1868 = vunpack.c.3.s8 %v1756
          %v1869 = vunpack.c.3.s8 %v1757
          %v1870 = vunpack.c.3.s8 %v1758
          %v1871 = vunpack.c.3.s8 %v1759
          %v1872 = vunpack.c.0.s8 %v1760
          %v1873 = vunpack.c.0.s8 %v1761
          %v1874 = vunpack.c.0.s8 %v1762
          %v1875 = vunpack.c.0.s8 %v1763
          %v1876 = vunpack.c.0.s8 %v1764
          %v1877 = vunpack.c.0.s8 %v1765
          %v1878 = vunpack.c.0.s8 %v1766
          %v1879 = vunpack.c.0.s8 %v1767
          %v1880 = vunpack.c.1.s8 %v1760
          %v1881 = vunpack.c.1.s8 %v1761
          %v1882 = vunpack.c.1.s8 %v1762
          %v1883 = vunpack.c.1.s8 %v1763
          %v1884 = vunpack.c.1.s8 %v1764
          %v1885 = vunpack.c.1.s8 %v1765
          %v1886 = vunpack.c.1.s8 %v1766
          %v1887 = vunpack.c.1.s8 %v1767
          %v1888 = vunpack.c.2.s8 %v1760
          %v1889 = vunpack.c.2.s8 %v1761
          %v1890 = vunpack.c.2.s8 %v1762
          %v1891 = vunpack.c.2.s8 %v1763
          %v1892 = vunpack.c.2.s8 %v1764
          %v1893 = vunpack.c.2.s8 %v1765
          %v1894 = vunpack.c.2.s8 %v1766
          %v1895 = vunpack.c.2.s8 %v1767
          %v1896 = vunpack.c.3.s8 %v1760
          %v1897 = vunpack.c.3.s8 %v1761
          %v1898 = vunpack.c.3.s8 %v1762
          %v1899 = vunpack.c.3.s8 %v1763
          %v1900 = vunpack.c.3.s8 %v1764
          %v1901 = vunpack.c.3.s8 %v1765
          %v1902 = vunpack.c.3.s8 %v1766
          %v1903 = vunpack.c.3.s8 %v1767
          %v1904 = vunpack.c.0.s8 %v1768
          %v1905 = vunpack.c.0.s8 %v1769
          %v1906 = vunpack.c.0.s8 %v1770
          %v1907 = vunpack.c.0.s8 %v1771
          %v1908 = vunpack.c.0.s8 %v1772
          %v1909 = vunpack.c.0.s8 %v1773
          %v1910 = vunpack.c.0.s8 %v1774
          %v1911 = vunpack.c.0.s8 %v1775
          %v1912 = vunpack.c.1.s8 %v1768
          %v1913 = vunpack.c.1.s8 %v1769
          %v1914 = vunpack.c.1.s8 %v1770
          %v1915 = vunpack.c.1.s8 %v1771
          %v1916 = vunpack.c.1.s8 %v1772
          %v1917 = vunpack.c.1.s8 %v1773
          %v1918 = vunpack.c.1.s8 %v1774
          %v1919 = vunpack.c.1.s8 %v1775
          %v1920 = vunpack.c.2.s8 %v1768
          %v1921 = vunpack.c.2.s8 %v1769
          %v1922 = vunpack.c.2.s8 %v1770
          %v1923 = vunpack.c.2.s8 %v1771
          %v1924 = vunpack.c.2.s8 %v1772
          %v1925 = vunpack.c.2.s8 %v1773
          %v1926 = vunpack.c.2.s8 %v1774
          %v1927 = vunpack.c.2.s8 %v1775
          %v1928 = vunpack.c.3.s8 %v1768
          %v1929 = vunpack.c.3.s8 %v1769
          %v1930 = vunpack.c.3.s8 %v1770
          %v1931 = vunpack.c.3.s8 %v1771
          %v1932 = vunpack.c.3.s8 %v1772
          %v1933 = vunpack.c.3.s8 %v1773
          %v1934 = vunpack.c.3.s8 %v1774
          %v1935 = vunpack.c.3.s8 %v1775
          %v1936 = vunpack.c.0.s8 %v1776
          %v1937 = vunpack.c.0.s8 %v1777
          %v1938 = vunpack.c.0.s8 %v1778
          %v1939 = vunpack.c.0.s8 %v1779
          %v1940 = vunpack.c.0.s8 %v1780
          %v1941 = vunpack.c.0.s8 %v1781
          %v1942 = vunpack.c.0.s8 %v1782
          %v1943 = vunpack.c.0.s8 %v1783
          %v1944 = vunpack.c.1.s8 %v1776
          %v1945 = vunpack.c.1.s8 %v1777
          %v1946 = vunpack.c.1.s8 %v1778
          %v1947 = vunpack.c.1.s8 %v1779
          %v1948 = vunpack.c.1.s8 %v1780
          %v1949 = vunpack.c.1.s8 %v1781
          %v1950 = vunpack.c.1.s8 %v1782
          %v1951 = vunpack.c.1.s8 %v1783
          %v1952 = vunpack.c.2.s8 %v1776
          %v1953 = vunpack.c.2.s8 %v1777
          %v1954 = vunpack.c.2.s8 %v1778
          %v1955 = vunpack.c.2.s8 %v1779
          %v1956 = vunpack.c.2.s8 %v1780
          %v1957 = vunpack.c.2.s8 %v1781
          %v1958 = vunpack.c.2.s8 %v1782
          %v1959 = vunpack.c.2.s8 %v1783
          %v1960 = vunpack.c.3.s8 %v1776
          %v1961 = vunpack.c.3.s8 %v1777
          %v1962 = vunpack.c.3.s8 %v1778
          %v1963 = vunpack.c.3.s8 %v1779
          %v1964 = vunpack.c.3.s8 %v1780
          %v1965 = vunpack.c.3.s8 %v1781
          %v1966 = vunpack.c.3.s8 %v1782
          %v1967 = vunpack.c.3.s8 %v1783
          %v1968 = vunpack.c.0.s8 %v1784
          %v1969 = vunpack.c.0.s8 %v1785
          %v1970 = vunpack.c.0.s8 %v1786
          %v1971 = vunpack.c.0.s8 %v1787
          %v1972 = vunpack.c.0.s8 %v1788
          %v1973 = vunpack.c.0.s8 %v1789
          %v1974 = vunpack.c.0.s8 %v1790
          %v1975 = vunpack.c.0.s8 %v1791
          %v1976 = vunpack.c.1.s8 %v1784
          %v1977 = vunpack.c.1.s8 %v1785
          %v1978 = vunpack.c.1.s8 %v1786
          %v1979 = vunpack.c.1.s8 %v1787
          %v1980 = vunpack.c.1.s8 %v1788
          %v1981 = vunpack.c.1.s8 %v1789
          %v1982 = vunpack.c.1.s8 %v1790
          %v1983 = vunpack.c.1.s8 %v1791
          %v1984 = vunpack.c.2.s8 %v1784
          %v1985 = vunpack.c.2.s8 %v1785
          %v1986 = vunpack.c.2.s8 %v1786
          %v1987 = vunpack.c.2.s8 %v1787
          %v1988 = vunpack.c.2.s8 %v1788
          %v1989 = vunpack.c.2.s8 %v1789
          %v1990 = vunpack.c.2.s8 %v1790
          %v1991 = vunpack.c.2.s8 %v1791
          %v1992 = vunpack.c.3.s8 %v1784
          %v1993 = vunpack.c.3.s8 %v1785
          %v1994 = vunpack.c.3.s8 %v1786
          %v1995 = vunpack.c.3.s8 %v1787
          %v1996 = vunpack.c.3.s8 %v1788
          %v1997 = vunpack.c.3.s8 %v1789
          %v1998 = vunpack.c.3.s8 %v1790
          %v1999 = vunpack.c.3.s8 %v1791
          %v2000 = vunpack.c.0.s8 %v1792
          %v2001 = vunpack.c.0.s8 %v1793
          %v2002 = vunpack.c.0.s8 %v1794
          %v2003 = vunpack.c.0.s8 %v1795
          %v2004 = vunpack.c.0.s8 %v1796
          %v2005 = vunpack.c.0.s8 %v1797
          %v2006 = vunpack.c.0.s8 %v1798
          %v2007 = vunpack.c.0.s8 %v1799
          %v2008 = vunpack.c.1.s8 %v1792
          %v2009 = vunpack.c.1.s8 %v1793
          %v2010 = vunpack.c.1.s8 %v1794
          %v2011 = vunpack.c.1.s8 %v1795
          %v2012 = vunpack.c.1.s8 %v1796
          %v2013 = vunpack.c.1.s8 %v1797
          %v2014 = vunpack.c.1.s8 %v1798
          %v2015 = vunpack.c.1.s8 %v1799
          %v2016 = vunpack.c.2.s8 %v1792
          %v2017 = vunpack.c.2.s8 %v1793
          %v2018 = vunpack.c.2.s8 %v1794
          %v2019 = vunpack.c.2.s8 %v1795
          %v2020 = vunpack.c.2.s8 %v1796
          %v2021 = vunpack.c.2.s8 %v1797
          %v2022 = vunpack.c.2.s8 %v1798
          %v2023 = vunpack.c.2.s8 %v1799
          %v2024 = vunpack.c.3.s8 %v1792
          %v2025 = vunpack.c.3.s8 %v1793
          %v2026 = vunpack.c.3.s8 %v1794
          %v2027 = vunpack.c.3.s8 %v1795
          %v2028 = vunpack.c.3.s8 %v1796
          %v2029 = vunpack.c.3.s8 %v1797
          %v2030 = vunpack.c.3.s8 %v1798
          %v2031 = vunpack.c.3.s8 %v1799
          %v2032 = vunpack.c.0.s8 %v1800
          %v2033 = vunpack.c.0.s8 %v1801
          %v2034 = vunpack.c.0.s8 %v1802
          %v2035 = vunpack.c.0.s8 %v1803
          %v2036 = vunpack.c.0.s8 %v1804
          %v2037 = vunpack.c.0.s8 %v1805
          %v2038 = vunpack.c.0.s8 %v1806
          %v2039 = vunpack.c.0.s8 %v1807
          %v2040 = vunpack.c.1.s8 %v1800
          %v2041 = vunpack.c.1.s8 %v1801
          %v2042 = vunpack.c.1.s8 %v1802
          %v2043 = vunpack.c.1.s8 %v1803
          %v2044 = vunpack.c.1.s8 %v1804
          %v2045 = vunpack.c.1.s8 %v1805
          %v2046 = vunpack.c.1.s8 %v1806
          %v2047 = vunpack.c.1.s8 %v1807
          %v2048 = vunpack.c.2.s8 %v1800
          %v2049 = vunpack.c.2.s8 %v1801
          %v2050 = vunpack.c.2.s8 %v1802
          %v2051 = vunpack.c.2.s8 %v1803
          %v2052 = vunpack.c.2.s8 %v1804
          %v2053 = vunpack.c.2.s8 %v1805
          %v2054 = vunpack.c.2.s8 %v1806
          %v2055 = vunpack.c.2.s8 %v1807
          %v2056 = vunpack.c.3.s8 %v1800
          %v2057 = vunpack.c.3.s8 %v1801
          %v2058 = vunpack.c.3.s8 %v1802
          %v2059 = vunpack.c.3.s8 %v1803
          %v2060 = vunpack.c.3.s8 %v1804
          %v2061 = vunpack.c.3.s8 %v1805
          %v2062 = vunpack.c.3.s8 %v1806
          %v2063 = vunpack.c.3.s8 %v1807
          %v2064 = vcvt.s32.f32 %v1808
          %v2065 = vcvt.s32.f32 %v1809
          %v2066 = vcvt.s32.f32 %v1810
          %v2067 = vcvt.s32.f32 %v1811
          %v2068 = vcvt.s32.f32 %v1812
          %v2069 = vcvt.s32.f32 %v1813
          %v2070 = vcvt.s32.f32 %v1814
          %v2071 = vcvt.s32.f32 %v1815
          %v2072 = vcvt.s32.f32 %v1816
          %v2073 = vcvt.s32.f32 %v1817
          %v2074 = vcvt.s32.f32 %v1818
          %v2075 = vcvt.s32.f32 %v1819
          %v2076 = vcvt.s32.f32 %v1820
          %v2077 = vcvt.s32.f32 %v1821
          %v2078 = vcvt.s32.f32 %v1822
          %v2079 = vcvt.s32.f32 %v1823
          %v2080 = vcvt.s32.f32 %v1824
          %v2081 = vcvt.s32.f32 %v1825
          %v2082 = vcvt.s32.f32 %v1826
          %v2083 = vcvt.s32.f32 %v1827
          %v2084 = vcvt.s32.f32 %v1828
          %v2085 = vcvt.s32.f32 %v1829
          %v2086 = vcvt.s32.f32 %v1830
          %v2087 = vcvt.s32.f32 %v1831
          %v2088 = vcvt.s32.f32 %v1832
          %v2089 = vcvt.s32.f32 %v1833
          %v2090 = vcvt.s32.f32 %v1834
          %v2091 = vcvt.s32.f32 %v1835
          %v2092 = vcvt.s32.f32 %v1836
          %v2093 = vcvt.s32.f32 %v1837
          %v2094 = vcvt.s32.f32 %v1838
          %v2095 = vcvt.s32.f32 %v1839
          %v2096 = vcvt.s32.f32 %v1840
          %v2097 = vcvt.s32.f32 %v1841
          %v2098 = vcvt.s32.f32 %v1842
          %v2099 = vcvt.s32.f32 %v1843
          %v2100 = vcvt.s32.f32 %v1844
          %v2101 = vcvt.s32.f32 %v1845
          %v2102 = vcvt.s32.f32 %v1846
          %v2103 = vcvt.s32.f32 %v1847
          %v2104 = vcvt.s32.f32 %v1848
          %v2105 = vcvt.s32.f32 %v1849
          %v2106 = vcvt.s32.f32 %v1850
          %v2107 = vcvt.s32.f32 %v1851
          %v2108 = vcvt.s32.f32 %v1852
          %v2109 = vcvt.s32.f32 %v1853
          %v2110 = vcvt.s32.f32 %v1854
          %v2111 = vcvt.s32.f32 %v1855
          %v2112 = vcvt.s32.f32 %v1856
          %v2113 = vcvt.s32.f32 %v1857
          %v2114 = vcvt.s32.f32 %v1858
          %v2115 = vcvt.s32.f32 %v1859
          %v2116 = vcvt.s32.f32 %v1860
          %v2117 = vcvt.s32.f32 %v1861
          %v2118 = vcvt.s32.f32 %v1862
          %v2119 = vcvt.s32.f32 %v1863
          %v2120 = vcvt.s32.f32 %v1864
          %v2121 = vcvt.s32.f32 %v1865
          %v2122 = vcvt.s32.f32 %v1866
          %v2123 = vcvt.s32.f32 %v1867
          %v2124 = vcvt.s32.f32 %v1868
          %v2125 = vcvt.s32.f32 %v1869
          %v2126 = vcvt.s32.f32 %v1870
          %v2127 = vcvt.s32.f32 %v1871
          %v2128 = vcvt.s32.f32 %v1872
          %v2129 = vcvt.s32.f32 %v1873
          %v2130 = vcvt.s32.f32 %v1874
          %v2131 = vcvt.s32.f32 %v1875
          %v2132 = vcvt.s32.f32 %v1876
          %v2133 = vcvt.s32.f32 %v1877
          %v2134 = vcvt.s32.f32 %v1878
          %v2135 = vcvt.s32.f32 %v1879
          %v2136 = vcvt.s32.f32 %v1880
          %v2137 = vcvt.s32.f32 %v1881
          %v2138 = vcvt.s32.f32 %v1882
          %v2139 = vcvt.s32.f32 %v1883
          %v2140 = vcvt.s32.f32 %v1884
          %v2141 = vcvt.s32.f32 %v1885
          %v2142 = vcvt.s32.f32 %v1886
          %v2143 = vcvt.s32.f32 %v1887
          %v2144 = vcvt.s32.f32 %v1888
          %v2145 = vcvt.s32.f32 %v1889
          %v2146 = vcvt.s32.f32 %v1890
          %v2147 = vcvt.s32.f32 %v1891
          %v2148 = vcvt.s32.f32 %v1892
          %v2149 = vcvt.s32.f32 %v1893
          %v2150 = vcvt.s32.f32 %v1894
          %v2151 = vcvt.s32.f32 %v1895
          %v2152 = vcvt.s32.f32 %v1896
          %v2153 = vcvt.s32.f32 %v1897
          %v2154 = vcvt.s32.f32 %v1898
          %v2155 = vcvt.s32.f32 %v1899
          %v2156 = vcvt.s32.f32 %v1900
          %v2157 = vcvt.s32.f32 %v1901
          %v2158 = vcvt.s32.f32 %v1902
          %v2159 = vcvt.s32.f32 %v1903
          %v2160 = vcvt.s32.f32 %v1904
          %v2161 = vcvt.s32.f32 %v1905
          %v2162 = vcvt.s32.f32 %v1906
          %v2163 = vcvt.s32.f32 %v1907
          %v2164 = vcvt.s32.f32 %v1908
          %v2165 = vcvt.s32.f32 %v1909
          %v2166 = vcvt.s32.f32 %v1910
          %v2167 = vcvt.s32.f32 %v1911
          %v2168 = vcvt.s32.f32 %v1912
          %v2169 = vcvt.s32.f32 %v1913
          %v2170 = vcvt.s32.f32 %v1914
          %v2171 = vcvt.s32.f32 %v1915
          %v2172 = vcvt.s32.f32 %v1916
          %v2173 = vcvt.s32.f32 %v1917
          %v2174 = vcvt.s32.f32 %v1918
          %v2175 = vcvt.s32.f32 %v1919
          %v2176 = vcvt.s32.f32 %v1920
          %v2177 = vcvt.s32.f32 %v1921
          %v2178 = vcvt.s32.f32 %v1922
          %v2179 = vcvt.s32.f32 %v1923
          %v2180 = vcvt.s32.f32 %v1924
          %v2181 = vcvt.s32.f32 %v1925
          %v2182 = vcvt.s32.f32 %v1926
          %v2183 = vcvt.s32.f32 %v1927
          %v2184 = vcvt.s32.f32 %v1928
          %v2185 = vcvt.s32.f32 %v1929
          %v2186 = vcvt.s32.f32 %v1930
          %v2187 = vcvt.s32.f32 %v1931
          %v2188 = vcvt.s32.f32 %v1932
          %v2189 = vcvt.s32.f32 %v1933
          %v2190 = vcvt.s32.f32 %v1934
          %v2191 = vcvt.s32.f32 %v1935
          %v2192 = vcvt.s32.f32 %v1936
          %v2193 = vcvt.s32.f32 %v1937
          %v2194 = vcvt.s32.f32 %v1938
          %v2195 = vcvt.s32.f32 %v1939
          %v2196 = vcvt.s32.f32 %v1940
          %v2197 = vcvt.s32.f32 %v1941
          %v2198 = vcvt.s32.f32 %v1942
          %v2199 = vcvt.s32.f32 %v1943
          %v2200 = vcvt.s32.f32 %v1944
          %v2201 = vcvt.s32.f32 %v1945
          %v2202 = vcvt.s32.f32 %v1946
          %v2203 = vcvt.s32.f32 %v1947
          %v2204 = vcvt.s32.f32 %v1948
          %v2205 = vcvt.s32.f32 %v1949
          %v2206 = vcvt.s32.f32 %v1950
          %v2207 = vcvt.s32.f32 %v1951
          %v2208 = vcvt.s32.f32 %v1952
          %v2209 = vcvt.s32.f32 %v1953
          %v2210 = vcvt.s32.f32 %v1954
          %v2211 = vcvt.s32.f32 %v1955
          %v2212 = vcvt.s32.f32 %v1956
          %v2213 = vcvt.s32.f32 %v1957
          %v2214 = vcvt.s32.f32 %v1958
          %v2215 = vcvt.s32.f32 %v1959
          %v2216 = vcvt.s32.f32 %v1960
          %v2217 = vcvt.s32.f32 %v1961
          %v2218 = vcvt.s32.f32 %v1962
          %v2219 = vcvt.s32.f32 %v1963
          %v2220 = vcvt.s32.f32 %v1964
          %v2221 = vcvt.s32.f32 %v1965
          %v2222 = vcvt.s32.f32 %v1966
          %v2223 = vcvt.s32.f32 %v1967
          %v2224 = vcvt.s32.f32 %v1968
          %v2225 = vcvt.s32.f32 %v1969
          %v2226 = vcvt.s32.f32 %v1970
          %v2227 = vcvt.s32.f32 %v1971
          %v2228 = vcvt.s32.f32 %v1972
          %v2229 = vcvt.s32.f32 %v1973
          %v2230 = vcvt.s32.f32 %v1974
          %v2231 = vcvt.s32.f32 %v1975
          %v2232 = vcvt.s32.f32 %v1976
          %v2233 = vcvt.s32.f32 %v1977
          %v2234 = vcvt.s32.f32 %v1978
          %v2235 = vcvt.s32.f32 %v1979
          %v2236 = vcvt.s32.f32 %v1980
          %v2237 = vcvt.s32.f32 %v1981
          %v2238 = vcvt.s32.f32 %v1982
          %v2239 = vcvt.s32.f32 %v1983
          %v2240 = vcvt.s32.f32 %v1984
          %v2241 = vcvt.s32.f32 %v1985
          %v2242 = vcvt.s32.f32 %v1986
          %v2243 = vcvt.s32.f32 %v1987
          %v2244 = vcvt.s32.f32 %v1988
          %v2245 = vcvt.s32.f32 %v1989
          %v2246 = vcvt.s32.f32 %v1990
          %v2247 = vcvt.s32.f32 %v1991
          %v2248 = vcvt.s32.f32 %v1992
          %v2249 = vcvt.s32.f32 %v1993
          %v2250 = vcvt.s32.f32 %v1994
          %v2251 = vcvt.s32.f32 %v1995
          %v2252 = vcvt.s32.f32 %v1996
          %v2253 = vcvt.s32.f32 %v1997
          %v2254 = vcvt.s32.f32 %v1998
          %v2255 = vcvt.s32.f32 %v1999
          %v2256 = vcvt.s32.f32 %v2000
          %v2257 = vcvt.s32.f32 %v2001
          %v2258 = vcvt.s32.f32 %v2002
          %v2259 = vcvt.s32.f32 %v2003
          %v2260 = vcvt.s32.f32 %v2004
          %v2261 = vcvt.s32.f32 %v2005
          %v2262 = vcvt.s32.f32 %v2006
          %v2263 = vcvt.s32.f32 %v2007
          %v2264 = vcvt.s32.f32 %v2008
          %v2265 = vcvt.s32.f32 %v2009
          %v2266 = vcvt.s32.f32 %v2010
          %v2267 = vcvt.s32.f32 %v2011
          %v2268 = vcvt.s32.f32 %v2012
          %v2269 = vcvt.s32.f32 %v2013
          %v2270 = vcvt.s32.f32 %v2014
          %v2271 = vcvt.s32.f32 %v2015
          %v2272 = vcvt.s32.f32 %v2016
          %v2273 = vcvt.s32.f32 %v2017
          %v2274 = vcvt.s32.f32 %v2018
          %v2275 = vcvt.s32.f32 %v2019
          %v2276 = vcvt.s32.f32 %v2020
          %v2277 = vcvt.s32.f32 %v2021
          %v2278 = vcvt.s32.f32 %v2022
          %v2279 = vcvt.s32.f32 %v2023
          %v2280 = vcvt.s32.f32 %v2024
          %v2281 = vcvt.s32.f32 %v2025
          %v2282 = vcvt.s32.f32 %v2026
          %v2283 = vcvt.s32.f32 %v2027
          %v2284 = vcvt.s32.f32 %v2028
          %v2285 = vcvt.s32.f32 %v2029
          %v2286 = vcvt.s32.f32 %v2030
          %v2287 = vcvt.s32.f32 %v2031
          %v2288 = vcvt.s32.f32 %v2032
          %v2289 = vcvt.s32.f32 %v2033
          %v2290 = vcvt.s32.f32 %v2034
          %v2291 = vcvt.s32.f32 %v2035
          %v2292 = vcvt.s32.f32 %v2036
          %v2293 = vcvt.s32.f32 %v2037
          %v2294 = vcvt.s32.f32 %v2038
          %v2295 = vcvt.s32.f32 %v2039
          %v2296 = vcvt.s32.f32 %v2040
          %v2297 = vcvt.s32.f32 %v2041
          %v2298 = vcvt.s32.f32 %v2042
          %v2299 = vcvt.s32.f32 %v2043
          %v2300 = vcvt.s32.f32 %v2044
          %v2301 = vcvt.s32.f32 %v2045
          %v2302 = vcvt.s32.f32 %v2046
          %v2303 = vcvt.s32.f32 %v2047
          %v2304 = vcvt.s32.f32 %v2048
          %v2305 = vcvt.s32.f32 %v2049
          %v2306 = vcvt.s32.f32 %v2050
          %v2307 = vcvt.s32.f32 %v2051
          %v2308 = vcvt.s32.f32 %v2052
          %v2309 = vcvt.s32.f32 %v2053
          %v2310 = vcvt.s32.f32 %v2054
          %v2311 = vcvt.s32.f32 %v2055
          %v2312 = vcvt.s32.f32 %v2056
          %v2313 = vcvt.s32.f32 %v2057
          %v2314 = vcvt.s32.f32 %v2058
          %v2315 = vcvt.s32.f32 %v2059
          %v2316 = vcvt.s32.f32 %v2060
          %v2317 = vcvt.s32.f32 %v2061
          %v2318 = vcvt.s32.f32 %v2062
          %v2319 = vcvt.s32.f32 %v2063
          %vm2320 = vcmp.gt.f32.partialorder %v2064, 0.0
          %vm2321 = vcmp.gt.f32.partialorder %v2065, 0.0
          %vm2322 = vcmp.gt.f32.partialorder %v2066, 0.0
          %vm2323 = vcmp.gt.f32.partialorder %v2067, 0.0
          %vm2324 = vcmp.gt.f32.partialorder %v2068, 0.0
          %vm2325 = vcmp.gt.f32.partialorder %v2069, 0.0
          %vm2326 = vcmp.gt.f32.partialorder %v2070, 0.0
          %vm2327 = vcmp.gt.f32.partialorder %v2071, 0.0
          %vm2328 = vcmp.gt.f32.partialorder %v2072, 0.0
          %vm2329 = vcmp.gt.f32.partialorder %v2073, 0.0
          %vm2330 = vcmp.gt.f32.partialorder %v2074, 0.0
          %vm2331 = vcmp.gt.f32.partialorder %v2075, 0.0
          %vm2332 = vcmp.gt.f32.partialorder %v2076, 0.0
          %vm2333 = vcmp.gt.f32.partialorder %v2077, 0.0
          %vm2334 = vcmp.gt.f32.partialorder %v2078, 0.0
          %vm2335 = vcmp.gt.f32.partialorder %v2079, 0.0
          %vm2336 = vcmp.gt.f32.partialorder %v2080, 0.0
          %vm2337 = vcmp.gt.f32.partialorder %v2081, 0.0
          %vm2338 = vcmp.gt.f32.partialorder %v2082, 0.0
          %vm2339 = vcmp.gt.f32.partialorder %v2083, 0.0
          %vm2340 = vcmp.gt.f32.partialorder %v2084, 0.0
          %vm2341 = vcmp.gt.f32.partialorder %v2085, 0.0
          %vm2342 = vcmp.gt.f32.partialorder %v2086, 0.0
          %vm2343 = vcmp.gt.f32.partialorder %v2087, 0.0
          %vm2344 = vcmp.gt.f32.partialorder %v2088, 0.0
          %vm2345 = vcmp.gt.f32.partialorder %v2089, 0.0
          %vm2346 = vcmp.gt.f32.partialorder %v2090, 0.0
          %vm2347 = vcmp.gt.f32.partialorder %v2091, 0.0
          %vm2348 = vcmp.gt.f32.partialorder %v2092, 0.0
          %vm2349 = vcmp.gt.f32.partialorder %v2093, 0.0
          %vm2350 = vcmp.gt.f32.partialorder %v2094, 0.0
          %vm2351 = vcmp.gt.f32.partialorder %v2095, 0.0
          %vm2352 = vcmp.gt.f32.partialorder %v2096, 0.0
          %vm2353 = vcmp.gt.f32.partialorder %v2097, 0.0
          %vm2354 = vcmp.gt.f32.partialorder %v2098, 0.0
          %vm2355 = vcmp.gt.f32.partialorder %v2099, 0.0
          %vm2356 = vcmp.gt.f32.partialorder %v2100, 0.0
          %vm2357 = vcmp.gt.f32.partialorder %v2101, 0.0
          %vm2358 = vcmp.gt.f32.partialorder %v2102, 0.0
          %vm2359 = vcmp.gt.f32.partialorder %v2103, 0.0
          %vm2360 = vcmp.gt.f32.partialorder %v2104, 0.0
          %vm2361 = vcmp.gt.f32.partialorder %v2105, 0.0
          %vm2362 = vcmp.gt.f32.partialorder %v2106, 0.0
          %vm2363 = vcmp.gt.f32.partialorder %v2107, 0.0
          %vm2364 = vcmp.gt.f32.partialorder %v2108, 0.0
          %vm2365 = vcmp.gt.f32.partialorder %v2109, 0.0
          %vm2366 = vcmp.gt.f32.partialorder %v2110, 0.0
          %vm2367 = vcmp.gt.f32.partialorder %v2111, 0.0
          %vm2368 = vcmp.gt.f32.partialorder %v2112, 0.0
          %vm2369 = vcmp.gt.f32.partialorder %v2113, 0.0
          %vm2370 = vcmp.gt.f32.partialorder %v2114, 0.0
          %vm2371 = vcmp.gt.f32.partialorder %v2115, 0.0
          %vm2372 = vcmp.gt.f32.partialorder %v2116, 0.0
          %vm2373 = vcmp.gt.f32.partialorder %v2117, 0.0
          %vm2374 = vcmp.gt.f32.partialorder %v2118, 0.0
          %vm2375 = vcmp.gt.f32.partialorder %v2119, 0.0
          %vm2376 = vcmp.gt.f32.partialorder %v2120, 0.0
          %vm2377 = vcmp.gt.f32.partialorder %v2121, 0.0
          %vm2378 = vcmp.gt.f32.partialorder %v2122, 0.0
          %vm2379 = vcmp.gt.f32.partialorder %v2123, 0.0
          %vm2380 = vcmp.gt.f32.partialorder %v2124, 0.0
          %vm2381 = vcmp.gt.f32.partialorder %v2125, 0.0
          %vm2382 = vcmp.gt.f32.partialorder %v2126, 0.0
          %vm2383 = vcmp.gt.f32.partialorder %v2127, 0.0
          %vm2384 = vcmp.gt.f32.partialorder %v2128, 0.0
          %vm2385 = vcmp.gt.f32.partialorder %v2129, 0.0
          %vm2386 = vcmp.gt.f32.partialorder %v2130, 0.0
          %vm2387 = vcmp.gt.f32.partialorder %v2131, 0.0
          %vm2388 = vcmp.gt.f32.partialorder %v2132, 0.0
          %vm2389 = vcmp.gt.f32.partialorder %v2133, 0.0
          %vm2390 = vcmp.gt.f32.partialorder %v2134, 0.0
          %vm2391 = vcmp.gt.f32.partialorder %v2135, 0.0
          %vm2392 = vcmp.gt.f32.partialorder %v2136, 0.0
          %vm2393 = vcmp.gt.f32.partialorder %v2137, 0.0
          %vm2394 = vcmp.gt.f32.partialorder %v2138, 0.0
          %vm2395 = vcmp.gt.f32.partialorder %v2139, 0.0
          %vm2396 = vcmp.gt.f32.partialorder %v2140, 0.0
          %vm2397 = vcmp.gt.f32.partialorder %v2141, 0.0
          %vm2398 = vcmp.gt.f32.partialorder %v2142, 0.0
          %vm2399 = vcmp.gt.f32.partialorder %v2143, 0.0
          %vm2400 = vcmp.gt.f32.partialorder %v2144, 0.0
          %vm2401 = vcmp.gt.f32.partialorder %v2145, 0.0
          %vm2402 = vcmp.gt.f32.partialorder %v2146, 0.0
          %vm2403 = vcmp.gt.f32.partialorder %v2147, 0.0
          %vm2404 = vcmp.gt.f32.partialorder %v2148, 0.0
          %vm2405 = vcmp.gt.f32.partialorder %v2149, 0.0
          %vm2406 = vcmp.gt.f32.partialorder %v2150, 0.0
          %vm2407 = vcmp.gt.f32.partialorder %v2151, 0.0
          %vm2408 = vcmp.gt.f32.partialorder %v2152, 0.0
          %vm2409 = vcmp.gt.f32.partialorder %v2153, 0.0
          %vm2410 = vcmp.gt.f32.partialorder %v2154, 0.0
          %vm2411 = vcmp.gt.f32.partialorder %v2155, 0.0
          %vm2412 = vcmp.gt.f32.partialorder %v2156, 0.0
          %vm2413 = vcmp.gt.f32.partialorder %v2157, 0.0
          %vm2414 = vcmp.gt.f32.partialorder %v2158, 0.0
          %vm2415 = vcmp.gt.f32.partialorder %v2159, 0.0
          %vm2416 = vcmp.gt.f32.partialorder %v2160, 0.0
          %vm2417 = vcmp.gt.f32.partialorder %v2161, 0.0
          %vm2418 = vcmp.gt.f32.partialorder %v2162, 0.0
          %vm2419 = vcmp.gt.f32.partialorder %v2163, 0.0
          %vm2420 = vcmp.gt.f32.partialorder %v2164, 0.0
          %vm2421 = vcmp.gt.f32.partialorder %v2165, 0.0
          %vm2422 = vcmp.gt.f32.partialorder %v2166, 0.0
          %vm2423 = vcmp.gt.f32.partialorder %v2167, 0.0
          %vm2424 = vcmp.gt.f32.partialorder %v2168, 0.0
          %vm2425 = vcmp.gt.f32.partialorder %v2169, 0.0
          %vm2426 = vcmp.gt.f32.partialorder %v2170, 0.0
          %vm2427 = vcmp.gt.f32.partialorder %v2171, 0.0
          %vm2428 = vcmp.gt.f32.partialorder %v2172, 0.0
          %vm2429 = vcmp.gt.f32.partialorder %v2173, 0.0
          %vm2430 = vcmp.gt.f32.partialorder %v2174, 0.0
          %vm2431 = vcmp.gt.f32.partialorder %v2175, 0.0
          %vm2432 = vcmp.gt.f32.partialorder %v2176, 0.0
          %vm2433 = vcmp.gt.f32.partialorder %v2177, 0.0
          %vm2434 = vcmp.gt.f32.partialorder %v2178, 0.0
          %vm2435 = vcmp.gt.f32.partialorder %v2179, 0.0
          %vm2436 = vcmp.gt.f32.partialorder %v2180, 0.0
          %vm2437 = vcmp.gt.f32.partialorder %v2181, 0.0
          %vm2438 = vcmp.gt.f32.partialorder %v2182, 0.0
          %vm2439 = vcmp.gt.f32.partialorder %v2183, 0.0
          %vm2440 = vcmp.gt.f32.partialorder %v2184, 0.0
          %vm2441 = vcmp.gt.f32.partialorder %v2185, 0.0
          %vm2442 = vcmp.gt.f32.partialorder %v2186, 0.0
          %vm2443 = vcmp.gt.f32.partialorder %v2187, 0.0
          %vm2444 = vcmp.gt.f32.partialorder %v2188, 0.0
          %vm2445 = vcmp.gt.f32.partialorder %v2189, 0.0
          %vm2446 = vcmp.gt.f32.partialorder %v2190, 0.0
          %vm2447 = vcmp.gt.f32.partialorder %v2191, 0.0
          %vm2448 = vcmp.gt.f32.partialorder %v2192, 0.0
          %vm2449 = vcmp.gt.f32.partialorder %v2193, 0.0
          %vm2450 = vcmp.gt.f32.partialorder %v2194, 0.0
          %vm2451 = vcmp.gt.f32.partialorder %v2195, 0.0
          %vm2452 = vcmp.gt.f32.partialorder %v2196, 0.0
          %vm2453 = vcmp.gt.f32.partialorder %v2197, 0.0
          %vm2454 = vcmp.gt.f32.partialorder %v2198, 0.0
          %vm2455 = vcmp.gt.f32.partialorder %v2199, 0.0
          %vm2456 = vcmp.gt.f32.partialorder %v2200, 0.0
          %vm2457 = vcmp.gt.f32.partialorder %v2201, 0.0
          %vm2458 = vcmp.gt.f32.partialorder %v2202, 0.0
          %vm2459 = vcmp.gt.f32.partialorder %v2203, 0.0
          %vm2460 = vcmp.gt.f32.partialorder %v2204, 0.0
          %vm2461 = vcmp.gt.f32.partialorder %v2205, 0.0
          %vm2462 = vcmp.gt.f32.partialorder %v2206, 0.0
          %vm2463 = vcmp.gt.f32.partialorder %v2207, 0.0
          %vm2464 = vcmp.gt.f32.partialorder %v2208, 0.0
          %vm2465 = vcmp.gt.f32.partialorder %v2209, 0.0
          %vm2466 = vcmp.gt.f32.partialorder %v2210, 0.0
          %vm2467 = vcmp.gt.f32.partialorder %v2211, 0.0
          %vm2468 = vcmp.gt.f32.partialorder %v2212, 0.0
          %vm2469 = vcmp.gt.f32.partialorder %v2213, 0.0
          %vm2470 = vcmp.gt.f32.partialorder %v2214, 0.0
          %vm2471 = vcmp.gt.f32.partialorder %v2215, 0.0
          %vm2472 = vcmp.gt.f32.partialorder %v2216, 0.0
          %vm2473 = vcmp.gt.f32.partialorder %v2217, 0.0
          %vm2474 = vcmp.gt.f32.partialorder %v2218, 0.0
          %vm2475 = vcmp.gt.f32.partialorder %v2219, 0.0
          %vm2476 = vcmp.gt.f32.partialorder %v2220, 0.0
          %vm2477 = vcmp.gt.f32.partialorder %v2221, 0.0
          %vm2478 = vcmp.gt.f32.partialorder %v2222, 0.0
          %vm2479 = vcmp.gt.f32.partialorder %v2223, 0.0
          %vm2480 = vcmp.gt.f32.partialorder %v2224, 0.0
          %vm2481 = vcmp.gt.f32.partialorder %v2225, 0.0
          %vm2482 = vcmp.gt.f32.partialorder %v2226, 0.0
          %vm2483 = vcmp.gt.f32.partialorder %v2227, 0.0
          %vm2484 = vcmp.gt.f32.partialorder %v2228, 0.0
          %vm2485 = vcmp.gt.f32.partialorder %v2229, 0.0
          %vm2486 = vcmp.gt.f32.partialorder %v2230, 0.0
          %vm2487 = vcmp.gt.f32.partialorder %v2231, 0.0
          %vm2488 = vcmp.gt.f32.partialorder %v2232, 0.0
          %vm2489 = vcmp.gt.f32.partialorder %v2233, 0.0
          %vm2490 = vcmp.gt.f32.partialorder %v2234, 0.0
          %vm2491 = vcmp.gt.f32.partialorder %v2235, 0.0
          %vm2492 = vcmp.gt.f32.partialorder %v2236, 0.0
          %vm2493 = vcmp.gt.f32.partialorder %v2237, 0.0
          %vm2494 = vcmp.gt.f32.partialorder %v2238, 0.0
          %vm2495 = vcmp.gt.f32.partialorder %v2239, 0.0
          %vm2496 = vcmp.gt.f32.partialorder %v2240, 0.0
          %vm2497 = vcmp.gt.f32.partialorder %v2241, 0.0
          %vm2498 = vcmp.gt.f32.partialorder %v2242, 0.0
          %vm2499 = vcmp.gt.f32.partialorder %v2243, 0.0
          %vm2500 = vcmp.gt.f32.partialorder %v2244, 0.0
          %vm2501 = vcmp.gt.f32.partialorder %v2245, 0.0
          %vm2502 = vcmp.gt.f32.partialorder %v2246, 0.0
          %vm2503 = vcmp.gt.f32.partialorder %v2247, 0.0
          %vm2504 = vcmp.gt.f32.partialorder %v2248, 0.0
          %vm2505 = vcmp.gt.f32.partialorder %v2249, 0.0
          %vm2506 = vcmp.gt.f32.partialorder %v2250, 0.0
          %vm2507 = vcmp.gt.f32.partialorder %v2251, 0.0
          %vm2508 = vcmp.gt.f32.partialorder %v2252, 0.0
          %vm2509 = vcmp.gt.f32.partialorder %v2253, 0.0
          %vm2510 = vcmp.gt.f32.partialorder %v2254, 0.0
          %vm2511 = vcmp.gt.f32.partialorder %v2255, 0.0
          %vm2512 = vcmp.gt.f32.partialorder %v2256, 0.0
          %vm2513 = vcmp.gt.f32.partialorder %v2257, 0.0
          %vm2514 = vcmp.gt.f32.partialorder %v2258, 0.0
          %vm2515 = vcmp.gt.f32.partialorder %v2259, 0.0
          %vm2516 = vcmp.gt.f32.partialorder %v2260, 0.0
          %vm2517 = vcmp.gt.f32.partialorder %v2261, 0.0
          %vm2518 = vcmp.gt.f32.partialorder %v2262, 0.0
          %vm2519 = vcmp.gt.f32.partialorder %v2263, 0.0
          %vm2520 = vcmp.gt.f32.partialorder %v2264, 0.0
          %vm2521 = vcmp.gt.f32.partialorder %v2265, 0.0
          %vm2522 = vcmp.gt.f32.partialorder %v2266, 0.0
          %vm2523 = vcmp.gt.f32.partialorder %v2267, 0.0
          %vm2524 = vcmp.gt.f32.partialorder %v2268, 0.0
          %vm2525 = vcmp.gt.f32.partialorder %v2269, 0.0
          %vm2526 = vcmp.gt.f32.partialorder %v2270, 0.0
          %vm2527 = vcmp.gt.f32.partialorder %v2271, 0.0
          %vm2528 = vcmp.gt.f32.partialorder %v2272, 0.0
          %vm2529 = vcmp.gt.f32.partialorder %v2273, 0.0
          %vm2530 = vcmp.gt.f32.partialorder %v2274, 0.0
          %vm2531 = vcmp.gt.f32.partialorder %v2275, 0.0
          %vm2532 = vcmp.gt.f32.partialorder %v2276, 0.0
          %vm2533 = vcmp.gt.f32.partialorder %v2277, 0.0
          %vm2534 = vcmp.gt.f32.partialorder %v2278, 0.0
          %vm2535 = vcmp.gt.f32.partialorder %v2279, 0.0
          %vm2536 = vcmp.gt.f32.partialorder %v2280, 0.0
          %vm2537 = vcmp.gt.f32.partialorder %v2281, 0.0
          %vm2538 = vcmp.gt.f32.partialorder %v2282, 0.0
          %vm2539 = vcmp.gt.f32.partialorder %v2283, 0.0
          %vm2540 = vcmp.gt.f32.partialorder %v2284, 0.0
          %vm2541 = vcmp.gt.f32.partialorder %v2285, 0.0
          %vm2542 = vcmp.gt.f32.partialorder %v2286, 0.0
          %vm2543 = vcmp.gt.f32.partialorder %v2287, 0.0
          %vm2544 = vcmp.gt.f32.partialorder %v2288, 0.0
          %vm2545 = vcmp.gt.f32.partialorder %v2289, 0.0
          %vm2546 = vcmp.gt.f32.partialorder %v2290, 0.0
          %vm2547 = vcmp.gt.f32.partialorder %v2291, 0.0
          %vm2548 = vcmp.gt.f32.partialorder %v2292, 0.0
          %vm2549 = vcmp.gt.f32.partialorder %v2293, 0.0
          %vm2550 = vcmp.gt.f32.partialorder %v2294, 0.0
          %vm2551 = vcmp.gt.f32.partialorder %v2295, 0.0
          %vm2552 = vcmp.gt.f32.partialorder %v2296, 0.0
          %vm2553 = vcmp.gt.f32.partialorder %v2297, 0.0
          %vm2554 = vcmp.gt.f32.partialorder %v2298, 0.0
          %vm2555 = vcmp.gt.f32.partialorder %v2299, 0.0
          %vm2556 = vcmp.gt.f32.partialorder %v2300, 0.0
          %vm2557 = vcmp.gt.f32.partialorder %v2301, 0.0
          %vm2558 = vcmp.gt.f32.partialorder %v2302, 0.0
          %vm2559 = vcmp.gt.f32.partialorder %v2303, 0.0
          %vm2560 = vcmp.gt.f32.partialorder %v2304, 0.0
          %vm2561 = vcmp.gt.f32.partialorder %v2305, 0.0
          %vm2562 = vcmp.gt.f32.partialorder %v2306, 0.0
          %vm2563 = vcmp.gt.f32.partialorder %v2307, 0.0
          %vm2564 = vcmp.gt.f32.partialorder %v2308, 0.0
          %vm2565 = vcmp.gt.f32.partialorder %v2309, 0.0
          %vm2566 = vcmp.gt.f32.partialorder %v2310, 0.0
          %vm2567 = vcmp.gt.f32.partialorder %v2311, 0.0
          %vm2568 = vcmp.gt.f32.partialorder %v2312, 0.0
          %vm2569 = vcmp.gt.f32.partialorder %v2313, 0.0
          %vm2570 = vcmp.gt.f32.partialorder %v2314, 0.0
          %vm2571 = vcmp.gt.f32.partialorder %v2315, 0.0
          %vm2572 = vcmp.gt.f32.partialorder %v2316, 0.0
          %vm2573 = vcmp.gt.f32.partialorder %v2317, 0.0
          %vm2574 = vcmp.gt.f32.partialorder %v2318, 0.0
          %vm2575 = vcmp.gt.f32.partialorder %v2319, 0.0
          %v2576 = vld [vmem:[%s363] sm:$0xff]
          %v2577 = vld [vmem:[%s363 + $0x8] sm:$0xff]
          %v2578 = vld [vmem:[%s363 + $0x10] sm:$0xff]
          %v2579 = vld [vmem:[%s363 + $0x18] sm:$0xff]
          %v2580 = vld [vmem:[%s363 + $0x20] sm:$0xff]
          %v2581 = vld [vmem:[%s363 + $0x28] sm:$0xff]
          %v2582 = vld [vmem:[%s363 + $0x30] sm:$0xff]
          %v2583 = vld [vmem:[%s363 + $0x38] sm:$0xff]
          %v2584 = vld [vmem:[%s363 + $0x40] sm:$0xff]
          %v2585 = vld [vmem:[%s363 + $0x48] sm:$0xff]
          %v2586 = vld [vmem:[%s363 + $0x50] sm:$0xff]
          %v2587 = vld [vmem:[%s363 + $0x58] sm:$0xff]
          %v2588 = vld [vmem:[%s363 + $0x60] sm:$0xff]
          %v2589 = vld [vmem:[%s363 + $0x68] sm:$0xff]
          %v2590 = vld [vmem:[%s363 + $0x70] sm:$0xff]
          %v2591 = vld [vmem:[%s363 + $0x78] sm:$0xff]
          %v2592 = vld [vmem:[%s363 + $0x80] sm:$0xff]
          %v2593 = vld [vmem:[%s363 + $0x88] sm:$0xff]
          %v2594 = vld [vmem:[%s363 + $0x90] sm:$0xff]
          %v2595 = vld [vmem:[%s363 + $0x98] sm:$0xff]
          %v2596 = vld [vmem:[%s363 + $0xa0] sm:$0xff]
          %v2597 = vld [vmem:[%s363 + $0xa8] sm:$0xff]
          %v2598 = vld [vmem:[%s363 + $0xb0] sm:$0xff]
          %v2599 = vld [vmem:[%s363 + $0xb8] sm:$0xff]
          %v2600 = vld [vmem:[%s363 + $0xc0] sm:$0xff]
          %v2601 = vld [vmem:[%s363 + $0xc8] sm:$0xff]
          %v2602 = vld [vmem:[%s363 + $0xd0] sm:$0xff]
          %v2603 = vld [vmem:[%s363 + $0xd8] sm:$0xff]
          %v2604 = vld [vmem:[%s363 + $0xe0] sm:$0xff]
          %v2605 = vld [vmem:[%s363 + $0xe8] sm:$0xff]
          %v2606 = vld [vmem:[%s363 + $0xf0] sm:$0xff]
          %v2607 = vld [vmem:[%s363 + $0xf8] sm:$0xff]
          %2609 = vset.pattern.permute.xlu0 0
          %2610 = vperm.xlu0 %2609, %v2576
          %v2611 = vpop.permute.xlu0 %2610
          %2614 = vset.pattern.permute.xlu0 0
          %2615 = vperm.xlu0 %2614, %v2577
          %v2616 = vpop.permute.xlu0 %2615
          %2619 = vset.pattern.permute.xlu0 0
          %2620 = vperm.xlu0 %2619, %v2578
          %v2621 = vpop.permute.xlu0 %2620
          %2624 = vset.pattern.permute.xlu0 0
          %2625 = vperm.xlu0 %2624, %v2579
          %v2626 = vpop.permute.xlu0 %2625
          %2629 = vset.pattern.permute.xlu0 0
          %2630 = vperm.xlu0 %2629, %v2580
          %v2631 = vpop.permute.xlu0 %2630
          %2634 = vset.pattern.permute.xlu0 0
          %2635 = vperm.xlu0 %2634, %v2581
          %v2636 = vpop.permute.xlu0 %2635
          %2639 = vset.pattern.permute.xlu0 0
          %2640 = vperm.xlu0 %2639, %v2582
          %v2641 = vpop.permute.xlu0 %2640
          %2644 = vset.pattern.permute.xlu0 0
          %2645 = vperm.xlu0 %2644, %v2583
          %v2646 = vpop.permute.xlu0 %2645
          %2649 = vset.pattern.permute.xlu0 0
          %2650 = vperm.xlu0 %2649, %v2584
          %v2651 = vpop.permute.xlu0 %2650
          %2654 = vset.pattern.permute.xlu0 0
          %2655 = vperm.xlu0 %2654, %v2585
          %v2656 = vpop.permute.xlu0 %2655
          %2659 = vset.pattern.permute.xlu0 0
          %2660 = vperm.xlu0 %2659, %v2586
          %v2661 = vpop.permute.xlu0 %2660
          %2664 = vset.pattern.permute.xlu0 0
          %2665 = vperm.xlu0 %2664, %v2587
          %v2666 = vpop.permute.xlu0 %2665
          %2669 = vset.pattern.permute.xlu0 0
          %2670 = vperm.xlu0 %2669, %v2588
          %v2671 = vpop.permute.xlu0 %2670
          %2674 = vset.pattern.permute.xlu0 0
          %2675 = vperm.xlu0 %2674, %v2589
          %v2676 = vpop.permute.xlu0 %2675
          %2679 = vset.pattern.permute.xlu0 0
          %2680 = vperm.xlu0 %2679, %v2590
          %v2681 = vpop.permute.xlu0 %2680
          %2684 = vset.pattern.permute.xlu0 0
          %2685 = vperm.xlu0 %2684, %v2591
          %v2686 = vpop.permute.xlu0 %2685
          %2689 = vset.pattern.permute.xlu0 0
          %2690 = vperm.xlu0 %2689, %v2592
          %v2691 = vpop.permute.xlu0 %2690
          %2694 = vset.pattern.permute.xlu0 0
          %2695 = vperm.xlu0 %2694, %v2593
          %v2696 = vpop.permute.xlu0 %2695
          %2699 = vset.pattern.permute.xlu0 0
          %2700 = vperm.xlu0 %2699, %v2594
          %v2701 = vpop.permute.xlu0 %2700
          %2704 = vset.pattern.permute.xlu0 0
          %2705 = vperm.xlu0 %2704, %v2595
          %v2706 = vpop.permute.xlu0 %2705
          %2709 = vset.pattern.permute.xlu0 0
          %2710 = vperm.xlu0 %2709, %v2596
          %v2711 = vpop.permute.xlu0 %2710
          %2714 = vset.pattern.permute.xlu0 0
          %2715 = vperm.xlu0 %2714, %v2597
          %v2716 = vpop.permute.xlu0 %2715
          %2719 = vset.pattern.permute.xlu0 0
          %2720 = vperm.xlu0 %2719, %v2598
          %v2721 = vpop.permute.xlu0 %2720
          %2724 = vset.pattern.permute.xlu0 0
          %2725 = vperm.xlu0 %2724, %v2599
          %v2726 = vpop.permute.xlu0 %2725
          %2729 = vset.pattern.permute.xlu0 0
          %2730 = vperm.xlu0 %2729, %v2600
          %v2731 = vpop.permute.xlu0 %2730
          %2734 = vset.pattern.permute.xlu0 0
          %2735 = vperm.xlu0 %2734, %v2601
          %v2736 = vpop.permute.xlu0 %2735
          %2739 = vset.pattern.permute.xlu0 0
          %2740 = vperm.xlu0 %2739, %v2602
          %v2741 = vpop.permute.xlu0 %2740
          %2744 = vset.pattern.permute.xlu0 0
          %2745 = vperm.xlu0 %2744, %v2603
          %v2746 = vpop.permute.xlu0 %2745
          %2749 = vset.pattern.permute.xlu0 0
          %2750 = vperm.xlu0 %2749, %v2604
          %v2751 = vpop.permute.xlu0 %2750
          %2754 = vset.pattern.permute.xlu0 0
          %2755 = vperm.xlu0 %2754, %v2605
          %v2756 = vpop.permute.xlu0 %2755
          %2759 = vset.pattern.permute.xlu0 0
          %2760 = vperm.xlu0 %2759, %v2606
          %v2761 = vpop.permute.xlu0 %2760
          %2764 = vset.pattern.permute.xlu0 0
          %2765 = vperm.xlu0 %2764, %v2607
          %v2766 = vpop.permute.xlu0 %2765
          %v2768 = vsub.f32 %v1488, %v2611
          %v2769 = vsub.f32 %v1489, %v2611
          %v2770 = vsub.f32 %v1490, %v2611
          %v2771 = vsub.f32 %v1491, %v2611
          %v2772 = vsub.f32 %v1492, %v2611
          %v2773 = vsub.f32 %v1493, %v2611
          %v2774 = vsub.f32 %v1494, %v2611
          %v2775 = vsub.f32 %v1495, %v2611
          %v2776 = vsub.f32 %v1496, %v2616
          %v2777 = vsub.f32 %v1497, %v2616
          %v2778 = vsub.f32 %v1498, %v2616
          %v2779 = vsub.f32 %v1499, %v2616
          %v2780 = vsub.f32 %v1500, %v2616
          %v2781 = vsub.f32 %v1501, %v2616
          %v2782 = vsub.f32 %v1502, %v2616
          %v2783 = vsub.f32 %v1503, %v2616
          %v2784 = vsub.f32 %v1504, %v2621
          %v2785 = vsub.f32 %v1505, %v2621
          %v2786 = vsub.f32 %v1506, %v2621
          %v2787 = vsub.f32 %v1507, %v2621
          %v2788 = vsub.f32 %v1508, %v2621
          %v2789 = vsub.f32 %v1509, %v2621
          %v2790 = vsub.f32 %v1510, %v2621
          %v2791 = vsub.f32 %v1511, %v2621
          %v2792 = vsub.f32 %v1512, %v2626
          %v2793 = vsub.f32 %v1513, %v2626
          %v2794 = vsub.f32 %v1514, %v2626
          %v2795 = vsub.f32 %v1515, %v2626
          %v2796 = vsub.f32 %v1516, %v2626
          %v2797 = vsub.f32 %v1517, %v2626
          %v2798 = vsub.f32 %v1518, %v2626
          %v2799 = vsub.f32 %v1519, %v2626
          %v2800 = vsub.f32 %v1520, %v2631
          %v2801 = vsub.f32 %v1521, %v2631
          %v2802 = vsub.f32 %v1522, %v2631
          %v2803 = vsub.f32 %v1523, %v2631
          %v2804 = vsub.f32 %v1524, %v2631
          %v2805 = vsub.f32 %v1525, %v2631
          %v2806 = vsub.f32 %v1526, %v2631
          %v2807 = vsub.f32 %v1527, %v2631
          %v2808 = vsub.f32 %v1528, %v2636
          %v2809 = vsub.f32 %v1529, %v2636
          %v2810 = vsub.f32 %v1530, %v2636
          %v2811 = vsub.f32 %v1531, %v2636
          %v2812 = vsub.f32 %v1532, %v2636
          %v2813 = vsub.f32 %v1533, %v2636
          %v2814 = vsub.f32 %v1534, %v2636
          %v2815 = vsub.f32 %v1535, %v2636
          %v2816 = vsub.f32 %v1536, %v2641
          %v2817 = vsub.f32 %v1537, %v2641
          %v2818 = vsub.f32 %v1538, %v2641
          %v2819 = vsub.f32 %v1539, %v2641
          %v2820 = vsub.f32 %v1540, %v2641
          %v2821 = vsub.f32 %v1541, %v2641
          %v2822 = vsub.f32 %v1542, %v2641
          %v2823 = vsub.f32 %v1543, %v2641
          %v2824 = vsub.f32 %v1544, %v2646
          %v2825 = vsub.f32 %v1545, %v2646
          %v2826 = vsub.f32 %v1546, %v2646
          %v2827 = vsub.f32 %v1547, %v2646
          %v2828 = vsub.f32 %v1548, %v2646
          %v2829 = vsub.f32 %v1549, %v2646
          %v2830 = vsub.f32 %v1550, %v2646
          %v2831 = vsub.f32 %v1551, %v2646
          %v2832 = vsub.f32 %v1552, %v2651
          %v2833 = vsub.f32 %v1553, %v2651
          %v2834 = vsub.f32 %v1554, %v2651
          %v2835 = vsub.f32 %v1555, %v2651
          %v2836 = vsub.f32 %v1556, %v2651
          %v2837 = vsub.f32 %v1557, %v2651
          %v2838 = vsub.f32 %v1558, %v2651
          %v2839 = vsub.f32 %v1559, %v2651
          %v2840 = vsub.f32 %v1560, %v2656
          %v2841 = vsub.f32 %v1561, %v2656
          %v2842 = vsub.f32 %v1562, %v2656
          %v2843 = vsub.f32 %v1563, %v2656
          %v2844 = vsub.f32 %v1564, %v2656
          %v2845 = vsub.f32 %v1565, %v2656
          %v2846 = vsub.f32 %v1566, %v2656
          %v2847 = vsub.f32 %v1567, %v2656
          %v2848 = vsub.f32 %v1568, %v2661
          %v2849 = vsub.f32 %v1569, %v2661
          %v2850 = vsub.f32 %v1570, %v2661
          %v2851 = vsub.f32 %v1571, %v2661
          %v2852 = vsub.f32 %v1572, %v2661
          %v2853 = vsub.f32 %v1573, %v2661
          %v2854 = vsub.f32 %v1574, %v2661
          %v2855 = vsub.f32 %v1575, %v2661
          %v2856 = vsub.f32 %v1576, %v2666
          %v2857 = vsub.f32 %v1577, %v2666
          %v2858 = vsub.f32 %v1578, %v2666
          %v2859 = vsub.f32 %v1579, %v2666
          %v2860 = vsub.f32 %v1580, %v2666
          %v2861 = vsub.f32 %v1581, %v2666
          %v2862 = vsub.f32 %v1582, %v2666
          %v2863 = vsub.f32 %v1583, %v2666
          %v2864 = vsub.f32 %v1584, %v2671
          %v2865 = vsub.f32 %v1585, %v2671
          %v2866 = vsub.f32 %v1586, %v2671
          %v2867 = vsub.f32 %v1587, %v2671
          %v2868 = vsub.f32 %v1588, %v2671
          %v2869 = vsub.f32 %v1589, %v2671
          %v2870 = vsub.f32 %v1590, %v2671
          %v2871 = vsub.f32 %v1591, %v2671
          %v2872 = vsub.f32 %v1592, %v2676
          %v2873 = vsub.f32 %v1593, %v2676
          %v2874 = vsub.f32 %v1594, %v2676
          %v2875 = vsub.f32 %v1595, %v2676
          %v2876 = vsub.f32 %v1596, %v2676
          %v2877 = vsub.f32 %v1597, %v2676
          %v2878 = vsub.f32 %v1598, %v2676
          %v2879 = vsub.f32 %v1599, %v2676
          %v2880 = vsub.f32 %v1600, %v2681
          %v2881 = vsub.f32 %v1601, %v2681
          %v2882 = vsub.f32 %v1602, %v2681
          %v2883 = vsub.f32 %v1603, %v2681
          %v2884 = vsub.f32 %v1604, %v2681
          %v2885 = vsub.f32 %v1605, %v2681
          %v2886 = vsub.f32 %v1606, %v2681
          %v2887 = vsub.f32 %v1607, %v2681
          %v2888 = vsub.f32 %v1608, %v2686
          %v2889 = vsub.f32 %v1609, %v2686
          %v2890 = vsub.f32 %v1610, %v2686
          %v2891 = vsub.f32 %v1611, %v2686
          %v2892 = vsub.f32 %v1612, %v2686
          %v2893 = vsub.f32 %v1613, %v2686
          %v2894 = vsub.f32 %v1614, %v2686
          %v2895 = vsub.f32 %v1615, %v2686
          %v2896 = vsub.f32 %v1616, %v2691
          %v2897 = vsub.f32 %v1617, %v2691
          %v2898 = vsub.f32 %v1618, %v2691
          %v2899 = vsub.f32 %v1619, %v2691
          %v2900 = vsub.f32 %v1620, %v2691
          %v2901 = vsub.f32 %v1621, %v2691
          %v2902 = vsub.f32 %v1622, %v2691
          %v2903 = vsub.f32 %v1623, %v2691
          %v2904 = vsub.f32 %v1624, %v2696
          %v2905 = vsub.f32 %v1625, %v2696
          %v2906 = vsub.f32 %v1626, %v2696
          %v2907 = vsub.f32 %v1627, %v2696
          %v2908 = vsub.f32 %v1628, %v2696
          %v2909 = vsub.f32 %v1629, %v2696
          %v2910 = vsub.f32 %v1630, %v2696
          %v2911 = vsub.f32 %v1631, %v2696
          %v2912 = vsub.f32 %v1632, %v2701
          %v2913 = vsub.f32 %v1633, %v2701
          %v2914 = vsub.f32 %v1634, %v2701
          %v2915 = vsub.f32 %v1635, %v2701
          %v2916 = vsub.f32 %v1636, %v2701
          %v2917 = vsub.f32 %v1637, %v2701
          %v2918 = vsub.f32 %v1638, %v2701
          %v2919 = vsub.f32 %v1639, %v2701
          %v2920 = vsub.f32 %v1640, %v2706
          %v2921 = vsub.f32 %v1641, %v2706
          %v2922 = vsub.f32 %v1642, %v2706
          %v2923 = vsub.f32 %v1643, %v2706
          %v2924 = vsub.f32 %v1644, %v2706
          %v2925 = vsub.f32 %v1645, %v2706
          %v2926 = vsub.f32 %v1646, %v2706
          %v2927 = vsub.f32 %v1647, %v2706
          %v2928 = vsub.f32 %v1648, %v2711
          %v2929 = vsub.f32 %v1649, %v2711
          %v2930 = vsub.f32 %v1650, %v2711
          %v2931 = vsub.f32 %v1651, %v2711
          %v2932 = vsub.f32 %v1652, %v2711
          %v2933 = vsub.f32 %v1653, %v2711
          %v2934 = vsub.f32 %v1654, %v2711
          %v2935 = vsub.f32 %v1655, %v2711
          %v2936 = vsub.f32 %v1656, %v2716
          %v2937 = vsub.f32 %v1657, %v2716
          %v2938 = vsub.f32 %v1658, %v2716
          %v2939 = vsub.f32 %v1659, %v2716
          %v2940 = vsub.f32 %v1660, %v2716
          %v2941 = vsub.f32 %v1661, %v2716
          %v2942 = vsub.f32 %v1662, %v2716
          %v2943 = vsub.f32 %v1663, %v2716
          %v2944 = vsub.f32 %v1664, %v2721
          %v2945 = vsub.f32 %v1665, %v2721
          %v2946 = vsub.f32 %v1666, %v2721
          %v2947 = vsub.f32 %v1667, %v2721
          %v2948 = vsub.f32 %v1668, %v2721
          %v2949 = vsub.f32 %v1669, %v2721
          %v2950 = vsub.f32 %v1670, %v2721
          %v2951 = vsub.f32 %v1671, %v2721
          %v2952 = vsub.f32 %v1672, %v2726
          %v2953 = vsub.f32 %v1673, %v2726
          %v2954 = vsub.f32 %v1674, %v2726
          %v2955 = vsub.f32 %v1675, %v2726
          %v2956 = vsub.f32 %v1676, %v2726
          %v2957 = vsub.f32 %v1677, %v2726
          %v2958 = vsub.f32 %v1678, %v2726
          %v2959 = vsub.f32 %v1679, %v2726
          %v2960 = vsub.f32 %v1680, %v2731
          %v2961 = vsub.f32 %v1681, %v2731
          %v2962 = vsub.f32 %v1682, %v2731
          %v2963 = vsub.f32 %v1683, %v2731
          %v2964 = vsub.f32 %v1684, %v2731
          %v2965 = vsub.f32 %v1685, %v2731
          %v2966 = vsub.f32 %v1686, %v2731
          %v2967 = vsub.f32 %v1687, %v2731
          %v2968 = vsub.f32 %v1688, %v2736
          %v2969 = vsub.f32 %v1689, %v2736
          %v2970 = vsub.f32 %v1690, %v2736
          %v2971 = vsub.f32 %v1691, %v2736
          %v2972 = vsub.f32 %v1692, %v2736
          %v2973 = vsub.f32 %v1693, %v2736
          %v2974 = vsub.f32 %v1694, %v2736
          %v2975 = vsub.f32 %v1695, %v2736
          %v2976 = vsub.f32 %v1696, %v2741
          %v2977 = vsub.f32 %v1697, %v2741
          %v2978 = vsub.f32 %v1698, %v2741
          %v2979 = vsub.f32 %v1699, %v2741
          %v2980 = vsub.f32 %v1700, %v2741
          %v2981 = vsub.f32 %v1701, %v2741
          %v2982 = vsub.f32 %v1702, %v2741
          %v2983 = vsub.f32 %v1703, %v2741
          %v2984 = vsub.f32 %v1704, %v2746
          %v2985 = vsub.f32 %v1705, %v2746
          %v2986 = vsub.f32 %v1706, %v2746
          %v2987 = vsub.f32 %v1707, %v2746
          %v2988 = vsub.f32 %v1708, %v2746
          %v2989 = vsub.f32 %v1709, %v2746
          %v2990 = vsub.f32 %v1710, %v2746
          %v2991 = vsub.f32 %v1711, %v2746
          %v2992 = vsub.f32 %v1712, %v2751
          %v2993 = vsub.f32 %v1713, %v2751
          %v2994 = vsub.f32 %v1714, %v2751
          %v2995 = vsub.f32 %v1715, %v2751
          %v2996 = vsub.f32 %v1716, %v2751
          %v2997 = vsub.f32 %v1717, %v2751
          %v2998 = vsub.f32 %v1718, %v2751
          %v2999 = vsub.f32 %v1719, %v2751
          %v3000 = vsub.f32 %v1720, %v2756
          %v3001 = vsub.f32 %v1721, %v2756
          %v3002 = vsub.f32 %v1722, %v2756
          %v3003 = vsub.f32 %v1723, %v2756
          %v3004 = vsub.f32 %v1724, %v2756
          %v3005 = vsub.f32 %v1725, %v2756
          %v3006 = vsub.f32 %v1726, %v2756
          %v3007 = vsub.f32 %v1727, %v2756
          %v3008 = vsub.f32 %v1728, %v2761
          %v3009 = vsub.f32 %v1729, %v2761
          %v3010 = vsub.f32 %v1730, %v2761
          %v3011 = vsub.f32 %v1731, %v2761
          %v3012 = vsub.f32 %v1732, %v2761
          %v3013 = vsub.f32 %v1733, %v2761
          %v3014 = vsub.f32 %v1734, %v2761
          %v3015 = vsub.f32 %v1735, %v2761
          %v3016 = vsub.f32 %v1736, %v2766
          %v3017 = vsub.f32 %v1737, %v2766
          %v3018 = vsub.f32 %v1738, %v2766
          %v3019 = vsub.f32 %v1739, %v2766
          %v3020 = vsub.f32 %v1740, %v2766
          %v3021 = vsub.f32 %v1741, %v2766
          %v3022 = vsub.f32 %v1742, %v2766
          %v3023 = vsub.f32 %v1743, %v2766
          %v3024 = vmul.f32 %v2768, 1.442695
          %v3025 = vpow.pop %v3024
          %v3026 = vmul.f32 %v2769, 1.442695
          %v3027 = vpow.pop %v3026
          %v3028 = vmul.f32 %v2770, 1.442695
          %v3029 = vpow.pop %v3028
          %v3030 = vmul.f32 %v2771, 1.442695
          %v3031 = vpow.pop %v3030
          %v3032 = vmul.f32 %v2772, 1.442695
          %v3033 = vpow.pop %v3032
          %v3034 = vmul.f32 %v2773, 1.442695
          %v3035 = vpow.pop %v3034
          %v3036 = vmul.f32 %v2774, 1.442695
          %v3037 = vpow.pop %v3036
          %v3038 = vmul.f32 %v2775, 1.442695
          %v3039 = vpow.pop %v3038
          %v3040 = vmul.f32 %v2776, 1.442695
          %v3041 = vpow.pop %v3040
          %v3042 = vmul.f32 %v2777, 1.442695
          %v3043 = vpow.pop %v3042
          %v3044 = vmul.f32 %v2778, 1.442695
          %v3045 = vpow.pop %v3044
          %v3046 = vmul.f32 %v2779, 1.442695
          %v3047 = vpow.pop %v3046
          %v3048 = vmul.f32 %v2780, 1.442695
          %v3049 = vpow.pop %v3048
          %v3050 = vmul.f32 %v2781, 1.442695
          %v3051 = vpow.pop %v3050
          %v3052 = vmul.f32 %v2782, 1.442695
          %v3053 = vpow.pop %v3052
          %v3054 = vmul.f32 %v2783, 1.442695
          %v3055 = vpow.pop %v3054
          %v3056 = vmul.f32 %v2784, 1.442695
          %v3057 = vpow.pop %v3056
          %v3058 = vmul.f32 %v2785, 1.442695
          %v3059 = vpow.pop %v3058
          %v3060 = vmul.f32 %v2786, 1.442695
          %v3061 = vpow.pop %v3060
          %v3062 = vmul.f32 %v2787, 1.442695
          %v3063 = vpow.pop %v3062
          %v3064 = vmul.f32 %v2788, 1.442695
          %v3065 = vpow.pop %v3064
          %v3066 = vmul.f32 %v2789, 1.442695
          %v3067 = vpow.pop %v3066
          %v3068 = vmul.f32 %v2790, 1.442695
          %v3069 = vpow.pop %v3068
          %v3070 = vmul.f32 %v2791, 1.442695
          %v3071 = vpow.pop %v3070
          %v3072 = vmul.f32 %v2792, 1.442695
          %v3073 = vpow.pop %v3072
          %v3074 = vmul.f32 %v2793, 1.442695
          %v3075 = vpow.pop %v3074
          %v3076 = vmul.f32 %v2794, 1.442695
          %v3077 = vpow.pop %v3076
          %v3078 = vmul.f32 %v2795, 1.442695
          %v3079 = vpow.pop %v3078
          %v3080 = vmul.f32 %v2796, 1.442695
          %v3081 = vpow.pop %v3080
          %v3082 = vmul.f32 %v2797, 1.442695
          %v3083 = vpow.pop %v3082
          %v3084 = vmul.f32 %v2798, 1.442695
          %v3085 = vpow.pop %v3084
          %v3086 = vmul.f32 %v2799, 1.442695
          %v3087 = vpow.pop %v3086
          %v3088 = vmul.f32 %v2800, 1.442695
          %v3089 = vpow.pop %v3088
          %v3090 = vmul.f32 %v2801, 1.442695
          %v3091 = vpow.pop %v3090
          %v3092 = vmul.f32 %v2802, 1.442695
          %v3093 = vpow.pop %v3092
          %v3094 = vmul.f32 %v2803, 1.442695
          %v3095 = vpow.pop %v3094
          %v3096 = vmul.f32 %v2804, 1.442695
          %v3097 = vpow.pop %v3096
          %v3098 = vmul.f32 %v2805, 1.442695
          %v3099 = vpow.pop %v3098
          %v3100 = vmul.f32 %v2806, 1.442695
          %v3101 = vpow.pop %v3100
          %v3102 = vmul.f32 %v2807, 1.442695
          %v3103 = vpow.pop %v3102
          %v3104 = vmul.f32 %v2808, 1.442695
          %v3105 = vpow.pop %v3104
          %v3106 = vmul.f32 %v2809, 1.442695
          %v3107 = vpow.pop %v3106
          %v3108 = vmul.f32 %v2810, 1.442695
          %v3109 = vpow.pop %v3108
          %v3110 = vmul.f32 %v2811, 1.442695
          %v3111 = vpow.pop %v3110
          %v3112 = vmul.f32 %v2812, 1.442695
          %v3113 = vpow.pop %v3112
          %v3114 = vmul.f32 %v2813, 1.442695
          %v3115 = vpow.pop %v3114
          %v3116 = vmul.f32 %v2814, 1.442695
          %v3117 = vpow.pop %v3116
          %v3118 = vmul.f32 %v2815, 1.442695
          %v3119 = vpow.pop %v3118
          %v3120 = vmul.f32 %v2816, 1.442695
          %v3121 = vpow.pop %v3120
          %v3122 = vmul.f32 %v2817, 1.442695
          %v3123 = vpow.pop %v3122
          %v3124 = vmul.f32 %v2818, 1.442695
          %v3125 = vpow.pop %v3124
          %v3126 = vmul.f32 %v2819, 1.442695
          %v3127 = vpow.pop %v3126
          %v3128 = vmul.f32 %v2820, 1.442695
          %v3129 = vpow.pop %v3128
          %v3130 = vmul.f32 %v2821, 1.442695
          %v3131 = vpow.pop %v3130
          %v3132 = vmul.f32 %v2822, 1.442695
          %v3133 = vpow.pop %v3132
          %v3134 = vmul.f32 %v2823, 1.442695
          %v3135 = vpow.pop %v3134
          %v3136 = vmul.f32 %v2824, 1.442695
          %v3137 = vpow.pop %v3136
          %v3138 = vmul.f32 %v2825, 1.442695
          %v3139 = vpow.pop %v3138
          %v3140 = vmul.f32 %v2826, 1.442695
          %v3141 = vpow.pop %v3140
          %v3142 = vmul.f32 %v2827, 1.442695
          %v3143 = vpow.pop %v3142
          %v3144 = vmul.f32 %v2828, 1.442695
          %v3145 = vpow.pop %v3144
          %v3146 = vmul.f32 %v2829, 1.442695
          %v3147 = vpow.pop %v3146
          %v3148 = vmul.f32 %v2830, 1.442695
          %v3149 = vpow.pop %v3148
          %v3150 = vmul.f32 %v2831, 1.442695
          %v3151 = vpow.pop %v3150
          %v3152 = vmul.f32 %v2832, 1.442695
          %v3153 = vpow.pop %v3152
          %v3154 = vmul.f32 %v2833, 1.442695
          %v3155 = vpow.pop %v3154
          %v3156 = vmul.f32 %v2834, 1.442695
          %v3157 = vpow.pop %v3156
          %v3158 = vmul.f32 %v2835, 1.442695
          %v3159 = vpow.pop %v3158
          %v3160 = vmul.f32 %v2836, 1.442695
          %v3161 = vpow.pop %v3160
          %v3162 = vmul.f32 %v2837, 1.442695
          %v3163 = vpow.pop %v3162
          %v3164 = vmul.f32 %v2838, 1.442695
          %v3165 = vpow.pop %v3164
          %v3166 = vmul.f32 %v2839, 1.442695
          %v3167 = vpow.pop %v3166
          %v3168 = vmul.f32 %v2840, 1.442695
          %v3169 = vpow.pop %v3168
          %v3170 = vmul.f32 %v2841, 1.442695
          %v3171 = vpow.pop %v3170
          %v3172 = vmul.f32 %v2842, 1.442695
          %v3173 = vpow.pop %v3172
          %v3174 = vmul.f32 %v2843, 1.442695
          %v3175 = vpow.pop %v3174
          %v3176 = vmul.f32 %v2844, 1.442695
          %v3177 = vpow.pop %v3176
          %v3178 = vmul.f32 %v2845, 1.442695
          %v3179 = vpow.pop %v3178
          %v3180 = vmul.f32 %v2846, 1.442695
          %v3181 = vpow.pop %v3180
          %v3182 = vmul.f32 %v2847, 1.442695
          %v3183 = vpow.pop %v3182
          %v3184 = vmul.f32 %v2848, 1.442695
          %v3185 = vpow.pop %v3184
          %v3186 = vmul.f32 %v2849, 1.442695
          %v3187 = vpow.pop %v3186
          %v3188 = vmul.f32 %v2850, 1.442695
          %v3189 = vpow.pop %v3188
          %v3190 = vmul.f32 %v2851, 1.442695
          %v3191 = vpow.pop %v3190
          %v3192 = vmul.f32 %v2852, 1.442695
          %v3193 = vpow.pop %v3192
          %v3194 = vmul.f32 %v2853, 1.442695
          %v3195 = vpow.pop %v3194
          %v3196 = vmul.f32 %v2854, 1.442695
          %v3197 = vpow.pop %v3196
          %v3198 = vmul.f32 %v2855, 1.442695
          %v3199 = vpow.pop %v3198
          %v3200 = vmul.f32 %v2856, 1.442695
          %v3201 = vpow.pop %v3200
          %v3202 = vmul.f32 %v2857, 1.442695
          %v3203 = vpow.pop %v3202
          %v3204 = vmul.f32 %v2858, 1.442695
          %v3205 = vpow.pop %v3204
          %v3206 = vmul.f32 %v2859, 1.442695
          %v3207 = vpow.pop %v3206
          %v3208 = vmul.f32 %v2860, 1.442695
          %v3209 = vpow.pop %v3208
          %v3210 = vmul.f32 %v2861, 1.442695
          %v3211 = vpow.pop %v3210
          %v3212 = vmul.f32 %v2862, 1.442695
          %v3213 = vpow.pop %v3212
          %v3214 = vmul.f32 %v2863, 1.442695
          %v3215 = vpow.pop %v3214
          %v3216 = vmul.f32 %v2864, 1.442695
          %v3217 = vpow.pop %v3216
          %v3218 = vmul.f32 %v2865, 1.442695
          %v3219 = vpow.pop %v3218
          %v3220 = vmul.f32 %v2866, 1.442695
          %v3221 = vpow.pop %v3220
          %v3222 = vmul.f32 %v2867, 1.442695
          %v3223 = vpow.pop %v3222
          %v3224 = vmul.f32 %v2868, 1.442695
          %v3225 = vpow.pop %v3224
          %v3226 = vmul.f32 %v2869, 1.442695
          %v3227 = vpow.pop %v3226
          %v3228 = vmul.f32 %v2870, 1.442695
          %v3229 = vpow.pop %v3228
          %v3230 = vmul.f32 %v2871, 1.442695
          %v3231 = vpow.pop %v3230
          %v3232 = vmul.f32 %v2872, 1.442695
          %v3233 = vpow.pop %v3232
          %v3234 = vmul.f32 %v2873, 1.442695
          %v3235 = vpow.pop %v3234
          %v3236 = vmul.f32 %v2874, 1.442695
          %v3237 = vpow.pop %v3236
          %v3238 = vmul.f32 %v2875, 1.442695
          %v3239 = vpow.pop %v3238
          %v3240 = vmul.f32 %v2876, 1.442695
          %v3241 = vpow.pop %v3240
          %v3242 = vmul.f32 %v2877, 1.442695
          %v3243 = vpow.pop %v3242
          %v3244 = vmul.f32 %v2878, 1.442695
          %v3245 = vpow.pop %v3244
          %v3246 = vmul.f32 %v2879, 1.442695
          %v3247 = vpow.pop %v3246
          %v3248 = vmul.f32 %v2880, 1.442695
          %v3249 = vpow.pop %v3248
          %v3250 = vmul.f32 %v2881, 1.442695
          %v3251 = vpow.pop %v3250
          %v3252 = vmul.f32 %v2882, 1.442695
          %v3253 = vpow.pop %v3252
          %v3254 = vmul.f32 %v2883, 1.442695
          %v3255 = vpow.pop %v3254
          %v3256 = vmul.f32 %v2884, 1.442695
          %v3257 = vpow.pop %v3256
          %v3258 = vmul.f32 %v2885, 1.442695
          %v3259 = vpow.pop %v3258
          %v3260 = vmul.f32 %v2886, 1.442695
          %v3261 = vpow.pop %v3260
          %v3262 = vmul.f32 %v2887, 1.442695
          %v3263 = vpow.pop %v3262
          %v3264 = vmul.f32 %v2888, 1.442695
          %v3265 = vpow.pop %v3264
          %v3266 = vmul.f32 %v2889, 1.442695
          %v3267 = vpow.pop %v3266
          %v3268 = vmul.f32 %v2890, 1.442695
          %v3269 = vpow.pop %v3268
          %v3270 = vmul.f32 %v2891, 1.442695
          %v3271 = vpow.pop %v3270
          %v3272 = vmul.f32 %v2892, 1.442695
          %v3273 = vpow.pop %v3272
          %v3274 = vmul.f32 %v2893, 1.442695
          %v3275 = vpow.pop %v3274
          %v3276 = vmul.f32 %v2894, 1.442695
          %v3277 = vpow.pop %v3276
          %v3278 = vmul.f32 %v2895, 1.442695
          %v3279 = vpow.pop %v3278
          %v3280 = vmul.f32 %v2896, 1.442695
          %v3281 = vpow.pop %v3280
          %v3282 = vmul.f32 %v2897, 1.442695
          %v3283 = vpow.pop %v3282
          %v3284 = vmul.f32 %v2898, 1.442695
          %v3285 = vpow.pop %v3284
          %v3286 = vmul.f32 %v2899, 1.442695
          %v3287 = vpow.pop %v3286
          %v3288 = vmul.f32 %v2900, 1.442695
          %v3289 = vpow.pop %v3288
          %v3290 = vmul.f32 %v2901, 1.442695
          %v3291 = vpow.pop %v3290
          %v3292 = vmul.f32 %v2902, 1.442695
          %v3293 = vpow.pop %v3292
          %v3294 = vmul.f32 %v2903, 1.442695
          %v3295 = vpow.pop %v3294
          %v3296 = vmul.f32 %v2904, 1.442695
          %v3297 = vpow.pop %v3296
          %v3298 = vmul.f32 %v2905, 1.442695
          %v3299 = vpow.pop %v3298
          %v3300 = vmul.f32 %v2906, 1.442695
          %v3301 = vpow.pop %v3300
          %v3302 = vmul.f32 %v2907, 1.442695
          %v3303 = vpow.pop %v3302
          %v3304 = vmul.f32 %v2908, 1.442695
          %v3305 = vpow.pop %v3304
          %v3306 = vmul.f32 %v2909, 1.442695
          %v3307 = vpow.pop %v3306
          %v3308 = vmul.f32 %v2910, 1.442695
          %v3309 = vpow.pop %v3308
          %v3310 = vmul.f32 %v2911, 1.442695
          %v3311 = vpow.pop %v3310
          %v3312 = vmul.f32 %v2912, 1.442695
          %v3313 = vpow.pop %v3312
          %v3314 = vmul.f32 %v2913, 1.442695
          %v3315 = vpow.pop %v3314
          %v3316 = vmul.f32 %v2914, 1.442695
          %v3317 = vpow.pop %v3316
          %v3318 = vmul.f32 %v2915, 1.442695
          %v3319 = vpow.pop %v3318
          %v3320 = vmul.f32 %v2916, 1.442695
          %v3321 = vpow.pop %v3320
          %v3322 = vmul.f32 %v2917, 1.442695
          %v3323 = vpow.pop %v3322
          %v3324 = vmul.f32 %v2918, 1.442695
          %v3325 = vpow.pop %v3324
          %v3326 = vmul.f32 %v2919, 1.442695
          %v3327 = vpow.pop %v3326
          %v3328 = vmul.f32 %v2920, 1.442695
          %v3329 = vpow.pop %v3328
          %v3330 = vmul.f32 %v2921, 1.442695
          %v3331 = vpow.pop %v3330
          %v3332 = vmul.f32 %v2922, 1.442695
          %v3333 = vpow.pop %v3332
          %v3334 = vmul.f32 %v2923, 1.442695
          %v3335 = vpow.pop %v3334
          %v3336 = vmul.f32 %v2924, 1.442695
          %v3337 = vpow.pop %v3336
          %v3338 = vmul.f32 %v2925, 1.442695
          %v3339 = vpow.pop %v3338
          %v3340 = vmul.f32 %v2926, 1.442695
          %v3341 = vpow.pop %v3340
          %v3342 = vmul.f32 %v2927, 1.442695
          %v3343 = vpow.pop %v3342
          %v3344 = vmul.f32 %v2928, 1.442695
          %v3345 = vpow.pop %v3344
          %v3346 = vmul.f32 %v2929, 1.442695
          %v3347 = vpow.pop %v3346
          %v3348 = vmul.f32 %v2930, 1.442695
          %v3349 = vpow.pop %v3348
          %v3350 = vmul.f32 %v2931, 1.442695
          %v3351 = vpow.pop %v3350
          %v3352 = vmul.f32 %v2932, 1.442695
          %v3353 = vpow.pop %v3352
          %v3354 = vmul.f32 %v2933, 1.442695
          %v3355 = vpow.pop %v3354
          %v3356 = vmul.f32 %v2934, 1.442695
          %v3357 = vpow.pop %v3356
          %v3358 = vmul.f32 %v2935, 1.442695
          %v3359 = vpow.pop %v3358
          %v3360 = vmul.f32 %v2936, 1.442695
          %v3361 = vpow.pop %v3360
          %v3362 = vmul.f32 %v2937, 1.442695
          %v3363 = vpow.pop %v3362
          %v3364 = vmul.f32 %v2938, 1.442695
          %v3365 = vpow.pop %v3364
          %v3366 = vmul.f32 %v2939, 1.442695
          %v3367 = vpow.pop %v3366
          %v3368 = vmul.f32 %v2940, 1.442695
          %v3369 = vpow.pop %v3368
          %v3370 = vmul.f32 %v2941, 1.442695
          %v3371 = vpow.pop %v3370
          %v3372 = vmul.f32 %v2942, 1.442695
          %v3373 = vpow.pop %v3372
          %v3374 = vmul.f32 %v2943, 1.442695
          %v3375 = vpow.pop %v3374
          %v3376 = vmul.f32 %v2944, 1.442695
          %v3377 = vpow.pop %v3376
          %v3378 = vmul.f32 %v2945, 1.442695
          %v3379 = vpow.pop %v3378
          %v3380 = vmul.f32 %v2946, 1.442695
          %v3381 = vpow.pop %v3380
          %v3382 = vmul.f32 %v2947, 1.442695
          %v3383 = vpow.pop %v3382
          %v3384 = vmul.f32 %v2948, 1.442695
          %v3385 = vpow.pop %v3384
          %v3386 = vmul.f32 %v2949, 1.442695
          %v3387 = vpow.pop %v3386
          %v3388 = vmul.f32 %v2950, 1.442695
          %v3389 = vpow.pop %v3388
          %v3390 = vmul.f32 %v2951, 1.442695
          %v3391 = vpow.pop %v3390
          %v3392 = vmul.f32 %v2952, 1.442695
          %v3393 = vpow.pop %v3392
          %v3394 = vmul.f32 %v2953, 1.442695
          %v3395 = vpow.pop %v3394
          %v3396 = vmul.f32 %v2954, 1.442695
          %v3397 = vpow.pop %v3396
          %v3398 = vmul.f32 %v2955, 1.442695
          %v3399 = vpow.pop %v3398
          %v3400 = vmul.f32 %v2956, 1.442695
          %v3401 = vpow.pop %v3400
          %v3402 = vmul.f32 %v2957, 1.442695
          %v3403 = vpow.pop %v3402
          %v3404 = vmul.f32 %v2958, 1.442695
          %v3405 = vpow.pop %v3404
          %v3406 = vmul.f32 %v2959, 1.442695
          %v3407 = vpow.pop %v3406
          %v3408 = vmul.f32 %v2960, 1.442695
          %v3409 = vpow.pop %v3408
          %v3410 = vmul.f32 %v2961, 1.442695
          %v3411 = vpow.pop %v3410
          %v3412 = vmul.f32 %v2962, 1.442695
          %v3413 = vpow.pop %v3412
          %v3414 = vmul.f32 %v2963, 1.442695
          %v3415 = vpow.pop %v3414
          %v3416 = vmul.f32 %v2964, 1.442695
          %v3417 = vpow.pop %v3416
          %v3418 = vmul.f32 %v2965, 1.442695
          %v3419 = vpow.pop %v3418
          %v3420 = vmul.f32 %v2966, 1.442695
          %v3421 = vpow.pop %v3420
          %v3422 = vmul.f32 %v2967, 1.442695
          %v3423 = vpow.pop %v3422
          %v3424 = vmul.f32 %v2968, 1.442695
          %v3425 = vpow.pop %v3424
          %v3426 = vmul.f32 %v2969, 1.442695
          %v3427 = vpow.pop %v3426
          %v3428 = vmul.f32 %v2970, 1.442695
          %v3429 = vpow.pop %v3428
          %v3430 = vmul.f32 %v2971, 1.442695
          %v3431 = vpow.pop %v3430
          %v3432 = vmul.f32 %v2972, 1.442695
          %v3433 = vpow.pop %v3432
          %v3434 = vmul.f32 %v2973, 1.442695
          %v3435 = vpow.pop %v3434
          %v3436 = vmul.f32 %v2974, 1.442695
          %v3437 = vpow.pop %v3436
          %v3438 = vmul.f32 %v2975, 1.442695
          %v3439 = vpow.pop %v3438
          %v3440 = vmul.f32 %v2976, 1.442695
          %v3441 = vpow.pop %v3440
          %v3442 = vmul.f32 %v2977, 1.442695
          %v3443 = vpow.pop %v3442
          %v3444 = vmul.f32 %v2978, 1.442695
          %v3445 = vpow.pop %v3444
          %v3446 = vmul.f32 %v2979, 1.442695
          %v3447 = vpow.pop %v3446
          %v3448 = vmul.f32 %v2980, 1.442695
          %v3449 = vpow.pop %v3448
          %v3450 = vmul.f32 %v2981, 1.442695
          %v3451 = vpow.pop %v3450
          %v3452 = vmul.f32 %v2982, 1.442695
          %v3453 = vpow.pop %v3452
          %v3454 = vmul.f32 %v2983, 1.442695
          %v3455 = vpow.pop %v3454
          %v3456 = vmul.f32 %v2984, 1.442695
          %v3457 = vpow.pop %v3456
          %v3458 = vmul.f32 %v2985, 1.442695
          %v3459 = vpow.pop %v3458
          %v3460 = vmul.f32 %v2986, 1.442695
          %v3461 = vpow.pop %v3460
          %v3462 = vmul.f32 %v2987, 1.442695
          %v3463 = vpow.pop %v3462
          %v3464 = vmul.f32 %v2988, 1.442695
          %v3465 = vpow.pop %v3464
          %v3466 = vmul.f32 %v2989, 1.442695
          %v3467 = vpow.pop %v3466
          %v3468 = vmul.f32 %v2990, 1.442695
          %v3469 = vpow.pop %v3468
          %v3470 = vmul.f32 %v2991, 1.442695
          %v3471 = vpow.pop %v3470
          %v3472 = vmul.f32 %v2992, 1.442695
          %v3473 = vpow.pop %v3472
          %v3474 = vmul.f32 %v2993, 1.442695
          %v3475 = vpow.pop %v3474
          %v3476 = vmul.f32 %v2994, 1.442695
          %v3477 = vpow.pop %v3476
          %v3478 = vmul.f32 %v2995, 1.442695
          %v3479 = vpow.pop %v3478
          %v3480 = vmul.f32 %v2996, 1.442695
          %v3481 = vpow.pop %v3480
          %v3482 = vmul.f32 %v2997, 1.442695
          %v3483 = vpow.pop %v3482
          %v3484 = vmul.f32 %v2998, 1.442695
          %v3485 = vpow.pop %v3484
          %v3486 = vmul.f32 %v2999, 1.442695
          %v3487 = vpow.pop %v3486
          %v3488 = vmul.f32 %v3000, 1.442695
          %v3489 = vpow.pop %v3488
          %v3490 = vmul.f32 %v3001, 1.442695
          %v3491 = vpow.pop %v3490
          %v3492 = vmul.f32 %v3002, 1.442695
          %v3493 = vpow.pop %v3492
          %v3494 = vmul.f32 %v3003, 1.442695
          %v3495 = vpow.pop %v3494
          %v3496 = vmul.f32 %v3004, 1.442695
          %v3497 = vpow.pop %v3496
          %v3498 = vmul.f32 %v3005, 1.442695
          %v3499 = vpow.pop %v3498
          %v3500 = vmul.f32 %v3006, 1.442695
          %v3501 = vpow.pop %v3500
          %v3502 = vmul.f32 %v3007, 1.442695
          %v3503 = vpow.pop %v3502
          %v3504 = vmul.f32 %v3008, 1.442695
          %v3505 = vpow.pop %v3504
          %v3506 = vmul.f32 %v3009, 1.442695
          %v3507 = vpow.pop %v3506
          %v3508 = vmul.f32 %v3010, 1.442695
          %v3509 = vpow.pop %v3508
          %v3510 = vmul.f32 %v3011, 1.442695
          %v3511 = vpow.pop %v3510
          %v3512 = vmul.f32 %v3012, 1.442695
          %v3513 = vpow.pop %v3512
          %v3514 = vmul.f32 %v3013, 1.442695
          %v3515 = vpow.pop %v3514
          %v3516 = vmul.f32 %v3014, 1.442695
          %v3517 = vpow.pop %v3516
          %v3518 = vmul.f32 %v3015, 1.442695
          %v3519 = vpow.pop %v3518
          %v3520 = vmul.f32 %v3016, 1.442695
          %v3521 = vpow.pop %v3520
          %v3522 = vmul.f32 %v3017, 1.442695
          %v3523 = vpow.pop %v3522
          %v3524 = vmul.f32 %v3018, 1.442695
          %v3525 = vpow.pop %v3524
          %v3526 = vmul.f32 %v3019, 1.442695
          %v3527 = vpow.pop %v3526
          %v3528 = vmul.f32 %v3020, 1.442695
          %v3529 = vpow.pop %v3528
          %v3530 = vmul.f32 %v3021, 1.442695
          %v3531 = vpow.pop %v3530
          %v3532 = vmul.f32 %v3022, 1.442695
          %v3533 = vpow.pop %v3532
          %v3534 = vmul.f32 %v3023, 1.442695
          %v3535 = vpow.pop %v3534
          %v3536 = vsel %vm2320, %v3025, 0.0
          %v3537 = vsel %vm2321, %v3027, 0.0
          %v3538 = vsel %vm2322, %v3029, 0.0
          %v3539 = vsel %vm2323, %v3031, 0.0
          %v3540 = vsel %vm2324, %v3033, 0.0
          %v3541 = vsel %vm2325, %v3035, 0.0
          %v3542 = vsel %vm2326, %v3037, 0.0
          %v3543 = vsel %vm2327, %v3039, 0.0
          %v3544 = vsel %vm2328, %v3041, 0.0
          %v3545 = vsel %vm2329, %v3043, 0.0
          %v3546 = vsel %vm2330, %v3045, 0.0
          %v3547 = vsel %vm2331, %v3047, 0.0
          %v3548 = vsel %vm2332, %v3049, 0.0
          %v3549 = vsel %vm2333, %v3051, 0.0
          %v3550 = vsel %vm2334, %v3053, 0.0
          %v3551 = vsel %vm2335, %v3055, 0.0
          %v3552 = vsel %vm2336, %v3057, 0.0
          %v3553 = vsel %vm2337, %v3059, 0.0
          %v3554 = vsel %vm2338, %v3061, 0.0
          %v3555 = vsel %vm2339, %v3063, 0.0
          %v3556 = vsel %vm2340, %v3065, 0.0
          %v3557 = vsel %vm2341, %v3067, 0.0
          %v3558 = vsel %vm2342, %v3069, 0.0
          %v3559 = vsel %vm2343, %v3071, 0.0
          %v3560 = vsel %vm2344, %v3073, 0.0
          %v3561 = vsel %vm2345, %v3075, 0.0
          %v3562 = vsel %vm2346, %v3077, 0.0
          %v3563 = vsel %vm2347, %v3079, 0.0
          %v3564 = vsel %vm2348, %v3081, 0.0
          %v3565 = vsel %vm2349, %v3083, 0.0
          %v3566 = vsel %vm2350, %v3085, 0.0
          %v3567 = vsel %vm2351, %v3087, 0.0
          %v3568 = vsel %vm2352, %v3089, 0.0
          %v3569 = vsel %vm2353, %v3091, 0.0
          %v3570 = vsel %vm2354, %v3093, 0.0
          %v3571 = vsel %vm2355, %v3095, 0.0
          %v3572 = vsel %vm2356, %v3097, 0.0
          %v3573 = vsel %vm2357, %v3099, 0.0
          %v3574 = vsel %vm2358, %v3101, 0.0
          %v3575 = vsel %vm2359, %v3103, 0.0
          %v3576 = vsel %vm2360, %v3105, 0.0
          %v3577 = vsel %vm2361, %v3107, 0.0
          %v3578 = vsel %vm2362, %v3109, 0.0
          %v3579 = vsel %vm2363, %v3111, 0.0
          %v3580 = vsel %vm2364, %v3113, 0.0
          %v3581 = vsel %vm2365, %v3115, 0.0
          %v3582 = vsel %vm2366, %v3117, 0.0
          %v3583 = vsel %vm2367, %v3119, 0.0
          %v3584 = vsel %vm2368, %v3121, 0.0
          %v3585 = vsel %vm2369, %v3123, 0.0
          %v3586 = vsel %vm2370, %v3125, 0.0
          %v3587 = vsel %vm2371, %v3127, 0.0
          %v3588 = vsel %vm2372, %v3129, 0.0
          %v3589 = vsel %vm2373, %v3131, 0.0
          %v3590 = vsel %vm2374, %v3133, 0.0
          %v3591 = vsel %vm2375, %v3135, 0.0
          %v3592 = vsel %vm2376, %v3137, 0.0
          %v3593 = vsel %vm2377, %v3139, 0.0
          %v3594 = vsel %vm2378, %v3141, 0.0
          %v3595 = vsel %vm2379, %v3143, 0.0
          %v3596 = vsel %vm2380, %v3145, 0.0
          %v3597 = vsel %vm2381, %v3147, 0.0
          %v3598 = vsel %vm2382, %v3149, 0.0
          %v3599 = vsel %vm2383, %v3151, 0.0
          %v3600 = vsel %vm2384, %v3153, 0.0
          %v3601 = vsel %vm2385, %v3155, 0.0
          %v3602 = vsel %vm2386, %v3157, 0.0
          %v3603 = vsel %vm2387, %v3159, 0.0
          %v3604 = vsel %vm2388, %v3161, 0.0
          %v3605 = vsel %vm2389, %v3163, 0.0
          %v3606 = vsel %vm2390, %v3165, 0.0
          %v3607 = vsel %vm2391, %v3167, 0.0
          %v3608 = vsel %vm2392, %v3169, 0.0
          %v3609 = vsel %vm2393, %v3171, 0.0
          %v3610 = vsel %vm2394, %v3173, 0.0
          %v3611 = vsel %vm2395, %v3175, 0.0
          %v3612 = vsel %vm2396, %v3177, 0.0
          %v3613 = vsel %vm2397, %v3179, 0.0
          %v3614 = vsel %vm2398, %v3181, 0.0
          %v3615 = vsel %vm2399, %v3183, 0.0
          %v3616 = vsel %vm2400, %v3185, 0.0
          %v3617 = vsel %vm2401, %v3187, 0.0
          %v3618 = vsel %vm2402, %v3189, 0.0
          %v3619 = vsel %vm2403, %v3191, 0.0
          %v3620 = vsel %vm2404, %v3193, 0.0
          %v3621 = vsel %vm2405, %v3195, 0.0
          %v3622 = vsel %vm2406, %v3197, 0.0
          %v3623 = vsel %vm2407, %v3199, 0.0
          %v3624 = vsel %vm2408, %v3201, 0.0
          %v3625 = vsel %vm2409, %v3203, 0.0
          %v3626 = vsel %vm2410, %v3205, 0.0
          %v3627 = vsel %vm2411, %v3207, 0.0
          %v3628 = vsel %vm2412, %v3209, 0.0
          %v3629 = vsel %vm2413, %v3211, 0.0
          %v3630 = vsel %vm2414, %v3213, 0.0
          %v3631 = vsel %vm2415, %v3215, 0.0
          %v3632 = vsel %vm2416, %v3217, 0.0
          %v3633 = vsel %vm2417, %v3219, 0.0
          %v3634 = vsel %vm2418, %v3221, 0.0
          %v3635 = vsel %vm2419, %v3223, 0.0
          %v3636 = vsel %vm2420, %v3225, 0.0
          %v3637 = vsel %vm2421, %v3227, 0.0
          %v3638 = vsel %vm2422, %v3229, 0.0
          %v3639 = vsel %vm2423, %v3231, 0.0
          %v3640 = vsel %vm2424, %v3233, 0.0
          %v3641 = vsel %vm2425, %v3235, 0.0
          %v3642 = vsel %vm2426, %v3237, 0.0
          %v3643 = vsel %vm2427, %v3239, 0.0
          %v3644 = vsel %vm2428, %v3241, 0.0
          %v3645 = vsel %vm2429, %v3243, 0.0
          %v3646 = vsel %vm2430, %v3245, 0.0
          %v3647 = vsel %vm2431, %v3247, 0.0
          %v3648 = vsel %vm2432, %v3249, 0.0
          %v3649 = vsel %vm2433, %v3251, 0.0
          %v3650 = vsel %vm2434, %v3253, 0.0
          %v3651 = vsel %vm2435, %v3255, 0.0
          %v3652 = vsel %vm2436, %v3257, 0.0
          %v3653 = vsel %vm2437, %v3259, 0.0
          %v3654 = vsel %vm2438, %v3261, 0.0
          %v3655 = vsel %vm2439, %v3263, 0.0
          %v3656 = vsel %vm2440, %v3265, 0.0
          %v3657 = vsel %vm2441, %v3267, 0.0
          %v3658 = vsel %vm2442, %v3269, 0.0
          %v3659 = vsel %vm2443, %v3271, 0.0
          %v3660 = vsel %vm2444, %v3273, 0.0
          %v3661 = vsel %vm2445, %v3275, 0.0
          %v3662 = vsel %vm2446, %v3277, 0.0
          %v3663 = vsel %vm2447, %v3279, 0.0
          %v3664 = vsel %vm2448, %v3281, 0.0
          %v3665 = vsel %vm2449, %v3283, 0.0
          %v3666 = vsel %vm2450, %v3285, 0.0
          %v3667 = vsel %vm2451, %v3287, 0.0
          %v3668 = vsel %vm2452, %v3289, 0.0
          %v3669 = vsel %vm2453, %v3291, 0.0
          %v3670 = vsel %vm2454, %v3293, 0.0
          %v3671 = vsel %vm2455, %v3295, 0.0
          %v3672 = vsel %vm2456, %v3297, 0.0
          %v3673 = vsel %vm2457, %v3299, 0.0
          %v3674 = vsel %vm2458, %v3301, 0.0
          %v3675 = vsel %vm2459, %v3303, 0.0
          %v3676 = vsel %vm2460, %v3305, 0.0
          %v3677 = vsel %vm2461, %v3307, 0.0
          %v3678 = vsel %vm2462, %v3309, 0.0
          %v3679 = vsel %vm2463, %v3311, 0.0
          %v3680 = vsel %vm2464, %v3313, 0.0
          %v3681 = vsel %vm2465, %v3315, 0.0
          %v3682 = vsel %vm2466, %v3317, 0.0
          %v3683 = vsel %vm2467, %v3319, 0.0
          %v3684 = vsel %vm2468, %v3321, 0.0
          %v3685 = vsel %vm2469, %v3323, 0.0
          %v3686 = vsel %vm2470, %v3325, 0.0
          %v3687 = vsel %vm2471, %v3327, 0.0
          %v3688 = vsel %vm2472, %v3329, 0.0
          %v3689 = vsel %vm2473, %v3331, 0.0
          %v3690 = vsel %vm2474, %v3333, 0.0
          %v3691 = vsel %vm2475, %v3335, 0.0
          %v3692 = vsel %vm2476, %v3337, 0.0
          %v3693 = vsel %vm2477, %v3339, 0.0
          %v3694 = vsel %vm2478, %v3341, 0.0
          %v3695 = vsel %vm2479, %v3343, 0.0
          %v3696 = vsel %vm2480, %v3345, 0.0
          %v3697 = vsel %vm2481, %v3347, 0.0
          %v3698 = vsel %vm2482, %v3349, 0.0
          %v3699 = vsel %vm2483, %v3351, 0.0
          %v3700 = vsel %vm2484, %v3353, 0.0
          %v3701 = vsel %vm2485, %v3355, 0.0
          %v3702 = vsel %vm2486, %v3357, 0.0
          %v3703 = vsel %vm2487, %v3359, 0.0
          %v3704 = vsel %vm2488, %v3361, 0.0
          %v3705 = vsel %vm2489, %v3363, 0.0
          %v3706 = vsel %vm2490, %v3365, 0.0
          %v3707 = vsel %vm2491, %v3367, 0.0
          %v3708 = vsel %vm2492, %v3369, 0.0
          %v3709 = vsel %vm2493, %v3371, 0.0
          %v3710 = vsel %vm2494, %v3373, 0.0
          %v3711 = vsel %vm2495, %v3375, 0.0
          %v3712 = vsel %vm2496, %v3377, 0.0
          %v3713 = vsel %vm2497, %v3379, 0.0
          %v3714 = vsel %vm2498, %v3381, 0.0
          %v3715 = vsel %vm2499, %v3383, 0.0
          %v3716 = vsel %vm2500, %v3385, 0.0
          %v3717 = vsel %vm2501, %v3387, 0.0
          %v3718 = vsel %vm2502, %v3389, 0.0
          %v3719 = vsel %vm2503, %v3391, 0.0
          %v3720 = vsel %vm2504, %v3393, 0.0
          %v3721 = vsel %vm2505, %v3395, 0.0
          %v3722 = vsel %vm2506, %v3397, 0.0
          %v3723 = vsel %vm2507, %v3399, 0.0
          %v3724 = vsel %vm2508, %v3401, 0.0
          %v3725 = vsel %vm2509, %v3403, 0.0
          %v3726 = vsel %vm2510, %v3405, 0.0
          %v3727 = vsel %vm2511, %v3407, 0.0
          %v3728 = vsel %vm2512, %v3409, 0.0
          %v3729 = vsel %vm2513, %v3411, 0.0
          %v3730 = vsel %vm2514, %v3413, 0.0
          %v3731 = vsel %vm2515, %v3415, 0.0
          %v3732 = vsel %vm2516, %v3417, 0.0
          %v3733 = vsel %vm2517, %v3419, 0.0
          %v3734 = vsel %vm2518, %v3421, 0.0
          %v3735 = vsel %vm2519, %v3423, 0.0
          %v3736 = vsel %vm2520, %v3425, 0.0
          %v3737 = vsel %vm2521, %v3427, 0.0
          %v3738 = vsel %vm2522, %v3429, 0.0
          %v3739 = vsel %vm2523, %v3431, 0.0
          %v3740 = vsel %vm2524, %v3433, 0.0
          %v3741 = vsel %vm2525, %v3435, 0.0
          %v3742 = vsel %vm2526, %v3437, 0.0
          %v3743 = vsel %vm2527, %v3439, 0.0
          %v3744 = vsel %vm2528, %v3441, 0.0
          %v3745 = vsel %vm2529, %v3443, 0.0
          %v3746 = vsel %vm2530, %v3445, 0.0
          %v3747 = vsel %vm2531, %v3447, 0.0
          %v3748 = vsel %vm2532, %v3449, 0.0
          %v3749 = vsel %vm2533, %v3451, 0.0
          %v3750 = vsel %vm2534, %v3453, 0.0
          %v3751 = vsel %vm2535, %v3455, 0.0
          %v3752 = vsel %vm2536, %v3457, 0.0
          %v3753 = vsel %vm2537, %v3459, 0.0
          %v3754 = vsel %vm2538, %v3461, 0.0
          %v3755 = vsel %vm2539, %v3463, 0.0
          %v3756 = vsel %vm2540, %v3465, 0.0
          %v3757 = vsel %vm2541, %v3467, 0.0
          %v3758 = vsel %vm2542, %v3469, 0.0
          %v3759 = vsel %vm2543, %v3471, 0.0
          %v3760 = vsel %vm2544, %v3473, 0.0
          %v3761 = vsel %vm2545, %v3475, 0.0
          %v3762 = vsel %vm2546, %v3477, 0.0
          %v3763 = vsel %vm2547, %v3479, 0.0
          %v3764 = vsel %vm2548, %v3481, 0.0
          %v3765 = vsel %vm2549, %v3483, 0.0
          %v3766 = vsel %vm2550, %v3485, 0.0
          %v3767 = vsel %vm2551, %v3487, 0.0
          %v3768 = vsel %vm2552, %v3489, 0.0
          %v3769 = vsel %vm2553, %v3491, 0.0
          %v3770 = vsel %vm2554, %v3493, 0.0
          %v3771 = vsel %vm2555, %v3495, 0.0
          %v3772 = vsel %vm2556, %v3497, 0.0
          %v3773 = vsel %vm2557, %v3499, 0.0
          %v3774 = vsel %vm2558, %v3501, 0.0
          %v3775 = vsel %vm2559, %v3503, 0.0
          %v3776 = vsel %vm2560, %v3505, 0.0
          %v3777 = vsel %vm2561, %v3507, 0.0
          %v3778 = vsel %vm2562, %v3509, 0.0
          %v3779 = vsel %vm2563, %v3511, 0.0
          %v3780 = vsel %vm2564, %v3513, 0.0
          %v3781 = vsel %vm2565, %v3515, 0.0
          %v3782 = vsel %vm2566, %v3517, 0.0
          %v3783 = vsel %vm2567, %v3519, 0.0
          %v3784 = vsel %vm2568, %v3521, 0.0
          %v3785 = vsel %vm2569, %v3523, 0.0
          %v3786 = vsel %vm2570, %v3525, 0.0
          %v3787 = vsel %vm2571, %v3527, 0.0
          %v3788 = vsel %vm2572, %v3529, 0.0
          %v3789 = vsel %vm2573, %v3531, 0.0
          %v3790 = vsel %vm2574, %v3533, 0.0
          %v3791 = vsel %vm2575, %v3535, 0.0
          %v3792 = vld [vmem:[#allocation2] sm:$0xff]
          %v3793 = vld [vmem:[#allocation2 + $0x8] sm:$0xff]
          %v3794 = vld [vmem:[#allocation2 + $0x10] sm:$0xff]
          %v3795 = vld [vmem:[#allocation2 + $0x18] sm:$0xff]
          %v3796 = vld [vmem:[#allocation2 + $0x20] sm:$0xff]
          %v3797 = vld [vmem:[#allocation2 + $0x28] sm:$0xff]
          %v3798 = vld [vmem:[#allocation2 + $0x30] sm:$0xff]
          %v3799 = vld [vmem:[#allocation2 + $0x38] sm:$0xff]
          %v3800 = vld [vmem:[#allocation2 + $0x40] sm:$0xff]
          %v3801 = vld [vmem:[#allocation2 + $0x48] sm:$0xff]
          %v3802 = vld [vmem:[#allocation2 + $0x50] sm:$0xff]
          %v3803 = vld [vmem:[#allocation2 + $0x58] sm:$0xff]
          %v3804 = vld [vmem:[#allocation2 + $0x60] sm:$0xff]
          %v3805 = vld [vmem:[#allocation2 + $0x68] sm:$0xff]
          %v3806 = vld [vmem:[#allocation2 + $0x70] sm:$0xff]
          %v3807 = vld [vmem:[#allocation2 + $0x78] sm:$0xff]
          %v3808 = vld [vmem:[#allocation2 + $0x80] sm:$0xff]
          %v3809 = vld [vmem:[#allocation2 + $0x88] sm:$0xff]
          %v3810 = vld [vmem:[#allocation2 + $0x90] sm:$0xff]
          %v3811 = vld [vmem:[#allocation2 + $0x98] sm:$0xff]
          %v3812 = vld [vmem:[#allocation2 + $0xa0] sm:$0xff]
          %v3813 = vld [vmem:[#allocation2 + $0xa8] sm:$0xff]
          %v3814 = vld [vmem:[#allocation2 + $0xb0] sm:$0xff]
          %v3815 = vld [vmem:[#allocation2 + $0xb8] sm:$0xff]
          %v3816 = vld [vmem:[#allocation2 + $0xc0] sm:$0xff]
          %v3817 = vld [vmem:[#allocation2 + $0xc8] sm:$0xff]
          %v3818 = vld [vmem:[#allocation2 + $0xd0] sm:$0xff]
          %v3819 = vld [vmem:[#allocation2 + $0xd8] sm:$0xff]
          %v3820 = vld [vmem:[#allocation2 + $0xe0] sm:$0xff]
          %v3821 = vld [vmem:[#allocation2 + $0xe8] sm:$0xff]
          %v3822 = vld [vmem:[#allocation2 + $0xf0] sm:$0xff]
          %v3823 = vld [vmem:[#allocation2 + $0xf8] sm:$0xff]
          %v3824 = vld [vmem:[#allocation2 + $0x100] sm:$0xff]
          %v3825 = vld [vmem:[#allocation2 + $0x108] sm:$0xff]
          %v3826 = vld [vmem:[#allocation2 + $0x110] sm:$0xff]
          %v3827 = vld [vmem:[#allocation2 + $0x118] sm:$0xff]
          %v3828 = vld [vmem:[#allocation2 + $0x120] sm:$0xff]
          %v3829 = vld [vmem:[#allocation2 + $0x128] sm:$0xff]
          %v3830 = vld [vmem:[#allocation2 + $0x130] sm:$0xff]
          %v3831 = vld [vmem:[#allocation2 + $0x138] sm:$0xff]
          %v3832 = vld [vmem:[#allocation2 + $0x140] sm:$0xff]
          %v3833 = vld [vmem:[#allocation2 + $0x148] sm:$0xff]
          %v3834 = vld [vmem:[#allocation2 + $0x150] sm:$0xff]
          %v3835 = vld [vmem:[#allocation2 + $0x158] sm:$0xff]
          %v3836 = vld [vmem:[#allocation2 + $0x160] sm:$0xff]
          %v3837 = vld [vmem:[#allocation2 + $0x168] sm:$0xff]
          %v3838 = vld [vmem:[#allocation2 + $0x170] sm:$0xff]
          %v3839 = vld [vmem:[#allocation2 + $0x178] sm:$0xff]
          %v3840 = vld [vmem:[#allocation2 + $0x180] sm:$0xff]
          %v3841 = vld [vmem:[#allocation2 + $0x188] sm:$0xff]
          %v3842 = vld [vmem:[#allocation2 + $0x190] sm:$0xff]
          %v3843 = vld [vmem:[#allocation2 + $0x198] sm:$0xff]
          %v3844 = vld [vmem:[#allocation2 + $0x1a0] sm:$0xff]
          %v3845 = vld [vmem:[#allocation2 + $0x1a8] sm:$0xff]
          %v3846 = vld [vmem:[#allocation2 + $0x1b0] sm:$0xff]
          %v3847 = vld [vmem:[#allocation2 + $0x1b8] sm:$0xff]
          %v3848 = vld [vmem:[#allocation2 + $0x1c0] sm:$0xff]
          %v3849 = vld [vmem:[#allocation2 + $0x1c8] sm:$0xff]
          %v3850 = vld [vmem:[#allocation2 + $0x1d0] sm:$0xff]
          %v3851 = vld [vmem:[#allocation2 + $0x1d8] sm:$0xff]
          %v3852 = vld [vmem:[#allocation2 + $0x1e0] sm:$0xff]
          %v3853 = vld [vmem:[#allocation2 + $0x1e8] sm:$0xff]
          %v3854 = vld [vmem:[#allocation2 + $0x1f0] sm:$0xff]
          %v3855 = vld [vmem:[#allocation2 + $0x1f8] sm:$0xff]
          %v3856 = vld [vmem:[#allocation2 + $0x200] sm:$0xff]
          %v3857 = vld [vmem:[#allocation2 + $0x208] sm:$0xff]
          %v3858 = vld [vmem:[#allocation2 + $0x210] sm:$0xff]
          %v3859 = vld [vmem:[#allocation2 + $0x218] sm:$0xff]
          %v3860 = vld [vmem:[#allocation2 + $0x220] sm:$0xff]
          %v3861 = vld [vmem:[#allocation2 + $0x228] sm:$0xff]
          %v3862 = vld [vmem:[#allocation2 + $0x230] sm:$0xff]
          %v3863 = vld [vmem:[#allocation2 + $0x238] sm:$0xff]
          %v3864 = vld [vmem:[#allocation2 + $0x240] sm:$0xff]
          %v3865 = vld [vmem:[#allocation2 + $0x248] sm:$0xff]
          %v3866 = vld [vmem:[#allocation2 + $0x250] sm:$0xff]
          %v3867 = vld [vmem:[#allocation2 + $0x258] sm:$0xff]
          %v3868 = vld [vmem:[#allocation2 + $0x260] sm:$0xff]
          %v3869 = vld [vmem:[#allocation2 + $0x268] sm:$0xff]
          %v3870 = vld [vmem:[#allocation2 + $0x270] sm:$0xff]
          %v3871 = vld [vmem:[#allocation2 + $0x278] sm:$0xff]
          %v3872 = vld [vmem:[#allocation2 + $0x280] sm:$0xff]
          %v3873 = vld [vmem:[#allocation2 + $0x288] sm:$0xff]
          %v3874 = vld [vmem:[#allocation2 + $0x290] sm:$0xff]
          %v3875 = vld [vmem:[#allocation2 + $0x298] sm:$0xff]
          %v3876 = vld [vmem:[#allocation2 + $0x2a0] sm:$0xff]
          %v3877 = vld [vmem:[#allocation2 + $0x2a8] sm:$0xff]
          %v3878 = vld [vmem:[#allocation2 + $0x2b0] sm:$0xff]
          %v3879 = vld [vmem:[#allocation2 + $0x2b8] sm:$0xff]
          %v3880 = vld [vmem:[#allocation2 + $0x2c0] sm:$0xff]
          %v3881 = vld [vmem:[#allocation2 + $0x2c8] sm:$0xff]
          %v3882 = vld [vmem:[#allocation2 + $0x2d0] sm:$0xff]
          %v3883 = vld [vmem:[#allocation2 + $0x2d8] sm:$0xff]
          %v3884 = vld [vmem:[#allocation2 + $0x2e0] sm:$0xff]
          %v3885 = vld [vmem:[#allocation2 + $0x2e8] sm:$0xff]
          %v3886 = vld [vmem:[#allocation2 + $0x2f0] sm:$0xff]
          %v3887 = vld [vmem:[#allocation2 + $0x2f8] sm:$0xff]
          %v3888 = vpack.c.bf16 %v3544, %v3536
          %v3889 = vpack.c.bf16 %v3545, %v3537
          %v3890 = vpack.c.bf16 %v3546, %v3538
          %v3891 = vpack.c.bf16 %v3547, %v3539
          %v3892 = vpack.c.bf16 %v3548, %v3540
          %v3893 = vpack.c.bf16 %v3549, %v3541
          %v3894 = vpack.c.bf16 %v3550, %v3542
          %v3895 = vpack.c.bf16 %v3551, %v3543
          %v3896 = vpack.c.bf16 %v3560, %v3552
          %v3897 = vpack.c.bf16 %v3561, %v3553
          %v3898 = vpack.c.bf16 %v3562, %v3554
          %v3899 = vpack.c.bf16 %v3563, %v3555
          %v3900 = vpack.c.bf16 %v3564, %v3556
          %v3901 = vpack.c.bf16 %v3565, %v3557
          %v3902 = vpack.c.bf16 %v3566, %v3558
          %v3903 = vpack.c.bf16 %v3567, %v3559
          %v3904 = vpack.c.bf16 %v3576, %v3568
          %v3905 = vpack.c.bf16 %v3577, %v3569
          %v3906 = vpack.c.bf16 %v3578, %v3570
          %v3907 = vpack.c.bf16 %v3579, %v3571
          %v3908 = vpack.c.bf16 %v3580, %v3572
          %v3909 = vpack.c.bf16 %v3581, %v3573
          %v3910 = vpack.c.bf16 %v3582, %v3574
          %v3911 = vpack.c.bf16 %v3583, %v3575
          %v3912 = vpack.c.bf16 %v3592, %v3584
          %v3913 = vpack.c.bf16 %v3593, %v3585
          %v3914 = vpack.c.bf16 %v3594, %v3586
          %v3915 = vpack.c.bf16 %v3595, %v3587
          %v3916 = vpack.c.bf16 %v3596, %v3588
          %v3917 = vpack.c.bf16 %v3597, %v3589
          %v3918 = vpack.c.bf16 %v3598, %v3590
          %v3919 = vpack.c.bf16 %v3599, %v3591
          %v3920 = vpack.c.bf16 %v3608, %v3600
          %v3921 = vpack.c.bf16 %v3609, %v3601
          %v3922 = vpack.c.bf16 %v3610, %v3602
          %v3923 = vpack.c.bf16 %v3611, %v3603
          %v3924 = vpack.c.bf16 %v3612, %v3604
          %v3925 = vpack.c.bf16 %v3613, %v3605
          %v3926 = vpack.c.bf16 %v3614, %v3606
          %v3927 = vpack.c.bf16 %v3615, %v3607
          %v3928 = vpack.c.bf16 %v3624, %v3616
          %v3929 = vpack.c.bf16 %v3625, %v3617
          %v3930 = vpack.c.bf16 %v3626, %v3618
          %v3931 = vpack.c.bf16 %v3627, %v3619
          %v3932 = vpack.c.bf16 %v3628, %v3620
          %v3933 = vpack.c.bf16 %v3629, %v3621
          %v3934 = vpack.c.bf16 %v3630, %v3622
          %v3935 = vpack.c.bf16 %v3631, %v3623
          %v3936 = vpack.c.bf16 %v3640, %v3632
          %v3937 = vpack.c.bf16 %v3641, %v3633
          %v3938 = vpack.c.bf16 %v3642, %v3634
          %v3939 = vpack.c.bf16 %v3643, %v3635
          %v3940 = vpack.c.bf16 %v3644, %v3636
          %v3941 = vpack.c.bf16 %v3645, %v3637
          %v3942 = vpack.c.bf16 %v3646, %v3638
          %v3943 = vpack.c.bf16 %v3647, %v3639
          %v3944 = vpack.c.bf16 %v3656, %v3648
          %v3945 = vpack.c.bf16 %v3657, %v3649
          %v3946 = vpack.c.bf16 %v3658, %v3650
          %v3947 = vpack.c.bf16 %v3659, %v3651
          %v3948 = vpack.c.bf16 %v3660, %v3652
          %v3949 = vpack.c.bf16 %v3661, %v3653
          %v3950 = vpack.c.bf16 %v3662, %v3654
          %v3951 = vpack.c.bf16 %v3663, %v3655
          %v3952 = vpack.c.bf16 %v3672, %v3664
          %v3953 = vpack.c.bf16 %v3673, %v3665
          %v3954 = vpack.c.bf16 %v3674, %v3666
          %v3955 = vpack.c.bf16 %v3675, %v3667
          %v3956 = vpack.c.bf16 %v3676, %v3668
          %v3957 = vpack.c.bf16 %v3677, %v3669
          %v3958 = vpack.c.bf16 %v3678, %v3670
          %v3959 = vpack.c.bf16 %v3679, %v3671
          %v3960 = vpack.c.bf16 %v3688, %v3680
          %v3961 = vpack.c.bf16 %v3689, %v3681
          %v3962 = vpack.c.bf16 %v3690, %v3682
          %v3963 = vpack.c.bf16 %v3691, %v3683
          %v3964 = vpack.c.bf16 %v3692, %v3684
          %v3965 = vpack.c.bf16 %v3693, %v3685
          %v3966 = vpack.c.bf16 %v3694, %v3686
          %v3967 = vpack.c.bf16 %v3695, %v3687
          %v3968 = vpack.c.bf16 %v3704, %v3696
          %v3969 = vpack.c.bf16 %v3705, %v3697
          %v3970 = vpack.c.bf16 %v3706, %v3698
          %v3971 = vpack.c.bf16 %v3707, %v3699
          %v3972 = vpack.c.bf16 %v3708, %v3700
          %v3973 = vpack.c.bf16 %v3709, %v3701
          %v3974 = vpack.c.bf16 %v3710, %v3702
          %v3975 = vpack.c.bf16 %v3711, %v3703
          %v3976 = vpack.c.bf16 %v3720, %v3712
          %v3977 = vpack.c.bf16 %v3721, %v3713
          %v3978 = vpack.c.bf16 %v3722, %v3714
          %v3979 = vpack.c.bf16 %v3723, %v3715
          %v3980 = vpack.c.bf16 %v3724, %v3716
          %v3981 = vpack.c.bf16 %v3725, %v3717
          %v3982 = vpack.c.bf16 %v3726, %v3718
          %v3983 = vpack.c.bf16 %v3727, %v3719
          %v3984 = vpack.c.bf16 %v3736, %v3728
          %v3985 = vpack.c.bf16 %v3737, %v3729
          %v3986 = vpack.c.bf16 %v3738, %v3730
          %v3987 = vpack.c.bf16 %v3739, %v3731
          %v3988 = vpack.c.bf16 %v3740, %v3732
          %v3989 = vpack.c.bf16 %v3741, %v3733
          %v3990 = vpack.c.bf16 %v3742, %v3734
          %v3991 = vpack.c.bf16 %v3743, %v3735
          %v3992 = vpack.c.bf16 %v3752, %v3744
          %v3993 = vpack.c.bf16 %v3753, %v3745
          %v3994 = vpack.c.bf16 %v3754, %v3746
          %v3995 = vpack.c.bf16 %v3755, %v3747
          %v3996 = vpack.c.bf16 %v3756, %v3748
          %v3997 = vpack.c.bf16 %v3757, %v3749
          %v3998 = vpack.c.bf16 %v3758, %v3750
          %v3999 = vpack.c.bf16 %v3759, %v3751
          %v4000 = vpack.c.bf16 %v3768, %v3760
          %v4001 = vpack.c.bf16 %v3769, %v3761
          %v4002 = vpack.c.bf16 %v3770, %v3762
          %v4003 = vpack.c.bf16 %v3771, %v3763
          %v4004 = vpack.c.bf16 %v3772, %v3764
          %v4005 = vpack.c.bf16 %v3773, %v3765
          %v4006 = vpack.c.bf16 %v3774, %v3766
          %v4007 = vpack.c.bf16 %v3775, %v3767
          %v4008 = vpack.c.bf16 %v3784, %v3776
          %v4009 = vpack.c.bf16 %v3785, %v3777
          %v4010 = vpack.c.bf16 %v3786, %v3778
          %v4011 = vpack.c.bf16 %v3787, %v3779
          %v4012 = vpack.c.bf16 %v3788, %v3780
          %v4013 = vpack.c.bf16 %v3789, %v3781
          %v4014 = vpack.c.bf16 %v3790, %v3782
          %v4015 = vpack.c.bf16 %v3791, %v3783
          %v4016 = vld [vmem:[#allocation5] sm:$0xff]
          %v4017 = vld [vmem:[#allocation5 + $0x8] sm:$0xf]
          %v4018 = vld [vmem:[#allocation5 + $0xc] sm:$0xff]
          %v4019 = vld [vmem:[#allocation5 + $0x14] sm:$0xf]
          %v4020 = vld [vmem:[#allocation5 + $0x18] sm:$0xff]
          %v4021 = vld [vmem:[#allocation5 + $0x20] sm:$0xf]
          %v4022 = vld [vmem:[#allocation5 + $0x24] sm:$0xff]
          %v4023 = vld [vmem:[#allocation5 + $0x2c] sm:$0xf]
          %v4024 = vld [vmem:[#allocation5 + $0x30] sm:$0xff]
          %v4025 = vld [vmem:[#allocation5 + $0x38] sm:$0xf]
          %v4026 = vld [vmem:[#allocation5 + $0x3c] sm:$0xff]
          %v4027 = vld [vmem:[#allocation5 + $0x44] sm:$0xf]
          %v4028 = vld [vmem:[#allocation5 + $0x48] sm:$0xff]
          %v4029 = vld [vmem:[#allocation5 + $0x50] sm:$0xf]
          %v4030 = vld [vmem:[#allocation5 + $0x54] sm:$0xff]
          %v4031 = vld [vmem:[#allocation5 + $0x5c] sm:$0xf]
          %v4032 = vld [vmem:[#allocation5 + $0x60] sm:$0xff]
          %v4033 = vld [vmem:[#allocation5 + $0x68] sm:$0xf]
          %v4034 = vld [vmem:[#allocation5 + $0x6c] sm:$0xff]
          %v4035 = vld [vmem:[#allocation5 + $0x74] sm:$0xf]
          %v4036 = vld [vmem:[#allocation5 + $0x78] sm:$0xff]
          %v4037 = vld [vmem:[#allocation5 + $0x80] sm:$0xf]
          %v4038 = vld [vmem:[#allocation5 + $0x84] sm:$0xff]
          %v4039 = vld [vmem:[#allocation5 + $0x8c] sm:$0xf]
          %v4040 = vld [vmem:[#allocation5 + $0x90] sm:$0xff]
          %v4041 = vld [vmem:[#allocation5 + $0x98] sm:$0xf]
          %v4042 = vld [vmem:[#allocation5 + $0x9c] sm:$0xff]
          %v4043 = vld [vmem:[#allocation5 + $0xa4] sm:$0xf]
          %v4044 = vld [vmem:[#allocation5 + $0xa8] sm:$0xff]
          %v4045 = vld [vmem:[#allocation5 + $0xb0] sm:$0xf]
          %v4046 = vld [vmem:[#allocation5 + $0xb4] sm:$0xff]
          %v4047 = vld [vmem:[#allocation5 + $0xbc] sm:$0xf]
          %v4048 = vld [vmem:[#allocation5 + $0xc0] sm:$0xff]
          %v4049 = vld [vmem:[#allocation5 + $0xc8] sm:$0xf]
          %v4050 = vld [vmem:[#allocation5 + $0xcc] sm:$0xff]
          %v4051 = vld [vmem:[#allocation5 + $0xd4] sm:$0xf]
          %v4052 = vld [vmem:[#allocation5 + $0xd8] sm:$0xff]
          %v4053 = vld [vmem:[#allocation5 + $0xe0] sm:$0xf]
          %v4054 = vld [vmem:[#allocation5 + $0xe4] sm:$0xff]
          %v4055 = vld [vmem:[#allocation5 + $0xec] sm:$0xf]
          %v4056 = vld [vmem:[#allocation5 + $0xf0] sm:$0xff]
          %v4057 = vld [vmem:[#allocation5 + $0xf8] sm:$0xf]
          %v4058 = vld [vmem:[#allocation5 + $0xfc] sm:$0xff]
          %v4059 = vld [vmem:[#allocation5 + $0x104] sm:$0xf]
          %v4060 = vld [vmem:[#allocation5 + $0x108] sm:$0xff]
          %v4061 = vld [vmem:[#allocation5 + $0x110] sm:$0xf]
          %v4062 = vld [vmem:[#allocation5 + $0x114] sm:$0xff]
          %v4063 = vld [vmem:[#allocation5 + $0x11c] sm:$0xf]
          %v4064 = vld [vmem:[#allocation5 + $0x120] sm:$0xff]
          %v4065 = vld [vmem:[#allocation5 + $0x128] sm:$0xf]
          %v4066 = vld [vmem:[#allocation5 + $0x12c] sm:$0xff]
          %v4067 = vld [vmem:[#allocation5 + $0x134] sm:$0xf]
          %v4068 = vld [vmem:[#allocation5 + $0x138] sm:$0xff]
          %v4069 = vld [vmem:[#allocation5 + $0x140] sm:$0xf]
          %v4070 = vld [vmem:[#allocation5 + $0x144] sm:$0xff]
          %v4071 = vld [vmem:[#allocation5 + $0x14c] sm:$0xf]
          %v4072 = vld [vmem:[#allocation5 + $0x150] sm:$0xff]
          %v4073 = vld [vmem:[#allocation5 + $0x158] sm:$0xf]
          %v4074 = vld [vmem:[#allocation5 + $0x15c] sm:$0xff]
          %v4075 = vld [vmem:[#allocation5 + $0x164] sm:$0xf]
          %v4076 = vld [vmem:[#allocation5 + $0x168] sm:$0xff]
          %v4077 = vld [vmem:[#allocation5 + $0x170] sm:$0xf]
          %v4078 = vld [vmem:[#allocation5 + $0x174] sm:$0xff]
          %v4079 = vld [vmem:[#allocation5 + $0x17c] sm:$0xf]
          %v4080 = vld [vmem:[#allocation5 + $0x180] sm:$0xff]
          %v4081 = vld [vmem:[#allocation5 + $0x188] sm:$0xf]
          %v4082 = vld [vmem:[#allocation5 + $0x18c] sm:$0xff]
          %v4083 = vld [vmem:[#allocation5 + $0x194] sm:$0xf]
          %v4084 = vld [vmem:[#allocation5 + $0x198] sm:$0xff]
          %v4085 = vld [vmem:[#allocation5 + $0x1a0] sm:$0xf]
          %v4086 = vld [vmem:[#allocation5 + $0x1a4] sm:$0xff]
          %v4087 = vld [vmem:[#allocation5 + $0x1ac] sm:$0xf]
          %v4088 = vld [vmem:[#allocation5 + $0x1b0] sm:$0xff]
          %v4089 = vld [vmem:[#allocation5 + $0x1b8] sm:$0xf]
          %v4090 = vld [vmem:[#allocation5 + $0x1bc] sm:$0xff]
          %v4091 = vld [vmem:[#allocation5 + $0x1c4] sm:$0xf]
          %v4092 = vld [vmem:[#allocation5 + $0x1c8] sm:$0xff]
          %v4093 = vld [vmem:[#allocation5 + $0x1d0] sm:$0xf]
          %v4094 = vld [vmem:[#allocation5 + $0x1d4] sm:$0xff]
          %v4095 = vld [vmem:[#allocation5 + $0x1dc] sm:$0xf]
          %v4096 = vld [vmem:[#allocation5 + $0x1e0] sm:$0xff]
          %v4097 = vld [vmem:[#allocation5 + $0x1e8] sm:$0xf]
          %v4098 = vld [vmem:[#allocation5 + $0x1ec] sm:$0xff]
          %v4099 = vld [vmem:[#allocation5 + $0x1f4] sm:$0xf]
          %v4100 = vld [vmem:[#allocation5 + $0x1f8] sm:$0xff]
          %v4101 = vld [vmem:[#allocation5 + $0x200] sm:$0xf]
          %v4102 = vld [vmem:[#allocation5 + $0x204] sm:$0xff]
          %v4103 = vld [vmem:[#allocation5 + $0x20c] sm:$0xf]
          %v4104 = vld [vmem:[#allocation5 + $0x210] sm:$0xff]
          %v4105 = vld [vmem:[#allocation5 + $0x218] sm:$0xf]
          %v4106 = vld [vmem:[#allocation5 + $0x21c] sm:$0xff]
          %v4107 = vld [vmem:[#allocation5 + $0x224] sm:$0xf]
          %v4108 = vld [vmem:[#allocation5 + $0x228] sm:$0xff]
          %v4109 = vld [vmem:[#allocation5 + $0x230] sm:$0xf]
          %v4110 = vld [vmem:[#allocation5 + $0x234] sm:$0xff]
          %v4111 = vld [vmem:[#allocation5 + $0x23c] sm:$0xf]
          %v4112 = vld [vmem:[#allocation5 + $0x240] sm:$0xff]
          %v4113 = vld [vmem:[#allocation5 + $0x248] sm:$0xf]
          %v4114 = vld [vmem:[#allocation5 + $0x24c] sm:$0xff]
          %v4115 = vld [vmem:[#allocation5 + $0x254] sm:$0xf]
          %v4116 = vld [vmem:[#allocation5 + $0x258] sm:$0xff]
          %v4117 = vld [vmem:[#allocation5 + $0x260] sm:$0xf]
          %v4118 = vld [vmem:[#allocation5 + $0x264] sm:$0xff]
          %v4119 = vld [vmem:[#allocation5 + $0x26c] sm:$0xf]
          %v4120 = vld [vmem:[#allocation5 + $0x270] sm:$0xff]
          %v4121 = vld [vmem:[#allocation5 + $0x278] sm:$0xf]
          %v4122 = vld [vmem:[#allocation5 + $0x27c] sm:$0xff]
          %v4123 = vld [vmem:[#allocation5 + $0x284] sm:$0xf]
          %v4124 = vld [vmem:[#allocation5 + $0x288] sm:$0xff]
          %v4125 = vld [vmem:[#allocation5 + $0x290] sm:$0xf]
          %v4126 = vld [vmem:[#allocation5 + $0x294] sm:$0xff]
          %v4127 = vld [vmem:[#allocation5 + $0x29c] sm:$0xf]
          %v4128 = vld [vmem:[#allocation5 + $0x2a0] sm:$0xff]
          %v4129 = vld [vmem:[#allocation5 + $0x2a8] sm:$0xf]
          %v4130 = vld [vmem:[#allocation5 + $0x2ac] sm:$0xff]
          %v4131 = vld [vmem:[#allocation5 + $0x2b4] sm:$0xf]
          %v4132 = vld [vmem:[#allocation5 + $0x2b8] sm:$0xff]
          %v4133 = vld [vmem:[#allocation5 + $0x2c0] sm:$0xf]
          %v4134 = vld [vmem:[#allocation5 + $0x2c4] sm:$0xff]
          %v4135 = vld [vmem:[#allocation5 + $0x2cc] sm:$0xf]
          %v4136 = vld [vmem:[#allocation5 + $0x2d0] sm:$0xff]
          %v4137 = vld [vmem:[#allocation5 + $0x2d8] sm:$0xf]
          %v4138 = vld [vmem:[#allocation5 + $0x2dc] sm:$0xff]
          %v4139 = vld [vmem:[#allocation5 + $0x2e4] sm:$0xf]
          %v4140 = vld [vmem:[#allocation5 + $0x2e8] sm:$0xff]
          %v4141 = vld [vmem:[#allocation5 + $0x2f0] sm:$0xf]
          %v4142 = vld [vmem:[#allocation5 + $0x2f4] sm:$0xff]
          %v4143 = vld [vmem:[#allocation5 + $0x2fc] sm:$0xf]
          %v4144 = vld [vmem:[#allocation5 + $0x300] sm:$0xff]
          %v4145 = vld [vmem:[#allocation5 + $0x308] sm:$0xf]
          %v4146 = vld [vmem:[#allocation5 + $0x30c] sm:$0xff]
          %v4147 = vld [vmem:[#allocation5 + $0x314] sm:$0xf]
          %v4148 = vld [vmem:[#allocation5 + $0x318] sm:$0xff]
          %v4149 = vld [vmem:[#allocation5 + $0x320] sm:$0xf]
          %v4150 = vld [vmem:[#allocation5 + $0x324] sm:$0xff]
          %v4151 = vld [vmem:[#allocation5 + $0x32c] sm:$0xf]
          %v4152 = vld [vmem:[#allocation5 + $0x330] sm:$0xff]
          %v4153 = vld [vmem:[#allocation5 + $0x338] sm:$0xf]
          %v4154 = vld [vmem:[#allocation5 + $0x33c] sm:$0xff]
          %v4155 = vld [vmem:[#allocation5 + $0x344] sm:$0xf]
          %v4156 = vld [vmem:[#allocation5 + $0x348] sm:$0xff]
          %v4157 = vld [vmem:[#allocation5 + $0x350] sm:$0xf]
          %v4158 = vld [vmem:[#allocation5 + $0x354] sm:$0xff]
          %v4159 = vld [vmem:[#allocation5 + $0x35c] sm:$0xf]
          %v4160 = vld [vmem:[#allocation5 + $0x360] sm:$0xff]
          %v4161 = vld [vmem:[#allocation5 + $0x368] sm:$0xf]
          %v4162 = vld [vmem:[#allocation5 + $0x36c] sm:$0xff]
          %v4163 = vld [vmem:[#allocation5 + $0x374] sm:$0xf]
          %v4164 = vld [vmem:[#allocation5 + $0x378] sm:$0xff]
          %v4165 = vld [vmem:[#allocation5 + $0x380] sm:$0xf]
          %v4166 = vld [vmem:[#allocation5 + $0x384] sm:$0xff]
          %v4167 = vld [vmem:[#allocation5 + $0x38c] sm:$0xf]
          %v4168 = vld [vmem:[#allocation5 + $0x390] sm:$0xff]
          %v4169 = vld [vmem:[#allocation5 + $0x398] sm:$0xf]
          %v4170 = vld [vmem:[#allocation5 + $0x39c] sm:$0xff]
          %v4171 = vld [vmem:[#allocation5 + $0x3a4] sm:$0xf]
          %v4172 = vld [vmem:[#allocation5 + $0x3a8] sm:$0xff]
          %v4173 = vld [vmem:[#allocation5 + $0x3b0] sm:$0xf]
          %v4174 = vld [vmem:[#allocation5 + $0x3b4] sm:$0xff]
          %v4175 = vld [vmem:[#allocation5 + $0x3bc] sm:$0xf]
          %v4176 = vld [vmem:[#allocation5 + $0x3c0] sm:$0xff]
          %v4177 = vld [vmem:[#allocation5 + $0x3c8] sm:$0xf]
          %v4178 = vld [vmem:[#allocation5 + $0x3cc] sm:$0xff]
          %v4179 = vld [vmem:[#allocation5 + $0x3d4] sm:$0xf]
          %v4180 = vld [vmem:[#allocation5 + $0x3d8] sm:$0xff]
          %v4181 = vld [vmem:[#allocation5 + $0x3e0] sm:$0xf]
          %v4182 = vld [vmem:[#allocation5 + $0x3e4] sm:$0xff]
          %v4183 = vld [vmem:[#allocation5 + $0x3ec] sm:$0xf]
          %v4184 = vld [vmem:[#allocation5 + $0x3f0] sm:$0xff]
          %v4185 = vld [vmem:[#allocation5 + $0x3f8] sm:$0xf]
          %v4186 = vld [vmem:[#allocation5 + $0x3fc] sm:$0xff]
          %v4187 = vld [vmem:[#allocation5 + $0x404] sm:$0xf]
          %v4188 = vld [vmem:[#allocation5 + $0x408] sm:$0xff]
          %v4189 = vld [vmem:[#allocation5 + $0x410] sm:$0xf]
          %v4190 = vld [vmem:[#allocation5 + $0x414] sm:$0xff]
          %v4191 = vld [vmem:[#allocation5 + $0x41c] sm:$0xf]
          %v4192 = vld [vmem:[#allocation5 + $0x420] sm:$0xff]
          %v4193 = vld [vmem:[#allocation5 + $0x428] sm:$0xf]
          %v4194 = vld [vmem:[#allocation5 + $0x42c] sm:$0xff]
          %v4195 = vld [vmem:[#allocation5 + $0x434] sm:$0xf]
          %v4196 = vld [vmem:[#allocation5 + $0x438] sm:$0xff]
          %v4197 = vld [vmem:[#allocation5 + $0x440] sm:$0xf]
          %v4198 = vld [vmem:[#allocation5 + $0x444] sm:$0xff]
          %v4199 = vld [vmem:[#allocation5 + $0x44c] sm:$0xf]
          %v4200 = vld [vmem:[#allocation5 + $0x450] sm:$0xff]
          %v4201 = vld [vmem:[#allocation5 + $0x458] sm:$0xf]
          %v4202 = vld [vmem:[#allocation5 + $0x45c] sm:$0xff]
          %v4203 = vld [vmem:[#allocation5 + $0x464] sm:$0xf]
          %v4204 = vld [vmem:[#allocation5 + $0x468] sm:$0xff]
          %v4205 = vld [vmem:[#allocation5 + $0x470] sm:$0xf]
          %v4206 = vld [vmem:[#allocation5 + $0x474] sm:$0xff]
          %v4207 = vld [vmem:[#allocation5 + $0x47c] sm:$0xf]
          %v4208 = vld [vmem:[#allocation5 + $0x480] sm:$0xff]
          %v4209 = vld [vmem:[#allocation5 + $0x488] sm:$0xf]
          %v4210 = vld [vmem:[#allocation5 + $0x48c] sm:$0xff]
          %v4211 = vld [vmem:[#allocation5 + $0x494] sm:$0xf]
          %v4212 = vld [vmem:[#allocation5 + $0x498] sm:$0xff]
          %v4213 = vld [vmem:[#allocation5 + $0x4a0] sm:$0xf]
          %v4214 = vld [vmem:[#allocation5 + $0x4a4] sm:$0xff]
          %v4215 = vld [vmem:[#allocation5 + $0x4ac] sm:$0xf]
          %v4216 = vld [vmem:[#allocation5 + $0x4b0] sm:$0xff]
          %v4217 = vld [vmem:[#allocation5 + $0x4b8] sm:$0xf]
          %v4218 = vld [vmem:[#allocation5 + $0x4bc] sm:$0xff]
          %v4219 = vld [vmem:[#allocation5 + $0x4c4] sm:$0xf]
          %v4220 = vld [vmem:[#allocation5 + $0x4c8] sm:$0xff]
          %v4221 = vld [vmem:[#allocation5 + $0x4d0] sm:$0xf]
          %v4222 = vld [vmem:[#allocation5 + $0x4d4] sm:$0xff]
          %v4223 = vld [vmem:[#allocation5 + $0x4dc] sm:$0xf]
          %v4224 = vld [vmem:[#allocation5 + $0x4e0] sm:$0xff]
          %v4225 = vld [vmem:[#allocation5 + $0x4e8] sm:$0xf]
          %v4226 = vld [vmem:[#allocation5 + $0x4ec] sm:$0xff]
          %v4227 = vld [vmem:[#allocation5 + $0x4f4] sm:$0xf]
          %v4228 = vld [vmem:[#allocation5 + $0x4f8] sm:$0xff]
          %v4229 = vld [vmem:[#allocation5 + $0x500] sm:$0xf]
          %v4230 = vld [vmem:[#allocation5 + $0x504] sm:$0xff]
          %v4231 = vld [vmem:[#allocation5 + $0x50c] sm:$0xf]
          %v4232 = vld [vmem:[#allocation5 + $0x510] sm:$0xff]
          %v4233 = vld [vmem:[#allocation5 + $0x518] sm:$0xf]
          %v4234 = vld [vmem:[#allocation5 + $0x51c] sm:$0xff]
          %v4235 = vld [vmem:[#allocation5 + $0x524] sm:$0xf]
          %v4236 = vld [vmem:[#allocation5 + $0x528] sm:$0xff]
          %v4237 = vld [vmem:[#allocation5 + $0x530] sm:$0xf]
          %v4238 = vld [vmem:[#allocation5 + $0x534] sm:$0xff]
          %v4239 = vld [vmem:[#allocation5 + $0x53c] sm:$0xf]
          %v4240 = vld [vmem:[#allocation5 + $0x540] sm:$0xff]
          %v4241 = vld [vmem:[#allocation5 + $0x548] sm:$0xf]
          %v4242 = vld [vmem:[#allocation5 + $0x54c] sm:$0xff]
          %v4243 = vld [vmem:[#allocation5 + $0x554] sm:$0xf]
          %v4244 = vld [vmem:[#allocation5 + $0x558] sm:$0xff]
          %v4245 = vld [vmem:[#allocation5 + $0x560] sm:$0xf]
          %v4246 = vld [vmem:[#allocation5 + $0x564] sm:$0xff]
          %v4247 = vld [vmem:[#allocation5 + $0x56c] sm:$0xf]
          %v4248 = vld [vmem:[#allocation5 + $0x570] sm:$0xff]
          %v4249 = vld [vmem:[#allocation5 + $0x578] sm:$0xf]
          %v4250 = vld [vmem:[#allocation5 + $0x57c] sm:$0xff]
          %v4251 = vld [vmem:[#allocation5 + $0x584] sm:$0xf]
          %v4252 = vld [vmem:[#allocation5 + $0x588] sm:$0xff]
          %v4253 = vld [vmem:[#allocation5 + $0x590] sm:$0xf]
          %v4254 = vld [vmem:[#allocation5 + $0x594] sm:$0xff]
          %v4255 = vld [vmem:[#allocation5 + $0x59c] sm:$0xf]
          %v4256 = vld [vmem:[#allocation5 + $0x5a0] sm:$0xff]
          %v4257 = vld [vmem:[#allocation5 + $0x5a8] sm:$0xf]
          %v4258 = vld [vmem:[#allocation5 + $0x5ac] sm:$0xff]
          %v4259 = vld [vmem:[#allocation5 + $0x5b4] sm:$0xf]
          %v4260 = vld [vmem:[#allocation5 + $0x5b8] sm:$0xff]
          %v4261 = vld [vmem:[#allocation5 + $0x5c0] sm:$0xf]
          %v4262 = vld [vmem:[#allocation5 + $0x5c4] sm:$0xff]
          %v4263 = vld [vmem:[#allocation5 + $0x5cc] sm:$0xf]
          %v4264 = vld [vmem:[#allocation5 + $0x5d0] sm:$0xff]
          %v4265 = vld [vmem:[#allocation5 + $0x5d8] sm:$0xf]
          %v4266 = vld [vmem:[#allocation5 + $0x5dc] sm:$0xff]
          %v4267 = vld [vmem:[#allocation5 + $0x5e4] sm:$0xf]
          %v4268 = vld [vmem:[#allocation5 + $0x5e8] sm:$0xff]
          %v4269 = vld [vmem:[#allocation5 + $0x5f0] sm:$0xf]
          %v4270 = vld [vmem:[#allocation5 + $0x5f4] sm:$0xff]
          %v4271 = vld [vmem:[#allocation5 + $0x5fc] sm:$0xf]
          %v4528 = vunpack.c.l.b16 %v4016
          %v4529 = vunpack.c.h.b16 %v4016
          %v4530 = vunpack.c.l.b16 %v4017
          %v4531 = vunpack.c.l.b16 %v4018
          %v4532 = vunpack.c.h.b16 %v4018
          %v4533 = vunpack.c.l.b16 %v4019
          %v4534 = vunpack.c.l.b16 %v4020
          %v4535 = vunpack.c.h.b16 %v4020
          %v4536 = vunpack.c.l.b16 %v4021
          %v4537 = vunpack.c.l.b16 %v4022
          %v4538 = vunpack.c.h.b16 %v4022
          %v4539 = vunpack.c.l.b16 %v4023
          %v4540 = vunpack.c.l.b16 %v4024
          %v4541 = vunpack.c.h.b16 %v4024
          %v4542 = vunpack.c.l.b16 %v4025
          %v4543 = vunpack.c.l.b16 %v4026
          %v4544 = vunpack.c.h.b16 %v4026
          %v4545 = vunpack.c.l.b16 %v4027
          %v4546 = vunpack.c.l.b16 %v4028
          %v4547 = vunpack.c.h.b16 %v4028
          %v4548 = vunpack.c.l.b16 %v4029
          %v4549 = vunpack.c.l.b16 %v4030
          %v4550 = vunpack.c.h.b16 %v4030
          %v4551 = vunpack.c.l.b16 %v4031
          %v4552 = vunpack.c.l.b16 %v4032
          %v4553 = vunpack.c.h.b16 %v4032
          %v4554 = vunpack.c.l.b16 %v4033
          %v4555 = vunpack.c.l.b16 %v4034
          %v4556 = vunpack.c.h.b16 %v4034
          %v4557 = vunpack.c.l.b16 %v4035
          %v4558 = vunpack.c.l.b16 %v4036
          %v4559 = vunpack.c.h.b16 %v4036
          %v4560 = vunpack.c.l.b16 %v4037
          %v4561 = vunpack.c.l.b16 %v4038
          %v4562 = vunpack.c.h.b16 %v4038
          %v4563 = vunpack.c.l.b16 %v4039
          %v4564 = vunpack.c.l.b16 %v4040
          %v4565 = vunpack.c.h.b16 %v4040
          %v4566 = vunpack.c.l.b16 %v4041
          %v4567 = vunpack.c.l.b16 %v4042
          %v4568 = vunpack.c.h.b16 %v4042
          %v4569 = vunpack.c.l.b16 %v4043
          %v4570 = vunpack.c.l.b16 %v4044
          %v4571 = vunpack.c.h.b16 %v4044
          %v4572 = vunpack.c.l.b16 %v4045
          %v4573 = vunpack.c.l.b16 %v4046
          %v4574 = vunpack.c.h.b16 %v4046
          %v4575 = vunpack.c.l.b16 %v4047
          %v4576 = vunpack.c.l.b16 %v4048
          %v4577 = vunpack.c.h.b16 %v4048
          %v4578 = vunpack.c.l.b16 %v4049
          %v4579 = vunpack.c.l.b16 %v4050
          %v4580 = vunpack.c.h.b16 %v4050
          %v4581 = vunpack.c.l.b16 %v4051
          %v4582 = vunpack.c.l.b16 %v4052
          %v4583 = vunpack.c.h.b16 %v4052
          %v4584 = vunpack.c.l.b16 %v4053
          %v4585 = vunpack.c.l.b16 %v4054
          %v4586 = vunpack.c.h.b16 %v4054
          %v4587 = vunpack.c.l.b16 %v4055
          %v4588 = vunpack.c.l.b16 %v4056
          %v4589 = vunpack.c.h.b16 %v4056
          %v4590 = vunpack.c.l.b16 %v4057
          %v4591 = vunpack.c.l.b16 %v4058
          %v4592 = vunpack.c.h.b16 %v4058
          %v4593 = vunpack.c.l.b16 %v4059
          %v4594 = vunpack.c.l.b16 %v4060
          %v4595 = vunpack.c.h.b16 %v4060
          %v4596 = vunpack.c.l.b16 %v4061
          %v4597 = vunpack.c.l.b16 %v4062
          %v4598 = vunpack.c.h.b16 %v4062
          %v4599 = vunpack.c.l.b16 %v4063
          %v4600 = vunpack.c.l.b16 %v4064
          %v4601 = vunpack.c.h.b16 %v4064
          %v4602 = vunpack.c.l.b16 %v4065
          %v4603 = vunpack.c.l.b16 %v4066
          %v4604 = vunpack.c.h.b16 %v4066
          %v4605 = vunpack.c.l.b16 %v4067
          %v4606 = vunpack.c.l.b16 %v4068
          %v4607 = vunpack.c.h.b16 %v4068
          %v4608 = vunpack.c.l.b16 %v4069
          %v4609 = vunpack.c.l.b16 %v4070
          %v4610 = vunpack.c.h.b16 %v4070
          %v4611 = vunpack.c.l.b16 %v4071
          %v4612 = vunpack.c.l.b16 %v4072
          %v4613 = vunpack.c.h.b16 %v4072
          %v4614 = vunpack.c.l.b16 %v4073
          %v4615 = vunpack.c.l.b16 %v4074
          %v4616 = vunpack.c.h.b16 %v4074
          %v4617 = vunpack.c.l.b16 %v4075
          %v4618 = vunpack.c.l.b16 %v4076
          %v4619 = vunpack.c.h.b16 %v4076
          %v4620 = vunpack.c.l.b16 %v4077
          %v4621 = vunpack.c.l.b16 %v4078
          %v4622 = vunpack.c.h.b16 %v4078
          %v4623 = vunpack.c.l.b16 %v4079
          %v4624 = vunpack.c.l.b16 %v4080
          %v4625 = vunpack.c.h.b16 %v4080
          %v4626 = vunpack.c.l.b16 %v4081
          %v4627 = vunpack.c.l.b16 %v4082
          %v4628 = vunpack.c.h.b16 %v4082
          %v4629 = vunpack.c.l.b16 %v4083
          %v4630 = vunpack.c.l.b16 %v4084
          %v4631 = vunpack.c.h.b16 %v4084
          %v4632 = vunpack.c.l.b16 %v4085
          %v4633 = vunpack.c.l.b16 %v4086
          %v4634 = vunpack.c.h.b16 %v4086
          %v4635 = vunpack.c.l.b16 %v4087
          %v4636 = vunpack.c.l.b16 %v4088
          %v4637 = vunpack.c.h.b16 %v4088
          %v4638 = vunpack.c.l.b16 %v4089
          %v4639 = vunpack.c.l.b16 %v4090
          %v4640 = vunpack.c.h.b16 %v4090
          %v4641 = vunpack.c.l.b16 %v4091
          %v4642 = vunpack.c.l.b16 %v4092
          %v4643 = vunpack.c.h.b16 %v4092
          %v4644 = vunpack.c.l.b16 %v4093
          %v4645 = vunpack.c.l.b16 %v4094
          %v4646 = vunpack.c.h.b16 %v4094
          %v4647 = vunpack.c.l.b16 %v4095
          %v4648 = vunpack.c.l.b16 %v4096
          %v4649 = vunpack.c.h.b16 %v4096
          %v4650 = vunpack.c.l.b16 %v4097
          %v4651 = vunpack.c.l.b16 %v4098
          %v4652 = vunpack.c.h.b16 %v4098
          %v4653 = vunpack.c.l.b16 %v4099
          %v4654 = vunpack.c.l.b16 %v4100
          %v4655 = vunpack.c.h.b16 %v4100
          %v4656 = vunpack.c.l.b16 %v4101
          %v4657 = vunpack.c.l.b16 %v4102
          %v4658 = vunpack.c.h.b16 %v4102
          %v4659 = vunpack.c.l.b16 %v4103
          %v4660 = vunpack.c.l.b16 %v4104
          %v4661 = vunpack.c.h.b16 %v4104
          %v4662 = vunpack.c.l.b16 %v4105
          %v4663 = vunpack.c.l.b16 %v4106
          %v4664 = vunpack.c.h.b16 %v4106
          %v4665 = vunpack.c.l.b16 %v4107
          %v4666 = vunpack.c.l.b16 %v4108
          %v4667 = vunpack.c.h.b16 %v4108
          %v4668 = vunpack.c.l.b16 %v4109
          %v4669 = vunpack.c.l.b16 %v4110
          %v4670 = vunpack.c.h.b16 %v4110
          %v4671 = vunpack.c.l.b16 %v4111
          %v4672 = vunpack.c.l.b16 %v4112
          %v4673 = vunpack.c.h.b16 %v4112
          %v4674 = vunpack.c.l.b16 %v4113
          %v4675 = vunpack.c.l.b16 %v4114
          %v4676 = vunpack.c.h.b16 %v4114
          %v4677 = vunpack.c.l.b16 %v4115
          %v4678 = vunpack.c.l.b16 %v4116
          %v4679 = vunpack.c.h.b16 %v4116
          %v4680 = vunpack.c.l.b16 %v4117
          %v4681 = vunpack.c.l.b16 %v4118
          %v4682 = vunpack.c.h.b16 %v4118
          %v4683 = vunpack.c.l.b16 %v4119
          %v4684 = vunpack.c.l.b16 %v4120
          %v4685 = vunpack.c.h.b16 %v4120
          %v4686 = vunpack.c.l.b16 %v4121
          %v4687 = vunpack.c.l.b16 %v4122
          %v4688 = vunpack.c.h.b16 %v4122
          %v4689 = vunpack.c.l.b16 %v4123
          %v4690 = vunpack.c.l.b16 %v4124
          %v4691 = vunpack.c.h.b16 %v4124
          %v4692 = vunpack.c.l.b16 %v4125
          %v4693 = vunpack.c.l.b16 %v4126
          %v4694 = vunpack.c.h.b16 %v4126
          %v4695 = vunpack.c.l.b16 %v4127
          %v4696 = vunpack.c.l.b16 %v4128
          %v4697 = vunpack.c.h.b16 %v4128
          %v4698 = vunpack.c.l.b16 %v4129
          %v4699 = vunpack.c.l.b16 %v4130
          %v4700 = vunpack.c.h.b16 %v4130
          %v4701 = vunpack.c.l.b16 %v4131
          %v4702 = vunpack.c.l.b16 %v4132
          %v4703 = vunpack.c.h.b16 %v4132
          %v4704 = vunpack.c.l.b16 %v4133
          %v4705 = vunpack.c.l.b16 %v4134
          %v4706 = vunpack.c.h.b16 %v4134
          %v4707 = vunpack.c.l.b16 %v4135
          %v4708 = vunpack.c.l.b16 %v4136
          %v4709 = vunpack.c.h.b16 %v4136
          %v4710 = vunpack.c.l.b16 %v4137
          %v4711 = vunpack.c.l.b16 %v4138
          %v4712 = vunpack.c.h.b16 %v4138
          %v4713 = vunpack.c.l.b16 %v4139
          %v4714 = vunpack.c.l.b16 %v4140
          %v4715 = vunpack.c.h.b16 %v4140
          %v4716 = vunpack.c.l.b16 %v4141
          %v4717 = vunpack.c.l.b16 %v4142
          %v4718 = vunpack.c.h.b16 %v4142
          %v4719 = vunpack.c.l.b16 %v4143
          %v4720 = vunpack.c.l.b16 %v4144
          %v4721 = vunpack.c.h.b16 %v4144
          %v4722 = vunpack.c.l.b16 %v4145
          %v4723 = vunpack.c.l.b16 %v4146
          %v4724 = vunpack.c.h.b16 %v4146
          %v4725 = vunpack.c.l.b16 %v4147
          %v4726 = vunpack.c.l.b16 %v4148
          %v4727 = vunpack.c.h.b16 %v4148
          %v4728 = vunpack.c.l.b16 %v4149
          %v4729 = vunpack.c.l.b16 %v4150
          %v4730 = vunpack.c.h.b16 %v4150
          %v4731 = vunpack.c.l.b16 %v4151
          %v4732 = vunpack.c.l.b16 %v4152
          %v4733 = vunpack.c.h.b16 %v4152
          %v4734 = vunpack.c.l.b16 %v4153
          %v4735 = vunpack.c.l.b16 %v4154
          %v4736 = vunpack.c.h.b16 %v4154
          %v4737 = vunpack.c.l.b16 %v4155
          %v4738 = vunpack.c.l.b16 %v4156
          %v4739 = vunpack.c.h.b16 %v4156
          %v4740 = vunpack.c.l.b16 %v4157
          %v4741 = vunpack.c.l.b16 %v4158
          %v4742 = vunpack.c.h.b16 %v4158
          %v4743 = vunpack.c.l.b16 %v4159
          %v4744 = vunpack.c.l.b16 %v4160
          %v4745 = vunpack.c.h.b16 %v4160
          %v4746 = vunpack.c.l.b16 %v4161
          %v4747 = vunpack.c.l.b16 %v4162
          %v4748 = vunpack.c.h.b16 %v4162
          %v4749 = vunpack.c.l.b16 %v4163
          %v4750 = vunpack.c.l.b16 %v4164
          %v4751 = vunpack.c.h.b16 %v4164
          %v4752 = vunpack.c.l.b16 %v4165
          %v4753 = vunpack.c.l.b16 %v4166
          %v4754 = vunpack.c.h.b16 %v4166
          %v4755 = vunpack.c.l.b16 %v4167
          %v4756 = vunpack.c.l.b16 %v4168
          %v4757 = vunpack.c.h.b16 %v4168
          %v4758 = vunpack.c.l.b16 %v4169
          %v4759 = vunpack.c.l.b16 %v4170
          %v4760 = vunpack.c.h.b16 %v4170
          %v4761 = vunpack.c.l.b16 %v4171
          %v4762 = vunpack.c.l.b16 %v4172
          %v4763 = vunpack.c.h.b16 %v4172
          %v4764 = vunpack.c.l.b16 %v4173
          %v4765 = vunpack.c.l.b16 %v4174
          %v4766 = vunpack.c.h.b16 %v4174
          %v4767 = vunpack.c.l.b16 %v4175
          %v4768 = vunpack.c.l.b16 %v4176
          %v4769 = vunpack.c.h.b16 %v4176
          %v4770 = vunpack.c.l.b16 %v4177
          %v4771 = vunpack.c.l.b16 %v4178
          %v4772 = vunpack.c.h.b16 %v4178
          %v4773 = vunpack.c.l.b16 %v4179
          %v4774 = vunpack.c.l.b16 %v4180
          %v4775 = vunpack.c.h.b16 %v4180
          %v4776 = vunpack.c.l.b16 %v4181
          %v4777 = vunpack.c.l.b16 %v4182
          %v4778 = vunpack.c.h.b16 %v4182
          %v4779 = vunpack.c.l.b16 %v4183
          %v4780 = vunpack.c.l.b16 %v4184
          %v4781 = vunpack.c.h.b16 %v4184
          %v4782 = vunpack.c.l.b16 %v4185
          %v4783 = vunpack.c.l.b16 %v4186
          %v4784 = vunpack.c.h.b16 %v4186
          %v4785 = vunpack.c.l.b16 %v4187
          %v4786 = vunpack.c.l.b16 %v4188
          %v4787 = vunpack.c.h.b16 %v4188
          %v4788 = vunpack.c.l.b16 %v4189
          %v4789 = vunpack.c.l.b16 %v4190
          %v4790 = vunpack.c.h.b16 %v4190
          %v4791 = vunpack.c.l.b16 %v4191
          %v4792 = vunpack.c.l.b16 %v4192
          %v4793 = vunpack.c.h.b16 %v4192
          %v4794 = vunpack.c.l.b16 %v4193
          %v4795 = vunpack.c.l.b16 %v4194
          %v4796 = vunpack.c.h.b16 %v4194
          %v4797 = vunpack.c.l.b16 %v4195
          %v4798 = vunpack.c.l.b16 %v4196
          %v4799 = vunpack.c.h.b16 %v4196
          %v4800 = vunpack.c.l.b16 %v4197
          %v4801 = vunpack.c.l.b16 %v4198
          %v4802 = vunpack.c.h.b16 %v4198
          %v4803 = vunpack.c.l.b16 %v4199
          %v4804 = vunpack.c.l.b16 %v4200
          %v4805 = vunpack.c.h.b16 %v4200
          %v4806 = vunpack.c.l.b16 %v4201
          %v4807 = vunpack.c.l.b16 %v4202
          %v4808 = vunpack.c.h.b16 %v4202
          %v4809 = vunpack.c.l.b16 %v4203
          %v4810 = vunpack.c.l.b16 %v4204
          %v4811 = vunpack.c.h.b16 %v4204
          %v4812 = vunpack.c.l.b16 %v4205
          %v4813 = vunpack.c.l.b16 %v4206
          %v4814 = vunpack.c.h.b16 %v4206
          %v4815 = vunpack.c.l.b16 %v4207
          %v4816 = vunpack.c.l.b16 %v4208
          %v4817 = vunpack.c.h.b16 %v4208
          %v4818 = vunpack.c.l.b16 %v4209
          %v4819 = vunpack.c.l.b16 %v4210
          %v4820 = vunpack.c.h.b16 %v4210
          %v4821 = vunpack.c.l.b16 %v4211
          %v4822 = vunpack.c.l.b16 %v4212
          %v4823 = vunpack.c.h.b16 %v4212
          %v4824 = vunpack.c.l.b16 %v4213
          %v4825 = vunpack.c.l.b16 %v4214
          %v4826 = vunpack.c.h.b16 %v4214
          %v4827 = vunpack.c.l.b16 %v4215
          %v4828 = vunpack.c.l.b16 %v4216
          %v4829 = vunpack.c.h.b16 %v4216
          %v4830 = vunpack.c.l.b16 %v4217
          %v4831 = vunpack.c.l.b16 %v4218
          %v4832 = vunpack.c.h.b16 %v4218
          %v4833 = vunpack.c.l.b16 %v4219
          %v4834 = vunpack.c.l.b16 %v4220
          %v4835 = vunpack.c.h.b16 %v4220
          %v4836 = vunpack.c.l.b16 %v4221
          %v4837 = vunpack.c.l.b16 %v4222
          %v4838 = vunpack.c.h.b16 %v4222
          %v4839 = vunpack.c.l.b16 %v4223
          %v4840 = vunpack.c.l.b16 %v4224
          %v4841 = vunpack.c.h.b16 %v4224
          %v4842 = vunpack.c.l.b16 %v4225
          %v4843 = vunpack.c.l.b16 %v4226
          %v4844 = vunpack.c.h.b16 %v4226
          %v4845 = vunpack.c.l.b16 %v4227
          %v4846 = vunpack.c.l.b16 %v4228
          %v4847 = vunpack.c.h.b16 %v4228
          %v4848 = vunpack.c.l.b16 %v4229
          %v4849 = vunpack.c.l.b16 %v4230
          %v4850 = vunpack.c.h.b16 %v4230
          %v4851 = vunpack.c.l.b16 %v4231
          %v4852 = vunpack.c.l.b16 %v4232
          %v4853 = vunpack.c.h.b16 %v4232
          %v4854 = vunpack.c.l.b16 %v4233
          %v4855 = vunpack.c.l.b16 %v4234
          %v4856 = vunpack.c.h.b16 %v4234
          %v4857 = vunpack.c.l.b16 %v4235
          %v4858 = vunpack.c.l.b16 %v4236
          %v4859 = vunpack.c.h.b16 %v4236
          %v4860 = vunpack.c.l.b16 %v4237
          %v4861 = vunpack.c.l.b16 %v4238
          %v4862 = vunpack.c.h.b16 %v4238
          %v4863 = vunpack.c.l.b16 %v4239
          %v4864 = vunpack.c.l.b16 %v4240
          %v4865 = vunpack.c.h.b16 %v4240
          %v4866 = vunpack.c.l.b16 %v4241
          %v4867 = vunpack.c.l.b16 %v4242
          %v4868 = vunpack.c.h.b16 %v4242
          %v4869 = vunpack.c.l.b16 %v4243
          %v4870 = vunpack.c.l.b16 %v4244
          %v4871 = vunpack.c.h.b16 %v4244
          %v4872 = vunpack.c.l.b16 %v4245
          %v4873 = vunpack.c.l.b16 %v4246
          %v4874 = vunpack.c.h.b16 %v4246
          %v4875 = vunpack.c.l.b16 %v4247
          %v4876 = vunpack.c.l.b16 %v4248
          %v4877 = vunpack.c.h.b16 %v4248
          %v4878 = vunpack.c.l.b16 %v4249
          %v4879 = vunpack.c.l.b16 %v4250
          %v4880 = vunpack.c.h.b16 %v4250
          %v4881 = vunpack.c.l.b16 %v4251
          %v4882 = vunpack.c.l.b16 %v4252
          %v4883 = vunpack.c.h.b16 %v4252
          %v4884 = vunpack.c.l.b16 %v4253
          %v4885 = vunpack.c.l.b16 %v4254
          %v4886 = vunpack.c.h.b16 %v4254
          %v4887 = vunpack.c.l.b16 %v4255
          %v4888 = vunpack.c.l.b16 %v4256
          %v4889 = vunpack.c.h.b16 %v4256
          %v4890 = vunpack.c.l.b16 %v4257
          %v4891 = vunpack.c.l.b16 %v4258
          %v4892 = vunpack.c.h.b16 %v4258
          %v4893 = vunpack.c.l.b16 %v4259
          %v4894 = vunpack.c.l.b16 %v4260
          %v4895 = vunpack.c.h.b16 %v4260
          %v4896 = vunpack.c.l.b16 %v4261
          %v4897 = vunpack.c.l.b16 %v4262
          %v4898 = vunpack.c.h.b16 %v4262
          %v4899 = vunpack.c.l.b16 %v4263
          %v4900 = vunpack.c.l.b16 %v4264
          %v4901 = vunpack.c.h.b16 %v4264
          %v4902 = vunpack.c.l.b16 %v4265
          %v4903 = vunpack.c.l.b16 %v4266
          %v4904 = vunpack.c.h.b16 %v4266
          %v4905 = vunpack.c.l.b16 %v4267
          %v4906 = vunpack.c.l.b16 %v4268
          %v4907 = vunpack.c.h.b16 %v4268
          %v4908 = vunpack.c.l.b16 %v4269
          %v4909 = vunpack.c.l.b16 %v4270
          %v4910 = vunpack.c.h.b16 %v4270
          %v4911 = vunpack.c.l.b16 %v4271
          %v4912 = vpack.c.b16 %v4531, %v4528
          %v4913 = vpack.c.b16 %v4532, %v4529
          %v4914 = vpack.c.b16 %v4533, %v4530
          %v4915 = vpack.c.b16 %v4537, %v4534
          %v4916 = vpack.c.b16 %v4538, %v4535
          %v4917 = vpack.c.b16 %v4539, %v4536
          %v4918 = vpack.c.b16 %v4543, %v4540
          %v4919 = vpack.c.b16 %v4544, %v4541
          %v4920 = vpack.c.b16 %v4545, %v4542
          %v4921 = vpack.c.b16 %v4549, %v4546
          %v4922 = vpack.c.b16 %v4550, %v4547
          %v4923 = vpack.c.b16 %v4551, %v4548
          %v4924 = vpack.c.b16 %v4555, %v4552
          %v4925 = vpack.c.b16 %v4556, %v4553
          %v4926 = vpack.c.b16 %v4557, %v4554
          %v4927 = vpack.c.b16 %v4561, %v4558
          %v4928 = vpack.c.b16 %v4562, %v4559
          %v4929 = vpack.c.b16 %v4563, %v4560
          %v4930 = vpack.c.b16 %v4567, %v4564
          %v4931 = vpack.c.b16 %v4568, %v4565
          %v4932 = vpack.c.b16 %v4569, %v4566
          %v4933 = vpack.c.b16 %v4573, %v4570
          %v4934 = vpack.c.b16 %v4574, %v4571
          %v4935 = vpack.c.b16 %v4575, %v4572
          %v4936 = vpack.c.b16 %v4579, %v4576
          %v4937 = vpack.c.b16 %v4580, %v4577
          %v4938 = vpack.c.b16 %v4581, %v4578
          %v4939 = vpack.c.b16 %v4585, %v4582
          %v4940 = vpack.c.b16 %v4586, %v4583
          %v4941 = vpack.c.b16 %v4587, %v4584
          %v4942 = vpack.c.b16 %v4591, %v4588
          %v4943 = vpack.c.b16 %v4592, %v4589
          %v4944 = vpack.c.b16 %v4593, %v4590
          %v4945 = vpack.c.b16 %v4597, %v4594
          %v4946 = vpack.c.b16 %v4598, %v4595
          %v4947 = vpack.c.b16 %v4599, %v4596
          %v4948 = vpack.c.b16 %v4603, %v4600
          %v4949 = vpack.c.b16 %v4604, %v4601
          %v4950 = vpack.c.b16 %v4605, %v4602
          %v4951 = vpack.c.b16 %v4609, %v4606
          %v4952 = vpack.c.b16 %v4610, %v4607
          %v4953 = vpack.c.b16 %v4611, %v4608
          %v4954 = vpack.c.b16 %v4615, %v4612
          %v4955 = vpack.c.b16 %v4616, %v4613
          %v4956 = vpack.c.b16 %v4617, %v4614
          %v4957 = vpack.c.b16 %v4621, %v4618
          %v4958 = vpack.c.b16 %v4622, %v4619
          %v4959 = vpack.c.b16 %v4623, %v4620
          %v4960 = vpack.c.b16 %v4627, %v4624
          %v4961 = vpack.c.b16 %v4628, %v4625
          %v4962 = vpack.c.b16 %v4629, %v4626
          %v4963 = vpack.c.b16 %v4633, %v4630
          %v4964 = vpack.c.b16 %v4634, %v4631
          %v4965 = vpack.c.b16 %v4635, %v4632
          %v4966 = vpack.c.b16 %v4639, %v4636
          %v4967 = vpack.c.b16 %v4640, %v4637
          %v4968 = vpack.c.b16 %v4641, %v4638
          %v4969 = vpack.c.b16 %v4645, %v4642
          %v4970 = vpack.c.b16 %v4646, %v4643
          %v4971 = vpack.c.b16 %v4647, %v4644
          %v4972 = vpack.c.b16 %v4651, %v4648
          %v4973 = vpack.c.b16 %v4652, %v4649
          %v4974 = vpack.c.b16 %v4653, %v4650
          %v4975 = vpack.c.b16 %v4657, %v4654
          %v4976 = vpack.c.b16 %v4658, %v4655
          %v4977 = vpack.c.b16 %v4659, %v4656
          %v4978 = vpack.c.b16 %v4663, %v4660
          %v4979 = vpack.c.b16 %v4664, %v4661
          %v4980 = vpack.c.b16 %v4665, %v4662
          %v4981 = vpack.c.b16 %v4669, %v4666
          %v4982 = vpack.c.b16 %v4670, %v4667
          %v4983 = vpack.c.b16 %v4671, %v4668
          %v4984 = vpack.c.b16 %v4675, %v4672
          %v4985 = vpack.c.b16 %v4676, %v4673
          %v4986 = vpack.c.b16 %v4677, %v4674
          %v4987 = vpack.c.b16 %v4681, %v4678
          %v4988 = vpack.c.b16 %v4682, %v4679
          %v4989 = vpack.c.b16 %v4683, %v4680
          %v4990 = vpack.c.b16 %v4687, %v4684
          %v4991 = vpack.c.b16 %v4688, %v4685
          %v4992 = vpack.c.b16 %v4689, %v4686
          %v4993 = vpack.c.b16 %v4693, %v4690
          %v4994 = vpack.c.b16 %v4694, %v4691
          %v4995 = vpack.c.b16 %v4695, %v4692
          %v4996 = vpack.c.b16 %v4699, %v4696
          %v4997 = vpack.c.b16 %v4700, %v4697
          %v4998 = vpack.c.b16 %v4701, %v4698
          %v4999 = vpack.c.b16 %v4705, %v4702
          %v5000 = vpack.c.b16 %v4706, %v4703
          %v5001 = vpack.c.b16 %v4707, %v4704
          %v5002 = vpack.c.b16 %v4711, %v4708
          %v5003 = vpack.c.b16 %v4712, %v4709
          %v5004 = vpack.c.b16 %v4713, %v4710
          %v5005 = vpack.c.b16 %v4717, %v4714
          %v5006 = vpack.c.b16 %v4718, %v4715
          %v5007 = vpack.c.b16 %v4719, %v4716
          %v5008 = vpack.c.b16 %v4723, %v4720
          %v5009 = vpack.c.b16 %v4724, %v4721
          %v5010 = vpack.c.b16 %v4725, %v4722
          %v5011 = vpack.c.b16 %v4729, %v4726
          %v5012 = vpack.c.b16 %v4730, %v4727
          %v5013 = vpack.c.b16 %v4731, %v4728
          %v5014 = vpack.c.b16 %v4735, %v4732
          %v5015 = vpack.c.b16 %v4736, %v4733
          %v5016 = vpack.c.b16 %v4737, %v4734
          %v5017 = vpack.c.b16 %v4741, %v4738
          %v5018 = vpack.c.b16 %v4742, %v4739
          %v5019 = vpack.c.b16 %v4743, %v4740
          %v5020 = vpack.c.b16 %v4747, %v4744
          %v5021 = vpack.c.b16 %v4748, %v4745
          %v5022 = vpack.c.b16 %v4749, %v4746
          %v5023 = vpack.c.b16 %v4753, %v4750
          %v5024 = vpack.c.b16 %v4754, %v4751
          %v5025 = vpack.c.b16 %v4755, %v4752
          %v5026 = vpack.c.b16 %v4759, %v4756
          %v5027 = vpack.c.b16 %v4760, %v4757
          %v5028 = vpack.c.b16 %v4761, %v4758
          %v5029 = vpack.c.b16 %v4765, %v4762
          %v5030 = vpack.c.b16 %v4766, %v4763
          %v5031 = vpack.c.b16 %v4767, %v4764
          %v5032 = vpack.c.b16 %v4771, %v4768
          %v5033 = vpack.c.b16 %v4772, %v4769
          %v5034 = vpack.c.b16 %v4773, %v4770
          %v5035 = vpack.c.b16 %v4777, %v4774
          %v5036 = vpack.c.b16 %v4778, %v4775
          %v5037 = vpack.c.b16 %v4779, %v4776
          %v5038 = vpack.c.b16 %v4783, %v4780
          %v5039 = vpack.c.b16 %v4784, %v4781
          %v5040 = vpack.c.b16 %v4785, %v4782
          %v5041 = vpack.c.b16 %v4789, %v4786
          %v5042 = vpack.c.b16 %v4790, %v4787
          %v5043 = vpack.c.b16 %v4791, %v4788
          %v5044 = vpack.c.b16 %v4795, %v4792
          %v5045 = vpack.c.b16 %v4796, %v4793
          %v5046 = vpack.c.b16 %v4797, %v4794
          %v5047 = vpack.c.b16 %v4801, %v4798
          %v5048 = vpack.c.b16 %v4802, %v4799
          %v5049 = vpack.c.b16 %v4803, %v4800
          %v5050 = vpack.c.b16 %v4807, %v4804
          %v5051 = vpack.c.b16 %v4808, %v4805
          %v5052 = vpack.c.b16 %v4809, %v4806
          %v5053 = vpack.c.b16 %v4813, %v4810
          %v5054 = vpack.c.b16 %v4814, %v4811
          %v5055 = vpack.c.b16 %v4815, %v4812
          %v5056 = vpack.c.b16 %v4819, %v4816
          %v5057 = vpack.c.b16 %v4820, %v4817
          %v5058 = vpack.c.b16 %v4821, %v4818
          %v5059 = vpack.c.b16 %v4825, %v4822
          %v5060 = vpack.c.b16 %v4826, %v4823
          %v5061 = vpack.c.b16 %v4827, %v4824
          %v5062 = vpack.c.b16 %v4831, %v4828
          %v5063 = vpack.c.b16 %v4832, %v4829
          %v5064 = vpack.c.b16 %v4833, %v4830
          %v5065 = vpack.c.b16 %v4837, %v4834
          %v5066 = vpack.c.b16 %v4838, %v4835
          %v5067 = vpack.c.b16 %v4839, %v4836
          %v5068 = vpack.c.b16 %v4843, %v4840
          %v5069 = vpack.c.b16 %v4844, %v4841
          %v5070 = vpack.c.b16 %v4845, %v4842
          %v5071 = vpack.c.b16 %v4849, %v4846
          %v5072 = vpack.c.b16 %v4850, %v4847
          %v5073 = vpack.c.b16 %v4851, %v4848
          %v5074 = vpack.c.b16 %v4855, %v4852
          %v5075 = vpack.c.b16 %v4856, %v4853
          %v5076 = vpack.c.b16 %v4857, %v4854
          %v5077 = vpack.c.b16 %v4861, %v4858
          %v5078 = vpack.c.b16 %v4862, %v4859
          %v5079 = vpack.c.b16 %v4863, %v4860
          %v5080 = vpack.c.b16 %v4867, %v4864
          %v5081 = vpack.c.b16 %v4868, %v4865
          %v5082 = vpack.c.b16 %v4869, %v4866
          %v5083 = vpack.c.b16 %v4873, %v4870
          %v5084 = vpack.c.b16 %v4874, %v4871
          %v5085 = vpack.c.b16 %v4875, %v4872
          %v5086 = vpack.c.b16 %v4879, %v4876
          %v5087 = vpack.c.b16 %v4880, %v4877
          %v5088 = vpack.c.b16 %v4881, %v4878
          %v5089 = vpack.c.b16 %v4885, %v4882
          %v5090 = vpack.c.b16 %v4886, %v4883
          %v5091 = vpack.c.b16 %v4887, %v4884
          %v5092 = vpack.c.b16 %v4891, %v4888
          %v5093 = vpack.c.b16 %v4892, %v4889
          %v5094 = vpack.c.b16 %v4893, %v4890
          %v5095 = vpack.c.b16 %v4897, %v4894
          %v5096 = vpack.c.b16 %v4898, %v4895
          %v5097 = vpack.c.b16 %v4899, %v4896
          %v5098 = vpack.c.b16 %v4903, %v4900
          %v5099 = vpack.c.b16 %v4904, %v4901
          %v5100 = vpack.c.b16 %v4905, %v4902
          %v5101 = vpack.c.b16 %v4909, %v4906
          %v5102 = vpack.c.b16 %v4910, %v4907
          %v5103 = vpack.c.b16 %v4911, %v4908
          %5296 = vmatprep.subr.bf16.mxu0 %v4934
          %5297 = vmatpush1.bf16.msra.mxu0 %v4933
          %5298 = vmatprep.subr.bf16.mxu0 %v4931
          %5299 = vmatpush1.bf16.msra.mxu0 %v4930
          %5300 = vmatprep.subr.bf16.mxu0 %v4928
          %5301 = vmatpush1.bf16.msra.mxu0 %v4927
          %5302 = vmatprep.subr.bf16.mxu0 %v4925
          %5303 = vmatpush1.bf16.msra.mxu0 %v4924
          %5304 = vmatprep.subr.bf16.mxu0 %v4922
          %5305 = vmatpush1.bf16.msra.mxu0 %v4921
          %5306 = vmatprep.subr.bf16.mxu0 %v4919
          %5307 = vmatpush1.bf16.msra.mxu0 %v4918
          %5308 = vmatprep.subr.bf16.mxu0 %v4916
          %5309 = vmatpush1.bf16.msra.mxu0 %v4915
          %5310 = vmatprep.subr.bf16.mxu0 %v4913
          %5311 = vmatpush1.bf16.msra.mxu0 %v4912
          %5312 = vmatprep.subr.bf16.mxu0 %v4958
          %5313 = vmatpush2.bf16.msra.mxu0 %v4957
          %5314 = vmatprep.subr.bf16.mxu0 %v4955
          %5315 = vmatpush2.bf16.msra.mxu0 %v4954
          %5316 = vmatprep.subr.bf16.mxu0 %v4952
          %5317 = vmatpush2.bf16.msra.mxu0 %v4951
          %5318 = vmatprep.subr.bf16.mxu0 %v4949
          %5319 = vmatpush2.bf16.msra.mxu0 %v4948
          %5320 = vmatprep.subr.bf16.mxu0 %v4946
          %5321 = vmatpush2.bf16.msra.mxu0 %v4945
          %5322 = vmatprep.subr.bf16.mxu0 %v4943
          %5323 = vmatpush2.bf16.msra.mxu0 %v4942
          %5324 = vmatprep.subr.bf16.mxu0 %v4940
          %5325 = vmatpush2.bf16.msra.mxu0 %v4939
          %5326 = vmatprep.subr.bf16.mxu0 %v4937
          %5327 = vmatpush2.bf16.msra.mxu0 %v4936
          %5328 = vmatprep.mubr.bf16.mxu0 %v3889
          %5329 = vmatmul.mubr.bf16.gmra.mxu0 %v3888
          %v5330 = vpop.f32.mrf.mxu0
          %v5331 = vadd.f32 0.0, %v5330
          %v5332 = vpop.f32.mrf.mxu0
          %v5333 = vadd.f32 0.0, %v5332
          %v5334 = vpop.f32.mrf.mxu0
          %v5335 = vadd.f32 0.0, %v5334
          %v5336 = vpop.f32.mrf.mxu0
          %v5337 = vadd.f32 0.0, %v5336
          %5338 = vmatprep.mubr.bf16.mxu0 %v3897
          %5339 = vmatmul.mubr.bf16.gmra.mxu0 %v3896
          %v5340 = vpop.f32.mrf.mxu0
          %v5341 = vadd.f32 0.0, %v5340
          %v5342 = vpop.f32.mrf.mxu0
          %v5343 = vadd.f32 0.0, %v5342
          %v5344 = vpop.f32.mrf.mxu0
          %v5345 = vadd.f32 0.0, %v5344
          %v5346 = vpop.f32.mrf.mxu0
          %v5347 = vadd.f32 0.0, %v5346
          %5348 = vmatprep.mubr.bf16.mxu0 %v3905
          %5349 = vmatmul.mubr.bf16.gmra.mxu0 %v3904
          %v5350 = vpop.f32.mrf.mxu0
          %v5351 = vadd.f32 0.0, %v5350
          %v5352 = vpop.f32.mrf.mxu0
          %v5353 = vadd.f32 0.0, %v5352
          %v5354 = vpop.f32.mrf.mxu0
          %v5355 = vadd.f32 0.0, %v5354
          %v5356 = vpop.f32.mrf.mxu0
          %v5357 = vadd.f32 0.0, %v5356
          %5358 = vmatprep.mubr.bf16.mxu0 %v3913
          %5359 = vmatmul.mubr.bf16.gmra.mxu0 %v3912
          %v5360 = vpop.f32.mrf.mxu0
          %v5361 = vadd.f32 0.0, %v5360
          %v5362 = vpop.f32.mrf.mxu0
          %v5363 = vadd.f32 0.0, %v5362
          %v5364 = vpop.f32.mrf.mxu0
          %v5365 = vadd.f32 0.0, %v5364
          %v5366 = vpop.f32.mrf.mxu0
          %v5367 = vadd.f32 0.0, %v5366
          %5368 = vmatprep.mubr.bf16.mxu0 %v3921
          %5369 = vmatmul.mubr.bf16.gmra.mxu0 %v3920
          %v5370 = vpop.f32.mrf.mxu0
          %v5371 = vadd.f32 0.0, %v5370
          %v5372 = vpop.f32.mrf.mxu0
          %v5373 = vadd.f32 0.0, %v5372
          %v5374 = vpop.f32.mrf.mxu0
          %v5375 = vadd.f32 0.0, %v5374
          %v5376 = vpop.f32.mrf.mxu0
          %v5377 = vadd.f32 0.0, %v5376
          %5378 = vmatprep.mubr.bf16.mxu0 %v3929
          %5379 = vmatmul.mubr.bf16.gmra.mxu0 %v3928
          %v5380 = vpop.f32.mrf.mxu0
          %v5381 = vadd.f32 0.0, %v5380
          %v5382 = vpop.f32.mrf.mxu0
          %v5383 = vadd.f32 0.0, %v5382
          %v5384 = vpop.f32.mrf.mxu0
          %v5385 = vadd.f32 0.0, %v5384
          %v5386 = vpop.f32.mrf.mxu0
          %v5387 = vadd.f32 0.0, %v5386
          %5388 = vmatprep.mubr.bf16.mxu0 %v3937
          %5389 = vmatmul.mubr.bf16.gmra.mxu0 %v3936
          %v5390 = vpop.f32.mrf.mxu0
          %v5391 = vadd.f32 0.0, %v5390
          %v5392 = vpop.f32.mrf.mxu0
          %v5393 = vadd.f32 0.0, %v5392
          %v5394 = vpop.f32.mrf.mxu0
          %v5395 = vadd.f32 0.0, %v5394
          %v5396 = vpop.f32.mrf.mxu0
          %v5397 = vadd.f32 0.0, %v5396
          %5398 = vmatprep.mubr.bf16.mxu0 %v3945
          %5399 = vmatmul.mubr.bf16.gmra.mxu0 %v3944
          %v5400 = vpop.f32.mrf.mxu0
          %v5401 = vadd.f32 0.0, %v5400
          %v5402 = vpop.f32.mrf.mxu0
          %v5403 = vadd.f32 0.0, %v5402
          %v5404 = vpop.f32.mrf.mxu0
          %v5405 = vadd.f32 0.0, %v5404
          %v5406 = vpop.f32.mrf.mxu0
          %v5407 = vadd.f32 0.0, %v5406
          %5408 = vmatprep.mubr.bf16.mxu0 %v3953
          %5409 = vmatmul.mubr.bf16.gmra.mxu0 %v3952
          %v5410 = vpop.f32.mrf.mxu0
          %v5411 = vadd.f32 0.0, %v5410
          %v5412 = vpop.f32.mrf.mxu0
          %v5413 = vadd.f32 0.0, %v5412
          %v5414 = vpop.f32.mrf.mxu0
          %v5415 = vadd.f32 0.0, %v5414
          %v5416 = vpop.f32.mrf.mxu0
          %v5417 = vadd.f32 0.0, %v5416
          %5418 = vmatprep.mubr.bf16.mxu0 %v3961
          %5419 = vmatmul.mubr.bf16.gmra.mxu0 %v3960
          %v5420 = vpop.f32.mrf.mxu0
          %v5421 = vadd.f32 0.0, %v5420
          %v5422 = vpop.f32.mrf.mxu0
          %v5423 = vadd.f32 0.0, %v5422
          %v5424 = vpop.f32.mrf.mxu0
          %v5425 = vadd.f32 0.0, %v5424
          %v5426 = vpop.f32.mrf.mxu0
          %v5427 = vadd.f32 0.0, %v5426
          %5428 = vmatprep.mubr.bf16.mxu0 %v3969
          %5429 = vmatmul.mubr.bf16.gmra.mxu0 %v3968
          %v5430 = vpop.f32.mrf.mxu0
          %v5431 = vadd.f32 0.0, %v5430
          %v5432 = vpop.f32.mrf.mxu0
          %v5433 = vadd.f32 0.0, %v5432
          %v5434 = vpop.f32.mrf.mxu0
          %v5435 = vadd.f32 0.0, %v5434
          %v5436 = vpop.f32.mrf.mxu0
          %v5437 = vadd.f32 0.0, %v5436
          %5438 = vmatprep.mubr.bf16.mxu0 %v3977
          %5439 = vmatmul.mubr.bf16.gmra.mxu0 %v3976
          %v5440 = vpop.f32.mrf.mxu0
          %v5441 = vadd.f32 0.0, %v5440
          %v5442 = vpop.f32.mrf.mxu0
          %v5443 = vadd.f32 0.0, %v5442
          %v5444 = vpop.f32.mrf.mxu0
          %v5445 = vadd.f32 0.0, %v5444
          %v5446 = vpop.f32.mrf.mxu0
          %v5447 = vadd.f32 0.0, %v5446
          %5448 = vmatprep.mubr.bf16.mxu0 %v3985
          %5449 = vmatmul.mubr.bf16.gmra.mxu0 %v3984
          %v5450 = vpop.f32.mrf.mxu0
          %v5451 = vadd.f32 0.0, %v5450
          %v5452 = vpop.f32.mrf.mxu0
          %v5453 = vadd.f32 0.0, %v5452
          %v5454 = vpop.f32.mrf.mxu0
          %v5455 = vadd.f32 0.0, %v5454
          %v5456 = vpop.f32.mrf.mxu0
          %v5457 = vadd.f32 0.0, %v5456
          %5458 = vmatprep.mubr.bf16.mxu0 %v3993
          %5459 = vmatmul.mubr.bf16.gmra.mxu0 %v3992
          %v5460 = vpop.f32.mrf.mxu0
          %v5461 = vadd.f32 0.0, %v5460
          %v5462 = vpop.f32.mrf.mxu0
          %v5463 = vadd.f32 0.0, %v5462
          %v5464 = vpop.f32.mrf.mxu0
          %v5465 = vadd.f32 0.0, %v5464
          %v5466 = vpop.f32.mrf.mxu0
          %v5467 = vadd.f32 0.0, %v5466
          %5468 = vmatprep.mubr.bf16.mxu0 %v4001
          %5469 = vmatmul.mubr.bf16.gmra.mxu0 %v4000
          %v5470 = vpop.f32.mrf.mxu0
          %v5471 = vadd.f32 0.0, %v5470
          %v5472 = vpop.f32.mrf.mxu0
          %v5473 = vadd.f32 0.0, %v5472
          %v5474 = vpop.f32.mrf.mxu0
          %v5475 = vadd.f32 0.0, %v5474
          %v5476 = vpop.f32.mrf.mxu0
          %v5477 = vadd.f32 0.0, %v5476
          %5478 = vmatprep.mubr.bf16.mxu0 %v4009
          %5479 = vmatmul.mubr.bf16.gmra.mxu0 %v4008
          %v5480 = vpop.f32.mrf.mxu0
          %v5481 = vadd.f32 0.0, %v5480
          %v5482 = vpop.f32.mrf.mxu0
          %v5483 = vadd.f32 0.0, %v5482
          %v5484 = vpop.f32.mrf.mxu0
          %v5485 = vadd.f32 0.0, %v5484
          %v5486 = vpop.f32.mrf.mxu0
          %v5487 = vadd.f32 0.0, %v5486
          %5488 = vdwg.mxu0
          %5489 = vmatprep.subr.bf16.mxu0 %v4982
          %5490 = vmatpush1.bf16.msra.mxu0 %v4981
          %5491 = vmatprep.subr.bf16.mxu0 %v4979
          %5492 = vmatpush1.bf16.msra.mxu0 %v4978
          %5493 = vmatprep.subr.bf16.mxu0 %v4976
          %5494 = vmatpush1.bf16.msra.mxu0 %v4975
          %5495 = vmatprep.subr.bf16.mxu0 %v4973
          %5496 = vmatpush1.bf16.msra.mxu0 %v4972
          %5497 = vmatprep.subr.bf16.mxu0 %v4970
          %5498 = vmatpush1.bf16.msra.mxu0 %v4969
          %5499 = vmatprep.subr.bf16.mxu0 %v4967
          %5500 = vmatpush1.bf16.msra.mxu0 %v4966
          %5501 = vmatprep.subr.bf16.mxu0 %v4964
          %5502 = vmatpush1.bf16.msra.mxu0 %v4963
          %5503 = vmatprep.subr.bf16.mxu0 %v4961
          %5504 = vmatpush1.bf16.msra.mxu0 %v4960
          %5505 = vmatprep.subr.bf16.mxu0 %v5006
          %5506 = vmatpush2.bf16.msra.mxu0 %v5005
          %5507 = vmatprep.subr.bf16.mxu0 %v5003
          %5508 = vmatpush2.bf16.msra.mxu0 %v5002
          %5509 = vmatprep.subr.bf16.mxu0 %v5000
          %5510 = vmatpush2.bf16.msra.mxu0 %v4999
          %5511 = vmatprep.subr.bf16.mxu0 %v4997
          %5512 = vmatpush2.bf16.msra.mxu0 %v4996
          %5513 = vmatprep.subr.bf16.mxu0 %v4994
          %5514 = vmatpush2.bf16.msra.mxu0 %v4993
          %5515 = vmatprep.subr.bf16.mxu0 %v4991
          %5516 = vmatpush2.bf16.msra.mxu0 %v4990
          %5517 = vmatprep.subr.bf16.mxu0 %v4988
          %5518 = vmatpush2.bf16.msra.mxu0 %v4987
          %5519 = vmatprep.subr.bf16.mxu0 %v4985
          %5520 = vmatpush2.bf16.msra.mxu0 %v4984
          %5521 = vmatprep.mubr.bf16.mxu0 %v3891
          %5522 = vmatmul.mubr.bf16.gmra.mxu0 %v3890
          %v5523 = vpop.f32.mrf.mxu0
          %v5524 = vadd.f32 %v5331, %v5523
          %v5525 = vpop.f32.mrf.mxu0
          %v5526 = vadd.f32 %v5333, %v5525
          %v5527 = vpop.f32.mrf.mxu0
          %v5528 = vadd.f32 %v5335, %v5527
          %v5529 = vpop.f32.mrf.mxu0
          %v5530 = vadd.f32 %v5337, %v5529
          %5531 = vmatprep.mubr.bf16.mxu0 %v3899
          %5532 = vmatmul.mubr.bf16.gmra.mxu0 %v3898
          %v5533 = vpop.f32.mrf.mxu0
          %v5534 = vadd.f32 %v5341, %v5533
          %v5535 = vpop.f32.mrf.mxu0
          %v5536 = vadd.f32 %v5343, %v5535
          %v5537 = vpop.f32.mrf.mxu0
          %v5538 = vadd.f32 %v5345, %v5537
          %v5539 = vpop.f32.mrf.mxu0
          %v5540 = vadd.f32 %v5347, %v5539
          %5541 = vmatprep.mubr.bf16.mxu0 %v3907
          %5542 = vmatmul.mubr.bf16.gmra.mxu0 %v3906
          %v5543 = vpop.f32.mrf.mxu0
          %v5544 = vadd.f32 %v5351, %v5543
          %v5545 = vpop.f32.mrf.mxu0
          %v5546 = vadd.f32 %v5353, %v5545
          %v5547 = vpop.f32.mrf.mxu0
          %v5548 = vadd.f32 %v5355, %v5547
          %v5549 = vpop.f32.mrf.mxu0
          %v5550 = vadd.f32 %v5357, %v5549
          %5551 = vmatprep.mubr.bf16.mxu0 %v3915
          %5552 = vmatmul.mubr.bf16.gmra.mxu0 %v3914
          %v5553 = vpop.f32.mrf.mxu0
          %v5554 = vadd.f32 %v5361, %v5553
          %v5555 = vpop.f32.mrf.mxu0
          %v5556 = vadd.f32 %v5363, %v5555
          %v5557 = vpop.f32.mrf.mxu0
          %v5558 = vadd.f32 %v5365, %v5557
          %v5559 = vpop.f32.mrf.mxu0
          %v5560 = vadd.f32 %v5367, %v5559
          %5561 = vmatprep.mubr.bf16.mxu0 %v3923
          %5562 = vmatmul.mubr.bf16.gmra.mxu0 %v3922
          %v5563 = vpop.f32.mrf.mxu0
          %v5564 = vadd.f32 %v5371, %v5563
          %v5565 = vpop.f32.mrf.mxu0
          %v5566 = vadd.f32 %v5373, %v5565
          %v5567 = vpop.f32.mrf.mxu0
          %v5568 = vadd.f32 %v5375, %v5567
          %v5569 = vpop.f32.mrf.mxu0
          %v5570 = vadd.f32 %v5377, %v5569
          %5571 = vmatprep.mubr.bf16.mxu0 %v3931
          %5572 = vmatmul.mubr.bf16.gmra.mxu0 %v3930
          %v5573 = vpop.f32.mrf.mxu0
          %v5574 = vadd.f32 %v5381, %v5573
          %v5575 = vpop.f32.mrf.mxu0
          %v5576 = vadd.f32 %v5383, %v5575
          %v5577 = vpop.f32.mrf.mxu0
          %v5578 = vadd.f32 %v5385, %v5577
          %v5579 = vpop.f32.mrf.mxu0
          %v5580 = vadd.f32 %v5387, %v5579
          %5581 = vmatprep.mubr.bf16.mxu0 %v3939
          %5582 = vmatmul.mubr.bf16.gmra.mxu0 %v3938
          %v5583 = vpop.f32.mrf.mxu0
          %v5584 = vadd.f32 %v5391, %v5583
          %v5585 = vpop.f32.mrf.mxu0
          %v5586 = vadd.f32 %v5393, %v5585
          %v5587 = vpop.f32.mrf.mxu0
          %v5588 = vadd.f32 %v5395, %v5587
          %v5589 = vpop.f32.mrf.mxu0
          %v5590 = vadd.f32 %v5397, %v5589
          %5591 = vmatprep.mubr.bf16.mxu0 %v3947
          %5592 = vmatmul.mubr.bf16.gmra.mxu0 %v3946
          %v5593 = vpop.f32.mrf.mxu0
          %v5594 = vadd.f32 %v5401, %v5593
          %v5595 = vpop.f32.mrf.mxu0
          %v5596 = vadd.f32 %v5403, %v5595
          %v5597 = vpop.f32.mrf.mxu0
          %v5598 = vadd.f32 %v5405, %v5597
          %v5599 = vpop.f32.mrf.mxu0
          %v5600 = vadd.f32 %v5407, %v5599
          %5601 = vmatprep.mubr.bf16.mxu0 %v3955
          %5602 = vmatmul.mubr.bf16.gmra.mxu0 %v3954
          %v5603 = vpop.f32.mrf.mxu0
          %v5604 = vadd.f32 %v5411, %v5603
          %v5605 = vpop.f32.mrf.mxu0
          %v5606 = vadd.f32 %v5413, %v5605
          %v5607 = vpop.f32.mrf.mxu0
          %v5608 = vadd.f32 %v5415, %v5607
          %v5609 = vpop.f32.mrf.mxu0
          %v5610 = vadd.f32 %v5417, %v5609
          %5611 = vmatprep.mubr.bf16.mxu0 %v3963
          %5612 = vmatmul.mubr.bf16.gmra.mxu0 %v3962
          %v5613 = vpop.f32.mrf.mxu0
          %v5614 = vadd.f32 %v5421, %v5613
          %v5615 = vpop.f32.mrf.mxu0
          %v5616 = vadd.f32 %v5423, %v5615
          %v5617 = vpop.f32.mrf.mxu0
          %v5618 = vadd.f32 %v5425, %v5617
          %v5619 = vpop.f32.mrf.mxu0
          %v5620 = vadd.f32 %v5427, %v5619
          %5621 = vmatprep.mubr.bf16.mxu0 %v3971
          %5622 = vmatmul.mubr.bf16.gmra.mxu0 %v3970
          %v5623 = vpop.f32.mrf.mxu0
          %v5624 = vadd.f32 %v5431, %v5623
          %v5625 = vpop.f32.mrf.mxu0
          %v5626 = vadd.f32 %v5433, %v5625
          %v5627 = vpop.f32.mrf.mxu0
          %v5628 = vadd.f32 %v5435, %v5627
          %v5629 = vpop.f32.mrf.mxu0
          %v5630 = vadd.f32 %v5437, %v5629
          %5631 = vmatprep.mubr.bf16.mxu0 %v3979
          %5632 = vmatmul.mubr.bf16.gmra.mxu0 %v3978
          %v5633 = vpop.f32.mrf.mxu0
          %v5634 = vadd.f32 %v5441, %v5633
          %v5635 = vpop.f32.mrf.mxu0
          %v5636 = vadd.f32 %v5443, %v5635
          %v5637 = vpop.f32.mrf.mxu0
          %v5638 = vadd.f32 %v5445, %v5637
          %v5639 = vpop.f32.mrf.mxu0
          %v5640 = vadd.f32 %v5447, %v5639
          %5641 = vmatprep.mubr.bf16.mxu0 %v3987
          %5642 = vmatmul.mubr.bf16.gmra.mxu0 %v3986
          %v5643 = vpop.f32.mrf.mxu0
          %v5644 = vadd.f32 %v5451, %v5643
          %v5645 = vpop.f32.mrf.mxu0
          %v5646 = vadd.f32 %v5453, %v5645
          %v5647 = vpop.f32.mrf.mxu0
          %v5648 = vadd.f32 %v5455, %v5647
          %v5649 = vpop.f32.mrf.mxu0
          %v5650 = vadd.f32 %v5457, %v5649
          %5651 = vmatprep.mubr.bf16.mxu0 %v3995
          %5652 = vmatmul.mubr.bf16.gmra.mxu0 %v3994
          %v5653 = vpop.f32.mrf.mxu0
          %v5654 = vadd.f32 %v5461, %v5653
          %v5655 = vpop.f32.mrf.mxu0
          %v5656 = vadd.f32 %v5463, %v5655
          %v5657 = vpop.f32.mrf.mxu0
          %v5658 = vadd.f32 %v5465, %v5657
          %v5659 = vpop.f32.mrf.mxu0
          %v5660 = vadd.f32 %v5467, %v5659
          %5661 = vmatprep.mubr.bf16.mxu0 %v4003
          %5662 = vmatmul.mubr.bf16.gmra.mxu0 %v4002
          %v5663 = vpop.f32.mrf.mxu0
          %v5664 = vadd.f32 %v5471, %v5663
          %v5665 = vpop.f32.mrf.mxu0
          %v5666 = vadd.f32 %v5473, %v5665
          %v5667 = vpop.f32.mrf.mxu0
          %v5668 = vadd.f32 %v5475, %v5667
          %v5669 = vpop.f32.mrf.mxu0
          %v5670 = vadd.f32 %v5477, %v5669
          %5671 = vmatprep.mubr.bf16.mxu0 %v4011
          %5672 = vmatmul.mubr.bf16.gmra.mxu0 %v4010
          %v5673 = vpop.f32.mrf.mxu0
          %v5674 = vadd.f32 %v5481, %v5673
          %v5675 = vpop.f32.mrf.mxu0
          %v5676 = vadd.f32 %v5483, %v5675
          %v5677 = vpop.f32.mrf.mxu0
          %v5678 = vadd.f32 %v5485, %v5677
          %v5679 = vpop.f32.mrf.mxu0
          %v5680 = vadd.f32 %v5487, %v5679
          %5681 = vdwg.mxu0
          %5682 = vmatprep.subr.bf16.mxu0 %v5030
          %5683 = vmatpush1.bf16.msra.mxu0 %v5029
          %5684 = vmatprep.subr.bf16.mxu0 %v5027
          %5685 = vmatpush1.bf16.msra.mxu0 %v5026
          %5686 = vmatprep.subr.bf16.mxu0 %v5024
          %5687 = vmatpush1.bf16.msra.mxu0 %v5023
          %5688 = vmatprep.subr.bf16.mxu0 %v5021
          %5689 = vmatpush1.bf16.msra.mxu0 %v5020
          %5690 = vmatprep.subr.bf16.mxu0 %v5018
          %5691 = vmatpush1.bf16.msra.mxu0 %v5017
          %5692 = vmatprep.subr.bf16.mxu0 %v5015
          %5693 = vmatpush1.bf16.msra.mxu0 %v5014
          %5694 = vmatprep.subr.bf16.mxu0 %v5012
          %5695 = vmatpush1.bf16.msra.mxu0 %v5011
          %5696 = vmatprep.subr.bf16.mxu0 %v5009
          %5697 = vmatpush1.bf16.msra.mxu0 %v5008
          %5698 = vmatprep.subr.bf16.mxu0 %v5054
          %5699 = vmatpush2.bf16.msra.mxu0 %v5053
          %5700 = vmatprep.subr.bf16.mxu0 %v5051
          %5701 = vmatpush2.bf16.msra.mxu0 %v5050
          %5702 = vmatprep.subr.bf16.mxu0 %v5048
          %5703 = vmatpush2.bf16.msra.mxu0 %v5047
          %5704 = vmatprep.subr.bf16.mxu0 %v5045
          %5705 = vmatpush2.bf16.msra.mxu0 %v5044
          %5706 = vmatprep.subr.bf16.mxu0 %v5042
          %5707 = vmatpush2.bf16.msra.mxu0 %v5041
          %5708 = vmatprep.subr.bf16.mxu0 %v5039
          %5709 = vmatpush2.bf16.msra.mxu0 %v5038
          %5710 = vmatprep.subr.bf16.mxu0 %v5036
          %5711 = vmatpush2.bf16.msra.mxu0 %v5035
          %5712 = vmatprep.subr.bf16.mxu0 %v5033
          %5713 = vmatpush2.bf16.msra.mxu0 %v5032
          %5714 = vmatprep.mubr.bf16.mxu0 %v3893
          %5715 = vmatmul.mubr.bf16.gmra.mxu0 %v3892
          %v5716 = vpop.f32.mrf.mxu0
          %v5717 = vadd.f32 %v5524, %v5716
          %v5718 = vpop.f32.mrf.mxu0
          %v5719 = vadd.f32 %v5526, %v5718
          %v5720 = vpop.f32.mrf.mxu0
          %v5721 = vadd.f32 %v5528, %v5720
          %v5722 = vpop.f32.mrf.mxu0
          %v5723 = vadd.f32 %v5530, %v5722
          %5724 = vmatprep.mubr.bf16.mxu0 %v3901
          %5725 = vmatmul.mubr.bf16.gmra.mxu0 %v3900
          %v5726 = vpop.f32.mrf.mxu0
          %v5727 = vadd.f32 %v5534, %v5726
          %v5728 = vpop.f32.mrf.mxu0
          %v5729 = vadd.f32 %v5536, %v5728
          %v5730 = vpop.f32.mrf.mxu0
          %v5731 = vadd.f32 %v5538, %v5730
          %v5732 = vpop.f32.mrf.mxu0
          %v5733 = vadd.f32 %v5540, %v5732
          %5734 = vmatprep.mubr.bf16.mxu0 %v3909
          %5735 = vmatmul.mubr.bf16.gmra.mxu0 %v3908
          %v5736 = vpop.f32.mrf.mxu0
          %v5737 = vadd.f32 %v5544, %v5736
          %v5738 = vpop.f32.mrf.mxu0
          %v5739 = vadd.f32 %v5546, %v5738
          %v5740 = vpop.f32.mrf.mxu0
          %v5741 = vadd.f32 %v5548, %v5740
          %v5742 = vpop.f32.mrf.mxu0
          %v5743 = vadd.f32 %v5550, %v5742
          %5744 = vmatprep.mubr.bf16.mxu0 %v3917
          %5745 = vmatmul.mubr.bf16.gmra.mxu0 %v3916
          %v5746 = vpop.f32.mrf.mxu0
          %v5747 = vadd.f32 %v5554, %v5746
          %v5748 = vpop.f32.mrf.mxu0
          %v5749 = vadd.f32 %v5556, %v5748
          %v5750 = vpop.f32.mrf.mxu0
          %v5751 = vadd.f32 %v5558, %v5750
          %v5752 = vpop.f32.mrf.mxu0
          %v5753 = vadd.f32 %v5560, %v5752
          %5754 = vmatprep.mubr.bf16.mxu0 %v3925
          %5755 = vmatmul.mubr.bf16.gmra.mxu0 %v3924
          %v5756 = vpop.f32.mrf.mxu0
          %v5757 = vadd.f32 %v5564, %v5756
          %v5758 = vpop.f32.mrf.mxu0
          %v5759 = vadd.f32 %v5566, %v5758
          %v5760 = vpop.f32.mrf.mxu0
          %v5761 = vadd.f32 %v5568, %v5760
          %v5762 = vpop.f32.mrf.mxu0
          %v5763 = vadd.f32 %v5570, %v5762
          %5764 = vmatprep.mubr.bf16.mxu0 %v3933
          %5765 = vmatmul.mubr.bf16.gmra.mxu0 %v3932
          %v5766 = vpop.f32.mrf.mxu0
          %v5767 = vadd.f32 %v5574, %v5766
          %v5768 = vpop.f32.mrf.mxu0
          %v5769 = vadd.f32 %v5576, %v5768
          %v5770 = vpop.f32.mrf.mxu0
          %v5771 = vadd.f32 %v5578, %v5770
          %v5772 = vpop.f32.mrf.mxu0
          %v5773 = vadd.f32 %v5580, %v5772
          %5774 = vmatprep.mubr.bf16.mxu0 %v3941
          %5775 = vmatmul.mubr.bf16.gmra.mxu0 %v3940
          %v5776 = vpop.f32.mrf.mxu0
          %v5777 = vadd.f32 %v5584, %v5776
          %v5778 = vpop.f32.mrf.mxu0
          %v5779 = vadd.f32 %v5586, %v5778
          %v5780 = vpop.f32.mrf.mxu0
          %v5781 = vadd.f32 %v5588, %v5780
          %v5782 = vpop.f32.mrf.mxu0
          %v5783 = vadd.f32 %v5590, %v5782
          %5784 = vmatprep.mubr.bf16.mxu0 %v3949
          %5785 = vmatmul.mubr.bf16.gmra.mxu0 %v3948
          %v5786 = vpop.f32.mrf.mxu0
          %v5787 = vadd.f32 %v5594, %v5786
          %v5788 = vpop.f32.mrf.mxu0
          %v5789 = vadd.f32 %v5596, %v5788
          %v5790 = vpop.f32.mrf.mxu0
          %v5791 = vadd.f32 %v5598, %v5790
          %v5792 = vpop.f32.mrf.mxu0
          %v5793 = vadd.f32 %v5600, %v5792
          %5794 = vmatprep.mubr.bf16.mxu0 %v3957
          %5795 = vmatmul.mubr.bf16.gmra.mxu0 %v3956
          %v5796 = vpop.f32.mrf.mxu0
          %v5797 = vadd.f32 %v5604, %v5796
          %v5798 = vpop.f32.mrf.mxu0
          %v5799 = vadd.f32 %v5606, %v5798
          %v5800 = vpop.f32.mrf.mxu0
          %v5801 = vadd.f32 %v5608, %v5800
          %v5802 = vpop.f32.mrf.mxu0
          %v5803 = vadd.f32 %v5610, %v5802
          %5804 = vmatprep.mubr.bf16.mxu0 %v3965
          %5805 = vmatmul.mubr.bf16.gmra.mxu0 %v3964
          %v5806 = vpop.f32.mrf.mxu0
          %v5807 = vadd.f32 %v5614, %v5806
          %v5808 = vpop.f32.mrf.mxu0
          %v5809 = vadd.f32 %v5616, %v5808
          %v5810 = vpop.f32.mrf.mxu0
          %v5811 = vadd.f32 %v5618, %v5810
          %v5812 = vpop.f32.mrf.mxu0
          %v5813 = vadd.f32 %v5620, %v5812
          %5814 = vmatprep.mubr.bf16.mxu0 %v3973
          %5815 = vmatmul.mubr.bf16.gmra.mxu0 %v3972
          %v5816 = vpop.f32.mrf.mxu0
          %v5817 = vadd.f32 %v5624, %v5816
          %v5818 = vpop.f32.mrf.mxu0
          %v5819 = vadd.f32 %v5626, %v5818
          %v5820 = vpop.f32.mrf.mxu0
          %v5821 = vadd.f32 %v5628, %v5820
          %v5822 = vpop.f32.mrf.mxu0
          %v5823 = vadd.f32 %v5630, %v5822
          %5824 = vmatprep.mubr.bf16.mxu0 %v3981
          %5825 = vmatmul.mubr.bf16.gmra.mxu0 %v3980
          %v5826 = vpop.f32.mrf.mxu0
          %v5827 = vadd.f32 %v5634, %v5826
          %v5828 = vpop.f32.mrf.mxu0
          %v5829 = vadd.f32 %v5636, %v5828
          %v5830 = vpop.f32.mrf.mxu0
          %v5831 = vadd.f32 %v5638, %v5830
          %v5832 = vpop.f32.mrf.mxu0
          %v5833 = vadd.f32 %v5640, %v5832
          %5834 = vmatprep.mubr.bf16.mxu0 %v3989
          %5835 = vmatmul.mubr.bf16.gmra.mxu0 %v3988
          %v5836 = vpop.f32.mrf.mxu0
          %v5837 = vadd.f32 %v5644, %v5836
          %v5838 = vpop.f32.mrf.mxu0
          %v5839 = vadd.f32 %v5646, %v5838
          %v5840 = vpop.f32.mrf.mxu0
          %v5841 = vadd.f32 %v5648, %v5840
          %v5842 = vpop.f32.mrf.mxu0
          %v5843 = vadd.f32 %v5650, %v5842
          %5844 = vmatprep.mubr.bf16.mxu0 %v3997
          %5845 = vmatmul.mubr.bf16.gmra.mxu0 %v3996
          %v5846 = vpop.f32.mrf.mxu0
          %v5847 = vadd.f32 %v5654, %v5846
          %v5848 = vpop.f32.mrf.mxu0
          %v5849 = vadd.f32 %v5656, %v5848
          %v5850 = vpop.f32.mrf.mxu0
          %v5851 = vadd.f32 %v5658, %v5850
          %v5852 = vpop.f32.mrf.mxu0
          %v5853 = vadd.f32 %v5660, %v5852
          %5854 = vmatprep.mubr.bf16.mxu0 %v4005
          %5855 = vmatmul.mubr.bf16.gmra.mxu0 %v4004
          %v5856 = vpop.f32.mrf.mxu0
          %v5857 = vadd.f32 %v5664, %v5856
          %v5858 = vpop.f32.mrf.mxu0
          %v5859 = vadd.f32 %v5666, %v5858
          %v5860 = vpop.f32.mrf.mxu0
          %v5861 = vadd.f32 %v5668, %v5860
          %v5862 = vpop.f32.mrf.mxu0
          %v5863 = vadd.f32 %v5670, %v5862
          %5864 = vmatprep.mubr.bf16.mxu0 %v4013
          %5865 = vmatmul.mubr.bf16.gmra.mxu0 %v4012
          %v5866 = vpop.f32.mrf.mxu0
          %v5867 = vadd.f32 %v5674, %v5866
          %v5868 = vpop.f32.mrf.mxu0
          %v5869 = vadd.f32 %v5676, %v5868
          %v5870 = vpop.f32.mrf.mxu0
          %v5871 = vadd.f32 %v5678, %v5870
          %v5872 = vpop.f32.mrf.mxu0
          %v5873 = vadd.f32 %v5680, %v5872
          %5874 = vdwg.mxu0
          %5875 = vmatprep.subr.bf16.mxu0 %v5078
          %5876 = vmatpush1.bf16.msra.mxu0 %v5077
          %5877 = vmatprep.subr.bf16.mxu0 %v5075
          %5878 = vmatpush1.bf16.msra.mxu0 %v5074
          %5879 = vmatprep.subr.bf16.mxu0 %v5072
          %5880 = vmatpush1.bf16.msra.mxu0 %v5071
          %5881 = vmatprep.subr.bf16.mxu0 %v5069
          %5882 = vmatpush1.bf16.msra.mxu0 %v5068
          %5883 = vmatprep.subr.bf16.mxu0 %v5066
          %5884 = vmatpush1.bf16.msra.mxu0 %v5065
          %5885 = vmatprep.subr.bf16.mxu0 %v5063
          %5886 = vmatpush1.bf16.msra.mxu0 %v5062
          %5887 = vmatprep.subr.bf16.mxu0 %v5060
          %5888 = vmatpush1.bf16.msra.mxu0 %v5059
          %5889 = vmatprep.subr.bf16.mxu0 %v5057
          %5890 = vmatpush1.bf16.msra.mxu0 %v5056
          %5891 = vmatprep.subr.bf16.mxu0 %v5102
          %5892 = vmatpush2.bf16.msra.mxu0 %v5101
          %5893 = vmatprep.subr.bf16.mxu0 %v5099
          %5894 = vmatpush2.bf16.msra.mxu0 %v5098
          %5895 = vmatprep.subr.bf16.mxu0 %v5096
          %5896 = vmatpush2.bf16.msra.mxu0 %v5095
          %5897 = vmatprep.subr.bf16.mxu0 %v5093
          %5898 = vmatpush2.bf16.msra.mxu0 %v5092
          %5899 = vmatprep.subr.bf16.mxu0 %v5090
          %5900 = vmatpush2.bf16.msra.mxu0 %v5089
          %5901 = vmatprep.subr.bf16.mxu0 %v5087
          %5902 = vmatpush2.bf16.msra.mxu0 %v5086
          %5903 = vmatprep.subr.bf16.mxu0 %v5084
          %5904 = vmatpush2.bf16.msra.mxu0 %v5083
          %5905 = vmatprep.subr.bf16.mxu0 %v5081
          %5906 = vmatpush2.bf16.msra.mxu0 %v5080
          %5907 = vmatprep.mubr.bf16.mxu0 %v3895
          %5908 = vmatmul.mubr.bf16.gmra.mxu0 %v3894
          %v5909 = vpop.f32.mrf.mxu0
          %v5910 = vadd.f32 %v5717, %v5909
          %v5911 = vpop.f32.mrf.mxu0
          %v5912 = vadd.f32 %v5719, %v5911
          %v5913 = vpop.f32.mrf.mxu0
          %v5914 = vadd.f32 %v5721, %v5913
          %v5915 = vpop.f32.mrf.mxu0
          %v5916 = vadd.f32 %v5723, %v5915
          %5917 = vmatprep.mubr.bf16.mxu0 %v3903
          %5918 = vmatmul.mubr.bf16.gmra.mxu0 %v3902
          %v5919 = vpop.f32.mrf.mxu0
          %v5920 = vadd.f32 %v5727, %v5919
          %v5921 = vpop.f32.mrf.mxu0
          %v5922 = vadd.f32 %v5729, %v5921
          %v5923 = vpop.f32.mrf.mxu0
          %v5924 = vadd.f32 %v5731, %v5923
          %v5925 = vpop.f32.mrf.mxu0
          %v5926 = vadd.f32 %v5733, %v5925
          %5927 = vmatprep.mubr.bf16.mxu0 %v3911
          %5928 = vmatmul.mubr.bf16.gmra.mxu0 %v3910
          %v5929 = vpop.f32.mrf.mxu0
          %v5930 = vadd.f32 %v5737, %v5929
          %v5931 = vpop.f32.mrf.mxu0
          %v5932 = vadd.f32 %v5739, %v5931
          %v5933 = vpop.f32.mrf.mxu0
          %v5934 = vadd.f32 %v5741, %v5933
          %v5935 = vpop.f32.mrf.mxu0
          %v5936 = vadd.f32 %v5743, %v5935
          %5937 = vmatprep.mubr.bf16.mxu0 %v3919
          %5938 = vmatmul.mubr.bf16.gmra.mxu0 %v3918
          %v5939 = vpop.f32.mrf.mxu0
          %v5940 = vadd.f32 %v5747, %v5939
          %v5941 = vpop.f32.mrf.mxu0
          %v5942 = vadd.f32 %v5749, %v5941
          %v5943 = vpop.f32.mrf.mxu0
          %v5944 = vadd.f32 %v5751, %v5943
          %v5945 = vpop.f32.mrf.mxu0
          %v5946 = vadd.f32 %v5753, %v5945
          %5947 = vmatprep.mubr.bf16.mxu0 %v3927
          %5948 = vmatmul.mubr.bf16.gmra.mxu0 %v3926
          %v5949 = vpop.f32.mrf.mxu0
          %v5950 = vadd.f32 %v5757, %v5949
          %v5951 = vpop.f32.mrf.mxu0
          %v5952 = vadd.f32 %v5759, %v5951
          %v5953 = vpop.f32.mrf.mxu0
          %v5954 = vadd.f32 %v5761, %v5953
          %v5955 = vpop.f32.mrf.mxu0
          %v5956 = vadd.f32 %v5763, %v5955
          %5957 = vmatprep.mubr.bf16.mxu0 %v3935
          %5958 = vmatmul.mubr.bf16.gmra.mxu0 %v3934
          %v5959 = vpop.f32.mrf.mxu0
          %v5960 = vadd.f32 %v5767, %v5959
          %v5961 = vpop.f32.mrf.mxu0
          %v5962 = vadd.f32 %v5769, %v5961
          %v5963 = vpop.f32.mrf.mxu0
          %v5964 = vadd.f32 %v5771, %v5963
          %v5965 = vpop.f32.mrf.mxu0
          %v5966 = vadd.f32 %v5773, %v5965
          %5967 = vmatprep.mubr.bf16.mxu0 %v3943
          %5968 = vmatmul.mubr.bf16.gmra.mxu0 %v3942
          %v5969 = vpop.f32.mrf.mxu0
          %v5970 = vadd.f32 %v5777, %v5969
          %v5971 = vpop.f32.mrf.mxu0
          %v5972 = vadd.f32 %v5779, %v5971
          %v5973 = vpop.f32.mrf.mxu0
          %v5974 = vadd.f32 %v5781, %v5973
          %v5975 = vpop.f32.mrf.mxu0
          %v5976 = vadd.f32 %v5783, %v5975
          %5977 = vmatprep.mubr.bf16.mxu0 %v3951
          %5978 = vmatmul.mubr.bf16.gmra.mxu0 %v3950
          %v5979 = vpop.f32.mrf.mxu0
          %v5980 = vadd.f32 %v5787, %v5979
          %v5981 = vpop.f32.mrf.mxu0
          %v5982 = vadd.f32 %v5789, %v5981
          %v5983 = vpop.f32.mrf.mxu0
          %v5984 = vadd.f32 %v5791, %v5983
          %v5985 = vpop.f32.mrf.mxu0
          %v5986 = vadd.f32 %v5793, %v5985
          %5987 = vmatprep.mubr.bf16.mxu0 %v3959
          %5988 = vmatmul.mubr.bf16.gmra.mxu0 %v3958
          %v5989 = vpop.f32.mrf.mxu0
          %v5990 = vadd.f32 %v5797, %v5989
          %v5991 = vpop.f32.mrf.mxu0
          %v5992 = vadd.f32 %v5799, %v5991
          %v5993 = vpop.f32.mrf.mxu0
          %v5994 = vadd.f32 %v5801, %v5993
          %v5995 = vpop.f32.mrf.mxu0
          %v5996 = vadd.f32 %v5803, %v5995
          %5997 = vmatprep.mubr.bf16.mxu0 %v3967
          %5998 = vmatmul.mubr.bf16.gmra.mxu0 %v3966
          %v5999 = vpop.f32.mrf.mxu0
          %v6000 = vadd.f32 %v5807, %v5999
          %v6001 = vpop.f32.mrf.mxu0
          %v6002 = vadd.f32 %v5809, %v6001
          %v6003 = vpop.f32.mrf.mxu0
          %v6004 = vadd.f32 %v5811, %v6003
          %v6005 = vpop.f32.mrf.mxu0
          %v6006 = vadd.f32 %v5813, %v6005
          %6007 = vmatprep.mubr.bf16.mxu0 %v3975
          %6008 = vmatmul.mubr.bf16.gmra.mxu0 %v3974
          %v6009 = vpop.f32.mrf.mxu0
          %v6010 = vadd.f32 %v5817, %v6009
          %v6011 = vpop.f32.mrf.mxu0
          %v6012 = vadd.f32 %v5819, %v6011
          %v6013 = vpop.f32.mrf.mxu0
          %v6014 = vadd.f32 %v5821, %v6013
          %v6015 = vpop.f32.mrf.mxu0
          %v6016 = vadd.f32 %v5823, %v6015
          %6017 = vmatprep.mubr.bf16.mxu0 %v3983
          %6018 = vmatmul.mubr.bf16.gmra.mxu0 %v3982
          %v6019 = vpop.f32.mrf.mxu0
          %v6020 = vadd.f32 %v5827, %v6019
          %v6021 = vpop.f32.mrf.mxu0
          %v6022 = vadd.f32 %v5829, %v6021
          %v6023 = vpop.f32.mrf.mxu0
          %v6024 = vadd.f32 %v5831, %v6023
          %v6025 = vpop.f32.mrf.mxu0
          %v6026 = vadd.f32 %v5833, %v6025
          %6027 = vmatprep.mubr.bf16.mxu0 %v3991
          %6028 = vmatmul.mubr.bf16.gmra.mxu0 %v3990
          %v6029 = vpop.f32.mrf.mxu0
          %v6030 = vadd.f32 %v5837, %v6029
          %v6031 = vpop.f32.mrf.mxu0
          %v6032 = vadd.f32 %v5839, %v6031
          %v6033 = vpop.f32.mrf.mxu0
          %v6034 = vadd.f32 %v5841, %v6033
          %v6035 = vpop.f32.mrf.mxu0
          %v6036 = vadd.f32 %v5843, %v6035
          %6037 = vmatprep.mubr.bf16.mxu0 %v3999
          %6038 = vmatmul.mubr.bf16.gmra.mxu0 %v3998
          %v6039 = vpop.f32.mrf.mxu0
          %v6040 = vadd.f32 %v5847, %v6039
          %v6041 = vpop.f32.mrf.mxu0
          %v6042 = vadd.f32 %v5849, %v6041
          %v6043 = vpop.f32.mrf.mxu0
          %v6044 = vadd.f32 %v5851, %v6043
          %v6045 = vpop.f32.mrf.mxu0
          %v6046 = vadd.f32 %v5853, %v6045
          %6047 = vmatprep.mubr.bf16.mxu0 %v4007
          %6048 = vmatmul.mubr.bf16.gmra.mxu0 %v4006
          %v6049 = vpop.f32.mrf.mxu0
          %v6050 = vadd.f32 %v5857, %v6049
          %v6051 = vpop.f32.mrf.mxu0
          %v6052 = vadd.f32 %v5859, %v6051
          %v6053 = vpop.f32.mrf.mxu0
          %v6054 = vadd.f32 %v5861, %v6053
          %v6055 = vpop.f32.mrf.mxu0
          %v6056 = vadd.f32 %v5863, %v6055
          %6057 = vmatprep.mubr.bf16.mxu0 %v4015
          %6058 = vmatmul.mubr.bf16.gmra.mxu0 %v4014
          %v6059 = vpop.f32.mrf.mxu0
          %v6060 = vadd.f32 %v5867, %v6059
          %v6061 = vpop.f32.mrf.mxu0
          %v6062 = vadd.f32 %v5869, %v6061
          %v6063 = vpop.f32.mrf.mxu0
          %v6064 = vadd.f32 %v5871, %v6063
          %v6065 = vpop.f32.mrf.mxu0
          %v6066 = vadd.f32 %v5873, %v6065
          %6067 = vdwg.mxu0
          %6068 = vmatprep.subr.bf16.mxu0 0
          %6069 = vmatpush1.bf16.msra.mxu0 %v4935
          %6070 = vmatprep.subr.bf16.mxu0 0
          %6071 = vmatpush1.bf16.msra.mxu0 %v4932
          %6072 = vmatprep.subr.bf16.mxu0 0
          %6073 = vmatpush1.bf16.msra.mxu0 %v4929
          %6074 = vmatprep.subr.bf16.mxu0 0
          %6075 = vmatpush1.bf16.msra.mxu0 %v4926
          %6076 = vmatprep.subr.bf16.mxu0 0
          %6077 = vmatpush1.bf16.msra.mxu0 %v4923
          %6078 = vmatprep.subr.bf16.mxu0 0
          %6079 = vmatpush1.bf16.msra.mxu0 %v4920
          %6080 = vmatprep.subr.bf16.mxu0 0
          %6081 = vmatpush1.bf16.msra.mxu0 %v4917
          %6082 = vmatprep.subr.bf16.mxu0 0
          %6083 = vmatpush1.bf16.msra.mxu0 %v4914
          %6084 = vmatprep.subr.bf16.mxu0 0
          %6085 = vmatpush2.bf16.msra.mxu0 %v4959
          %6086 = vmatprep.subr.bf16.mxu0 0
          %6087 = vmatpush2.bf16.msra.mxu0 %v4956
          %6088 = vmatprep.subr.bf16.mxu0 0
          %6089 = vmatpush2.bf16.msra.mxu0 %v4953
          %6090 = vmatprep.subr.bf16.mxu0 0
          %6091 = vmatpush2.bf16.msra.mxu0 %v4950
          %6092 = vmatprep.subr.bf16.mxu0 0
          %6093 = vmatpush2.bf16.msra.mxu0 %v4947
          %6094 = vmatprep.subr.bf16.mxu0 0
          %6095 = vmatpush2.bf16.msra.mxu0 %v4944
          %6096 = vmatprep.subr.bf16.mxu0 0
          %6097 = vmatpush2.bf16.msra.mxu0 %v4941
          %6098 = vmatprep.subr.bf16.mxu0 0
          %6099 = vmatpush2.bf16.msra.mxu0 %v4938
          %6100 = vmatprep.mubr.bf16.mxu0 %v3889
          %6101 = vmatmul.mubr.bf16.gmra.mxu0 %v3888
          %v6102 = vpop.f32.mrf.mxu0
          %v6103 = vadd.f32 0.0, %v6102
          %v6104 = vpop.f32.mrf.mxu0
          %v6105 = vpop.f32.mrf.mxu0
          %v6106 = vadd.f32 0.0, %v6105
          %v6107 = vpop.f32.mrf.mxu0
          %6108 = vmatprep.mubr.bf16.mxu0 %v3897
          %6109 = vmatmul.mubr.bf16.gmra.mxu0 %v3896
          %v6110 = vpop.f32.mrf.mxu0
          %v6111 = vadd.f32 0.0, %v6110
          %v6112 = vpop.f32.mrf.mxu0
          %v6113 = vpop.f32.mrf.mxu0
          %v6114 = vadd.f32 0.0, %v6113
          %v6115 = vpop.f32.mrf.mxu0
          %6116 = vmatprep.mubr.bf16.mxu0 %v3905
          %6117 = vmatmul.mubr.bf16.gmra.mxu0 %v3904
          %v6118 = vpop.f32.mrf.mxu0
          %v6119 = vadd.f32 0.0, %v6118
          %v6120 = vpop.f32.mrf.mxu0
          %v6121 = vpop.f32.mrf.mxu0
          %v6122 = vadd.f32 0.0, %v6121
          %v6123 = vpop.f32.mrf.mxu0
          %6124 = vmatprep.mubr.bf16.mxu0 %v3913
          %6125 = vmatmul.mubr.bf16.gmra.mxu0 %v3912
          %v6126 = vpop.f32.mrf.mxu0
          %v6127 = vadd.f32 0.0, %v6126
          %v6128 = vpop.f32.mrf.mxu0
          %v6129 = vpop.f32.mrf.mxu0
          %v6130 = vadd.f32 0.0, %v6129
          %v6131 = vpop.f32.mrf.mxu0
          %6132 = vmatprep.mubr.bf16.mxu0 %v3921
          %6133 = vmatmul.mubr.bf16.gmra.mxu0 %v3920
          %v6134 = vpop.f32.mrf.mxu0
          %v6135 = vadd.f32 0.0, %v6134
          %v6136 = vpop.f32.mrf.mxu0
          %v6137 = vpop.f32.mrf.mxu0
          %v6138 = vadd.f32 0.0, %v6137
          %v6139 = vpop.f32.mrf.mxu0
          %6140 = vmatprep.mubr.bf16.mxu0 %v3929
          %6141 = vmatmul.mubr.bf16.gmra.mxu0 %v3928
          %v6142 = vpop.f32.mrf.mxu0
          %v6143 = vadd.f32 0.0, %v6142
          %v6144 = vpop.f32.mrf.mxu0
          %v6145 = vpop.f32.mrf.mxu0
          %v6146 = vadd.f32 0.0, %v6145
          %v6147 = vpop.f32.mrf.mxu0
          %6148 = vmatprep.mubr.bf16.mxu0 %v3937
          %6149 = vmatmul.mubr.bf16.gmra.mxu0 %v3936
          %v6150 = vpop.f32.mrf.mxu0
          %v6151 = vadd.f32 0.0, %v6150
          %v6152 = vpop.f32.mrf.mxu0
          %v6153 = vpop.f32.mrf.mxu0
          %v6154 = vadd.f32 0.0, %v6153
          %v6155 = vpop.f32.mrf.mxu0
          %6156 = vmatprep.mubr.bf16.mxu0 %v3945
          %6157 = vmatmul.mubr.bf16.gmra.mxu0 %v3944
          %v6158 = vpop.f32.mrf.mxu0
          %v6159 = vadd.f32 0.0, %v6158
          %v6160 = vpop.f32.mrf.mxu0
          %v6161 = vpop.f32.mrf.mxu0
          %v6162 = vadd.f32 0.0, %v6161
          %v6163 = vpop.f32.mrf.mxu0
          %6164 = vmatprep.mubr.bf16.mxu0 %v3953
          %6165 = vmatmul.mubr.bf16.gmra.mxu0 %v3952
          %v6166 = vpop.f32.mrf.mxu0
          %v6167 = vadd.f32 0.0, %v6166
          %v6168 = vpop.f32.mrf.mxu0
          %v6169 = vpop.f32.mrf.mxu0
          %v6170 = vadd.f32 0.0, %v6169
          %v6171 = vpop.f32.mrf.mxu0
          %6172 = vmatprep.mubr.bf16.mxu0 %v3961
          %6173 = vmatmul.mubr.bf16.gmra.mxu0 %v3960
          %v6174 = vpop.f32.mrf.mxu0
          %v6175 = vadd.f32 0.0, %v6174
          %v6176 = vpop.f32.mrf.mxu0
          %v6177 = vpop.f32.mrf.mxu0
          %v6178 = vadd.f32 0.0, %v6177
          %v6179 = vpop.f32.mrf.mxu0
          %6180 = vmatprep.mubr.bf16.mxu0 %v3969
          %6181 = vmatmul.mubr.bf16.gmra.mxu0 %v3968
          %v6182 = vpop.f32.mrf.mxu0
          %v6183 = vadd.f32 0.0, %v6182
          %v6184 = vpop.f32.mrf.mxu0
          %v6185 = vpop.f32.mrf.mxu0
          %v6186 = vadd.f32 0.0, %v6185
          %v6187 = vpop.f32.mrf.mxu0
          %6188 = vmatprep.mubr.bf16.mxu0 %v3977
          %6189 = vmatmul.mubr.bf16.gmra.mxu0 %v3976
          %v6190 = vpop.f32.mrf.mxu0
          %v6191 = vadd.f32 0.0, %v6190
          %v6192 = vpop.f32.mrf.mxu0
          %v6193 = vpop.f32.mrf.mxu0
          %v6194 = vadd.f32 0.0, %v6193
          %v6195 = vpop.f32.mrf.mxu0
          %6196 = vmatprep.mubr.bf16.mxu0 %v3985
          %6197 = vmatmul.mubr.bf16.gmra.mxu0 %v3984
          %v6198 = vpop.f32.mrf.mxu0
          %v6199 = vadd.f32 0.0, %v6198
          %v6200 = vpop.f32.mrf.mxu0
          %v6201 = vpop.f32.mrf.mxu0
          %v6202 = vadd.f32 0.0, %v6201
          %v6203 = vpop.f32.mrf.mxu0
          %6204 = vmatprep.mubr.bf16.mxu0 %v3993
          %6205 = vmatmul.mubr.bf16.gmra.mxu0 %v3992
          %v6206 = vpop.f32.mrf.mxu0
          %v6207 = vadd.f32 0.0, %v6206
          %v6208 = vpop.f32.mrf.mxu0
          %v6209 = vpop.f32.mrf.mxu0
          %v6210 = vadd.f32 0.0, %v6209
          %v6211 = vpop.f32.mrf.mxu0
          %6212 = vmatprep.mubr.bf16.mxu0 %v4001
          %6213 = vmatmul.mubr.bf16.gmra.mxu0 %v4000
          %v6214 = vpop.f32.mrf.mxu0
          %v6215 = vadd.f32 0.0, %v6214
          %v6216 = vpop.f32.mrf.mxu0
          %v6217 = vpop.f32.mrf.mxu0
          %v6218 = vadd.f32 0.0, %v6217
          %v6219 = vpop.f32.mrf.mxu0
          %6220 = vmatprep.mubr.bf16.mxu0 %v4009
          %6221 = vmatmul.mubr.bf16.gmra.mxu0 %v4008
          %v6222 = vpop.f32.mrf.mxu0
          %v6223 = vadd.f32 0.0, %v6222
          %v6224 = vpop.f32.mrf.mxu0
          %v6225 = vpop.f32.mrf.mxu0
          %v6226 = vadd.f32 0.0, %v6225
          %v6227 = vpop.f32.mrf.mxu0
          %6228 = vdwg.mxu0
          %6229 = vmatprep.subr.bf16.mxu0 0
          %6230 = vmatpush1.bf16.msra.mxu0 %v4983
          %6231 = vmatprep.subr.bf16.mxu0 0
          %6232 = vmatpush1.bf16.msra.mxu0 %v4980
          %6233 = vmatprep.subr.bf16.mxu0 0
          %6234 = vmatpush1.bf16.msra.mxu0 %v4977
          %6235 = vmatprep.subr.bf16.mxu0 0
          %6236 = vmatpush1.bf16.msra.mxu0 %v4974
          %6237 = vmatprep.subr.bf16.mxu0 0
          %6238 = vmatpush1.bf16.msra.mxu0 %v4971
          %6239 = vmatprep.subr.bf16.mxu0 0
          %6240 = vmatpush1.bf16.msra.mxu0 %v4968
          %6241 = vmatprep.subr.bf16.mxu0 0
          %6242 = vmatpush1.bf16.msra.mxu0 %v4965
          %6243 = vmatprep.subr.bf16.mxu0 0
          %6244 = vmatpush1.bf16.msra.mxu0 %v4962
          %6245 = vmatprep.subr.bf16.mxu0 0
          %6246 = vmatpush2.bf16.msra.mxu0 %v5007
          %6247 = vmatprep.subr.bf16.mxu0 0
          %6248 = vmatpush2.bf16.msra.mxu0 %v5004
          %6249 = vmatprep.subr.bf16.mxu0 0
          %6250 = vmatpush2.bf16.msra.mxu0 %v5001
          %6251 = vmatprep.subr.bf16.mxu0 0
          %6252 = vmatpush2.bf16.msra.mxu0 %v4998
          %6253 = vmatprep.subr.bf16.mxu0 0
          %6254 = vmatpush2.bf16.msra.mxu0 %v4995
          %6255 = vmatprep.subr.bf16.mxu0 0
          %6256 = vmatpush2.bf16.msra.mxu0 %v4992
          %6257 = vmatprep.subr.bf16.mxu0 0
          %6258 = vmatpush2.bf16.msra.mxu0 %v4989
          %6259 = vmatprep.subr.bf16.mxu0 0
          %6260 = vmatpush2.bf16.msra.mxu0 %v4986
          %6261 = vmatprep.mubr.bf16.mxu0 %v3891
          %6262 = vmatmul.mubr.bf16.gmra.mxu0 %v3890
          %v6263 = vpop.f32.mrf.mxu0
          %v6264 = vadd.f32 %v6103, %v6263
          %v6265 = vpop.f32.mrf.mxu0
          %v6266 = vpop.f32.mrf.mxu0
          %v6267 = vadd.f32 %v6106, %v6266
          %v6268 = vpop.f32.mrf.mxu0
          %6269 = vmatprep.mubr.bf16.mxu0 %v3899
          %6270 = vmatmul.mubr.bf16.gmra.mxu0 %v3898
          %v6271 = vpop.f32.mrf.mxu0
          %v6272 = vadd.f32 %v6111, %v6271
          %v6273 = vpop.f32.mrf.mxu0
          %v6274 = vpop.f32.mrf.mxu0
          %v6275 = vadd.f32 %v6114, %v6274
          %v6276 = vpop.f32.mrf.mxu0
          %6277 = vmatprep.mubr.bf16.mxu0 %v3907
          %6278 = vmatmul.mubr.bf16.gmra.mxu0 %v3906
          %v6279 = vpop.f32.mrf.mxu0
          %v6280 = vadd.f32 %v6119, %v6279
          %v6281 = vpop.f32.mrf.mxu0
          %v6282 = vpop.f32.mrf.mxu0
          %v6283 = vadd.f32 %v6122, %v6282
          %v6284 = vpop.f32.mrf.mxu0
          %6285 = vmatprep.mubr.bf16.mxu0 %v3915
          %6286 = vmatmul.mubr.bf16.gmra.mxu0 %v3914
          %v6287 = vpop.f32.mrf.mxu0
          %v6288 = vadd.f32 %v6127, %v6287
          %v6289 = vpop.f32.mrf.mxu0
          %v6290 = vpop.f32.mrf.mxu0
          %v6291 = vadd.f32 %v6130, %v6290
          %v6292 = vpop.f32.mrf.mxu0
          %6293 = vmatprep.mubr.bf16.mxu0 %v3923
          %6294 = vmatmul.mubr.bf16.gmra.mxu0 %v3922
          %v6295 = vpop.f32.mrf.mxu0
          %v6296 = vadd.f32 %v6135, %v6295
          %v6297 = vpop.f32.mrf.mxu0
          %v6298 = vpop.f32.mrf.mxu0
          %v6299 = vadd.f32 %v6138, %v6298
          %v6300 = vpop.f32.mrf.mxu0
          %6301 = vmatprep.mubr.bf16.mxu0 %v3931
          %6302 = vmatmul.mubr.bf16.gmra.mxu0 %v3930
          %v6303 = vpop.f32.mrf.mxu0
          %v6304 = vadd.f32 %v6143, %v6303
          %v6305 = vpop.f32.mrf.mxu0
          %v6306 = vpop.f32.mrf.mxu0
          %v6307 = vadd.f32 %v6146, %v6306
          %v6308 = vpop.f32.mrf.mxu0
          %6309 = vmatprep.mubr.bf16.mxu0 %v3939
          %6310 = vmatmul.mubr.bf16.gmra.mxu0 %v3938
          %v6311 = vpop.f32.mrf.mxu0
          %v6312 = vadd.f32 %v6151, %v6311
          %v6313 = vpop.f32.mrf.mxu0
          %v6314 = vpop.f32.mrf.mxu0
          %v6315 = vadd.f32 %v6154, %v6314
          %v6316 = vpop.f32.mrf.mxu0
          %6317 = vmatprep.mubr.bf16.mxu0 %v3947
          %6318 = vmatmul.mubr.bf16.gmra.mxu0 %v3946
          %v6319 = vpop.f32.mrf.mxu0
          %v6320 = vadd.f32 %v6159, %v6319
          %v6321 = vpop.f32.mrf.mxu0
          %v6322 = vpop.f32.mrf.mxu0
          %v6323 = vadd.f32 %v6162, %v6322
          %v6324 = vpop.f32.mrf.mxu0
          %6325 = vmatprep.mubr.bf16.mxu0 %v3955
          %6326 = vmatmul.mubr.bf16.gmra.mxu0 %v3954
          %v6327 = vpop.f32.mrf.mxu0
          %v6328 = vadd.f32 %v6167, %v6327
          %v6329 = vpop.f32.mrf.mxu0
          %v6330 = vpop.f32.mrf.mxu0
          %v6331 = vadd.f32 %v6170, %v6330
          %v6332 = vpop.f32.mrf.mxu0
          %6333 = vmatprep.mubr.bf16.mxu0 %v3963
          %6334 = vmatmul.mubr.bf16.gmra.mxu0 %v3962
          %v6335 = vpop.f32.mrf.mxu0
          %v6336 = vadd.f32 %v6175, %v6335
          %v6337 = vpop.f32.mrf.mxu0
          %v6338 = vpop.f32.mrf.mxu0
          %v6339 = vadd.f32 %v6178, %v6338
          %v6340 = vpop.f32.mrf.mxu0
          %6341 = vmatprep.mubr.bf16.mxu0 %v3971
          %6342 = vmatmul.mubr.bf16.gmra.mxu0 %v3970
          %v6343 = vpop.f32.mrf.mxu0
          %v6344 = vadd.f32 %v6183, %v6343
          %v6345 = vpop.f32.mrf.mxu0
          %v6346 = vpop.f32.mrf.mxu0
          %v6347 = vadd.f32 %v6186, %v6346
          %v6348 = vpop.f32.mrf.mxu0
          %6349 = vmatprep.mubr.bf16.mxu0 %v3979
          %6350 = vmatmul.mubr.bf16.gmra.mxu0 %v3978
          %v6351 = vpop.f32.mrf.mxu0
          %v6352 = vadd.f32 %v6191, %v6351
          %v6353 = vpop.f32.mrf.mxu0
          %v6354 = vpop.f32.mrf.mxu0
          %v6355 = vadd.f32 %v6194, %v6354
          %v6356 = vpop.f32.mrf.mxu0
          %6357 = vmatprep.mubr.bf16.mxu0 %v3987
          %6358 = vmatmul.mubr.bf16.gmra.mxu0 %v3986
          %v6359 = vpop.f32.mrf.mxu0
          %v6360 = vadd.f32 %v6199, %v6359
          %v6361 = vpop.f32.mrf.mxu0
          %v6362 = vpop.f32.mrf.mxu0
          %v6363 = vadd.f32 %v6202, %v6362
          %v6364 = vpop.f32.mrf.mxu0
          %6365 = vmatprep.mubr.bf16.mxu0 %v3995
          %6366 = vmatmul.mubr.bf16.gmra.mxu0 %v3994
          %v6367 = vpop.f32.mrf.mxu0
          %v6368 = vadd.f32 %v6207, %v6367
          %v6369 = vpop.f32.mrf.mxu0
          %v6370 = vpop.f32.mrf.mxu0
          %v6371 = vadd.f32 %v6210, %v6370
          %v6372 = vpop.f32.mrf.mxu0
          %6373 = vmatprep.mubr.bf16.mxu0 %v4003
          %6374 = vmatmul.mubr.bf16.gmra.mxu0 %v4002
          %v6375 = vpop.f32.mrf.mxu0
          %v6376 = vadd.f32 %v6215, %v6375
          %v6377 = vpop.f32.mrf.mxu0
          %v6378 = vpop.f32.mrf.mxu0
          %v6379 = vadd.f32 %v6218, %v6378
          %v6380 = vpop.f32.mrf.mxu0
          %6381 = vmatprep.mubr.bf16.mxu0 %v4011
          %6382 = vmatmul.mubr.bf16.gmra.mxu0 %v4010
          %v6383 = vpop.f32.mrf.mxu0
          %v6384 = vadd.f32 %v6223, %v6383
          %v6385 = vpop.f32.mrf.mxu0
          %v6386 = vpop.f32.mrf.mxu0
          %v6387 = vadd.f32 %v6226, %v6386
          %v6388 = vpop.f32.mrf.mxu0
          %6389 = vdwg.mxu0
          %6390 = vmatprep.subr.bf16.mxu0 0
          %6391 = vmatpush1.bf16.msra.mxu0 %v5031
          %6392 = vmatprep.subr.bf16.mxu0 0
          %6393 = vmatpush1.bf16.msra.mxu0 %v5028
          %6394 = vmatprep.subr.bf16.mxu0 0
          %6395 = vmatpush1.bf16.msra.mxu0 %v5025
          %6396 = vmatprep.subr.bf16.mxu0 0
          %6397 = vmatpush1.bf16.msra.mxu0 %v5022
          %6398 = vmatprep.subr.bf16.mxu0 0
          %6399 = vmatpush1.bf16.msra.mxu0 %v5019
          %6400 = vmatprep.subr.bf16.mxu0 0
          %6401 = vmatpush1.bf16.msra.mxu0 %v5016
          %6402 = vmatprep.subr.bf16.mxu0 0
          %6403 = vmatpush1.bf16.msra.mxu0 %v5013
          %6404 = vmatprep.subr.bf16.mxu0 0
          %6405 = vmatpush1.bf16.msra.mxu0 %v5010
          %6406 = vmatprep.subr.bf16.mxu0 0
          %6407 = vmatpush2.bf16.msra.mxu0 %v5055
          %6408 = vmatprep.subr.bf16.mxu0 0
          %6409 = vmatpush2.bf16.msra.mxu0 %v5052
          %6410 = vmatprep.subr.bf16.mxu0 0
          %6411 = vmatpush2.bf16.msra.mxu0 %v5049
          %6412 = vmatprep.subr.bf16.mxu0 0
          %6413 = vmatpush2.bf16.msra.mxu0 %v5046
          %6414 = vmatprep.subr.bf16.mxu0 0
          %6415 = vmatpush2.bf16.msra.mxu0 %v5043
          %6416 = vmatprep.subr.bf16.mxu0 0
          %6417 = vmatpush2.bf16.msra.mxu0 %v5040
          %6418 = vmatprep.subr.bf16.mxu0 0
          %6419 = vmatpush2.bf16.msra.mxu0 %v5037
          %6420 = vmatprep.subr.bf16.mxu0 0
          %6421 = vmatpush2.bf16.msra.mxu0 %v5034
          %6422 = vmatprep.mubr.bf16.mxu0 %v3893
          %6423 = vmatmul.mubr.bf16.gmra.mxu0 %v3892
          %v6424 = vpop.f32.mrf.mxu0
          %v6425 = vadd.f32 %v6264, %v6424
          %v6426 = vpop.f32.mrf.mxu0
          %v6427 = vpop.f32.mrf.mxu0
          %v6428 = vadd.f32 %v6267, %v6427
          %v6429 = vpop.f32.mrf.mxu0
          %6430 = vmatprep.mubr.bf16.mxu0 %v3901
          %6431 = vmatmul.mubr.bf16.gmra.mxu0 %v3900
          %v6432 = vpop.f32.mrf.mxu0
          %v6433 = vadd.f32 %v6272, %v6432
          %v6434 = vpop.f32.mrf.mxu0
          %v6435 = vpop.f32.mrf.mxu0
          %v6436 = vadd.f32 %v6275, %v6435
          %v6437 = vpop.f32.mrf.mxu0
          %6438 = vmatprep.mubr.bf16.mxu0 %v3909
          %6439 = vmatmul.mubr.bf16.gmra.mxu0 %v3908
          %v6440 = vpop.f32.mrf.mxu0
          %v6441 = vadd.f32 %v6280, %v6440
          %v6442 = vpop.f32.mrf.mxu0
          %v6443 = vpop.f32.mrf.mxu0
          %v6444 = vadd.f32 %v6283, %v6443
          %v6445 = vpop.f32.mrf.mxu0
          %6446 = vmatprep.mubr.bf16.mxu0 %v3917
          %6447 = vmatmul.mubr.bf16.gmra.mxu0 %v3916
          %v6448 = vpop.f32.mrf.mxu0
          %v6449 = vadd.f32 %v6288, %v6448
          %v6450 = vpop.f32.mrf.mxu0
          %v6451 = vpop.f32.mrf.mxu0
          %v6452 = vadd.f32 %v6291, %v6451
          %v6453 = vpop.f32.mrf.mxu0
          %6454 = vmatprep.mubr.bf16.mxu0 %v3925
          %6455 = vmatmul.mubr.bf16.gmra.mxu0 %v3924
          %v6456 = vpop.f32.mrf.mxu0
          %v6457 = vadd.f32 %v6296, %v6456
          %v6458 = vpop.f32.mrf.mxu0
          %v6459 = vpop.f32.mrf.mxu0
          %v6460 = vadd.f32 %v6299, %v6459
          %v6461 = vpop.f32.mrf.mxu0
          %6462 = vmatprep.mubr.bf16.mxu0 %v3933
          %6463 = vmatmul.mubr.bf16.gmra.mxu0 %v3932
          %v6464 = vpop.f32.mrf.mxu0
          %v6465 = vadd.f32 %v6304, %v6464
          %v6466 = vpop.f32.mrf.mxu0
          %v6467 = vpop.f32.mrf.mxu0
          %v6468 = vadd.f32 %v6307, %v6467
          %v6469 = vpop.f32.mrf.mxu0
          %6470 = vmatprep.mubr.bf16.mxu0 %v3941
          %6471 = vmatmul.mubr.bf16.gmra.mxu0 %v3940
          %v6472 = vpop.f32.mrf.mxu0
          %v6473 = vadd.f32 %v6312, %v6472
          %v6474 = vpop.f32.mrf.mxu0
          %v6475 = vpop.f32.mrf.mxu0
          %v6476 = vadd.f32 %v6315, %v6475
          %v6477 = vpop.f32.mrf.mxu0
          %6478 = vmatprep.mubr.bf16.mxu0 %v3949
          %6479 = vmatmul.mubr.bf16.gmra.mxu0 %v3948
          %v6480 = vpop.f32.mrf.mxu0
          %v6481 = vadd.f32 %v6320, %v6480
          %v6482 = vpop.f32.mrf.mxu0
          %v6483 = vpop.f32.mrf.mxu0
          %v6484 = vadd.f32 %v6323, %v6483
          %v6485 = vpop.f32.mrf.mxu0
          %6486 = vmatprep.mubr.bf16.mxu0 %v3957
          %6487 = vmatmul.mubr.bf16.gmra.mxu0 %v3956
          %v6488 = vpop.f32.mrf.mxu0
          %v6489 = vadd.f32 %v6328, %v6488
          %v6490 = vpop.f32.mrf.mxu0
          %v6491 = vpop.f32.mrf.mxu0
          %v6492 = vadd.f32 %v6331, %v6491
          %v6493 = vpop.f32.mrf.mxu0
          %6494 = vmatprep.mubr.bf16.mxu0 %v3965
          %6495 = vmatmul.mubr.bf16.gmra.mxu0 %v3964
          %v6496 = vpop.f32.mrf.mxu0
          %v6497 = vadd.f32 %v6336, %v6496
          %v6498 = vpop.f32.mrf.mxu0
          %v6499 = vpop.f32.mrf.mxu0
          %v6500 = vadd.f32 %v6339, %v6499
          %v6501 = vpop.f32.mrf.mxu0
          %6502 = vmatprep.mubr.bf16.mxu0 %v3973
          %6503 = vmatmul.mubr.bf16.gmra.mxu0 %v3972
          %v6504 = vpop.f32.mrf.mxu0
          %v6505 = vadd.f32 %v6344, %v6504
          %v6506 = vpop.f32.mrf.mxu0
          %v6507 = vpop.f32.mrf.mxu0
          %v6508 = vadd.f32 %v6347, %v6507
          %v6509 = vpop.f32.mrf.mxu0
          %6510 = vmatprep.mubr.bf16.mxu0 %v3981
          %6511 = vmatmul.mubr.bf16.gmra.mxu0 %v3980
          %v6512 = vpop.f32.mrf.mxu0
          %v6513 = vadd.f32 %v6352, %v6512
          %v6514 = vpop.f32.mrf.mxu0
          %v6515 = vpop.f32.mrf.mxu0
          %v6516 = vadd.f32 %v6355, %v6515
          %v6517 = vpop.f32.mrf.mxu0
          %6518 = vmatprep.mubr.bf16.mxu0 %v3989
          %6519 = vmatmul.mubr.bf16.gmra.mxu0 %v3988
          %v6520 = vpop.f32.mrf.mxu0
          %v6521 = vadd.f32 %v6360, %v6520
          %v6522 = vpop.f32.mrf.mxu0
          %v6523 = vpop.f32.mrf.mxu0
          %v6524 = vadd.f32 %v6363, %v6523
          %v6525 = vpop.f32.mrf.mxu0
          %6526 = vmatprep.mubr.bf16.mxu0 %v3997
          %6527 = vmatmul.mubr.bf16.gmra.mxu0 %v3996
          %v6528 = vpop.f32.mrf.mxu0
          %v6529 = vadd.f32 %v6368, %v6528
          %v6530 = vpop.f32.mrf.mxu0
          %v6531 = vpop.f32.mrf.mxu0
          %v6532 = vadd.f32 %v6371, %v6531
          %v6533 = vpop.f32.mrf.mxu0
          %6534 = vmatprep.mubr.bf16.mxu0 %v4005
          %6535 = vmatmul.mubr.bf16.gmra.mxu0 %v4004
          %v6536 = vpop.f32.mrf.mxu0
          %v6537 = vadd.f32 %v6376, %v6536
          %v6538 = vpop.f32.mrf.mxu0
          %v6539 = vpop.f32.mrf.mxu0
          %v6540 = vadd.f32 %v6379, %v6539
          %v6541 = vpop.f32.mrf.mxu0
          %6542 = vmatprep.mubr.bf16.mxu0 %v4013
          %6543 = vmatmul.mubr.bf16.gmra.mxu0 %v4012
          %v6544 = vpop.f32.mrf.mxu0
          %v6545 = vadd.f32 %v6384, %v6544
          %v6546 = vpop.f32.mrf.mxu0
          %v6547 = vpop.f32.mrf.mxu0
          %v6548 = vadd.f32 %v6387, %v6547
          %v6549 = vpop.f32.mrf.mxu0
          %6550 = vdwg.mxu0
          %6551 = vmatprep.subr.bf16.mxu0 0
          %6552 = vmatpush1.bf16.msra.mxu0 %v5079
          %6553 = vmatprep.subr.bf16.mxu0 0
          %6554 = vmatpush1.bf16.msra.mxu0 %v5076
          %6555 = vmatprep.subr.bf16.mxu0 0
          %6556 = vmatpush1.bf16.msra.mxu0 %v5073
          %6557 = vmatprep.subr.bf16.mxu0 0
          %6558 = vmatpush1.bf16.msra.mxu0 %v5070
          %6559 = vmatprep.subr.bf16.mxu0 0
          %6560 = vmatpush1.bf16.msra.mxu0 %v5067
          %6561 = vmatprep.subr.bf16.mxu0 0
          %6562 = vmatpush1.bf16.msra.mxu0 %v5064
          %6563 = vmatprep.subr.bf16.mxu0 0
          %6564 = vmatpush1.bf16.msra.mxu0 %v5061
          %6565 = vmatprep.subr.bf16.mxu0 0
          %6566 = vmatpush1.bf16.msra.mxu0 %v5058
          %6567 = vmatprep.subr.bf16.mxu0 0
          %6568 = vmatpush2.bf16.msra.mxu0 %v5103
          %6569 = vmatprep.subr.bf16.mxu0 0
          %6570 = vmatpush2.bf16.msra.mxu0 %v5100
          %6571 = vmatprep.subr.bf16.mxu0 0
          %6572 = vmatpush2.bf16.msra.mxu0 %v5097
          %6573 = vmatprep.subr.bf16.mxu0 0
          %6574 = vmatpush2.bf16.msra.mxu0 %v5094
          %6575 = vmatprep.subr.bf16.mxu0 0
          %6576 = vmatpush2.bf16.msra.mxu0 %v5091
          %6577 = vmatprep.subr.bf16.mxu0 0
          %6578 = vmatpush2.bf16.msra.mxu0 %v5088
          %6579 = vmatprep.subr.bf16.mxu0 0
          %6580 = vmatpush2.bf16.msra.mxu0 %v5085
          %6581 = vmatprep.subr.bf16.mxu0 0
          %6582 = vmatpush2.bf16.msra.mxu0 %v5082
          %6583 = vmatprep.mubr.bf16.mxu0 %v3895
          %6584 = vmatmul.mubr.bf16.gmra.mxu0 %v3894
          %v6585 = vpop.f32.mrf.mxu0
          %v6586 = vadd.f32 %v6425, %v6585
          %v6587 = vpop.f32.mrf.mxu0
          %v6588 = vpop.f32.mrf.mxu0
          %v6589 = vadd.f32 %v6428, %v6588
          %v6590 = vpop.f32.mrf.mxu0
          %6591 = vmatprep.mubr.bf16.mxu0 %v3903
          %6592 = vmatmul.mubr.bf16.gmra.mxu0 %v3902
          %v6593 = vpop.f32.mrf.mxu0
          %v6594 = vadd.f32 %v6433, %v6593
          %v6595 = vpop.f32.mrf.mxu0
          %v6596 = vpop.f32.mrf.mxu0
          %v6597 = vadd.f32 %v6436, %v6596
          %v6598 = vpop.f32.mrf.mxu0
          %6599 = vmatprep.mubr.bf16.mxu0 %v3911
          %6600 = vmatmul.mubr.bf16.gmra.mxu0 %v3910
          %v6601 = vpop.f32.mrf.mxu0
          %v6602 = vadd.f32 %v6441, %v6601
          %v6603 = vpop.f32.mrf.mxu0
          %v6604 = vpop.f32.mrf.mxu0
          %v6605 = vadd.f32 %v6444, %v6604
          %v6606 = vpop.f32.mrf.mxu0
          %6607 = vmatprep.mubr.bf16.mxu0 %v3919
          %6608 = vmatmul.mubr.bf16.gmra.mxu0 %v3918
          %v6609 = vpop.f32.mrf.mxu0
          %v6610 = vadd.f32 %v6449, %v6609
          %v6611 = vpop.f32.mrf.mxu0
          %v6612 = vpop.f32.mrf.mxu0
          %v6613 = vadd.f32 %v6452, %v6612
          %v6614 = vpop.f32.mrf.mxu0
          %6615 = vmatprep.mubr.bf16.mxu0 %v3927
          %6616 = vmatmul.mubr.bf16.gmra.mxu0 %v3926
          %v6617 = vpop.f32.mrf.mxu0
          %v6618 = vadd.f32 %v6457, %v6617
          %v6619 = vpop.f32.mrf.mxu0
          %v6620 = vpop.f32.mrf.mxu0
          %v6621 = vadd.f32 %v6460, %v6620
          %v6622 = vpop.f32.mrf.mxu0
          %6623 = vmatprep.mubr.bf16.mxu0 %v3935
          %6624 = vmatmul.mubr.bf16.gmra.mxu0 %v3934
          %v6625 = vpop.f32.mrf.mxu0
          %v6626 = vadd.f32 %v6465, %v6625
          %v6627 = vpop.f32.mrf.mxu0
          %v6628 = vpop.f32.mrf.mxu0
          %v6629 = vadd.f32 %v6468, %v6628
          %v6630 = vpop.f32.mrf.mxu0
          %6631 = vmatprep.mubr.bf16.mxu0 %v3943
          %6632 = vmatmul.mubr.bf16.gmra.mxu0 %v3942
          %v6633 = vpop.f32.mrf.mxu0
          %v6634 = vadd.f32 %v6473, %v6633
          %v6635 = vpop.f32.mrf.mxu0
          %v6636 = vpop.f32.mrf.mxu0
          %v6637 = vadd.f32 %v6476, %v6636
          %v6638 = vpop.f32.mrf.mxu0
          %6639 = vmatprep.mubr.bf16.mxu0 %v3951
          %6640 = vmatmul.mubr.bf16.gmra.mxu0 %v3950
          %v6641 = vpop.f32.mrf.mxu0
          %v6642 = vadd.f32 %v6481, %v6641
          %v6643 = vpop.f32.mrf.mxu0
          %v6644 = vpop.f32.mrf.mxu0
          %v6645 = vadd.f32 %v6484, %v6644
          %v6646 = vpop.f32.mrf.mxu0
          %6647 = vmatprep.mubr.bf16.mxu0 %v3959
          %6648 = vmatmul.mubr.bf16.gmra.mxu0 %v3958
          %v6649 = vpop.f32.mrf.mxu0
          %v6650 = vadd.f32 %v6489, %v6649
          %v6651 = vpop.f32.mrf.mxu0
          %v6652 = vpop.f32.mrf.mxu0
          %v6653 = vadd.f32 %v6492, %v6652
          %v6654 = vpop.f32.mrf.mxu0
          %6655 = vmatprep.mubr.bf16.mxu0 %v3967
          %6656 = vmatmul.mubr.bf16.gmra.mxu0 %v3966
          %v6657 = vpop.f32.mrf.mxu0
          %v6658 = vadd.f32 %v6497, %v6657
          %v6659 = vpop.f32.mrf.mxu0
          %v6660 = vpop.f32.mrf.mxu0
          %v6661 = vadd.f32 %v6500, %v6660
          %v6662 = vpop.f32.mrf.mxu0
          %6663 = vmatprep.mubr.bf16.mxu0 %v3975
          %6664 = vmatmul.mubr.bf16.gmra.mxu0 %v3974
          %v6665 = vpop.f32.mrf.mxu0
          %v6666 = vadd.f32 %v6505, %v6665
          %v6667 = vpop.f32.mrf.mxu0
          %v6668 = vpop.f32.mrf.mxu0
          %v6669 = vadd.f32 %v6508, %v6668
          %v6670 = vpop.f32.mrf.mxu0
          %6671 = vmatprep.mubr.bf16.mxu0 %v3983
          %6672 = vmatmul.mubr.bf16.gmra.mxu0 %v3982
          %v6673 = vpop.f32.mrf.mxu0
          %v6674 = vadd.f32 %v6513, %v6673
          %v6675 = vpop.f32.mrf.mxu0
          %v6676 = vpop.f32.mrf.mxu0
          %v6677 = vadd.f32 %v6516, %v6676
          %v6678 = vpop.f32.mrf.mxu0
          %6679 = vmatprep.mubr.bf16.mxu0 %v3991
          %6680 = vmatmul.mubr.bf16.gmra.mxu0 %v3990
          %v6681 = vpop.f32.mrf.mxu0
          %v6682 = vadd.f32 %v6521, %v6681
          %v6683 = vpop.f32.mrf.mxu0
          %v6684 = vpop.f32.mrf.mxu0
          %v6685 = vadd.f32 %v6524, %v6684
          %v6686 = vpop.f32.mrf.mxu0
          %6687 = vmatprep.mubr.bf16.mxu0 %v3999
          %6688 = vmatmul.mubr.bf16.gmra.mxu0 %v3998
          %v6689 = vpop.f32.mrf.mxu0
          %v6690 = vadd.f32 %v6529, %v6689
          %v6691 = vpop.f32.mrf.mxu0
          %v6692 = vpop.f32.mrf.mxu0
          %v6693 = vadd.f32 %v6532, %v6692
          %v6694 = vpop.f32.mrf.mxu0
          %6695 = vmatprep.mubr.bf16.mxu0 %v4007
          %6696 = vmatmul.mubr.bf16.gmra.mxu0 %v4006
          %v6697 = vpop.f32.mrf.mxu0
          %v6698 = vadd.f32 %v6537, %v6697
          %v6699 = vpop.f32.mrf.mxu0
          %v6700 = vpop.f32.mrf.mxu0
          %v6701 = vadd.f32 %v6540, %v6700
          %v6702 = vpop.f32.mrf.mxu0
          %6703 = vmatprep.mubr.bf16.mxu0 %v4015
          %6704 = vmatmul.mubr.bf16.gmra.mxu0 %v4014
          %v6705 = vpop.f32.mrf.mxu0
          %v6706 = vadd.f32 %v6545, %v6705
          %v6707 = vpop.f32.mrf.mxu0
          %v6708 = vpop.f32.mrf.mxu0
          %v6709 = vadd.f32 %v6548, %v6708
          %v6710 = vpop.f32.mrf.mxu0
          %6711 = vdwg.mxu0
          %v6712 = vadd.f32 %v3792, %v5910
          %v6713 = vadd.f32 %v3793, %v5912
          %v6714 = vadd.f32 %v3794, %v6586
          %v6715 = vadd.f32 %v3795, %v5914
          %v6716 = vadd.f32 %v3796, %v5916
          %v6717 = vadd.f32 %v3797, %v6589
          %v6718 = vadd.f32 %v3798, %v5920
          %v6719 = vadd.f32 %v3799, %v5922
          %v6720 = vadd.f32 %v3800, %v6594
          %v6721 = vadd.f32 %v3801, %v5924
          %v6722 = vadd.f32 %v3802, %v5926
          %v6723 = vadd.f32 %v3803, %v6597
          %v6724 = vadd.f32 %v3804, %v5930
          %v6725 = vadd.f32 %v3805, %v5932
          %v6726 = vadd.f32 %v3806, %v6602
          %v6727 = vadd.f32 %v3807, %v5934
          %v6728 = vadd.f32 %v3808, %v5936
          %v6729 = vadd.f32 %v3809, %v6605
          %v6730 = vadd.f32 %v3810, %v5940
          %v6731 = vadd.f32 %v3811, %v5942
          %v6732 = vadd.f32 %v3812, %v6610
          %v6733 = vadd.f32 %v3813, %v5944
          %v6734 = vadd.f32 %v3814, %v5946
          %v6735 = vadd.f32 %v3815, %v6613
          %v6736 = vadd.f32 %v3816, %v5950
          %v6737 = vadd.f32 %v3817, %v5952
          %v6738 = vadd.f32 %v3818, %v6618
          %v6739 = vadd.f32 %v3819, %v5954
          %v6740 = vadd.f32 %v3820, %v5956
          %v6741 = vadd.f32 %v3821, %v6621
          %v6742 = vadd.f32 %v3822, %v5960
          %v6743 = vadd.f32 %v3823, %v5962
          %v6744 = vadd.f32 %v3824, %v6626
          %v6745 = vadd.f32 %v3825, %v5964
          %v6746 = vadd.f32 %v3826, %v5966
          %v6747 = vadd.f32 %v3827, %v6629
          %v6748 = vadd.f32 %v3828, %v5970
          %v6749 = vadd.f32 %v3829, %v5972
          %v6750 = vadd.f32 %v3830, %v6634
          %v6751 = vadd.f32 %v3831, %v5974
          %v6752 = vadd.f32 %v3832, %v5976
          %v6753 = vadd.f32 %v3833, %v6637
          %v6754 = vadd.f32 %v3834, %v5980
          %v6755 = vadd.f32 %v3835, %v5982
          %v6756 = vadd.f32 %v3836, %v6642
          %v6757 = vadd.f32 %v3837, %v5984
          %v6758 = vadd.f32 %v3838, %v5986
          %v6759 = vadd.f32 %v3839, %v6645
          %v6760 = vadd.f32 %v3840, %v5990
          %v6761 = vadd.f32 %v3841, %v5992
          %v6762 = vadd.f32 %v3842, %v6650
          %v6763 = vadd.f32 %v3843, %v5994
          %v6764 = vadd.f32 %v3844, %v5996
          %v6765 = vadd.f32 %v3845, %v6653
          %v6766 = vadd.f32 %v3846, %v6000
          %v6767 = vadd.f32 %v3847, %v6002
          %v6768 = vadd.f32 %v3848, %v6658
          %v6769 = vadd.f32 %v3849, %v6004
          %v6770 = vadd.f32 %v3850, %v6006
          %v6771 = vadd.f32 %v3851, %v6661
          %v6772 = vadd.f32 %v3852, %v6010
          %v6773 = vadd.f32 %v3853, %v6012
          %v6774 = vadd.f32 %v3854, %v6666
          %v6775 = vadd.f32 %v3855, %v6014
          %v6776 = vadd.f32 %v3856, %v6016
          %v6777 = vadd.f32 %v3857, %v6669
          %v6778 = vadd.f32 %v3858, %v6020
          %v6779 = vadd.f32 %v3859, %v6022
          %v6780 = vadd.f32 %v3860, %v6674
          %v6781 = vadd.f32 %v3861, %v6024
          %v6782 = vadd.f32 %v3862, %v6026
          %v6783 = vadd.f32 %v3863, %v6677
          %v6784 = vadd.f32 %v3864, %v6030
          %v6785 = vadd.f32 %v3865, %v6032
          %v6786 = vadd.f32 %v3866, %v6682
          %v6787 = vadd.f32 %v3867, %v6034
          %v6788 = vadd.f32 %v3868, %v6036
          %v6789 = vadd.f32 %v3869, %v6685
          %v6790 = vadd.f32 %v3870, %v6040
          %v6791 = vadd.f32 %v3871, %v6042
          %v6792 = vadd.f32 %v3872, %v6690
          %v6793 = vadd.f32 %v3873, %v6044
          %v6794 = vadd.f32 %v3874, %v6046
          %v6795 = vadd.f32 %v3875, %v6693
          %v6796 = vadd.f32 %v3876, %v6050
          %v6797 = vadd.f32 %v3877, %v6052
          %v6798 = vadd.f32 %v3878, %v6698
          %v6799 = vadd.f32 %v3879, %v6054
          %v6800 = vadd.f32 %v3880, %v6056
          %v6801 = vadd.f32 %v3881, %v6701
          %v6802 = vadd.f32 %v3882, %v6060
          %v6803 = vadd.f32 %v3883, %v6062
          %v6804 = vadd.f32 %v3884, %v6706
          %v6805 = vadd.f32 %v3885, %v6064
          %v6806 = vadd.f32 %v3886, %v6066
          %v6807 = vadd.f32 %v3887, %v6709
          %6808 = vst [vmem:[#allocation2] sm:$0xff] %v6712
          %6809 = vst [vmem:[#allocation2 + $0x8] sm:$0xff] %v6713
          %6810 = vst [vmem:[#allocation2 + $0x10] sm:$0xff] %v6714
          %6811 = vst [vmem:[#allocation2 + $0x18] sm:$0xff] %v6715
          %6812 = vst [vmem:[#allocation2 + $0x20] sm:$0xff] %v6716
          %6813 = vst [vmem:[#allocation2 + $0x28] sm:$0xff] %v6717
          %6814 = vst [vmem:[#allocation2 + $0x30] sm:$0xff] %v6718
          %6815 = vst [vmem:[#allocation2 + $0x38] sm:$0xff] %v6719
          %6816 = vst [vmem:[#allocation2 + $0x40] sm:$0xff] %v6720
          %6817 = vst [vmem:[#allocation2 + $0x48] sm:$0xff] %v6721
          %6818 = vst [vmem:[#allocation2 + $0x50] sm:$0xff] %v6722
          %6819 = vst [vmem:[#allocation2 + $0x58] sm:$0xff] %v6723
          %6820 = vst [vmem:[#allocation2 + $0x60] sm:$0xff] %v6724
          %6821 = vst [vmem:[#allocation2 + $0x68] sm:$0xff] %v6725
          %6822 = vst [vmem:[#allocation2 + $0x70] sm:$0xff] %v6726
          %6823 = vst [vmem:[#allocation2 + $0x78] sm:$0xff] %v6727
          %6824 = vst [vmem:[#allocation2 + $0x80] sm:$0xff] %v6728
          %6825 = vst [vmem:[#allocation2 + $0x88] sm:$0xff] %v6729
          %6826 = vst [vmem:[#allocation2 + $0x90] sm:$0xff] %v6730
          %6827 = vst [vmem:[#allocation2 + $0x98] sm:$0xff] %v6731
          %6828 = vst [vmem:[#allocation2 + $0xa0] sm:$0xff] %v6732
          %6829 = vst [vmem:[#allocation2 + $0xa8] sm:$0xff] %v6733
          %6830 = vst [vmem:[#allocation2 + $0xb0] sm:$0xff] %v6734
          %6831 = vst [vmem:[#allocation2 + $0xb8] sm:$0xff] %v6735
          %6832 = vst [vmem:[#allocation2 + $0xc0] sm:$0xff] %v6736
          %6833 = vst [vmem:[#allocation2 + $0xc8] sm:$0xff] %v6737
          %6834 = vst [vmem:[#allocation2 + $0xd0] sm:$0xff] %v6738
          %6835 = vst [vmem:[#allocation2 + $0xd8] sm:$0xff] %v6739
          %6836 = vst [vmem:[#allocation2 + $0xe0] sm:$0xff] %v6740
          %6837 = vst [vmem:[#allocation2 + $0xe8] sm:$0xff] %v6741
          %6838 = vst [vmem:[#allocation2 + $0xf0] sm:$0xff] %v6742
          %6839 = vst [vmem:[#allocation2 + $0xf8] sm:$0xff] %v6743
          %6840 = vst [vmem:[#allocation2 + $0x100] sm:$0xff] %v6744
          %6841 = vst [vmem:[#allocation2 + $0x108] sm:$0xff] %v6745
          %6842 = vst [vmem:[#allocation2 + $0x110] sm:$0xff] %v6746
          %6843 = vst [vmem:[#allocation2 + $0x118] sm:$0xff] %v6747
          %6844 = vst [vmem:[#allocation2 + $0x120] sm:$0xff] %v6748
          %6845 = vst [vmem:[#allocation2 + $0x128] sm:$0xff] %v6749
          %6846 = vst [vmem:[#allocation2 + $0x130] sm:$0xff] %v6750
          %6847 = vst [vmem:[#allocation2 + $0x138] sm:$0xff] %v6751
          %6848 = vst [vmem:[#allocation2 + $0x140] sm:$0xff] %v6752
          %6849 = vst [vmem:[#allocation2 + $0x148] sm:$0xff] %v6753
          %6850 = vst [vmem:[#allocation2 + $0x150] sm:$0xff] %v6754
          %6851 = vst [vmem:[#allocation2 + $0x158] sm:$0xff] %v6755
          %6852 = vst [vmem:[#allocation2 + $0x160] sm:$0xff] %v6756
          %6853 = vst [vmem:[#allocation2 + $0x168] sm:$0xff] %v6757
          %6854 = vst [vmem:[#allocation2 + $0x170] sm:$0xff] %v6758
          %6855 = vst [vmem:[#allocation2 + $0x178] sm:$0xff] %v6759
          %6856 = vst [vmem:[#allocation2 + $0x180] sm:$0xff] %v6760
          %6857 = vst [vmem:[#allocation2 + $0x188] sm:$0xff] %v6761
          %6858 = vst [vmem:[#allocation2 + $0x190] sm:$0xff] %v6762
          %6859 = vst [vmem:[#allocation2 + $0x198] sm:$0xff] %v6763
          %6860 = vst [vmem:[#allocation2 + $0x1a0] sm:$0xff] %v6764
          %6861 = vst [vmem:[#allocation2 + $0x1a8] sm:$0xff] %v6765
          %6862 = vst [vmem:[#allocation2 + $0x1b0] sm:$0xff] %v6766
          %6863 = vst [vmem:[#allocation2 + $0x1b8] sm:$0xff] %v6767
          %6864 = vst [vmem:[#allocation2 + $0x1c0] sm:$0xff] %v6768
          %6865 = vst [vmem:[#allocation2 + $0x1c8] sm:$0xff] %v6769
          %6866 = vst [vmem:[#allocation2 + $0x1d0] sm:$0xff] %v6770
          %6867 = vst [vmem:[#allocation2 + $0x1d8] sm:$0xff] %v6771
          %6868 = vst [vmem:[#allocation2 + $0x1e0] sm:$0xff] %v6772
          %6869 = vst [vmem:[#allocation2 + $0x1e8] sm:$0xff] %v6773
          %6870 = vst [vmem:[#allocation2 + $0x1f0] sm:$0xff] %v6774
          %6871 = vst [vmem:[#allocation2 + $0x1f8] sm:$0xff] %v6775
          %6872 = vst [vmem:[#allocation2 + $0x200] sm:$0xff] %v6776
          %6873 = vst [vmem:[#allocation2 + $0x208] sm:$0xff] %v6777
          %6874 = vst [vmem:[#allocation2 + $0x210] sm:$0xff] %v6778
          %6875 = vst [vmem:[#allocation2 + $0x218] sm:$0xff] %v6779
          %6876 = vst [vmem:[#allocation2 + $0x220] sm:$0xff] %v6780
          %6877 = vst [vmem:[#allocation2 + $0x228] sm:$0xff] %v6781
          %6878 = vst [vmem:[#allocation2 + $0x230] sm:$0xff] %v6782
          %6879 = vst [vmem:[#allocation2 + $0x238] sm:$0xff] %v6783
          %6880 = vst [vmem:[#allocation2 + $0x240] sm:$0xff] %v6784
          %6881 = vst [vmem:[#allocation2 + $0x248] sm:$0xff] %v6785
          %6882 = vst [vmem:[#allocation2 + $0x250] sm:$0xff] %v6786
          %6883 = vst [vmem:[#allocation2 + $0x258] sm:$0xff] %v6787
          %6884 = vst [vmem:[#allocation2 + $0x260] sm:$0xff] %v6788
          %6885 = vst [vmem:[#allocation2 + $0x268] sm:$0xff] %v6789
          %6886 = vst [vmem:[#allocation2 + $0x270] sm:$0xff] %v6790
          %6887 = vst [vmem:[#allocation2 + $0x278] sm:$0xff] %v6791
          %6888 = vst [vmem:[#allocation2 + $0x280] sm:$0xff] %v6792
          %6889 = vst [vmem:[#allocation2 + $0x288] sm:$0xff] %v6793
          %6890 = vst [vmem:[#allocation2 + $0x290] sm:$0xff] %v6794
          %6891 = vst [vmem:[#allocation2 + $0x298] sm:$0xff] %v6795
          %6892 = vst [vmem:[#allocation2 + $0x2a0] sm:$0xff] %v6796
          %6893 = vst [vmem:[#allocation2 + $0x2a8] sm:$0xff] %v6797
          %6894 = vst [vmem:[#allocation2 + $0x2b0] sm:$0xff] %v6798
          %6895 = vst [vmem:[#allocation2 + $0x2b8] sm:$0xff] %v6799
          %6896 = vst [vmem:[#allocation2 + $0x2c0] sm:$0xff] %v6800
          %6897 = vst [vmem:[#allocation2 + $0x2c8] sm:$0xff] %v6801
          %6898 = vst [vmem:[#allocation2 + $0x2d0] sm:$0xff] %v6802
          %6899 = vst [vmem:[#allocation2 + $0x2d8] sm:$0xff] %v6803
          %6900 = vst [vmem:[#allocation2 + $0x2e0] sm:$0xff] %v6804
          %6901 = vst [vmem:[#allocation2 + $0x2e8] sm:$0xff] %v6805
          %6902 = vst [vmem:[#allocation2 + $0x2f0] sm:$0xff] %v6806
          %6903 = vst [vmem:[#allocation2 + $0x2f8] sm:$0xff] %v6807
        $region56: #{tpu_custom_call.1} parent=43 // pred_fallthru
          _
        // Predicated region
        $region57: #{tpu_custom_call.1} parent=43 // pred_check
          %p6904 = pneg %p380
        $region58: #{tpu_custom_call.1} parent=43 // pred_check_branch
          %6906 = sbr.rel (%p6904) target = $region60
        $region59: #{tpu_custom_call.1} parent=43 // pred_region
          %v6907 = vld [vmem:[#allocation2] sm:$0xff]
          %v6908 = vld [vmem:[#allocation2 + $0x8] sm:$0xff]
          %v6909 = vld [vmem:[#allocation2 + $0x10] sm:$0xff]
          %v6910 = vld [vmem:[#allocation2 + $0x18] sm:$0xff]
          %v6911 = vld [vmem:[#allocation2 + $0x20] sm:$0xff]
          %v6912 = vld [vmem:[#allocation2 + $0x28] sm:$0xff]
          %v6913 = vld [vmem:[#allocation2 + $0x30] sm:$0xff]
          %v6914 = vld [vmem:[#allocation2 + $0x38] sm:$0xff]
          %v6915 = vld [vmem:[#allocation2 + $0x40] sm:$0xff]
          %v6916 = vld [vmem:[#allocation2 + $0x48] sm:$0xff]
          %v6917 = vld [vmem:[#allocation2 + $0x50] sm:$0xff]
          %v6918 = vld [vmem:[#allocation2 + $0x58] sm:$0xff]
          %v6919 = vld [vmem:[#allocation2 + $0x60] sm:$0xff]
          %v6920 = vld [vmem:[#allocation2 + $0x68] sm:$0xff]
          %v6921 = vld [vmem:[#allocation2 + $0x70] sm:$0xff]
          %v6922 = vld [vmem:[#allocation2 + $0x78] sm:$0xff]
          %v6923 = vld [vmem:[#allocation2 + $0x80] sm:$0xff]
          %v6924 = vld [vmem:[#allocation2 + $0x88] sm:$0xff]
          %v6925 = vld [vmem:[#allocation2 + $0x90] sm:$0xff]
          %v6926 = vld [vmem:[#allocation2 + $0x98] sm:$0xff]
          %v6927 = vld [vmem:[#allocation2 + $0xa0] sm:$0xff]
          %v6928 = vld [vmem:[#allocation2 + $0xa8] sm:$0xff]
          %v6929 = vld [vmem:[#allocation2 + $0xb0] sm:$0xff]
          %v6930 = vld [vmem:[#allocation2 + $0xb8] sm:$0xff]
          %v6931 = vld [vmem:[#allocation2 + $0xc0] sm:$0xff]
          %v6932 = vld [vmem:[#allocation2 + $0xc8] sm:$0xff]
          %v6933 = vld [vmem:[#allocation2 + $0xd0] sm:$0xff]
          %v6934 = vld [vmem:[#allocation2 + $0xd8] sm:$0xff]
          %v6935 = vld [vmem:[#allocation2 + $0xe0] sm:$0xff]
          %v6936 = vld [vmem:[#allocation2 + $0xe8] sm:$0xff]
          %v6937 = vld [vmem:[#allocation2 + $0xf0] sm:$0xff]
          %v6938 = vld [vmem:[#allocation2 + $0xf8] sm:$0xff]
          %v6939 = vld [vmem:[#allocation2 + $0x100] sm:$0xff]
          %v6940 = vld [vmem:[#allocation2 + $0x108] sm:$0xff]
          %v6941 = vld [vmem:[#allocation2 + $0x110] sm:$0xff]
          %v6942 = vld [vmem:[#allocation2 + $0x118] sm:$0xff]
          %v6943 = vld [vmem:[#allocation2 + $0x120] sm:$0xff]
          %v6944 = vld [vmem:[#allocation2 + $0x128] sm:$0xff]
          %v6945 = vld [vmem:[#allocation2 + $0x130] sm:$0xff]
          %v6946 = vld [vmem:[#allocation2 + $0x138] sm:$0xff]
          %v6947 = vld [vmem:[#allocation2 + $0x140] sm:$0xff]
          %v6948 = vld [vmem:[#allocation2 + $0x148] sm:$0xff]
          %v6949 = vld [vmem:[#allocation2 + $0x150] sm:$0xff]
          %v6950 = vld [vmem:[#allocation2 + $0x158] sm:$0xff]
          %v6951 = vld [vmem:[#allocation2 + $0x160] sm:$0xff]
          %v6952 = vld [vmem:[#allocation2 + $0x168] sm:$0xff]
          %v6953 = vld [vmem:[#allocation2 + $0x170] sm:$0xff]
          %v6954 = vld [vmem:[#allocation2 + $0x178] sm:$0xff]
          %v6955 = vld [vmem:[#allocation2 + $0x180] sm:$0xff]
          %v6956 = vld [vmem:[#allocation2 + $0x188] sm:$0xff]
          %v6957 = vld [vmem:[#allocation2 + $0x190] sm:$0xff]
          %v6958 = vld [vmem:[#allocation2 + $0x198] sm:$0xff]
          %v6959 = vld [vmem:[#allocation2 + $0x1a0] sm:$0xff]
          %v6960 = vld [vmem:[#allocation2 + $0x1a8] sm:$0xff]
          %v6961 = vld [vmem:[#allocation2 + $0x1b0] sm:$0xff]
          %v6962 = vld [vmem:[#allocation2 + $0x1b8] sm:$0xff]
          %v6963 = vld [vmem:[#allocation2 + $0x1c0] sm:$0xff]
          %v6964 = vld [vmem:[#allocation2 + $0x1c8] sm:$0xff]
          %v6965 = vld [vmem:[#allocation2 + $0x1d0] sm:$0xff]
          %v6966 = vld [vmem:[#allocation2 + $0x1d8] sm:$0xff]
          %v6967 = vld [vmem:[#allocation2 + $0x1e0] sm:$0xff]
          %v6968 = vld [vmem:[#allocation2 + $0x1e8] sm:$0xff]
          %v6969 = vld [vmem:[#allocation2 + $0x1f0] sm:$0xff]
          %v6970 = vld [vmem:[#allocation2 + $0x1f8] sm:$0xff]
          %v6971 = vld [vmem:[#allocation2 + $0x200] sm:$0xff]
          %v6972 = vld [vmem:[#allocation2 + $0x208] sm:$0xff]
          %v6973 = vld [vmem:[#allocation2 + $0x210] sm:$0xff]
          %v6974 = vld [vmem:[#allocation2 + $0x218] sm:$0xff]
          %v6975 = vld [vmem:[#allocation2 + $0x220] sm:$0xff]
          %v6976 = vld [vmem:[#allocation2 + $0x228] sm:$0xff]
          %v6977 = vld [vmem:[#allocation2 + $0x230] sm:$0xff]
          %v6978 = vld [vmem:[#allocation2 + $0x238] sm:$0xff]
          %v6979 = vld [vmem:[#allocation2 + $0x240] sm:$0xff]
          %v6980 = vld [vmem:[#allocation2 + $0x248] sm:$0xff]
          %v6981 = vld [vmem:[#allocation2 + $0x250] sm:$0xff]
          %v6982 = vld [vmem:[#allocation2 + $0x258] sm:$0xff]
          %v6983 = vld [vmem:[#allocation2 + $0x260] sm:$0xff]
          %v6984 = vld [vmem:[#allocation2 + $0x268] sm:$0xff]
          %v6985 = vld [vmem:[#allocation2 + $0x270] sm:$0xff]
          %v6986 = vld [vmem:[#allocation2 + $0x278] sm:$0xff]
          %v6987 = vld [vmem:[#allocation2 + $0x280] sm:$0xff]
          %v6988 = vld [vmem:[#allocation2 + $0x288] sm:$0xff]
          %v6989 = vld [vmem:[#allocation2 + $0x290] sm:$0xff]
          %v6990 = vld [vmem:[#allocation2 + $0x298] sm:$0xff]
          %v6991 = vld [vmem:[#allocation2 + $0x2a0] sm:$0xff]
          %v6992 = vld [vmem:[#allocation2 + $0x2a8] sm:$0xff]
          %v6993 = vld [vmem:[#allocation2 + $0x2b0] sm:$0xff]
          %v6994 = vld [vmem:[#allocation2 + $0x2b8] sm:$0xff]
          %v6995 = vld [vmem:[#allocation2 + $0x2c0] sm:$0xff]
          %v6996 = vld [vmem:[#allocation2 + $0x2c8] sm:$0xff]
          %v6997 = vld [vmem:[#allocation2 + $0x2d0] sm:$0xff]
          %v6998 = vld [vmem:[#allocation2 + $0x2d8] sm:$0xff]
          %v6999 = vld [vmem:[#allocation2 + $0x2e0] sm:$0xff]
          %v7000 = vld [vmem:[#allocation2 + $0x2e8] sm:$0xff]
          %v7001 = vld [vmem:[#allocation2 + $0x2f0] sm:$0xff]
          %v7002 = vld [vmem:[#allocation2 + $0x2f8] sm:$0xff]
          %v7003 = vmax.f32 %v6909, 1e-09
          %v7004 = vmax.f32 %v6912, 1e-09
          %v7005 = vmax.f32 %v6915, 1e-09
          %v7006 = vmax.f32 %v6918, 1e-09
          %v7007 = vmax.f32 %v6921, 1e-09
          %v7008 = vmax.f32 %v6924, 1e-09
          %v7009 = vmax.f32 %v6927, 1e-09
          %v7010 = vmax.f32 %v6930, 1e-09
          %v7011 = vmax.f32 %v6933, 1e-09
          %v7012 = vmax.f32 %v6936, 1e-09
          %v7013 = vmax.f32 %v6939, 1e-09
          %v7014 = vmax.f32 %v6942, 1e-09
          %v7015 = vmax.f32 %v6945, 1e-09
          %v7016 = vmax.f32 %v6948, 1e-09
          %v7017 = vmax.f32 %v6951, 1e-09
          %v7018 = vmax.f32 %v6954, 1e-09
          %v7019 = vmax.f32 %v6957, 1e-09
          %v7020 = vmax.f32 %v6960, 1e-09
          %v7021 = vmax.f32 %v6963, 1e-09
          %v7022 = vmax.f32 %v6966, 1e-09
          %v7023 = vmax.f32 %v6969, 1e-09
          %v7024 = vmax.f32 %v6972, 1e-09
          %v7025 = vmax.f32 %v6975, 1e-09
          %v7026 = vmax.f32 %v6978, 1e-09
          %v7027 = vmax.f32 %v6981, 1e-09
          %v7028 = vmax.f32 %v6984, 1e-09
          %v7029 = vmax.f32 %v6987, 1e-09
          %v7030 = vmax.f32 %v6990, 1e-09
          %v7031 = vmax.f32 %v6993, 1e-09
          %v7032 = vmax.f32 %v6996, 1e-09
          %v7033 = vmax.f32 %v6999, 1e-09
          %v7034 = vmax.f32 %v7002, 1e-09
          %v7035 = vrcp.pop %v7003
          %v7036 = vrcp.pop %v7004
          %v7037 = vrcp.pop %v7005
          %v7038 = vrcp.pop %v7006
          %v7039 = vrcp.pop %v7007
          %v7040 = vrcp.pop %v7008
          %v7041 = vrcp.pop %v7009
          %v7042 = vrcp.pop %v7010
          %v7043 = vrcp.pop %v7011
          %v7044 = vrcp.pop %v7012
          %v7045 = vrcp.pop %v7013
          %v7046 = vrcp.pop %v7014
          %v7047 = vrcp.pop %v7015
          %v7048 = vrcp.pop %v7016
          %v7049 = vrcp.pop %v7017
          %v7050 = vrcp.pop %v7018
          %v7051 = vrcp.pop %v7019
          %v7052 = vrcp.pop %v7020
          %v7053 = vrcp.pop %v7021
          %v7054 = vrcp.pop %v7022
          %v7055 = vrcp.pop %v7023
          %v7056 = vrcp.pop %v7024
          %v7057 = vrcp.pop %v7025
          %v7058 = vrcp.pop %v7026
          %v7059 = vrcp.pop %v7027
          %v7060 = vrcp.pop %v7028
          %v7061 = vrcp.pop %v7029
          %v7062 = vrcp.pop %v7030
          %v7063 = vrcp.pop %v7031
          %v7064 = vrcp.pop %v7032
          %v7065 = vrcp.pop %v7033
          %v7066 = vrcp.pop %v7034
          %7068 = vset.pattern.permute.xlu0 0
          %7069 = vperm.xlu0 %7068, %v7035
          %v7070 = vpop.permute.xlu0 %7069
          %7073 = vset.pattern.permute.xlu0 0
          %7074 = vperm.xlu0 %7073, %v7036
          %v7075 = vpop.permute.xlu0 %7074
          %7078 = vset.pattern.permute.xlu0 0
          %7079 = vperm.xlu0 %7078, %v7037
          %v7080 = vpop.permute.xlu0 %7079
          %7083 = vset.pattern.permute.xlu0 0
          %7084 = vperm.xlu0 %7083, %v7038
          %v7085 = vpop.permute.xlu0 %7084
          %7088 = vset.pattern.permute.xlu0 0
          %7089 = vperm.xlu0 %7088, %v7039
          %v7090 = vpop.permute.xlu0 %7089
          %7093 = vset.pattern.permute.xlu0 0
          %7094 = vperm.xlu0 %7093, %v7040
          %v7095 = vpop.permute.xlu0 %7094
          %7098 = vset.pattern.permute.xlu0 0
          %7099 = vperm.xlu0 %7098, %v7041
          %v7100 = vpop.permute.xlu0 %7099
          %7103 = vset.pattern.permute.xlu0 0
          %7104 = vperm.xlu0 %7103, %v7042
          %v7105 = vpop.permute.xlu0 %7104
          %7108 = vset.pattern.permute.xlu0 0
          %7109 = vperm.xlu0 %7108, %v7043
          %v7110 = vpop.permute.xlu0 %7109
          %7113 = vset.pattern.permute.xlu0 0
          %7114 = vperm.xlu0 %7113, %v7044
          %v7115 = vpop.permute.xlu0 %7114
          %7118 = vset.pattern.permute.xlu0 0
          %7119 = vperm.xlu0 %7118, %v7045
          %v7120 = vpop.permute.xlu0 %7119
          %7123 = vset.pattern.permute.xlu0 0
          %7124 = vperm.xlu0 %7123, %v7046
          %v7125 = vpop.permute.xlu0 %7124
          %7128 = vset.pattern.permute.xlu0 0
          %7129 = vperm.xlu0 %7128, %v7047
          %v7130 = vpop.permute.xlu0 %7129
          %7133 = vset.pattern.permute.xlu0 0
          %7134 = vperm.xlu0 %7133, %v7048
          %v7135 = vpop.permute.xlu0 %7134
          %7138 = vset.pattern.permute.xlu0 0
          %7139 = vperm.xlu0 %7138, %v7049
          %v7140 = vpop.permute.xlu0 %7139
          %7143 = vset.pattern.permute.xlu0 0
          %7144 = vperm.xlu0 %7143, %v7050
          %v7145 = vpop.permute.xlu0 %7144
          %7148 = vset.pattern.permute.xlu0 0
          %7149 = vperm.xlu0 %7148, %v7051
          %v7150 = vpop.permute.xlu0 %7149
          %7153 = vset.pattern.permute.xlu0 0
          %7154 = vperm.xlu0 %7153, %v7052
          %v7155 = vpop.permute.xlu0 %7154
          %7158 = vset.pattern.permute.xlu0 0
          %7159 = vperm.xlu0 %7158, %v7053
          %v7160 = vpop.permute.xlu0 %7159
          %7163 = vset.pattern.permute.xlu0 0
          %7164 = vperm.xlu0 %7163, %v7054
          %v7165 = vpop.permute.xlu0 %7164
          %7168 = vset.pattern.permute.xlu0 0
          %7169 = vperm.xlu0 %7168, %v7055
          %v7170 = vpop.permute.xlu0 %7169
          %7173 = vset.pattern.permute.xlu0 0
          %7174 = vperm.xlu0 %7173, %v7056
          %v7175 = vpop.permute.xlu0 %7174
          %7178 = vset.pattern.permute.xlu0 0
          %7179 = vperm.xlu0 %7178, %v7057
          %v7180 = vpop.permute.xlu0 %7179
          %7183 = vset.pattern.permute.xlu0 0
          %7184 = vperm.xlu0 %7183, %v7058
          %v7185 = vpop.permute.xlu0 %7184
          %7188 = vset.pattern.permute.xlu0 0
          %7189 = vperm.xlu0 %7188, %v7059
          %v7190 = vpop.permute.xlu0 %7189
          %7193 = vset.pattern.permute.xlu0 0
          %7194 = vperm.xlu0 %7193, %v7060
          %v7195 = vpop.permute.xlu0 %7194
          %7198 = vset.pattern.permute.xlu0 0
          %7199 = vperm.xlu0 %7198, %v7061
          %v7200 = vpop.permute.xlu0 %7199
          %7203 = vset.pattern.permute.xlu0 0
          %7204 = vperm.xlu0 %7203, %v7062
          %v7205 = vpop.permute.xlu0 %7204
          %7208 = vset.pattern.permute.xlu0 0
          %7209 = vperm.xlu0 %7208, %v7063
          %v7210 = vpop.permute.xlu0 %7209
          %7213 = vset.pattern.permute.xlu0 0
          %7214 = vperm.xlu0 %7213, %v7064
          %v7215 = vpop.permute.xlu0 %7214
          %7218 = vset.pattern.permute.xlu0 0
          %7219 = vperm.xlu0 %7218, %v7065
          %v7220 = vpop.permute.xlu0 %7219
          %7223 = vset.pattern.permute.xlu0 0
          %7224 = vperm.xlu0 %7223, %v7066
          %v7225 = vpop.permute.xlu0 %7224
          %v7227 = vmul.f32 %v6907, %v7070
          %v7228 = vmul.f32 %v6908, %v7070
          %v7229 = vmul.f32 %v6910, %v7075
          %v7230 = vmul.f32 %v6911, %v7075
          %v7231 = vmul.f32 %v6913, %v7080
          %v7232 = vmul.f32 %v6914, %v7080
          %v7233 = vmul.f32 %v6916, %v7085
          %v7234 = vmul.f32 %v6917, %v7085
          %v7235 = vmul.f32 %v6919, %v7090
          %v7236 = vmul.f32 %v6920, %v7090
          %v7237 = vmul.f32 %v6922, %v7095
          %v7238 = vmul.f32 %v6923, %v7095
          %v7239 = vmul.f32 %v6925, %v7100
          %v7240 = vmul.f32 %v6926, %v7100
          %v7241 = vmul.f32 %v6928, %v7105
          %v7242 = vmul.f32 %v6929, %v7105
          %v7243 = vmul.f32 %v6931, %v7110
          %v7244 = vmul.f32 %v6932, %v7110
          %v7245 = vmul.f32 %v6934, %v7115
          %v7246 = vmul.f32 %v6935, %v7115
          %v7247 = vmul.f32 %v6937, %v7120
          %v7248 = vmul.f32 %v6938, %v7120
          %v7249 = vmul.f32 %v6940, %v7125
          %v7250 = vmul.f32 %v6941, %v7125
          %v7251 = vmul.f32 %v6943, %v7130
          %v7252 = vmul.f32 %v6944, %v7130
          %v7253 = vmul.f32 %v6946, %v7135
          %v7254 = vmul.f32 %v6947, %v7135
          %v7255 = vmul.f32 %v6949, %v7140
          %v7256 = vmul.f32 %v6950, %v7140
          %v7257 = vmul.f32 %v6952, %v7145
          %v7258 = vmul.f32 %v6953, %v7145
          %v7259 = vmul.f32 %v6955, %v7150
          %v7260 = vmul.f32 %v6956, %v7150
          %v7261 = vmul.f32 %v6958, %v7155
          %v7262 = vmul.f32 %v6959, %v7155
          %v7263 = vmul.f32 %v6961, %v7160
          %v7264 = vmul.f32 %v6962, %v7160
          %v7265 = vmul.f32 %v6964, %v7165
          %v7266 = vmul.f32 %v6965, %v7165
          %v7267 = vmul.f32 %v6967, %v7170
          %v7268 = vmul.f32 %v6968, %v7170
          %v7269 = vmul.f32 %v6970, %v7175
          %v7270 = vmul.f32 %v6971, %v7175
          %v7271 = vmul.f32 %v6973, %v7180
          %v7272 = vmul.f32 %v6974, %v7180
          %v7273 = vmul.f32 %v6976, %v7185
          %v7274 = vmul.f32 %v6977, %v7185
          %v7275 = vmul.f32 %v6979, %v7190
          %v7276 = vmul.f32 %v6980, %v7190
          %v7277 = vmul.f32 %v6982, %v7195
          %v7278 = vmul.f32 %v6983, %v7195
          %v7279 = vmul.f32 %v6985, %v7200
          %v7280 = vmul.f32 %v6986, %v7200
          %v7281 = vmul.f32 %v6988, %v7205
          %v7282 = vmul.f32 %v6989, %v7205
          %v7283 = vmul.f32 %v6991, %v7210
          %v7284 = vmul.f32 %v6992, %v7210
          %v7285 = vmul.f32 %v6994, %v7215
          %v7286 = vmul.f32 %v6995, %v7215
          %v7287 = vmul.f32 %v6997, %v7220
          %v7288 = vmul.f32 %v6998, %v7220
          %v7289 = vmul.f32 %v7000, %v7225
          %v7290 = vmul.f32 %v7001, %v7225
          %v7291 = vld [vmem:[%s6] sm:$0x3]
          %v7293 = vlaneseq
          %v7294 = vshrl.u32 %v7293, 7
          %v7295 = vsub.s32 0, %v7294
          %v7296 = vrot.slane %v7291, %v7295
          %v7297 = vlaneseq
          %v7298 = vshrl.u32 %v7297, 7
          %v7299 = vsub.s32 1, %v7298
          %v7300 = vrot.slane %v7291, %v7299
          %v7303 = vadd.f32 %v7227, %v7296
          %v7304 = vadd.f32 %v7228, %v7300
          %v7305 = vadd.f32 %v7229, %v7296
          %v7306 = vadd.f32 %v7230, %v7300
          %v7307 = vadd.f32 %v7231, %v7296
          %v7308 = vadd.f32 %v7232, %v7300
          %v7309 = vadd.f32 %v7233, %v7296
          %v7310 = vadd.f32 %v7234, %v7300
          %v7311 = vadd.f32 %v7235, %v7296
          %v7312 = vadd.f32 %v7236, %v7300
          %v7313 = vadd.f32 %v7237, %v7296
          %v7314 = vadd.f32 %v7238, %v7300
          %v7315 = vadd.f32 %v7239, %v7296
          %v7316 = vadd.f32 %v7240, %v7300
          %v7317 = vadd.f32 %v7241, %v7296
          %v7318 = vadd.f32 %v7242, %v7300
          %v7319 = vadd.f32 %v7243, %v7296
          %v7320 = vadd.f32 %v7244, %v7300
          %v7321 = vadd.f32 %v7245, %v7296
          %v7322 = vadd.f32 %v7246, %v7300
          %v7323 = vadd.f32 %v7247, %v7296
          %v7324 = vadd.f32 %v7248, %v7300
          %v7325 = vadd.f32 %v7249, %v7296
          %v7326 = vadd.f32 %v7250, %v7300
          %v7327 = vadd.f32 %v7251, %v7296
          %v7328 = vadd.f32 %v7252, %v7300
          %v7329 = vadd.f32 %v7253, %v7296
          %v7330 = vadd.f32 %v7254, %v7300
          %v7331 = vadd.f32 %v7255, %v7296
          %v7332 = vadd.f32 %v7256, %v7300
          %v7333 = vadd.f32 %v7257, %v7296
          %v7334 = vadd.f32 %v7258, %v7300
          %v7335 = vadd.f32 %v7259, %v7296
          %v7336 = vadd.f32 %v7260, %v7300
          %v7337 = vadd.f32 %v7261, %v7296
          %v7338 = vadd.f32 %v7262, %v7300
          %v7339 = vadd.f32 %v7263, %v7296
          %v7340 = vadd.f32 %v7264, %v7300
          %v7341 = vadd.f32 %v7265, %v7296
          %v7342 = vadd.f32 %v7266, %v7300
          %v7343 = vadd.f32 %v7267, %v7296
          %v7344 = vadd.f32 %v7268, %v7300
          %v7345 = vadd.f32 %v7269, %v7296
          %v7346 = vadd.f32 %v7270, %v7300
          %v7347 = vadd.f32 %v7271, %v7296
          %v7348 = vadd.f32 %v7272, %v7300
          %v7349 = vadd.f32 %v7273, %v7296
          %v7350 = vadd.f32 %v7274, %v7300
          %v7351 = vadd.f32 %v7275, %v7296
          %v7352 = vadd.f32 %v7276, %v7300
          %v7353 = vadd.f32 %v7277, %v7296
          %v7354 = vadd.f32 %v7278, %v7300
          %v7355 = vadd.f32 %v7279, %v7296
          %v7356 = vadd.f32 %v7280, %v7300
          %v7357 = vadd.f32 %v7281, %v7296
          %v7358 = vadd.f32 %v7282, %v7300
          %v7359 = vadd.f32 %v7283, %v7296
          %v7360 = vadd.f32 %v7284, %v7300
          %v7361 = vadd.f32 %v7285, %v7296
          %v7362 = vadd.f32 %v7286, %v7300
          %v7363 = vadd.f32 %v7287, %v7296
          %v7364 = vadd.f32 %v7288, %v7300
          %v7365 = vadd.f32 %v7289, %v7296
          %v7366 = vadd.f32 %v7290, %v7300
          %v7367 = vmax.f32 %v7303, 0.0
          %v7368 = vmax.f32 %v7304, 0.0
          %v7369 = vmax.f32 %v7305, 0.0
          %v7370 = vmax.f32 %v7306, 0.0
          %v7371 = vmax.f32 %v7307, 0.0
          %v7372 = vmax.f32 %v7308, 0.0
          %v7373 = vmax.f32 %v7309, 0.0
          %v7374 = vmax.f32 %v7310, 0.0
          %v7375 = vmax.f32 %v7311, 0.0
          %v7376 = vmax.f32 %v7312, 0.0
          %v7377 = vmax.f32 %v7313, 0.0
          %v7378 = vmax.f32 %v7314, 0.0
          %v7379 = vmax.f32 %v7315, 0.0
          %v7380 = vmax.f32 %v7316, 0.0
          %v7381 = vmax.f32 %v7317, 0.0
          %v7382 = vmax.f32 %v7318, 0.0
          %v7383 = vmax.f32 %v7319, 0.0
          %v7384 = vmax.f32 %v7320, 0.0
          %v7385 = vmax.f32 %v7321, 0.0
          %v7386 = vmax.f32 %v7322, 0.0
          %v7387 = vmax.f32 %v7323, 0.0
          %v7388 = vmax.f32 %v7324, 0.0
          %v7389 = vmax.f32 %v7325, 0.0
          %v7390 = vmax.f32 %v7326, 0.0
          %v7391 = vmax.f32 %v7327, 0.0
          %v7392 = vmax.f32 %v7328, 0.0
          %v7393 = vmax.f32 %v7329, 0.0
          %v7394 = vmax.f32 %v7330, 0.0
          %v7395 = vmax.f32 %v7331, 0.0
          %v7396 = vmax.f32 %v7332, 0.0
          %v7397 = vmax.f32 %v7333, 0.0
          %v7398 = vmax.f32 %v7334, 0.0
          %v7399 = vmax.f32 %v7335, 0.0
          %v7400 = vmax.f32 %v7336, 0.0
          %v7401 = vmax.f32 %v7337, 0.0
          %v7402 = vmax.f32 %v7338, 0.0
          %v7403 = vmax.f32 %v7339, 0.0
          %v7404 = vmax.f32 %v7340, 0.0
          %v7405 = vmax.f32 %v7341, 0.0
          %v7406 = vmax.f32 %v7342, 0.0
          %v7407 = vmax.f32 %v7343, 0.0
          %v7408 = vmax.f32 %v7344, 0.0
          %v7409 = vmax.f32 %v7345, 0.0
          %v7410 = vmax.f32 %v7346, 0.0
          %v7411 = vmax.f32 %v7347, 0.0
          %v7412 = vmax.f32 %v7348, 0.0
          %v7413 = vmax.f32 %v7349, 0.0
          %v7414 = vmax.f32 %v7350, 0.0
          %v7415 = vmax.f32 %v7351, 0.0
          %v7416 = vmax.f32 %v7352, 0.0
          %v7417 = vmax.f32 %v7353, 0.0
          %v7418 = vmax.f32 %v7354, 0.0
          %v7419 = vmax.f32 %v7355, 0.0
          %v7420 = vmax.f32 %v7356, 0.0
          %v7421 = vmax.f32 %v7357, 0.0
          %v7422 = vmax.f32 %v7358, 0.0
          %v7423 = vmax.f32 %v7359, 0.0
          %v7424 = vmax.f32 %v7360, 0.0
          %v7425 = vmax.f32 %v7361, 0.0
          %v7426 = vmax.f32 %v7362, 0.0
          %v7427 = vmax.f32 %v7363, 0.0
          %v7428 = vmax.f32 %v7364, 0.0
          %v7429 = vmax.f32 %v7365, 0.0
          %v7430 = vmax.f32 %v7366, 0.0
          %7431 = vst [vmem:[%s347] sm:$0xff] %v7367
          %7432 = vst [vmem:[%s347 + $0x8] sm:$0xff] %v7368
          %7433 = vst [vmem:[%s347 + $0x10] sm:$0xff] %v7369
          %7434 = vst [vmem:[%s347 + $0x18] sm:$0xff] %v7370
          %7435 = vst [vmem:[%s347 + $0x20] sm:$0xff] %v7371
          %7436 = vst [vmem:[%s347 + $0x28] sm:$0xff] %v7372
          %7437 = vst [vmem:[%s347 + $0x30] sm:$0xff] %v7373
          %7438 = vst [vmem:[%s347 + $0x38] sm:$0xff] %v7374
          %7439 = vst [vmem:[%s347 + $0x40] sm:$0xff] %v7375
          %7440 = vst [vmem:[%s347 + $0x48] sm:$0xff] %v7376
          %7441 = vst [vmem:[%s347 + $0x50] sm:$0xff] %v7377
          %7442 = vst [vmem:[%s347 + $0x58] sm:$0xff] %v7378
          %7443 = vst [vmem:[%s347 + $0x60] sm:$0xff] %v7379
          %7444 = vst [vmem:[%s347 + $0x68] sm:$0xff] %v7380
          %7445 = vst [vmem:[%s347 + $0x70] sm:$0xff] %v7381
          %7446 = vst [vmem:[%s347 + $0x78] sm:$0xff] %v7382
          %7447 = vst [vmem:[%s347 + $0x80] sm:$0xff] %v7383
          %7448 = vst [vmem:[%s347 + $0x88] sm:$0xff] %v7384
          %7449 = vst [vmem:[%s347 + $0x90] sm:$0xff] %v7385
          %7450 = vst [vmem:[%s347 + $0x98] sm:$0xff] %v7386
          %7451 = vst [vmem:[%s347 + $0xa0] sm:$0xff] %v7387
          %7452 = vst [vmem:[%s347 + $0xa8] sm:$0xff] %v7388
          %7453 = vst [vmem:[%s347 + $0xb0] sm:$0xff] %v7389
          %7454 = vst [vmem:[%s347 + $0xb8] sm:$0xff] %v7390
          %7455 = vst [vmem:[%s347 + $0xc0] sm:$0xff] %v7391
          %7456 = vst [vmem:[%s347 + $0xc8] sm:$0xff] %v7392
          %7457 = vst [vmem:[%s347 + $0xd0] sm:$0xff] %v7393
          %7458 = vst [vmem:[%s347 + $0xd8] sm:$0xff] %v7394
          %7459 = vst [vmem:[%s347 + $0xe0] sm:$0xff] %v7395
          %7460 = vst [vmem:[%s347 + $0xe8] sm:$0xff] %v7396
          %7461 = vst [vmem:[%s347 + $0xf0] sm:$0xff] %v7397
          %7462 = vst [vmem:[%s347 + $0xf8] sm:$0xff] %v7398
          %7463 = vst [vmem:[%s347 + $0x100] sm:$0xff] %v7399
          %7464 = vst [vmem:[%s347 + $0x108] sm:$0xff] %v7400
          %7465 = vst [vmem:[%s347 + $0x110] sm:$0xff] %v7401
          %7466 = vst [vmem:[%s347 + $0x118] sm:$0xff] %v7402
          %7467 = vst [vmem:[%s347 + $0x120] sm:$0xff] %v7403
          %7468 = vst [vmem:[%s347 + $0x128] sm:$0xff] %v7404
          %7469 = vst [vmem:[%s347 + $0x130] sm:$0xff] %v7405
          %7470 = vst [vmem:[%s347 + $0x138] sm:$0xff] %v7406
          %7471 = vst [vmem:[%s347 + $0x140] sm:$0xff] %v7407
          %7472 = vst [vmem:[%s347 + $0x148] sm:$0xff] %v7408
          %7473 = vst [vmem:[%s347 + $0x150] sm:$0xff] %v7409
          %7474 = vst [vmem:[%s347 + $0x158] sm:$0xff] %v7410
          %7475 = vst [vmem:[%s347 + $0x160] sm:$0xff] %v7411
          %7476 = vst [vmem:[%s347 + $0x168] sm:$0xff] %v7412
          %7477 = vst [vmem:[%s347 + $0x170] sm:$0xff] %v7413
          %7478 = vst [vmem:[%s347 + $0x178] sm:$0xff] %v7414
          %7479 = vst [vmem:[%s347 + $0x180] sm:$0xff] %v7415
          %7480 = vst [vmem:[%s347 + $0x188] sm:$0xff] %v7416
          %7481 = vst [vmem:[%s347 + $0x190] sm:$0xff] %v7417
          %7482 = vst [vmem:[%s347 + $0x198] sm:$0xff] %v7418
          %7483 = vst [vmem:[%s347 + $0x1a0] sm:$0xff] %v7419
          %7484 = vst [vmem:[%s347 + $0x1a8] sm:$0xff] %v7420
          %7485 = vst [vmem:[%s347 + $0x1b0] sm:$0xff] %v7421
          %7486 = vst [vmem:[%s347 + $0x1b8] sm:$0xff] %v7422
          %7487 = vst [vmem:[%s347 + $0x1c0] sm:$0xff] %v7423
          %7488 = vst [vmem:[%s347 + $0x1c8] sm:$0xff] %v7424
          %7489 = vst [vmem:[%s347 + $0x1d0] sm:$0xff] %v7425
          %7490 = vst [vmem:[%s347 + $0x1d8] sm:$0xff] %v7426
          %7491 = vst [vmem:[%s347 + $0x1e0] sm:$0xff] %v7427
          %7492 = vst [vmem:[%s347 + $0x1e8] sm:$0xff] %v7428
          %7493 = vst [vmem:[%s347 + $0x1f0] sm:$0xff] %v7429
          %7494 = vst [vmem:[%s347 + $0x1f8] sm:$0xff] %v7430
        $region60: #{tpu_custom_call.1} parent=43 // pred_fallthru
          _
        %s7495 = sand.u32 %s201, 1
        %s7496 = scalar_lea.sflag [#allocation7], %s7495
        %s7497 = sand.u32 %s201, 1
        %s7498 = smul.addr %s7497, 512
        %s7499 = scalar_lea.vmem [#allocation8], %s7498
        // Predicated region
        $region61: #{tpu_custom_call.1} parent=43 // pred_check
          %p7500 = pneg %p211
        $region62: #{tpu_custom_call.1} parent=43 // pred_check_branch
          %7502 = sbr.rel (%p7500) target = $region64
        $region63: #{tpu_custom_call.1} parent=43 // pred_region
          %s7503 = smul.u32 32, %s32
          %s7505 = ssub.s32 8192, 8192
          %7506 = vsyncadd %s7496, %s7505
          %s7507 = smul.addr %s7503, 2
          %s7508 = smul.addr %s7507, 128
          %s7509 = scalar_lea.hbm %s7, %s7508
          %s7510 = sshll.u32 %s7499, 4
          %s7511 = int_to_ptr.vmem [resolvable:$true] %s7510
          %7516 = dma.vmem_to_hbm [thread:$0]  %s7511, 8192, %s7509, %s7496, 256, 256, 16
        $region64: #{tpu_custom_call.1} parent=43 // pred_fallthru
          _
      $region44: #{tpu_custom_call.1} parent=5 // pred_fallthru
        _
      %p7517 = scmp.le.s32.totalorder 2, %s23
      // Predicated region
      $region65: #{tpu_custom_call.1} parent=5 // pred_check
        %p7518 = pneg %p7517
      $region66: #{tpu_custom_call.1} parent=5 // pred_check_branch
        %7520 = sbr.rel (%p7518) target = $region68
      $region67: #{tpu_custom_call.1} parent=5 // pred_region
        %s7521 = ssub.s32 %s23, 2
        // Predicated region
        $region69: #{tpu_custom_call.1} parent=67 // pred_check
          %p7522 = pneg %p217
        $region70: #{tpu_custom_call.1} parent=67 // pred_check_branch
          %7524 = sbr.rel (%p7522) target = $region72
        $region71: #{tpu_custom_call.1} parent=67 // pred_region
          %s7525 = sand.u32 %s202, 1
          %s7526 = scalar_lea.sflag [#allocation7], %s7525
          %s7527 = sand.u32 %s202, 1
          %s7528 = smul.addr %s7527, 512
          %s7529 = scalar_lea.vmem [#allocation8], %s7528
          %7530 = dma.done %s7526, 8192
        $region72: #{tpu_custom_call.1} parent=67 // pred_fallthru
          _
      $region68: #{tpu_custom_call.1} parent=5 // pred_fallthru
        _
    $region6: #{tpu_custom_call.1} parent=1 // loop_footer
      %s27 = sadd.s32 1, %s23
    $region7: #{tpu_custom_call.1} parent=1 // loop_footer_branch
      %22 = sbr.rel target = $region3
    $region8: #{tpu_custom_call.1} parent=1 // loop_exit
      _
    %7531 = vsyncpa [#allocation6], 1
    %s7532 = scalar_lea.sflag [#allocation6], 1
    %7533 = vsyncpa %s7532, 1
    %7534 = vsyncpa [#allocation7], 1
    %s7535 = scalar_lea.sflag [#allocation7], 1
    %7536 = vsyncpa %s7535, 1

</llo_original>
